<compile_context>
chip_gen: v5e
topology: v5e:2x2
jax: 0.10.0
libtpu: 0.0.40
codegen_flags: <defaults>
</compile_context>

<pallas_src>
import numpy as np

import jax
import jax.numpy as jnp
from jax import lax
from jax.experimental import pallas as pl
from jax.experimental.pallas import tpu as pltpu


_POOL_TAPS = 9  # 3x3 max-pool window -> 9 taps
_POOL_WIN = 7   # 5x5 conv + 3x3 pool -> 7x7 input window per pooled position


def _round_up(v, m):
    return (v + m - 1) // m * m


def _tap_scatter_matrix():
    """Constant 0/1 tensor S[(di+ki)*7+(dj+kj), di*3+dj, ki*5+kj] = 1.

    Scatters a 5x5 conv kernel into the 7x7 pooled-window patch slots for each
    of the 9 pool taps.  Built once with numpy -> embedded as a constant.
    """
    s = np.zeros((_POOL_WIN * _POOL_WIN, _POOL_TAPS, 25), np.float32)
    for di in range(3):
        for dj in range(3):
            for ki in range(5):
                for kj in range(5):
                    s[(di + ki) * _POOL_WIN + (dj + kj), di * 3 + dj, ki * 5 + kj] = 1.0
    return s


_S_TAPS = _tap_scatter_matrix()  # (49, 9, 25) constant


# ---------------------------------------------------------------------------
# Pallas kernel 1: conv1 + bias + ReLU + 3x3 max-pool as 9 streamed per-tap
# dots with a running max (no 9x materialized intermediate).
# ---------------------------------------------------------------------------
def _conv_pool_kernel(p_ref, w_ref, b_ref, y_ref):
    # p_ref: (rows, 49) bf16   7x7 pooled-window patches (shared by all taps)
    # w_ref: (9, 49, C) bf16   per-tap scattered conv weights
    # b_ref: (1, C) f32        conv bias (tap-invariant)
    # y_ref: (rows, C) bf16
    p = p_ref[...]
    m = jnp.dot(p, w_ref[0], preferred_element_type=jnp.float32)
    for t in range(1, w_ref.shape[0]):
        m = jnp.maximum(m, jnp.dot(p, w_ref[t], preferred_element_type=jnp.float32))
    # max -> +bias -> ReLU == maxpool(ReLU(conv + bias)):
    # bias is tap-invariant and max/ReLU are monotone.
    y_ref[...] = jnp.maximum(m + b_ref[...], 0.0).astype(y_ref.dtype)


def conv_relu_pool_stage1(p1, w_taps, b):
    rows, k = p1.shape
    taps, _, c = w_taps.shape
    # Row-block grid: one step at small N; "parallel" lets v7x's two TCs split
    # the rows once N grows.  TODO(synk): tune block_rows / vmem_limit_bytes
    # (pltpu.CompilerParams) for very large N.
    block_rows = min(rows, 6400)
    grid = (pl.cdiv(rows, block_rows),)
    flops = 2 * rows * k * c * taps
    bytes_accessed = rows * k * 2 + taps * k * c * 2 + c * 4 + rows * c * 2
    return pl.pallas_call(
        _conv_pool_kernel,
        out_shape=jax.ShapeDtypeStruct((rows, c), jnp.bfloat16),
        grid=grid,
        in_specs=[pl.BlockSpec((block_rows, k), lambda i: (i, 0)),
                  pl.BlockSpec((taps, k, c), lambda i: (0, 0, 0)),
                  pl.BlockSpec((1, c), lambda i: (0, 0))],
        out_specs=pl.BlockSpec((block_rows, c), lambda i: (i, 0)),
        compiler_params=pltpu.CompilerParams(dimension_semantics=("parallel",)),
        cost_estimate=pl.CostEstimate(flops=flops, transcendentals=0,
                                      bytes_accessed=bytes_accessed),
    )(p1, w_taps, b)


# ---------------------------------------------------------------------------
# Pallas kernel 2: conv2 (9 streamed per-tap dots + running max) + bias + ReLU
#                  + Dropout(identity) + Flatten + Linear(500,100)
#                  + Linear(100,15), fully fused.  Flatten is realized as 25
#                  accumulated per-position dots (no scratch, no masked vst).
# ---------------------------------------------------------------------------
def _conv_pool_fc_kernel(p_ref, w2_ref, b2_ref, wf1_ref, bf1_ref,
                         wf2_ref, bf2_ref, o_ref):
    n_pos = wf1_ref.shape[0]            # 25 pooled spatial positions
    padded_n = p_ref.shape[0] // n_pos  # rows per position, padded to mult. of 8

    p = p_ref[...]
    m = jnp.dot(p, w2_ref[0], preferred_element_type=jnp.float32)
    for t in range(1, w2_ref.shape[0]):
        m = jnp.maximum(m, jnp.dot(p, w2_ref[t], preferred_element_type=jnp.float32))
    # y2 rows are (pos, n_padded); pad rows (n >= true batch) hold ReLU(bias)
    # garbage but only ever feed h rows >= true batch, which are never output.
    y2 = jnp.maximum(m + b2_ref[...], 0.0)             # (n_pos*padded_n, 20) f32

    # TODO(synk): Dropout(p=0.5) is identity here (eval-mode semantics).

    # Flatten + fc1 as 25 sublane-aligned accumulated dots (MXU has slack).
    h = jnp.zeros((padded_n, wf1_ref.shape[2]), jnp.float32)
    for pos in range(n_pos):
        h = h + jnp.dot(y2[pos * padded_n:(pos + 1) * padded_n, :], wf1_ref[pos],
                        preferred_element_type=jnp.float32)
    h = h + bf1_ref[...]
    out = jnp.dot(h, wf2_ref[...], preferred_element_type=jnp.float32) + bf2_ref[...]
    o_ref[...] = out[0:o_ref.shape[0], :]


def conv_relu_pool_fc_stage2(p2, w2_taps, b2, wf1, bf1, wf2, bf2, n):
    rows = p2.shape[0]
    taps, k2, c2 = w2_taps.shape
    n_pos, _, hid = wf1.shape
    padded_n = rows // n_pos
    flops = (2 * rows * k2 * c2 * taps
             + 2 * n_pos * padded_n * c2 * hid
             + 2 * padded_n * hid * wf2.shape[1])
    bytes_accessed = (p2.size * 2 + w2_taps.size * 2 + wf1.size * 4
                      + wf2.size * 4 + n * wf2.shape[1] * 4)
    return pl.pallas_call(
        _conv_pool_fc_kernel,
        out_shape=jax.ShapeDtypeStruct((n, wf2.shape[1]), jnp.float32),
        in_specs=[pl.BlockSpec(memory_space=pltpu.MemorySpace.VMEM)] * 7,
        out_specs=pl.BlockSpec(memory_space=pltpu.MemorySpace.VMEM),
        cost_estimate=pl.CostEstimate(flops=flops, transcendentals=0,
                                      bytes_accessed=bytes_accessed),
    )(p2, w2_taps, b2, wf1, bf1, wf2, bf2)


# ---------------------------------------------------------------------------
# Full forward pass
# ---------------------------------------------------------------------------
def simple_net_dropout_forward(x, params):
    n = x.shape[0]
    padded_n = _round_up(n, 8)

    # --- stage-1 weights: scatter 5x5 conv1 into the 9 pooled-window taps ---
    w1m = params["conv1_w"].reshape(10, 25).T                         # (25, 10)
    w1_taps = jnp.einsum("ftk,kc->tfc", _S_TAPS, w1m).astype(jnp.bfloat16)  # (9,49,10)
    b1 = params["conv1_b"].reshape(1, 10)

    # --- stage-1 patches: cast to bf16 BEFORE extraction; ONE patches op ---
    xb = x.astype(jnp.bfloat16).reshape(n, 64, 64, 1)
    p1 = lax.conv_general_dilated_patches(
        xb, (_POOL_WIN, _POOL_WIN), (3, 3), "VALID",
        dimension_numbers=("NHWC", "HWIO", "NHWC"))                    # (N,20,20,49)
    p1 = p1.reshape(n * 400, 49)

    # conv1 + ReLU + MaxPool(3,3), bf16 output (halves the HBM round trip)
    y1 = conv_relu_pool_stage1(p1, w1_taps, b1)                        # (N*400, 10) bf16

    # --- stage-2 patches: ONE patches op on channels-last y1 ---
    p2 = lax.conv_general_dilated_patches(
        y1.reshape(n, 20, 20, 10), (_POOL_WIN, _POOL_WIN), (3, 3), "VALID",
        dimension_numbers=("NHWC", "HWIO", "NHWC"))                    # (N,5,5,490)
    p2 = p2.reshape(n, 25, 490).transpose(1, 0, 2)                     # rows (pos, n)
    p2 = jnp.pad(p2, ((0, 0), (0, padded_n - n), (0, 0))).reshape(25 * padded_n, 490)
    assert p2.shape[0] == 25 * padded_n  # flatten loop bound in the kernel

    # --- stage-2 weights ---
    w2m = params["conv2_w"].transpose(1, 2, 3, 0).reshape(10, 25, 20)  # (ci, k, co)
    w2_taps = (jnp.einsum("ftk,cko->tcfo", _S_TAPS, w2m)
               .reshape(_POOL_TAPS, 490, 20).astype(jnp.bfloat16))     # (9, 490, 20)
    b2 = params["conv2_b"].reshape(1, 20)
    # fc1 weight regrouped to (pos, ci, out) so flatten == 25 accumulated dots.
    wf1 = params["fc1_w"].reshape(100, 20, 25).transpose(2, 1, 0)      # (25, 20, 100)
    bf1 = params["fc1_b"].reshape(1, 100)
    wf2 = params["fc2_w"].T                                            # (100, 15)
    bf2 = params["fc2_b"].reshape(1, 15)

    return conv_relu_pool_fc_stage2(p2, w2_taps, b2, wf1, bf1, wf2, bf2, n=n)


# ---------------------------------------------------------------------------
# Pure-JAX reference (for correctness checking only)
# ---------------------------------------------------------------------------
def reference_forward(x, p):
    def conv2d(x, w, b):
        y = lax.conv_general_dilated(x, w, (1, 1), "VALID",
                                     dimension_numbers=("NCHW", "OIHW", "NCHW"))
        return y + b[None, :, None, None]

    def maxpool3(x):
        n, c, h, w = x.shape
        ho, wo = h // 3, w // 3
        x = x[:, :, :ho * 3, :wo * 3].reshape(n, c, ho, 3, wo, 3)
        return x.max(axis=(3, 5))

    h = maxpool3(jnp.maximum(conv2d(x, p["conv1_w"], p["conv1_b"]), 0.0))
    h = maxpool3(jnp.maximum(conv2d(h, p["conv2_w"], p["conv2_b"]), 0.0))
    f = h.reshape(x.shape[0], -1)
    f = f @ p["fc1_w"].T + p["fc1_b"]
    return f @ p["fc2_w"].T + p["fc2_b"]


def init_params(key):
    ks = jax.random.split(key, 8)
    s = 0.1
    return {
        "conv1_w": s * jax.random.normal(ks[0], (10, 1, 5, 5), jnp.float32),
        "conv1_b": s * jax.random.normal(ks[1], (10,), jnp.float32),
        "conv2_w": s * jax.random.normal(ks[2], (20, 10, 5, 5), jnp.float32),
        "conv2_b": s * jax.random.normal(ks[3], (20,), jnp.float32),
        "fc1_w": s * jax.random.normal(ks[4], (100, 500), jnp.float32),
        "fc1_b": s * jax.random.normal(ks[5], (100,), jnp.float32),
        "fc2_w": s * jax.random.normal(ks[6], (15, 100), jnp.float32),
        "fc2_b": s * jax.random.normal(ks[7], (15,), jnp.float32),
    }


if __name__ == "__main__":
    key = jax.random.PRNGKey(0)
    k_x, k_p = jax.random.split(key)

    # Input: (N, C, H, W) = (2, 1, 64, 64) so that the flatten dim is 500.
    x = jax.random.normal(k_x, (2, 1, 64, 64), jnp.float32)
    params = init_params(k_p)

    out = jax.block_until_ready(jax.jit(simple_net_dropout_forward)(x, params))
    assert out.shape == (2, 15), out.shape

    ref = jax.block_until_ready(reference_forward(x, params))
    err = jnp.max(jnp.abs(out - ref))
    # bf16 conv operands / bf16 y1 with f32 accumulation -> looser tolerance.
    assert jnp.allclose(out, ref, rtol=3e-2, atol=3e-2), f"max abs err {err}"

    print("KERNEL_OK")
</pallas_src>

<mosaic_0001>
module attributes {stable_mosaic.version = 11 : i64} {
  func.func @_conv_pool_kernel(%arg0: i32, %arg1: memref<800x49xbf16, #tpu.memory_space<vmem>>, %arg2: memref<9x49x10xbf16, #tpu.memory_space<vmem>>, %arg3: memref<1x10xf32, #tpu.memory_space<vmem>>, %arg4: memref<800x10xbf16, #tpu.memory_space<vmem>>) attributes {dimension_semantics = [#tpu.dimension_semantics<parallel>], iteration_bounds = array<i64: 1>, scalar_prefetch = 0 : i64, scratch_operands = 0 : i64, tpu.core_type = #tpu.core_type<tc>, window_params = [{transform_indices = @transform_0, window_bounds = array<i64: 800, 49>}, {pipeline_mode = #tpu.pipeline_mode<synchronous>, transform_indices = @transform_1, window_bounds = array<i64: 9, 49, 10>}, {pipeline_mode = #tpu.pipeline_mode<synchronous>, transform_indices = @transform_2, window_bounds = array<i64: 1, 10>}, {transform_indices = @transform_3, window_bounds = array<i64: 800, 10>}]} {
    %c0 = arith.constant 0 : index
    %c0_0 = arith.constant 0 : index
    %0 = vector.load %arg1[%c0, %c0_0] : memref<800x49xbf16, #tpu.memory_space<vmem>>, vector<800x49xbf16>
    %c0_1 = arith.constant 0 : index
    %c0_2 = arith.constant 0 : index
    %c0_3 = arith.constant 0 : index
    %1 = vector.load %arg2[%c0_1, %c0_2, %c0_3] : memref<9x49x10xbf16, #tpu.memory_space<vmem>>, vector<1x49x10xbf16>
    %2 = vector.shape_cast %1 : vector<1x49x10xbf16> to vector<49x10xbf16>
    %cst = arith.constant dense<0.000000e+00> : vector<800x10xf32>
    %3 = tpu.matmul %0, %2, %cst {dimension_numbers = #tpu.dot_dimension_numbers<[1], [0], [0], [1], [0, 0, 1, 1], [], []>} : vector<800x49xbf16>, vector<49x10xbf16>, vector<800x10xf32> -> vector<800x10xf32>
    %c1 = arith.constant 1 : index
    %c0_4 = arith.constant 0 : index
    %c0_5 = arith.constant 0 : index
    %4 = vector.load %arg2[%c1, %c0_4, %c0_5] : memref<9x49x10xbf16, #tpu.memory_space<vmem>>, vector<1x49x10xbf16>
    %5 = vector.shape_cast %4 : vector<1x49x10xbf16> to vector<49x10xbf16>
    %cst_6 = arith.constant dense<0.000000e+00> : vector<800x10xf32>
    %6 = tpu.matmul %0, %5, %cst_6 {dimension_numbers = #tpu.dot_dimension_numbers<[1], [0], [0], [1], [0, 0, 1, 1], [], []>} : vector<800x49xbf16>, vector<49x10xbf16>, vector<800x10xf32> -> vector<800x10xf32>
    %7 = arith.maximumf %3, %6 : vector<800x10xf32>
    %c2 = arith.constant 2 : index
    %c0_7 = arith.constant 0 : index
    %c0_8 = arith.constant 0 : index
    %8 = vector.load %arg2[%c2, %c0_7, %c0_8] : memref<9x49x10xbf16, #tpu.memory_space<vmem>>, vector<1x49x10xbf16>
    %9 = vector.shape_cast %8 : vector<1x49x10xbf16> to vector<49x10xbf16>
    %cst_9 = arith.constant dense<0.000000e+00> : vector<800x10xf32>
    %10 = tpu.matmul %0, %9, %cst_9 {dimension_numbers = #tpu.dot_dimension_numbers<[1], [0], [0], [1], [0, 0, 1, 1], [], []>} : vector<800x49xbf16>, vector<49x10xbf16>, vector<800x10xf32> -> vector<800x10xf32>
    %11 = arith.maximumf %7, %10 : vector<800x10xf32>
    %c3 = arith.constant 3 : index
    %c0_10 = arith.constant 0 : index
    %c0_11 = arith.constant 0 : index
    %12 = vector.load %arg2[%c3, %c0_10, %c0_11] : memref<9x49x10xbf16, #tpu.memory_space<vmem>>, vector<1x49x10xbf16>
    %13 = vector.shape_cast %12 : vector<1x49x10xbf16> to vector<49x10xbf16>
    %cst_12 = arith.constant dense<0.000000e+00> : vector<800x10xf32>
    %14 = tpu.matmul %0, %13, %cst_12 {dimension_numbers = #tpu.dot_dimension_numbers<[1], [0], [0], [1], [0, 0, 1, 1], [], []>} : vector<800x49xbf16>, vector<49x10xbf16>, vector<800x10xf32> -> vector<800x10xf32>
    %15 = arith.maximumf %11, %14 : vector<800x10xf32>
    %c4 = arith.constant 4 : index
    %c0_13 = arith.constant 0 : index
    %c0_14 = arith.constant 0 : index
    %16 = vector.load %arg2[%c4, %c0_13, %c0_14] : memref<9x49x10xbf16, #tpu.memory_space<vmem>>, vector<1x49x10xbf16>
    %17 = vector.shape_cast %16 : vector<1x49x10xbf16> to vector<49x10xbf16>
    %cst_15 = arith.constant dense<0.000000e+00> : vector<800x10xf32>
    %18 = tpu.matmul %0, %17, %cst_15 {dimension_numbers = #tpu.dot_dimension_numbers<[1], [0], [0], [1], [0, 0, 1, 1], [], []>} : vector<800x49xbf16>, vector<49x10xbf16>, vector<800x10xf32> -> vector<800x10xf32>
    %19 = arith.maximumf %15, %18 : vector<800x10xf32>
    %c5 = arith.constant 5 : index
    %c0_16 = arith.constant 0 : index
    %c0_17 = arith.constant 0 : index
    %20 = vector.load %arg2[%c5, %c0_16, %c0_17] : memref<9x49x10xbf16, #tpu.memory_space<vmem>>, vector<1x49x10xbf16>
    %21 = vector.shape_cast %20 : vector<1x49x10xbf16> to vector<49x10xbf16>
    %cst_18 = arith.constant dense<0.000000e+00> : vector<800x10xf32>
    %22 = tpu.matmul %0, %21, %cst_18 {dimension_numbers = #tpu.dot_dimension_numbers<[1], [0], [0], [1], [0, 0, 1, 1], [], []>} : vector<800x49xbf16>, vector<49x10xbf16>, vector<800x10xf32> -> vector<800x10xf32>
    %23 = arith.maximumf %19, %22 : vector<800x10xf32>
    %c6 = arith.constant 6 : index
    %c0_19 = arith.constant 0 : index
    %c0_20 = arith.constant 0 : index
    %24 = vector.load %arg2[%c6, %c0_19, %c0_20] : memref<9x49x10xbf16, #tpu.memory_space<vmem>>, vector<1x49x10xbf16>
    %25 = vector.shape_cast %24 : vector<1x49x10xbf16> to vector<49x10xbf16>
    %cst_21 = arith.constant dense<0.000000e+00> : vector<800x10xf32>
    %26 = tpu.matmul %0, %25, %cst_21 {dimension_numbers = #tpu.dot_dimension_numbers<[1], [0], [0], [1], [0, 0, 1, 1], [], []>} : vector<800x49xbf16>, vector<49x10xbf16>, vector<800x10xf32> -> vector<800x10xf32>
    %27 = arith.maximumf %23, %26 : vector<800x10xf32>
    %c7 = arith.constant 7 : index
    %c0_22 = arith.constant 0 : index
    %c0_23 = arith.constant 0 : index
    %28 = vector.load %arg2[%c7, %c0_22, %c0_23] : memref<9x49x10xbf16, #tpu.memory_space<vmem>>, vector<1x49x10xbf16>
    %29 = vector.shape_cast %28 : vector<1x49x10xbf16> to vector<49x10xbf16>
    %cst_24 = arith.constant dense<0.000000e+00> : vector<800x10xf32>
    %30 = tpu.matmul %0, %29, %cst_24 {dimension_numbers = #tpu.dot_dimension_numbers<[1], [0], [0], [1], [0, 0, 1, 1], [], []>} : vector<800x49xbf16>, vector<49x10xbf16>, vector<800x10xf32> -> vector<800x10xf32>
    %31 = arith.maximumf %27, %30 : vector<800x10xf32>
    %c8 = arith.constant 8 : index
    %c0_25 = arith.constant 0 : index
    %c0_26 = arith.constant 0 : index
    %32 = vector.load %arg2[%c8, %c0_25, %c0_26] : memref<9x49x10xbf16, #tpu.memory_space<vmem>>, vector<1x49x10xbf16>
    %33 = vector.shape_cast %32 : vector<1x49x10xbf16> to vector<49x10xbf16>
    %cst_27 = arith.constant dense<0.000000e+00> : vector<800x10xf32>
    %34 = tpu.matmul %0, %33, %cst_27 {dimension_numbers = #tpu.dot_dimension_numbers<[1], [0], [0], [1], [0, 0, 1, 1], [], []>} : vector<800x49xbf16>, vector<49x10xbf16>, vector<800x10xf32> -> vector<800x10xf32>
    %35 = arith.maximumf %31, %34 : vector<800x10xf32>
    %c0_28 = arith.constant 0 : index
    %c0_29 = arith.constant 0 : index
    %36 = vector.load %arg3[%c0_28, %c0_29] : memref<1x10xf32, #tpu.memory_space<vmem>>, vector<1x10xf32>
    %37 = vector.broadcast %36 : vector<1x10xf32> to vector<800x10xf32>
    %38 = arith.addf %35, %37 : vector<800x10xf32>
    %cst_30 = arith.constant 0.000000e+00 : f32
    %39 = vector.broadcast %cst_30 : f32 to vector<800x10xf32>
    %40 = arith.maximumf %38, %39 : vector<800x10xf32>
    %41 = arith.truncf %40 : vector<800x10xf32> to vector<800x10xbf16>
    %c0_31 = arith.constant 0 : index
    %c0_32 = arith.constant 0 : index
    %42 = vector.load %arg4[%c0_31, %c0_32] : memref<800x10xbf16, #tpu.memory_space<vmem>>, vector<800x10xbf16>
    tpu.vector_store %arg4[%c0_31, %c0_32], %41 {strides = array<i32>} : memref<800x10xbf16, #tpu.memory_space<vmem>>, vector<800x10xbf16>,
    return
  }
  func.func @transform_0(%arg0: i32) -> (i32, i32) {
    %c0_i32 = arith.constant 0 : i32
    %c0_i32_0 = arith.constant 0 : i32
    return %arg0, %c0_i32 : i32, i32
  }
  func.func @transform_1(%arg0: i32) -> (i32, i32, i32) {
    %c0_i32 = arith.constant 0 : i32
    %c0_i32_0 = arith.constant 0 : i32
    %c0_i32_1 = arith.constant 0 : i32
    %c0_i32_2 = arith.constant 0 : i32
    return %c0_i32, %c0_i32_0, %c0_i32_1 : i32, i32, i32
  }
  func.func @transform_2(%arg0: i32) -> (i32, i32) {
    %c0_i32 = arith.constant 0 : i32
    %c0_i32_0 = arith.constant 0 : i32
    %c0_i32_1 = arith.constant 0 : i32
    return %c0_i32, %c0_i32_0 : i32, i32
  }
  func.func @transform_3(%arg0: i32) -> (i32, i32) {
    %c0_i32 = arith.constant 0 : i32
    %c0_i32_0 = arith.constant 0 : i32
    return %arg0, %c0_i32 : i32, i32
  }
}

module attributes {stable_mosaic.version = 11 : i64} {
  func.func @_conv_pool_fc_kernel(%arg0: memref<200x490xbf16, #tpu.memory_space<vmem>>, %arg1: memref<9x490x20xbf16, #tpu.memory_space<vmem>>, %arg2: memref<1x20xf32, #tpu.memory_space<vmem>>, %arg3: memref<25x20x100xf32, #tpu.memory_space<vmem>>, %arg4: memref<1x100xf32, #tpu.memory_space<vmem>>, %arg5: memref<100x15xf32, #tpu.memory_space<vmem>>, %arg6: memref<1x15xf32, #tpu.memory_space<vmem>>, %arg7: memref<2x15xf32, #tpu.memory_space<vmem>>) attributes {dimension_semantics = [], scalar_prefetch = 0 : i64, scratch_operands = 0 : i64, tpu.core_type = #tpu.core_type<tc>} {
    %c0 = arith.constant 0 : index
    %c0_0 = arith.constant 0 : index
    %0 = vector.load %arg0[%c0, %c0_0] : memref<200x490xbf16, #tpu.memory_space<vmem>>, vector<200x490xbf16>
    %c0_1 = arith.constant 0 : index
    %c0_2 = arith.constant 0 : index
    %c0_3 = arith.constant 0 : index
    %1 = vector.load %arg1[%c0_1, %c0_2, %c0_3] : memref<9x490x20xbf16, #tpu.memory_space<vmem>>, vector<1x490x20xbf16>
    %2 = vector.shape_cast %1 : vector<1x490x20xbf16> to vector<490x20xbf16>
    %cst = arith.constant dense<0.000000e+00> : vector<200x20xf32>
    %3 = tpu.matmul %0, %2, %cst {dimension_numbers = #tpu.dot_dimension_numbers<[1], [0], [0], [1], [0, 0, 1, 1], [], []>} : vector<200x490xbf16>, vector<490x20xbf16>, vector<200x20xf32> -> vector<200x20xf32>
    %c1 = arith.constant 1 : index
    %c0_4 = arith.constant 0 : index
    %c0_5 = arith.constant 0 : index
    %4 = vector.load %arg1[%c1, %c0_4, %c0_5] : memref<9x490x20xbf16, #tpu.memory_space<vmem>>, vector<1x490x20xbf16>
    %5 = vector.shape_cast %4 : vector<1x490x20xbf16> to vector<490x20xbf16>
    %cst_6 = arith.constant dense<0.000000e+00> : vector<200x20xf32>
    %6 = tpu.matmul %0, %5, %cst_6 {dimension_numbers = #tpu.dot_dimension_numbers<[1], [0], [0], [1], [0, 0, 1, 1], [], []>} : vector<200x490xbf16>, vector<490x20xbf16>, vector<200x20xf32> -> vector<200x20xf32>
    %7 = arith.maximumf %3, %6 : vector<200x20xf32>
    %c2 = arith.constant 2 : index
    %c0_7 = arith.constant 0 : index
    %c0_8 = arith.constant 0 : index
    %8 = vector.load %arg1[%c2, %c0_7, %c0_8] : memref<9x490x20xbf16, #tpu.memory_space<vmem>>, vector<1x490x20xbf16>
    %9 = vector.shape_cast %8 : vector<1x490x20xbf16> to vector<490x20xbf16>
    %cst_9 = arith.constant dense<0.000000e+00> : vector<200x20xf32>
    %10 = tpu.matmul %0, %9, %cst_9 {dimension_numbers = #tpu.dot_dimension_numbers<[1], [0], [0], [1], [0, 0, 1, 1], [], []>} : vector<200x490xbf16>, vector<490x20xbf16>, vector<200x20xf32> -> vector<200x20xf32>
    %11 = arith.maximumf %7, %10 : vector<200x20xf32>
    %c3 = arith.constant 3 : index
    %c0_10 = arith.constant 0 : index
    %c0_11 = arith.constant 0 : index
    %12 = vector.load %arg1[%c3, %c0_10, %c0_11] : memref<9x490x20xbf16, #tpu.memory_space<vmem>>, vector<1x490x20xbf16>
    %13 = vector.shape_cast %12 : vector<1x490x20xbf16> to vector<490x20xbf16>
    %cst_12 = arith.constant dense<0.000000e+00> : vector<200x20xf32>
    %14 = tpu.matmul %0, %13, %cst_12 {dimension_numbers = #tpu.dot_dimension_numbers<[1], [0], [0], [1], [0, 0, 1, 1], [], []>} : vector<200x490xbf16>, vector<490x20xbf16>, vector<200x20xf32> -> vector<200x20xf32>
    %15 = arith.maximumf %11, %14 : vector<200x20xf32>
    %c4 = arith.constant 4 : index
    %c0_13 = arith.constant 0 : index
    %c0_14 = arith.constant 0 : index
    %16 = vector.load %arg1[%c4, %c0_13, %c0_14] : memref<9x490x20xbf16, #tpu.memory_space<vmem>>, vector<1x490x20xbf16>
    %17 = vector.shape_cast %16 : vector<1x490x20xbf16> to vector<490x20xbf16>
    %cst_15 = arith.constant dense<0.000000e+00> : vector<200x20xf32>
    %18 = tpu.matmul %0, %17, %cst_15 {dimension_numbers = #tpu.dot_dimension_numbers<[1], [0], [0], [1], [0, 0, 1, 1], [], []>} : vector<200x490xbf16>, vector<490x20xbf16>, vector<200x20xf32> -> vector<200x20xf32>
    %19 = arith.maximumf %15, %18 : vector<200x20xf32>
    %c5 = arith.constant 5 : index
    %c0_16 = arith.constant 0 : index
    %c0_17 = arith.constant 0 : index
    %20 = vector.load %arg1[%c5, %c0_16, %c0_17] : memref<9x490x20xbf16, #tpu.memory_space<vmem>>, vector<1x490x20xbf16>
    %21 = vector.shape_cast %20 : vector<1x490x20xbf16> to vector<490x20xbf16>
    %cst_18 = arith.constant dense<0.000000e+00> : vector<200x20xf32>
    %22 = tpu.matmul %0, %21, %cst_18 {dimension_numbers = #tpu.dot_dimension_numbers<[1], [0], [0], [1], [0, 0, 1, 1], [], []>} : vector<200x490xbf16>, vector<490x20xbf16>, vector<200x20xf32> -> vector<200x20xf32>
    %23 = arith.maximumf %19, %22 : vector<200x20xf32>
    %c6 = arith.constant 6 : index
    %c0_19 = arith.constant 0 : index
    %c0_20 = arith.constant 0 : index
    %24 = vector.load %arg1[%c6, %c0_19, %c0_20] : memref<9x490x20xbf16, #tpu.memory_space<vmem>>, vector<1x490x20xbf16>
    %25 = vector.shape_cast %24 : vector<1x490x20xbf16> to vector<490x20xbf16>
    %cst_21 = arith.constant dense<0.000000e+00> : vector<200x20xf32>
    %26 = tpu.matmul %0, %25, %cst_21 {dimension_numbers = #tpu.dot_dimension_numbers<[1], [0], [0], [1], [0, 0, 1, 1], [], []>} : vector<200x490xbf16>, vector<490x20xbf16>, vector<200x20xf32> -> vector<200x20xf32>
    %27 = arith.maximumf %23, %26 : vector<200x20xf32>
    %c7 = arith.constant 7 : index
    %c0_22 = arith.constant 0 : index
    %c0_23 = arith.constant 0 : index
    %28 = vector.load %arg1[%c7, %c0_22, %c0_23] : memref<9x490x20xbf16, #tpu.memory_space<vmem>>, vector<1x490x20xbf16>
    %29 = vector.shape_cast %28 : vector<1x490x20xbf16> to vector<490x20xbf16>
    %cst_24 = arith.constant dense<0.000000e+00> : vector<200x20xf32>
    %30 = tpu.matmul %0, %29, %cst_24 {dimension_numbers = #tpu.dot_dimension_numbers<[1], [0], [0], [1], [0, 0, 1, 1], [], []>} : vector<200x490xbf16>, vector<490x20xbf16>, vector<200x20xf32> -> vector<200x20xf32>
    %31 = arith.maximumf %27, %30 : vector<200x20xf32>
    %c8 = arith.constant 8 : index
    %c0_25 = arith.constant 0 : index
    %c0_26 = arith.constant 0 : index
    %32 = vector.load %arg1[%c8, %c0_25, %c0_26] : memref<9x490x20xbf16, #tpu.memory_space<vmem>>, vector<1x490x20xbf16>
    %33 = vector.shape_cast %32 : vector<1x490x20xbf16> to vector<490x20xbf16>
    %cst_27 = arith.constant dense<0.000000e+00> : vector<200x20xf32>
    %34 = tpu.matmul %0, %33, %cst_27 {dimension_numbers = #tpu.dot_dimension_numbers<[1], [0], [0], [1], [0, 0, 1, 1], [], []>} : vector<200x490xbf16>, vector<490x20xbf16>, vector<200x20xf32> -> vector<200x20xf32>
    %35 = arith.maximumf %31, %34 : vector<200x20xf32>
    %c0_28 = arith.constant 0 : index
    %c0_29 = arith.constant 0 : index
    %36 = vector.load %arg2[%c0_28, %c0_29] : memref<1x20xf32, #tpu.memory_space<vmem>>, vector<1x20xf32>
    %37 = vector.broadcast %36 : vector<1x20xf32> to vector<200x20xf32>
    %38 = arith.addf %35, %37 : vector<200x20xf32>
    %cst_30 = arith.constant 0.000000e+00 : f32
    %39 = vector.broadcast %cst_30 : f32 to vector<200x20xf32>
    %40 = arith.maximumf %38, %39 : vector<200x20xf32>
    %cst_31 = arith.constant 0.000000e+00 : f32
    %41 = vector.broadcast %cst_31 : f32 to vector<8x100xf32>
    %42 = vector.extract_strided_slice %40 {offsets = [0, 0], sizes = [8, 20], strides = [1, 1]} : vector<200x20xf32> to vector<8x20xf32>
    %c0_32 = arith.constant 0 : index
    %c0_33 = arith.constant 0 : index
    %c0_34 = arith.constant 0 : index
    %43 = vector.load %arg3[%c0_32, %c0_33, %c0_34] : memref<25x20x100xf32, #tpu.memory_space<vmem>>, vector<1x20x100xf32>
    %44 = vector.shape_cast %43 : vector<1x20x100xf32> to vector<20x100xf32>
    %cst_35 = arith.constant dense<0.000000e+00> : vector<8x100xf32>
    %45 = tpu.matmul %42, %44, %cst_35 {dimension_numbers = #tpu.dot_dimension_numbers<[1], [0], [0], [1], [0, 0, 1, 1], [], []>} : vector<8x20xf32>, vector<20x100xf32>, vector<8x100xf32> -> vector<8x100xf32>
    %46 = arith.addf %41, %45 : vector<8x100xf32>
    %47 = vector.extract_strided_slice %40 {offsets = [8, 0], sizes = [8, 20], strides = [1, 1]} : vector<200x20xf32> to vector<8x20xf32>
    %c1_36 = arith.constant 1 : index
    %c0_37 = arith.constant 0 : index
    %c0_38 = arith.constant 0 : index
    %48 = vector.load %arg3[%c1_36, %c0_37, %c0_38] : memref<25x20x100xf32, #tpu.memory_space<vmem>>, vector<1x20x100xf32>
    %49 = vector.shape_cast %48 : vector<1x20x100xf32> to vector<20x100xf32>
    %cst_39 = arith.constant dense<0.000000e+00> : vector<8x100xf32>
    %50 = tpu.matmul %47, %49, %cst_39 {dimension_numbers = #tpu.dot_dimension_numbers<[1], [0], [0], [1], [0, 0, 1, 1], [], []>} : vector<8x20xf32>, vector<20x100xf32>, vector<8x100xf32> -> vector<8x100xf32>
    %51 = arith.addf %46, %50 : vector<8x100xf32>
    %52 = vector.extract_strided_slice %40 {offsets = [16, 0], sizes = [8, 20], strides = [1, 1]} : vector<200x20xf32> to vector<8x20xf32>
    %c2_40 = arith.constant 2 : index
    %c0_41 = arith.constant 0 : index
    %c0_42 = arith.constant 0 : index
    %53 = vector.load %arg3[%c2_40, %c0_41, %c0_42] : memref<25x20x100xf32, #tpu.memory_space<vmem>>, vector<1x20x100xf32>
    %54 = vector.shape_cast %53 : vector<1x20x100xf32> to vector<20x100xf32>
    %cst_43 = arith.constant dense<0.000000e+00> : vector<8x100xf32>
    %55 = tpu.matmul %52, %54, %cst_43 {dimension_numbers = #tpu.dot_dimension_numbers<[1], [0], [0], [1], [0, 0, 1, 1], [], []>} : vector<8x20xf32>, vector<20x100xf32>, vector<8x100xf32> -> vector<8x100xf32>
    %56 = arith.addf %51, %55 : vector<8x100xf32>
    %57 = vector.extract_strided_slice %40 {offsets = [24, 0], sizes = [8, 20], strides = [1, 1]} : vector<200x20xf32> to vector<8x20xf32>
    %c3_44 = arith.constant 3 : index
    %c0_45 = arith.constant 0 : index
    %c0_46 = arith.constant 0 : index
    %58 = vector.load %arg3[%c3_44, %c0_45, %c0_46] : memref<25x20x100xf32, #tpu.memory_space<vmem>>, vector<1x20x100xf32>
    %59 = vector.shape_cast %58 : vector<1x20x100xf32> to vector<20x100xf32>
    %cst_47 = arith.constant dense<0.000000e+00> : vector<8x100xf32>
    %60 = tpu.matmul %57, %59, %cst_47 {dimension_numbers = #tpu.dot_dimension_numbers<[1], [0], [0], [1], [0, 0, 1, 1], [], []>} : vector<8x20xf32>, vector<20x100xf32>, vector<8x100xf32> -> vector<8x100xf32>
    %61 = arith.addf %56, %60 : vector<8x100xf32>
    %62 = vector.extract_strided_slice %40 {offsets = [32, 0], sizes = [8, 20], strides = [1, 1]} : vector<200x20xf32> to vector<8x20xf32>
    %c4_48 = arith.constant 4 : index
    %c0_49 = arith.constant 0 : index
    %c0_50 = arith.constant 0 : index
    %63 = vector.load %arg3[%c4_48, %c0_49, %c0_50] : memref<25x20x100xf32, #tpu.memory_space<vmem>>, vector<1x20x100xf32>
    %64 = vector.shape_cast %63 : vector<1x20x100xf32> to vector<20x100xf32>
    %cst_51 = arith.constant dense<0.000000e+00> : vector<8x100xf32>
    %65 = tpu.matmul %62, %64, %cst_51 {dimension_numbers = #tpu.dot_dimension_numbers<[1], [0], [0], [1], [0, 0, 1, 1], [], []>} : vector<8x20xf32>, vector<20x100xf32>, vector<8x100xf32> -> vector<8x100xf32>
    %66 = arith.addf %61, %65 : vector<8x100xf32>
    %67 = vector.extract_strided_slice %40 {offsets = [40, 0], sizes = [8, 20], strides = [1, 1]} : vector<200x20xf32> to vector<8x20xf32>
    %c5_52 = arith.constant 5 : index
    %c0_53 = arith.constant 0 : index
    %c0_54 = arith.constant 0 : index
    %68 = vector.load %arg3[%c5_52, %c0_53, %c0_54] : memref<25x20x100xf32, #tpu.memory_space<vmem>>, vector<1x20x100xf32>
    %69 = vector.shape_cast %68 : vector<1x20x100xf32> to vector<20x100xf32>
    %cst_55 = arith.constant dense<0.000000e+00> : vector<8x100xf32>
    %70 = tpu.matmul %67, %69, %cst_55 {dimension_numbers = #tpu.dot_dimension_numbers<[1], [0], [0], [1], [0, 0, 1, 1], [], []>} : vector<8x20xf32>, vector<20x100xf32>, vector<8x100xf32> -> vector<8x100xf32>
    %71 = arith.addf %66, %70 : vector<8x100xf32>
    %72 = vector.extract_strided_slice %40 {offsets = [48, 0], sizes = [8, 20], strides = [1, 1]} : vector<200x20xf32> to vector<8x20xf32>
    %c6_56 = arith.constant 6 : index
    %c0_57 = arith.constant 0 : index
    %c0_58 = arith.constant 0 : index
    %73 = vector.load %arg3[%c6_56, %c0_57, %c0_58] : memref<25x20x100xf32, #tpu.memory_space<vmem>>, vector<1x20x100xf32>
    %74 = vector.shape_cast %73 : vector<1x20x100xf32> to vector<20x100xf32>
    %cst_59 = arith.constant dense<0.000000e+00> : vector<8x100xf32>
    %75 = tpu.matmul %72, %74, %cst_59 {dimension_numbers = #tpu.dot_dimension_numbers<[1], [0], [0], [1], [0, 0, 1, 1], [], []>} : vector<8x20xf32>, vector<20x100xf32>, vector<8x100xf32> -> vector<8x100xf32>
    %76 = arith.addf %71, %75 : vector<8x100xf32>
    %77 = vector.extract_strided_slice %40 {offsets = [56, 0], sizes = [8, 20], strides = [1, 1]} : vector<200x20xf32> to vector<8x20xf32>
    %c7_60 = arith.constant 7 : index
    %c0_61 = arith.constant 0 : index
    %c0_62 = arith.constant 0 : index
    %78 = vector.load %arg3[%c7_60, %c0_61, %c0_62] : memref<25x20x100xf32, #tpu.memory_space<vmem>>, vector<1x20x100xf32>
    %79 = vector.shape_cast %78 : vector<1x20x100xf32> to vector<20x100xf32>
    %cst_63 = arith.constant dense<0.000000e+00> : vector<8x100xf32>
    %80 = tpu.matmul %77, %79, %cst_63 {dimension_numbers = #tpu.dot_dimension_numbers<[1], [0], [0], [1], [0, 0, 1, 1], [], []>} : vector<8x20xf32>, vector<20x100xf32>, vector<8x100xf32> -> vector<8x100xf32>
    %81 = arith.addf %76, %80 : vector<8x100xf32>
    %82 = vector.extract_strided_slice %40 {offsets = [64, 0], sizes = [8, 20], strides = [1, 1]} : vector<200x20xf32> to vector<8x20xf32>
    %c8_64 = arith.constant 8 : index
    %c0_65 = arith.constant 0 : index
    %c0_66 = arith.constant 0 : index
    %83 = vector.load %arg3[%c8_64, %c0_65, %c0_66] : memref<25x20x100xf32, #tpu.memory_space<vmem>>, vector<1x20x100xf32>
    %84 = vector.shape_cast %83 : vector<1x20x100xf32> to vector<20x100xf32>
    %cst_67 = arith.constant dense<0.000000e+00> : vector<8x100xf32>
    %85 = tpu.matmul %82, %84, %cst_67 {dimension_numbers = #tpu.dot_dimension_numbers<[1], [0], [0], [1], [0, 0, 1, 1], [], []>} : vector<8x20xf32>, vector<20x100xf32>, vector<8x100xf32> -> vector<8x100xf32>
    %86 = arith.addf %81, %85 : vector<8x100xf32>
    %87 = vector.extract_strided_slice %40 {offsets = [72, 0], sizes = [8, 20], strides = [1, 1]} : vector<200x20xf32> to vector<8x20xf32>
    %c9 = arith.constant 9 : index
    %c0_68 = arith.constant 0 : index
    %c0_69 = arith.constant 0 : index
    %88 = vector.load %arg3[%c9, %c0_68, %c0_69] : memref<25x20x100xf32, #tpu.memory_space<vmem>>, vector<1x20x100xf32>
    %89 = vector.shape_cast %88 : vector<1x20x100xf32> to vector<20x100xf32>
    %cst_70 = arith.constant dense<0.000000e+00> : vector<8x100xf32>
    %90 = tpu.matmul %87, %89, %cst_70 {dimension_numbers = #tpu.dot_dimension_numbers<[1], [0], [0], [1], [0, 0, 1, 1], [], []>} : vector<8x20xf32>, vector<20x100xf32>, vector<8x100xf32> -> vector<8x100xf32>
    %91 = arith.addf %86, %90 : vector<8x100xf32>
    %92 = vector.extract_strided_slice %40 {offsets = [80, 0], sizes = [8, 20], strides = [1, 1]} : vector<200x20xf32> to vector<8x20xf32>
    %c10 = arith.constant 10 : index
    %c0_71 = arith.constant 0 : index
    %c0_72 = arith.constant 0 : index
    %93 = vector.load %arg3[%c10, %c0_71, %c0_72] : memref<25x20x100xf32, #tpu.memory_space<vmem>>, vector<1x20x100xf32>
    %94 = vector.shape_cast %93 : vector<1x20x100xf32> to vector<20x100xf32>
    %cst_73 = arith.constant dense<0.000000e+00> : vector<8x100xf32>
    %95 = tpu.matmul %92, %94, %cst_73 {dimension_numbers = #tpu.dot_dimension_numbers<[1], [0], [0], [1], [0, 0, 1, 1], [], []>} : vector<8x20xf32>, vector<20x100xf32>, vector<8x100xf32> -> vector<8x100xf32>
    %96 = arith.addf %91, %95 : vector<8x100xf32>
    %97 = vector.extract_strided_slice %40 {offsets = [88, 0], sizes = [8, 20], strides = [1, 1]} : vector<200x20xf32> to vector<8x20xf32>
    %c11 = arith.constant 11 : index
    %c0_74 = arith.constant 0 : index
    %c0_75 = arith.constant 0 : index
    %98 = vector.load %arg3[%c11, %c0_74, %c0_75] : memref<25x20x100xf32, #tpu.memory_space<vmem>>, vector<1x20x100xf32>
    %99 = vector.shape_cast %98 : vector<1x20x100xf32> to vector<20x100xf32>
    %cst_76 = arith.constant dense<0.000000e+00> : vector<8x100xf32>
    %100 = tpu.matmul %97, %99, %cst_76 {dimension_numbers = #tpu.dot_dimension_numbers<[1], [0], [0], [1], [0, 0, 1, 1], [], []>} : vector<8x20xf32>, vector<20x100xf32>, vector<8x100xf32> -> vector<8x100xf32>
    %101 = arith.addf %96, %100 : vector<8x100xf32>
    %102 = vector.extract_strided_slice %40 {offsets = [96, 0], sizes = [8, 20], strides = [1, 1]} : vector<200x20xf32> to vector<8x20xf32>
    %c12 = arith.constant 12 : index
    %c0_77 = arith.constant 0 : index
    %c0_78 = arith.constant 0 : index
    %103 = vector.load %arg3[%c12, %c0_77, %c0_78] : memref<25x20x100xf32, #tpu.memory_space<vmem>>, vector<1x20x100xf32>
    %104 = vector.shape_cast %103 : vector<1x20x100xf32> to vector<20x100xf32>
    %cst_79 = arith.constant dense<0.000000e+00> : vector<8x100xf32>
    %105 = tpu.matmul %102, %104, %cst_79 {dimension_numbers = #tpu.dot_dimension_numbers<[1], [0], [0], [1], [0, 0, 1, 1], [], []>} : vector<8x20xf32>, vector<20x100xf32>, vector<8x100xf32> -> vector<8x100xf32>
    %106 = arith.addf %101, %105 : vector<8x100xf32>
    %107 = vector.extract_strided_slice %40 {offsets = [104, 0], sizes = [8, 20], strides = [1, 1]} : vector<200x20xf32> to vector<8x20xf32>
    %c13 = arith.constant 13 : index
    %c0_80 = arith.constant 0 : index
    %c0_81 = arith.constant 0 : index
    %108 = vector.load %arg3[%c13, %c0_80, %c0_81] : memref<25x20x100xf32, #tpu.memory_space<vmem>>, vector<1x20x100xf32>
    %109 = vector.shape_cast %108 : vector<1x20x100xf32> to vector<20x100xf32>
    %cst_82 = arith.constant dense<0.000000e+00> : vector<8x100xf32>
    %110 = tpu.matmul %107, %109, %cst_82 {dimension_numbers = #tpu.dot_dimension_numbers<[1], [0], [0], [1], [0, 0, 1, 1], [], []>} : vector<8x20xf32>, vector<20x100xf32>, vector<8x100xf32> -> vector<8x100xf32>
    %111 = arith.addf %106, %110 : vector<8x100xf32>
    %112 = vector.extract_strided_slice %40 {offsets = [112, 0], sizes = [8, 20], strides = [1, 1]} : vector<200x20xf32> to vector<8x20xf32>
    %c14 = arith.constant 14 : index
    %c0_83 = arith.constant 0 : index
    %c0_84 = arith.constant 0 : index
    %113 = vector.load %arg3[%c14, %c0_83, %c0_84] : memref<25x20x100xf32, #tpu.memory_space<vmem>>, vector<1x20x100xf32>
    %114 = vector.shape_cast %113 : vector<1x20x100xf32> to vector<20x100xf32>
    %cst_85 = arith.constant dense<0.000000e+00> : vector<8x100xf32>
    %115 = tpu.matmul %112, %114, %cst_85 {dimension_numbers = #tpu.dot_dimension_numbers<[1], [0], [0], [1], [0, 0, 1, 1], [], []>} : vector<8x20xf32>, vector<20x100xf32>, vector<8x100xf32> -> vector<8x100xf32>
    %116 = arith.addf %111, %115 : vector<8x100xf32>
    %117 = vector.extract_strided_slice %40 {offsets = [120, 0], sizes = [8, 20], strides = [1, 1]} : vector<200x20xf32> to vector<8x20xf32>
    %c15 = arith.constant 15 : index
    %c0_86 = arith.constant 0 : index
    %c0_87 = arith.constant 0 : index
    %118 = vector.load %arg3[%c15, %c0_86, %c0_87] : memref<25x20x100xf32, #tpu.memory_space<vmem>>, vector<1x20x100xf32>
    %119 = vector.shape_cast %118 : vector<1x20x100xf32> to vector<20x100xf32>
    %cst_88 = arith.constant dense<0.000000e+00> : vector<8x100xf32>
    %120 = tpu.matmul %117, %119, %cst_88 {dimension_numbers = #tpu.dot_dimension_numbers<[1], [0], [0], [1], [0, 0, 1, 1], [], []>} : vector<8x20xf32>, vector<20x100xf32>, vector<8x100xf32> -> vector<8x100xf32>
    %121 = arith.addf %116, %120 : vector<8x100xf32>
    %122 = vector.extract_strided_slice %40 {offsets = [128, 0], sizes = [8, 20], strides = [1, 1]} : vector<200x20xf32> to vector<8x20xf32>
    %c16 = arith.constant 16 : index
    %c0_89 = arith.constant 0 : index
    %c0_90 = arith.constant 0 : index
    %123 = vector.load %arg3[%c16, %c0_89, %c0_90] : memref<25x20x100xf32, #tpu.memory_space<vmem>>, vector<1x20x100xf32>
    %124 = vector.shape_cast %123 : vector<1x20x100xf32> to vector<20x100xf32>
    %cst_91 = arith.constant dense<0.000000e+00> : vector<8x100xf32>
    %125 = tpu.matmul %122, %124, %cst_91 {dimension_numbers = #tpu.dot_dimension_numbers<[1], [0], [0], [1], [0, 0, 1, 1], [], []>} : vector<8x20xf32>, vector<20x100xf32>, vector<8x100xf32> -> vector<8x100xf32>
    %126 = arith.addf %121, %125 : vector<8x100xf32>
    %127 = vector.extract_strided_slice %40 {offsets = [136, 0], sizes = [8, 20], strides = [1, 1]} : vector<200x20xf32> to vector<8x20xf32>
    %c17 = arith.constant 17 : index
    %c0_92 = arith.constant 0 : index
    %c0_93 = arith.constant 0 : index
    %128 = vector.load %arg3[%c17, %c0_92, %c0_93] : memref<25x20x100xf32, #tpu.memory_space<vmem>>, vector<1x20x100xf32>
    %129 = vector.shape_cast %128 : vector<1x20x100xf32> to vector<20x100xf32>
    %cst_94 = arith.constant dense<0.000000e+00> : vector<8x100xf32>
    %130 = tpu.matmul %127, %129, %cst_94 {dimension_numbers = #tpu.dot_dimension_numbers<[1], [0], [0], [1], [0, 0, 1, 1], [], []>} : vector<8x20xf32>, vector<20x100xf32>, vector<8x100xf32> -> vector<8x100xf32>
    %131 = arith.addf %126, %130 : vector<8x100xf32>
    %132 = vector.extract_strided_slice %40 {offsets = [144, 0], sizes = [8, 20], strides = [1, 1]} : vector<200x20xf32> to vector<8x20xf32>
    %c18 = arith.constant 18 : index
    %c0_95 = arith.constant 0 : index
    %c0_96 = arith.constant 0 : index
    %133 = vector.load %arg3[%c18, %c0_95, %c0_96] : memref<25x20x100xf32, #tpu.memory_space<vmem>>, vector<1x20x100xf32>
    %134 = vector.shape_cast %133 : vector<1x20x100xf32> to vector<20x100xf32>
    %cst_97 = arith.constant dense<0.000000e+00> : vector<8x100xf32>
    %135 = tpu.matmul %132, %134, %cst_97 {dimension_numbers = #tpu.dot_dimension_numbers<[1], [0], [0], [1], [0, 0, 1, 1], [], []>} : vector<8x20xf32>, vector<20x100xf32>, vector<8x100xf32> -> vector<8x100xf32>
    %136 = arith.addf %131, %135 : vector<8x100xf32>
    %137 = vector.extract_strided_slice %40 {offsets = [152, 0], sizes = [8, 20], strides = [1, 1]} : vector<200x20xf32> to vector<8x20xf32>
    %c19 = arith.constant 19 : index
    %c0_98 = arith.constant 0 : index
    %c0_99 = arith.constant 0 : index
    %138 = vector.load %arg3[%c19, %c0_98, %c0_99] : memref<25x20x100xf32, #tpu.memory_space<vmem>>, vector<1x20x100xf32>
    %139 = vector.shape_cast %138 : vector<1x20x100xf32> to vector<20x100xf32>
    %cst_100 = arith.constant dense<0.000000e+00> : vector<8x100xf32>
    %140 = tpu.matmul %137, %139, %cst_100 {dimension_numbers = #tpu.dot_dimension_numbers<[1], [0], [0], [1], [0, 0, 1, 1], [], []>} : vector<8x20xf32>, vector<20x100xf32>, vector<8x100xf32> -> vector<8x100xf32>
    %141 = arith.addf %136, %140 : vector<8x100xf32>
    %142 = vector.extract_strided_slice %40 {offsets = [160, 0], sizes = [8, 20], strides = [1, 1]} : vector<200x20xf32> to vector<8x20xf32>
    %c20 = arith.constant 20 : index
    %c0_101 = arith.constant 0 : index
    %c0_102 = arith.constant 0 : index
    %143 = vector.load %arg3[%c20, %c0_101, %c0_102] : memref<25x20x100xf32, #tpu.memory_space<vmem>>, vector<1x20x100xf32>
    %144 = vector.shape_cast %143 : vector<1x20x100xf32> to vector<20x100xf32>
    %cst_103 = arith.constant dense<0.000000e+00> : vector<8x100xf32>
    %145 = tpu.matmul %142, %144, %cst_103 {dimension_numbers = #tpu.dot_dimension_numbers<[1], [0], [0], [1], [0, 0, 1, 1], [], []>} : vector<8x20xf32>, vector<20x100xf32>, vector<8x100xf32> -> vector<8x100xf32>
    %146 = arith.addf %141, %145 : vector<8x100xf32>
    %147 = vector.extract_strided_slice %40 {offsets = [168, 0], sizes = [8, 20], strides = [1, 1]} : vector<200x20xf32> to vector<8x20xf32>
    %c21 = arith.constant 21 : index
    %c0_104 = arith.constant 0 : index
    %c0_105 = arith.constant 0 : index
    %148 = vector.load %arg3[%c21, %c0_104, %c0_105] : memref<25x20x100xf32, #tpu.memory_space<vmem>>, vector<1x20x100xf32>
    %149 = vector.shape_cast %148 : vector<1x20x100xf32> to vector<20x100xf32>
    %cst_106 = arith.constant dense<0.000000e+00> : vector<8x100xf32>
    %150 = tpu.matmul %147, %149, %cst_106 {dimension_numbers = #tpu.dot_dimension_numbers<[1], [0], [0], [1], [0, 0, 1, 1], [], []>} : vector<8x20xf32>, vector<20x100xf32>, vector<8x100xf32> -> vector<8x100xf32>
    %151 = arith.addf %146, %150 : vector<8x100xf32>
    %152 = vector.extract_strided_slice %40 {offsets = [176, 0], sizes = [8, 20], strides = [1, 1]} : vector<200x20xf32> to vector<8x20xf32>
    %c22 = arith.constant 22 : index
    %c0_107 = arith.constant 0 : index
    %c0_108 = arith.constant 0 : index
    %153 = vector.load %arg3[%c22, %c0_107, %c0_108] : memref<25x20x100xf32, #tpu.memory_space<vmem>>, vector<1x20x100xf32>
    %154 = vector.shape_cast %153 : vector<1x20x100xf32> to vector<20x100xf32>
    %cst_109 = arith.constant dense<0.000000e+00> : vector<8x100xf32>
    %155 = tpu.matmul %152, %154, %cst_109 {dimension_numbers = #tpu.dot_dimension_numbers<[1], [0], [0], [1], [0, 0, 1, 1], [], []>} : vector<8x20xf32>, vector<20x100xf32>, vector<8x100xf32> -> vector<8x100xf32>
    %156 = arith.addf %151, %155 : vector<8x100xf32>
    %157 = vector.extract_strided_slice %40 {offsets = [184, 0], sizes = [8, 20], strides = [1, 1]} : vector<200x20xf32> to vector<8x20xf32>
    %c23 = arith.constant 23 : index
    %c0_110 = arith.constant 0 : index
    %c0_111 = arith.constant 0 : index
    %158 = vector.load %arg3[%c23, %c0_110, %c0_111] : memref<25x20x100xf32, #tpu.memory_space<vmem>>, vector<1x20x100xf32>
    %159 = vector.shape_cast %158 : vector<1x20x100xf32> to vector<20x100xf32>
    %cst_112 = arith.constant dense<0.000000e+00> : vector<8x100xf32>
    %160 = tpu.matmul %157, %159, %cst_112 {dimension_numbers = #tpu.dot_dimension_numbers<[1], [0], [0], [1], [0, 0, 1, 1], [], []>} : vector<8x20xf32>, vector<20x100xf32>, vector<8x100xf32> -> vector<8x100xf32>
    %161 = arith.addf %156, %160 : vector<8x100xf32>
    %162 = vector.extract_strided_slice %40 {offsets = [192, 0], sizes = [8, 20], strides = [1, 1]} : vector<200x20xf32> to vector<8x20xf32>
    %c24 = arith.constant 24 : index
    %c0_113 = arith.constant 0 : index
    %c0_114 = arith.constant 0 : index
    %163 = vector.load %arg3[%c24, %c0_113, %c0_114] : memref<25x20x100xf32, #tpu.memory_space<vmem>>, vector<1x20x100xf32>
    %164 = vector.shape_cast %163 : vector<1x20x100xf32> to vector<20x100xf32>
    %cst_115 = arith.constant dense<0.000000e+00> : vector<8x100xf32>
    %165 = tpu.matmul %162, %164, %cst_115 {dimension_numbers = #tpu.dot_dimension_numbers<[1], [0], [0], [1], [0, 0, 1, 1], [], []>} : vector<8x20xf32>, vector<20x100xf32>, vector<8x100xf32> -> vector<8x100xf32>
    %166 = arith.addf %161, %165 : vector<8x100xf32>
    %c0_116 = arith.constant 0 : index
    %c0_117 = arith.constant 0 : index
    %167 = vector.load %arg4[%c0_116, %c0_117] : memref<1x100xf32, #tpu.memory_space<vmem>>, vector<1x100xf32>
    %168 = vector.broadcast %167 : vector<1x100xf32> to vector<8x100xf32>
    %169 = arith.addf %166, %168 : vector<8x100xf32>
    %c0_118 = arith.constant 0 : index
    %c0_119 = arith.constant 0 : index
    %170 = vector.load %arg5[%c0_118, %c0_119] : memref<100x15xf32, #tpu.memory_space<vmem>>, vector<100x15xf32>
    %cst_120 = arith.constant dense<0.000000e+00> : vector<8x15xf32>
    %171 = tpu.matmul %169, %170, %cst_120 {dimension_numbers = #tpu.dot_dimension_numbers<[1], [0], [0], [1], [0, 0, 1, 1], [], []>} : vector<8x100xf32>, vector<100x15xf32>, vector<8x15xf32> -> vector<8x15xf32>
    %c0_121 = arith.constant 0 : index
    %c0_122 = arith.constant 0 : index
    %172 = vector.load %arg6[%c0_121, %c0_122] : memref<1x15xf32, #tpu.memory_space<vmem>>, vector<1x15xf32>
    %173 = vector.broadcast %172 : vector<1x15xf32> to vector<8x15xf32>
    %174 = arith.addf %171, %173 : vector<8x15xf32>
    %175 = vector.extract_strided_slice %174 {offsets = [0, 0], sizes = [2, 15], strides = [1, 1]} : vector<8x15xf32> to vector<2x15xf32>
    %c0_123 = arith.constant 0 : index
    %c0_124 = arith.constant 0 : index
    %176 = vector.load %arg7[%c0_123, %c0_124] : memref<2x15xf32, #tpu.memory_space<vmem>>, vector<2x15xf32>
    tpu.vector_store %arg7[%c0_123, %c0_124], %175 {strides = array<i32>} : memref<2x15xf32, #tpu.memory_space<vmem>>, vector<2x15xf32>,
    return
  }
}

</mosaic_0001>

<llo_original>
// kernel: simple_net_dropout_forward.2
$region0: #{simple_net_dropout_forward.2}
  #allocation0 [shape = 'u32[]', space=smem, size = 0x4, offset = 0x4, fixed_abs, tag = 'smem constant byte address 0x4 - core index']
  #allocation1 [shape = 'u32[72,128]{1,0:T(1,128)}', space=vmem, size = 0x9000, scoped, tag = 'internal scratch']
  %s0 = inlined_call_operand.vmem [shape: bf16[800,49], index: 0, kind: input, shape index: {}]
  %s1 = inlined_call_operand.vmem [shape: bf16[9,49,10], index: 1, kind: input, shape index: {}]
  %s2 = inlined_call_operand.vmem [shape: f32[1,10], index: 2, kind: input, shape index: {}]
  %s3 = inlined_call_operand.vmem [shape: bf16[800,10], index: 3, kind: output, shape index: {}]
  %s4 = sld [smem:[#allocation0]]
  $region22: #{simple_net_dropout_forward.2} parent=0
    _
  %s6 = ssub.s32 1, %s4
  %s7 = scalar_select 0, %s6, %s4
  // Predicated region
  $region2: #{simple_net_dropout_forward.2} parent=0 // pred_check
    _
  $region3: #{simple_net_dropout_forward.2} parent=0 // pred_check_branch
    %9 = sbr.rel (0) target = $region5
  $region4: #{simple_net_dropout_forward.2} parent=0 // pred_region
    _
  $region5: #{simple_net_dropout_forward.2} parent=0 // pred_fallthru
    _
  // Predicated region
  $region6: #{simple_net_dropout_forward.2} parent=0 // pred_check
    _
  $region7: #{simple_net_dropout_forward.2} parent=0 // pred_check_branch
    %11 = sbr.rel (0) target = $region9
  $region8: #{simple_net_dropout_forward.2} parent=0 // pred_region
    _
  $region9: #{simple_net_dropout_forward.2} parent=0 // pred_fallthru
    _
  // Predicated region
  $region10: #{simple_net_dropout_forward.2} parent=0 // pred_check
    _
  $region11: #{simple_net_dropout_forward.2} parent=0 // pred_check_branch
    %13 = sbr.rel (0) target = $region13
  $region12: #{simple_net_dropout_forward.2} parent=0 // pred_region
    _
  $region13: #{simple_net_dropout_forward.2} parent=0 // pred_fallthru
    _
  %v15 = vld [vmem:[%s0] sm:$0xf]
  %v16 = vld [vmem:[%s0 + $0x4] sm:$0xf]
  %v17 = vld [vmem:[%s0 + $0x8] sm:$0xf]
  %v18 = vld [vmem:[%s0 + $0xc] sm:$0xf]
  %v19 = vld [vmem:[%s0 + $0x10] sm:$0xf]
  %v20 = vld [vmem:[%s0 + $0x14] sm:$0xf]
  %v21 = vld [vmem:[%s0 + $0x18] sm:$0xf]
  %v22 = vld [vmem:[%s0 + $0x1c] sm:$0xf]
  %v23 = vld [vmem:[%s0 + $0x20] sm:$0xf]
  %v24 = vld [vmem:[%s0 + $0x24] sm:$0xf]
  %v25 = vld [vmem:[%s0 + $0x28] sm:$0xf]
  %v26 = vld [vmem:[%s0 + $0x2c] sm:$0xf]
  %v27 = vld [vmem:[%s0 + $0x30] sm:$0xf]
  %v28 = vld [vmem:[%s0 + $0x34] sm:$0xf]
  %v29 = vld [vmem:[%s0 + $0x38] sm:$0xf]
  %v30 = vld [vmem:[%s0 + $0x3c] sm:$0xf]
  %v31 = vld [vmem:[%s0 + $0x40] sm:$0xf]
  %v32 = vld [vmem:[%s0 + $0x44] sm:$0xf]
  %v33 = vld [vmem:[%s0 + $0x48] sm:$0xf]
  %v34 = vld [vmem:[%s0 + $0x4c] sm:$0xf]
  %v35 = vld [vmem:[%s0 + $0x50] sm:$0xf]
  %v36 = vld [vmem:[%s0 + $0x54] sm:$0xf]
  %v37 = vld [vmem:[%s0 + $0x58] sm:$0xf]
  %v38 = vld [vmem:[%s0 + $0x5c] sm:$0xf]
  %v39 = vld [vmem:[%s0 + $0x60] sm:$0xf]
  %v40 = vld [vmem:[%s0 + $0x64] sm:$0xf]
  %v41 = vld [vmem:[%s0 + $0x68] sm:$0xf]
  %v42 = vld [vmem:[%s0 + $0x6c] sm:$0xf]
  %v43 = vld [vmem:[%s0 + $0x70] sm:$0xf]
  %v44 = vld [vmem:[%s0 + $0x74] sm:$0xf]
  %v45 = vld [vmem:[%s0 + $0x78] sm:$0xf]
  %v46 = vld [vmem:[%s0 + $0x7c] sm:$0xf]
  %v47 = vld [vmem:[%s0 + $0x80] sm:$0xf]
  %v48 = vld [vmem:[%s0 + $0x84] sm:$0xf]
  %v49 = vld [vmem:[%s0 + $0x88] sm:$0xf]
  %v50 = vld [vmem:[%s0 + $0x8c] sm:$0xf]
  %v51 = vld [vmem:[%s0 + $0x90] sm:$0xf]
  %v52 = vld [vmem:[%s0 + $0x94] sm:$0xf]
  %v53 = vld [vmem:[%s0 + $0x98] sm:$0xf]
  %v54 = vld [vmem:[%s0 + $0x9c] sm:$0xf]
  %v55 = vld [vmem:[%s0 + $0xa0] sm:$0xf]
  %v56 = vld [vmem:[%s0 + $0xa4] sm:$0xf]
  %v57 = vld [vmem:[%s0 + $0xa8] sm:$0xf]
  %v58 = vld [vmem:[%s0 + $0xac] sm:$0xf]
  %v59 = vld [vmem:[%s0 + $0xb0] sm:$0xf]
  %v60 = vld [vmem:[%s0 + $0xb4] sm:$0xf]
  %v61 = vld [vmem:[%s0 + $0xb8] sm:$0xf]
  %v62 = vld [vmem:[%s0 + $0xbc] sm:$0xf]
  %v63 = vld [vmem:[%s0 + $0xc0] sm:$0xf]
  %v64 = vld [vmem:[%s0 + $0xc4] sm:$0xf]
  %v65 = vld [vmem:[%s0 + $0xc8] sm:$0xf]
  %v66 = vld [vmem:[%s0 + $0xcc] sm:$0xf]
  %v67 = vld [vmem:[%s0 + $0xd0] sm:$0xf]
  %v68 = vld [vmem:[%s0 + $0xd4] sm:$0xf]
  %v69 = vld [vmem:[%s0 + $0xd8] sm:$0xf]
  %v70 = vld [vmem:[%s0 + $0xdc] sm:$0xf]
  %v71 = vld [vmem:[%s0 + $0xe0] sm:$0xf]
  %v72 = vld [vmem:[%s0 + $0xe4] sm:$0xf]
  %v73 = vld [vmem:[%s0 + $0xe8] sm:$0xf]
  %v74 = vld [vmem:[%s0 + $0xec] sm:$0xf]
  %v75 = vld [vmem:[%s0 + $0xf0] sm:$0xf]
  %v76 = vld [vmem:[%s0 + $0xf4] sm:$0xf]
  %v77 = vld [vmem:[%s0 + $0xf8] sm:$0xf]
  %v78 = vld [vmem:[%s0 + $0xfc] sm:$0xf]
  %v79 = vld [vmem:[%s0 + $0x100] sm:$0xf]
  %v80 = vld [vmem:[%s0 + $0x104] sm:$0xf]
  %v81 = vld [vmem:[%s0 + $0x108] sm:$0xf]
  %v82 = vld [vmem:[%s0 + $0x10c] sm:$0xf]
  %v83 = vld [vmem:[%s0 + $0x110] sm:$0xf]
  %v84 = vld [vmem:[%s0 + $0x114] sm:$0xf]
  %v85 = vld [vmem:[%s0 + $0x118] sm:$0xf]
  %v86 = vld [vmem:[%s0 + $0x11c] sm:$0xf]
  %v87 = vld [vmem:[%s0 + $0x120] sm:$0xf]
  %v88 = vld [vmem:[%s0 + $0x124] sm:$0xf]
  %v89 = vld [vmem:[%s0 + $0x128] sm:$0xf]
  %v90 = vld [vmem:[%s0 + $0x12c] sm:$0xf]
  %v91 = vld [vmem:[%s0 + $0x130] sm:$0xf]
  %v92 = vld [vmem:[%s0 + $0x134] sm:$0xf]
  %v93 = vld [vmem:[%s0 + $0x138] sm:$0xf]
  %v94 = vld [vmem:[%s0 + $0x13c] sm:$0xf]
  %v95 = vld [vmem:[%s0 + $0x140] sm:$0xf]
  %v96 = vld [vmem:[%s0 + $0x144] sm:$0xf]
  %v97 = vld [vmem:[%s0 + $0x148] sm:$0xf]
  %v98 = vld [vmem:[%s0 + $0x14c] sm:$0xf]
  %v99 = vld [vmem:[%s0 + $0x150] sm:$0xf]
  %v100 = vld [vmem:[%s0 + $0x154] sm:$0xf]
  %v101 = vld [vmem:[%s0 + $0x158] sm:$0xf]
  %v102 = vld [vmem:[%s0 + $0x15c] sm:$0xf]
  %v103 = vld [vmem:[%s0 + $0x160] sm:$0xf]
  %v104 = vld [vmem:[%s0 + $0x164] sm:$0xf]
  %v105 = vld [vmem:[%s0 + $0x168] sm:$0xf]
  %v106 = vld [vmem:[%s0 + $0x16c] sm:$0xf]
  %v107 = vld [vmem:[%s0 + $0x170] sm:$0xf]
  %v108 = vld [vmem:[%s0 + $0x174] sm:$0xf]
  %v109 = vld [vmem:[%s0 + $0x178] sm:$0xf]
  %v110 = vld [vmem:[%s0 + $0x17c] sm:$0xf]
  %v111 = vld [vmem:[%s0 + $0x180] sm:$0xf]
  %v112 = vld [vmem:[%s0 + $0x184] sm:$0xf]
  %v113 = vld [vmem:[%s0 + $0x188] sm:$0xf]
  %v114 = vld [vmem:[%s0 + $0x18c] sm:$0xf]
  %v115 = vld [vmem:[%s1] sm:$0xf]
  %v116 = vld [vmem:[%s1 + $0x4] sm:$0xf]
  %v117 = vld [vmem:[%s1 + $0x8] sm:$0xf]
  %v118 = vld [vmem:[%s1 + $0xc] sm:$0xf]
  %v119 = vld [vmem:[%s1 + $0x10] sm:$0xf]
  %v120 = vld [vmem:[%s1 + $0x14] sm:$0xf]
  %v121 = vld [vmem:[%s1 + $0x18] sm:$0x1]
  %v222 = vunpack.c.l.b16 %v15
  %v223 = vunpack.c.l.b16 %v16
  %v224 = vunpack.c.l.b16 %v17
  %v225 = vunpack.c.l.b16 %v18
  %v226 = vunpack.c.l.b16 %v19
  %v227 = vunpack.c.l.b16 %v20
  %v228 = vunpack.c.l.b16 %v21
  %v229 = vunpack.c.l.b16 %v22
  %v230 = vunpack.c.l.b16 %v23
  %v231 = vunpack.c.l.b16 %v24
  %v232 = vunpack.c.l.b16 %v25
  %v233 = vunpack.c.l.b16 %v26
  %v234 = vunpack.c.l.b16 %v27
  %v235 = vunpack.c.l.b16 %v28
  %v236 = vunpack.c.l.b16 %v29
  %v237 = vunpack.c.l.b16 %v30
  %v238 = vunpack.c.l.b16 %v31
  %v239 = vunpack.c.l.b16 %v32
  %v240 = vunpack.c.l.b16 %v33
  %v241 = vunpack.c.l.b16 %v34
  %v242 = vunpack.c.l.b16 %v35
  %v243 = vunpack.c.l.b16 %v36
  %v244 = vunpack.c.l.b16 %v37
  %v245 = vunpack.c.l.b16 %v38
  %v246 = vunpack.c.l.b16 %v39
  %v247 = vunpack.c.l.b16 %v40
  %v248 = vunpack.c.l.b16 %v41
  %v249 = vunpack.c.l.b16 %v42
  %v250 = vunpack.c.l.b16 %v43
  %v251 = vunpack.c.l.b16 %v44
  %v252 = vunpack.c.l.b16 %v45
  %v253 = vunpack.c.l.b16 %v46
  %v254 = vunpack.c.l.b16 %v47
  %v255 = vunpack.c.l.b16 %v48
  %v256 = vunpack.c.l.b16 %v49
  %v257 = vunpack.c.l.b16 %v50
  %v258 = vunpack.c.l.b16 %v51
  %v259 = vunpack.c.l.b16 %v52
  %v260 = vunpack.c.l.b16 %v53
  %v261 = vunpack.c.l.b16 %v54
  %v262 = vunpack.c.l.b16 %v55
  %v263 = vunpack.c.l.b16 %v56
  %v264 = vunpack.c.l.b16 %v57
  %v265 = vunpack.c.l.b16 %v58
  %v266 = vunpack.c.l.b16 %v59
  %v267 = vunpack.c.l.b16 %v60
  %v268 = vunpack.c.l.b16 %v61
  %v269 = vunpack.c.l.b16 %v62
  %v270 = vunpack.c.l.b16 %v63
  %v271 = vunpack.c.l.b16 %v64
  %v272 = vunpack.c.l.b16 %v65
  %v273 = vunpack.c.l.b16 %v66
  %v274 = vunpack.c.l.b16 %v67
  %v275 = vunpack.c.l.b16 %v68
  %v276 = vunpack.c.l.b16 %v69
  %v277 = vunpack.c.l.b16 %v70
  %v278 = vunpack.c.l.b16 %v71
  %v279 = vunpack.c.l.b16 %v72
  %v280 = vunpack.c.l.b16 %v73
  %v281 = vunpack.c.l.b16 %v74
  %v282 = vunpack.c.l.b16 %v75
  %v283 = vunpack.c.l.b16 %v76
  %v284 = vunpack.c.l.b16 %v77
  %v285 = vunpack.c.l.b16 %v78
  %v286 = vunpack.c.l.b16 %v79
  %v287 = vunpack.c.l.b16 %v80
  %v288 = vunpack.c.l.b16 %v81
  %v289 = vunpack.c.l.b16 %v82
  %v290 = vunpack.c.l.b16 %v83
  %v291 = vunpack.c.l.b16 %v84
  %v292 = vunpack.c.l.b16 %v85
  %v293 = vunpack.c.l.b16 %v86
  %v294 = vunpack.c.l.b16 %v87
  %v295 = vunpack.c.l.b16 %v88
  %v296 = vunpack.c.l.b16 %v89
  %v297 = vunpack.c.l.b16 %v90
  %v298 = vunpack.c.l.b16 %v91
  %v299 = vunpack.c.l.b16 %v92
  %v300 = vunpack.c.l.b16 %v93
  %v301 = vunpack.c.l.b16 %v94
  %v302 = vunpack.c.l.b16 %v95
  %v303 = vunpack.c.l.b16 %v96
  %v304 = vunpack.c.l.b16 %v97
  %v305 = vunpack.c.l.b16 %v98
  %v306 = vunpack.c.l.b16 %v99
  %v307 = vunpack.c.l.b16 %v100
  %v308 = vunpack.c.l.b16 %v101
  %v309 = vunpack.c.l.b16 %v102
  %v310 = vunpack.c.l.b16 %v103
  %v311 = vunpack.c.l.b16 %v104
  %v312 = vunpack.c.l.b16 %v105
  %v313 = vunpack.c.l.b16 %v106
  %v314 = vunpack.c.l.b16 %v107
  %v315 = vunpack.c.l.b16 %v108
  %v316 = vunpack.c.l.b16 %v109
  %v317 = vunpack.c.l.b16 %v110
  %v318 = vunpack.c.l.b16 %v111
  %v319 = vunpack.c.l.b16 %v112
  %v320 = vunpack.c.l.b16 %v113
  %v321 = vunpack.c.l.b16 %v114
  %v322 = vpack.c.b16 %v223, %v222
  %v323 = vpack.c.b16 %v225, %v224
  %v324 = vpack.c.b16 %v227, %v226
  %v325 = vpack.c.b16 %v229, %v228
  %v326 = vpack.c.b16 %v231, %v230
  %v327 = vpack.c.b16 %v233, %v232
  %v328 = vpack.c.b16 %v235, %v234
  %v329 = vpack.c.b16 %v237, %v236
  %v330 = vpack.c.b16 %v239, %v238
  %v331 = vpack.c.b16 %v241, %v240
  %v332 = vpack.c.b16 %v243, %v242
  %v333 = vpack.c.b16 %v245, %v244
  %v334 = vpack.c.b16 %v247, %v246
  %v335 = vpack.c.b16 %v249, %v248
  %v336 = vpack.c.b16 %v251, %v250
  %v337 = vpack.c.b16 %v253, %v252
  %v338 = vpack.c.b16 %v255, %v254
  %v339 = vpack.c.b16 %v257, %v256
  %v340 = vpack.c.b16 %v259, %v258
  %v341 = vpack.c.b16 %v261, %v260
  %v342 = vpack.c.b16 %v263, %v262
  %v343 = vpack.c.b16 %v265, %v264
  %v344 = vpack.c.b16 %v267, %v266
  %v345 = vpack.c.b16 %v269, %v268
  %v346 = vpack.c.b16 %v271, %v270
  %v347 = vpack.c.b16 %v273, %v272
  %v348 = vpack.c.b16 %v275, %v274
  %v349 = vpack.c.b16 %v277, %v276
  %v350 = vpack.c.b16 %v279, %v278
  %v351 = vpack.c.b16 %v281, %v280
  %v352 = vpack.c.b16 %v283, %v282
  %v353 = vpack.c.b16 %v285, %v284
  %v354 = vpack.c.b16 %v287, %v286
  %v355 = vpack.c.b16 %v289, %v288
  %v356 = vpack.c.b16 %v291, %v290
  %v357 = vpack.c.b16 %v293, %v292
  %v358 = vpack.c.b16 %v295, %v294
  %v359 = vpack.c.b16 %v297, %v296
  %v360 = vpack.c.b16 %v299, %v298
  %v361 = vpack.c.b16 %v301, %v300
  %v362 = vpack.c.b16 %v303, %v302
  %v363 = vpack.c.b16 %v305, %v304
  %v364 = vpack.c.b16 %v307, %v306
  %v365 = vpack.c.b16 %v309, %v308
  %v366 = vpack.c.b16 %v311, %v310
  %v367 = vpack.c.b16 %v313, %v312
  %v368 = vpack.c.b16 %v315, %v314
  %v369 = vpack.c.b16 %v317, %v316
  %v370 = vpack.c.b16 %v319, %v318
  %v371 = vpack.c.b16 %v321, %v320
  %v379 = vunpack.c.l.b16 %v115
  %v380 = vunpack.c.l.b16 %v116
  %v381 = vunpack.c.l.b16 %v117
  %v382 = vunpack.c.l.b16 %v118
  %v383 = vunpack.c.l.b16 %v119
  %v384 = vunpack.c.l.b16 %v120
  %v385 = vunpack.c.l.b16 %v121
  %v386 = vpack.c.b16 %v380, %v379
  %v387 = vpack.c.b16 %v382, %v381
  %v388 = vpack.c.b16 %v384, %v383
  %v389 = vpack.c.b16 %v385, %v385
  %vm393 = vcmask 400384
  %v395 = vsel %vm393, %v322, 0
  %v398 = vsel %vm393, %v323, 0
  %v401 = vsel %vm393, %v324, 0
  %v404 = vsel %vm393, %v325, 0
  %v407 = vsel %vm393, %v326, 0
  %v410 = vsel %vm393, %v327, 0
  %v413 = vsel %vm393, %v328, 0
  %v416 = vsel %vm393, %v329, 0
  %v419 = vsel %vm393, %v330, 0
  %v422 = vsel %vm393, %v331, 0
  %v425 = vsel %vm393, %v332, 0
  %v428 = vsel %vm393, %v333, 0
  %v431 = vsel %vm393, %v334, 0
  %v434 = vsel %vm393, %v335, 0
  %v437 = vsel %vm393, %v336, 0
  %v440 = vsel %vm393, %v337, 0
  %v443 = vsel %vm393, %v338, 0
  %v446 = vsel %vm393, %v339, 0
  %v449 = vsel %vm393, %v340, 0
  %v452 = vsel %vm393, %v341, 0
  %v455 = vsel %vm393, %v342, 0
  %v458 = vsel %vm393, %v343, 0
  %v461 = vsel %vm393, %v344, 0
  %v464 = vsel %vm393, %v345, 0
  %v467 = vsel %vm393, %v346, 0
  %v470 = vsel %vm393, %v347, 0
  %v473 = vsel %vm393, %v348, 0
  %v476 = vsel %vm393, %v349, 0
  %v479 = vsel %vm393, %v350, 0
  %v482 = vsel %vm393, %v351, 0
  %v485 = vsel %vm393, %v352, 0
  %v488 = vsel %vm393, %v353, 0
  %v491 = vsel %vm393, %v354, 0
  %v494 = vsel %vm393, %v355, 0
  %v497 = vsel %vm393, %v356, 0
  %v500 = vsel %vm393, %v357, 0
  %v503 = vsel %vm393, %v358, 0
  %v506 = vsel %vm393, %v359, 0
  %v509 = vsel %vm393, %v360, 0
  %v512 = vsel %vm393, %v361, 0
  %v515 = vsel %vm393, %v362, 0
  %v518 = vsel %vm393, %v363, 0
  %v521 = vsel %vm393, %v364, 0
  %v524 = vsel %vm393, %v365, 0
  %v527 = vsel %vm393, %v366, 0
  %v530 = vsel %vm393, %v367, 0
  %v533 = vsel %vm393, %v368, 0
  %v536 = vsel %vm393, %v369, 0
  %v539 = vsel %vm393, %v370, 0
  %v542 = vsel %vm393, %v371, 0
  %vm544 = vcmask 1040384
  %v545 = vsel 0, 4294967295, 65535
  %v546 = vsel %vm544, %v545, 0
  %v548 = vand.u32 %v389, %v546
  %550 = vmatpush.bf16.msra.mxu0 0
  %551 = vmatpush.bf16.msra.mxu0 0
  %552 = vmatpush.bf16.msra.mxu0 0
  %553 = vmatpush.bf16.msra.mxu0 0
  %554 = vmatpush.bf16.msra.mxu0 %v548
  %555 = vmatpush.bf16.msra.mxu0 %v388
  %556 = vmatpush.bf16.msra.mxu0 %v387
  %557 = vmatpush.bf16.msra.mxu0 %v386
  %558 = vmatmul.bf16.gmra.mxu0 %v395
  %v559 = vpop.f32.mrf.mxu0
  %v560 = vadd.f32 0.0, %v559
  %v561 = vpop.f32.mrf.mxu0
  %v562 = vadd.f32 0.0, %v561
  %563 = vmatmul.bf16.gmra.mxu0 %v398
  %v564 = vpop.f32.mrf.mxu0
  %v565 = vadd.f32 0.0, %v564
  %v566 = vpop.f32.mrf.mxu0
  %v567 = vadd.f32 0.0, %v566
  %568 = vmatmul.bf16.gmra.mxu0 %v401
  %v569 = vpop.f32.mrf.mxu0
  %v570 = vadd.f32 0.0, %v569
  %v571 = vpop.f32.mrf.mxu0
  %v572 = vadd.f32 0.0, %v571
  %573 = vmatmul.bf16.gmra.mxu0 %v404
  %v574 = vpop.f32.mrf.mxu0
  %v575 = vadd.f32 0.0, %v574
  %v576 = vpop.f32.mrf.mxu0
  %v577 = vadd.f32 0.0, %v576
  %578 = vmatmul.bf16.gmra.mxu0 %v407
  %v579 = vpop.f32.mrf.mxu0
  %v580 = vadd.f32 0.0, %v579
  %v581 = vpop.f32.mrf.mxu0
  %v582 = vadd.f32 0.0, %v581
  %583 = vmatmul.bf16.gmra.mxu0 %v410
  %v584 = vpop.f32.mrf.mxu0
  %v585 = vadd.f32 0.0, %v584
  %v586 = vpop.f32.mrf.mxu0
  %v587 = vadd.f32 0.0, %v586
  %588 = vmatmul.bf16.gmra.mxu0 %v413
  %v589 = vpop.f32.mrf.mxu0
  %v590 = vadd.f32 0.0, %v589
  %v591 = vpop.f32.mrf.mxu0
  %v592 = vadd.f32 0.0, %v591
  %593 = vmatmul.bf16.gmra.mxu0 %v416
  %v594 = vpop.f32.mrf.mxu0
  %v595 = vadd.f32 0.0, %v594
  %v596 = vpop.f32.mrf.mxu0
  %v597 = vadd.f32 0.0, %v596
  %598 = vmatmul.bf16.gmra.mxu0 %v419
  %v599 = vpop.f32.mrf.mxu0
  %v600 = vadd.f32 0.0, %v599
  %v601 = vpop.f32.mrf.mxu0
  %v602 = vadd.f32 0.0, %v601
  %603 = vmatmul.bf16.gmra.mxu0 %v422
  %v604 = vpop.f32.mrf.mxu0
  %v605 = vadd.f32 0.0, %v604
  %v606 = vpop.f32.mrf.mxu0
  %v607 = vadd.f32 0.0, %v606
  %608 = vmatmul.bf16.gmra.mxu0 %v425
  %v609 = vpop.f32.mrf.mxu0
  %v610 = vadd.f32 0.0, %v609
  %v611 = vpop.f32.mrf.mxu0
  %v612 = vadd.f32 0.0, %v611
  %613 = vmatmul.bf16.gmra.mxu0 %v428
  %v614 = vpop.f32.mrf.mxu0
  %v615 = vadd.f32 0.0, %v614
  %v616 = vpop.f32.mrf.mxu0
  %v617 = vadd.f32 0.0, %v616
  %618 = vmatmul.bf16.gmra.mxu0 %v431
  %v619 = vpop.f32.mrf.mxu0
  %v620 = vadd.f32 0.0, %v619
  %v621 = vpop.f32.mrf.mxu0
  %v622 = vadd.f32 0.0, %v621
  %623 = vmatmul.bf16.gmra.mxu0 %v434
  %v624 = vpop.f32.mrf.mxu0
  %v625 = vadd.f32 0.0, %v624
  %v626 = vpop.f32.mrf.mxu0
  %v627 = vadd.f32 0.0, %v626
  %628 = vmatmul.bf16.gmra.mxu0 %v437
  %v629 = vpop.f32.mrf.mxu0
  %v630 = vadd.f32 0.0, %v629
  %v631 = vpop.f32.mrf.mxu0
  %v632 = vadd.f32 0.0, %v631
  %633 = vmatmul.bf16.gmra.mxu0 %v440
  %v634 = vpop.f32.mrf.mxu0
  %v635 = vadd.f32 0.0, %v634
  %v636 = vpop.f32.mrf.mxu0
  %v637 = vadd.f32 0.0, %v636
  %638 = vmatmul.bf16.gmra.mxu0 %v443
  %v639 = vpop.f32.mrf.mxu0
  %v640 = vadd.f32 0.0, %v639
  %v641 = vpop.f32.mrf.mxu0
  %v642 = vadd.f32 0.0, %v641
  %643 = vmatmul.bf16.gmra.mxu0 %v446
  %v644 = vpop.f32.mrf.mxu0
  %v645 = vadd.f32 0.0, %v644
  %v646 = vpop.f32.mrf.mxu0
  %v647 = vadd.f32 0.0, %v646
  %648 = vmatmul.bf16.gmra.mxu0 %v449
  %v649 = vpop.f32.mrf.mxu0
  %v650 = vadd.f32 0.0, %v649
  %v651 = vpop.f32.mrf.mxu0
  %v652 = vadd.f32 0.0, %v651
  %653 = vmatmul.bf16.gmra.mxu0 %v452
  %v654 = vpop.f32.mrf.mxu0
  %v655 = vadd.f32 0.0, %v654
  %v656 = vpop.f32.mrf.mxu0
  %v657 = vadd.f32 0.0, %v656
  %658 = vmatmul.bf16.gmra.mxu0 %v455
  %v659 = vpop.f32.mrf.mxu0
  %v660 = vadd.f32 0.0, %v659
  %v661 = vpop.f32.mrf.mxu0
  %v662 = vadd.f32 0.0, %v661
  %663 = vmatmul.bf16.gmra.mxu0 %v458
  %v664 = vpop.f32.mrf.mxu0
  %v665 = vadd.f32 0.0, %v664
  %v666 = vpop.f32.mrf.mxu0
  %v667 = vadd.f32 0.0, %v666
  %668 = vmatmul.bf16.gmra.mxu0 %v461
  %v669 = vpop.f32.mrf.mxu0
  %v670 = vadd.f32 0.0, %v669
  %v671 = vpop.f32.mrf.mxu0
  %v672 = vadd.f32 0.0, %v671
  %673 = vmatmul.bf16.gmra.mxu0 %v464
  %v674 = vpop.f32.mrf.mxu0
  %v675 = vadd.f32 0.0, %v674
  %v676 = vpop.f32.mrf.mxu0
  %v677 = vadd.f32 0.0, %v676
  %678 = vmatmul.bf16.gmra.mxu0 %v467
  %v679 = vpop.f32.mrf.mxu0
  %v680 = vadd.f32 0.0, %v679
  %v681 = vpop.f32.mrf.mxu0
  %v682 = vadd.f32 0.0, %v681
  %683 = vmatmul.bf16.gmra.mxu0 %v470
  %v684 = vpop.f32.mrf.mxu0
  %v685 = vadd.f32 0.0, %v684
  %v686 = vpop.f32.mrf.mxu0
  %v687 = vadd.f32 0.0, %v686
  %688 = vmatmul.bf16.gmra.mxu0 %v473
  %v689 = vpop.f32.mrf.mxu0
  %v690 = vadd.f32 0.0, %v689
  %v691 = vpop.f32.mrf.mxu0
  %v692 = vadd.f32 0.0, %v691
  %693 = vmatmul.bf16.gmra.mxu0 %v476
  %v694 = vpop.f32.mrf.mxu0
  %v695 = vadd.f32 0.0, %v694
  %v696 = vpop.f32.mrf.mxu0
  %v697 = vadd.f32 0.0, %v696
  %698 = vmatmul.bf16.gmra.mxu0 %v479
  %v699 = vpop.f32.mrf.mxu0
  %v700 = vadd.f32 0.0, %v699
  %v701 = vpop.f32.mrf.mxu0
  %v702 = vadd.f32 0.0, %v701
  %703 = vmatmul.bf16.gmra.mxu0 %v482
  %v704 = vpop.f32.mrf.mxu0
  %v705 = vadd.f32 0.0, %v704
  %v706 = vpop.f32.mrf.mxu0
  %v707 = vadd.f32 0.0, %v706
  %708 = vmatmul.bf16.gmra.mxu0 %v485
  %v709 = vpop.f32.mrf.mxu0
  %v710 = vadd.f32 0.0, %v709
  %v711 = vpop.f32.mrf.mxu0
  %v712 = vadd.f32 0.0, %v711
  %713 = vmatmul.bf16.gmra.mxu0 %v488
  %v714 = vpop.f32.mrf.mxu0
  %v715 = vadd.f32 0.0, %v714
  %v716 = vpop.f32.mrf.mxu0
  %v717 = vadd.f32 0.0, %v716
  %718 = vmatmul.bf16.gmra.mxu0 %v491
  %v719 = vpop.f32.mrf.mxu0
  %v720 = vadd.f32 0.0, %v719
  %v721 = vpop.f32.mrf.mxu0
  %v722 = vadd.f32 0.0, %v721
  %723 = vmatmul.bf16.gmra.mxu0 %v494
  %v724 = vpop.f32.mrf.mxu0
  %v725 = vadd.f32 0.0, %v724
  %v726 = vpop.f32.mrf.mxu0
  %v727 = vadd.f32 0.0, %v726
  %728 = vmatmul.bf16.gmra.mxu0 %v497
  %v729 = vpop.f32.mrf.mxu0
  %v730 = vadd.f32 0.0, %v729
  %v731 = vpop.f32.mrf.mxu0
  %v732 = vadd.f32 0.0, %v731
  %733 = vmatmul.bf16.gmra.mxu0 %v500
  %v734 = vpop.f32.mrf.mxu0
  %v735 = vadd.f32 0.0, %v734
  %v736 = vpop.f32.mrf.mxu0
  %v737 = vadd.f32 0.0, %v736
  %738 = vmatmul.bf16.gmra.mxu0 %v503
  %v739 = vpop.f32.mrf.mxu0
  %v740 = vadd.f32 0.0, %v739
  %v741 = vpop.f32.mrf.mxu0
  %v742 = vadd.f32 0.0, %v741
  %743 = vmatmul.bf16.gmra.mxu0 %v506
  %v744 = vpop.f32.mrf.mxu0
  %v745 = vadd.f32 0.0, %v744
  %v746 = vpop.f32.mrf.mxu0
  %v747 = vadd.f32 0.0, %v746
  %748 = vmatmul.bf16.gmra.mxu0 %v509
  %v749 = vpop.f32.mrf.mxu0
  %v750 = vadd.f32 0.0, %v749
  %v751 = vpop.f32.mrf.mxu0
  %v752 = vadd.f32 0.0, %v751
  %753 = vmatmul.bf16.gmra.mxu0 %v512
  %v754 = vpop.f32.mrf.mxu0
  %v755 = vadd.f32 0.0, %v754
  %v756 = vpop.f32.mrf.mxu0
  %v757 = vadd.f32 0.0, %v756
  %758 = vmatmul.bf16.gmra.mxu0 %v515
  %v759 = vpop.f32.mrf.mxu0
  %v760 = vadd.f32 0.0, %v759
  %v761 = vpop.f32.mrf.mxu0
  %v762 = vadd.f32 0.0, %v761
  %763 = vmatmul.bf16.gmra.mxu0 %v518
  %v764 = vpop.f32.mrf.mxu0
  %v765 = vadd.f32 0.0, %v764
  %v766 = vpop.f32.mrf.mxu0
  %v767 = vadd.f32 0.0, %v766
  %768 = vmatmul.bf16.gmra.mxu0 %v521
  %v769 = vpop.f32.mrf.mxu0
  %v770 = vadd.f32 0.0, %v769
  %v771 = vpop.f32.mrf.mxu0
  %v772 = vadd.f32 0.0, %v771
  %773 = vmatmul.bf16.gmra.mxu0 %v524
  %v774 = vpop.f32.mrf.mxu0
  %v775 = vadd.f32 0.0, %v774
  %v776 = vpop.f32.mrf.mxu0
  %v777 = vadd.f32 0.0, %v776
  %778 = vmatmul.bf16.gmra.mxu0 %v527
  %v779 = vpop.f32.mrf.mxu0
  %v780 = vadd.f32 0.0, %v779
  %v781 = vpop.f32.mrf.mxu0
  %v782 = vadd.f32 0.0, %v781
  %783 = vmatmul.bf16.gmra.mxu0 %v530
  %v784 = vpop.f32.mrf.mxu0
  %v785 = vadd.f32 0.0, %v784
  %v786 = vpop.f32.mrf.mxu0
  %v787 = vadd.f32 0.0, %v786
  %788 = vmatmul.bf16.gmra.mxu0 %v533
  %v789 = vpop.f32.mrf.mxu0
  %v790 = vadd.f32 0.0, %v789
  %v791 = vpop.f32.mrf.mxu0
  %v792 = vadd.f32 0.0, %v791
  %793 = vmatmul.bf16.gmra.mxu0 %v536
  %v794 = vpop.f32.mrf.mxu0
  %v795 = vadd.f32 0.0, %v794
  %v796 = vpop.f32.mrf.mxu0
  %v797 = vadd.f32 0.0, %v796
  %798 = vmatmul.bf16.gmra.mxu0 %v539
  %v799 = vpop.f32.mrf.mxu0
  %v800 = vadd.f32 0.0, %v799
  %v801 = vpop.f32.mrf.mxu0
  %v802 = vadd.f32 0.0, %v801
  %803 = vmatmul.bf16.gmra.mxu0 %v542
  %v804 = vpop.f32.mrf.mxu0
  %v805 = vadd.f32 0.0, %v804
  %v806 = vpop.f32.mrf.mxu0
  %v807 = vadd.f32 0.0, %v806
  %808 = vdwg.mxu0
  %s809 = scalar_lea.vmem %s1, 28
  %v810 = vld [vmem:[%s809] sm:$0xf]
  %v811 = vld [vmem:[%s809 + $0x4] sm:$0xf]
  %v812 = vld [vmem:[%s809 + $0x8] sm:$0xf]
  %v813 = vld [vmem:[%s809 + $0xc] sm:$0xf]
  %v814 = vld [vmem:[%s809 + $0x10] sm:$0xf]
  %v815 = vld [vmem:[%s809 + $0x14] sm:$0xf]
  %v816 = vld [vmem:[%s809 + $0x18] sm:$0x1]
  %v824 = vunpack.c.l.b16 %v810
  %v825 = vunpack.c.l.b16 %v811
  %v826 = vunpack.c.l.b16 %v812
  %v827 = vunpack.c.l.b16 %v813
  %v828 = vunpack.c.l.b16 %v814
  %v829 = vunpack.c.l.b16 %v815
  %v830 = vunpack.c.l.b16 %v816
  %v831 = vpack.c.b16 %v825, %v824
  %v832 = vpack.c.b16 %v827, %v826
  %v833 = vpack.c.b16 %v829, %v828
  %v834 = vpack.c.b16 %v830, %v830
  %v839 = vand.u32 %v834, %v546
  %841 = vmatpush.bf16.msra.mxu0 0
  %842 = vmatpush.bf16.msra.mxu0 0
  %843 = vmatpush.bf16.msra.mxu0 0
  %844 = vmatpush.bf16.msra.mxu0 0
  %845 = vmatpush.bf16.msra.mxu0 %v839
  %846 = vmatpush.bf16.msra.mxu0 %v833
  %847 = vmatpush.bf16.msra.mxu0 %v832
  %848 = vmatpush.bf16.msra.mxu0 %v831
  %849 = vmatmul.bf16.gmra.mxu0 %v395
  %v850 = vpop.f32.mrf.mxu0
  %v851 = vadd.f32 0.0, %v850
  %v852 = vpop.f32.mrf.mxu0
  %v853 = vadd.f32 0.0, %v852
  %854 = vmatmul.bf16.gmra.mxu0 %v398
  %v855 = vpop.f32.mrf.mxu0
  %v856 = vadd.f32 0.0, %v855
  %v857 = vpop.f32.mrf.mxu0
  %v858 = vadd.f32 0.0, %v857
  %859 = vmatmul.bf16.gmra.mxu0 %v401
  %v860 = vpop.f32.mrf.mxu0
  %v861 = vadd.f32 0.0, %v860
  %v862 = vpop.f32.mrf.mxu0
  %v863 = vadd.f32 0.0, %v862
  %864 = vmatmul.bf16.gmra.mxu0 %v404
  %v865 = vpop.f32.mrf.mxu0
  %v866 = vadd.f32 0.0, %v865
  %v867 = vpop.f32.mrf.mxu0
  %v868 = vadd.f32 0.0, %v867
  %869 = vmatmul.bf16.gmra.mxu0 %v407
  %v870 = vpop.f32.mrf.mxu0
  %v871 = vadd.f32 0.0, %v870
  %v872 = vpop.f32.mrf.mxu0
  %v873 = vadd.f32 0.0, %v872
  %874 = vmatmul.bf16.gmra.mxu0 %v410
  %v875 = vpop.f32.mrf.mxu0
  %v876 = vadd.f32 0.0, %v875
  %v877 = vpop.f32.mrf.mxu0
  %v878 = vadd.f32 0.0, %v877
  %879 = vmatmul.bf16.gmra.mxu0 %v413
  %v880 = vpop.f32.mrf.mxu0
  %v881 = vadd.f32 0.0, %v880
  %v882 = vpop.f32.mrf.mxu0
  %v883 = vadd.f32 0.0, %v882
  %884 = vmatmul.bf16.gmra.mxu0 %v416
  %v885 = vpop.f32.mrf.mxu0
  %v886 = vadd.f32 0.0, %v885
  %v887 = vpop.f32.mrf.mxu0
  %v888 = vadd.f32 0.0, %v887
  %889 = vmatmul.bf16.gmra.mxu0 %v419
  %v890 = vpop.f32.mrf.mxu0
  %v891 = vadd.f32 0.0, %v890
  %v892 = vpop.f32.mrf.mxu0
  %v893 = vadd.f32 0.0, %v892
  %894 = vmatmul.bf16.gmra.mxu0 %v422
  %v895 = vpop.f32.mrf.mxu0
  %v896 = vadd.f32 0.0, %v895
  %v897 = vpop.f32.mrf.mxu0
  %v898 = vadd.f32 0.0, %v897
  %899 = vmatmul.bf16.gmra.mxu0 %v425
  %v900 = vpop.f32.mrf.mxu0
  %v901 = vadd.f32 0.0, %v900
  %v902 = vpop.f32.mrf.mxu0
  %v903 = vadd.f32 0.0, %v902
  %904 = vmatmul.bf16.gmra.mxu0 %v428
  %v905 = vpop.f32.mrf.mxu0
  %v906 = vadd.f32 0.0, %v905
  %v907 = vpop.f32.mrf.mxu0
  %v908 = vadd.f32 0.0, %v907
  %909 = vmatmul.bf16.gmra.mxu0 %v431
  %v910 = vpop.f32.mrf.mxu0
  %v911 = vadd.f32 0.0, %v910
  %v912 = vpop.f32.mrf.mxu0
  %v913 = vadd.f32 0.0, %v912
  %914 = vmatmul.bf16.gmra.mxu0 %v434
  %v915 = vpop.f32.mrf.mxu0
  %v916 = vadd.f32 0.0, %v915
  %v917 = vpop.f32.mrf.mxu0
  %v918 = vadd.f32 0.0, %v917
  %919 = vmatmul.bf16.gmra.mxu0 %v437
  %v920 = vpop.f32.mrf.mxu0
  %v921 = vadd.f32 0.0, %v920
  %v922 = vpop.f32.mrf.mxu0
  %v923 = vadd.f32 0.0, %v922
  %924 = vmatmul.bf16.gmra.mxu0 %v440
  %v925 = vpop.f32.mrf.mxu0
  %v926 = vadd.f32 0.0, %v925
  %v927 = vpop.f32.mrf.mxu0
  %v928 = vadd.f32 0.0, %v927
  %929 = vmatmul.bf16.gmra.mxu0 %v443
  %v930 = vpop.f32.mrf.mxu0
  %v931 = vadd.f32 0.0, %v930
  %v932 = vpop.f32.mrf.mxu0
  %v933 = vadd.f32 0.0, %v932
  %934 = vmatmul.bf16.gmra.mxu0 %v446
  %v935 = vpop.f32.mrf.mxu0
  %v936 = vadd.f32 0.0, %v935
  %v937 = vpop.f32.mrf.mxu0
  %v938 = vadd.f32 0.0, %v937
  %939 = vmatmul.bf16.gmra.mxu0 %v449
  %v940 = vpop.f32.mrf.mxu0
  %v941 = vadd.f32 0.0, %v940
  %v942 = vpop.f32.mrf.mxu0
  %v943 = vadd.f32 0.0, %v942
  %944 = vmatmul.bf16.gmra.mxu0 %v452
  %v945 = vpop.f32.mrf.mxu0
  %v946 = vadd.f32 0.0, %v945
  %v947 = vpop.f32.mrf.mxu0
  %v948 = vadd.f32 0.0, %v947
  %949 = vmatmul.bf16.gmra.mxu0 %v455
  %v950 = vpop.f32.mrf.mxu0
  %v951 = vadd.f32 0.0, %v950
  %v952 = vpop.f32.mrf.mxu0
  %v953 = vadd.f32 0.0, %v952
  %954 = vmatmul.bf16.gmra.mxu0 %v458
  %v955 = vpop.f32.mrf.mxu0
  %v956 = vadd.f32 0.0, %v955
  %v957 = vpop.f32.mrf.mxu0
  %v958 = vadd.f32 0.0, %v957
  %959 = vmatmul.bf16.gmra.mxu0 %v461
  %v960 = vpop.f32.mrf.mxu0
  %v961 = vadd.f32 0.0, %v960
  %v962 = vpop.f32.mrf.mxu0
  %v963 = vadd.f32 0.0, %v962
  %964 = vmatmul.bf16.gmra.mxu0 %v464
  %v965 = vpop.f32.mrf.mxu0
  %v966 = vadd.f32 0.0, %v965
  %v967 = vpop.f32.mrf.mxu0
  %v968 = vadd.f32 0.0, %v967
  %969 = vmatmul.bf16.gmra.mxu0 %v467
  %v970 = vpop.f32.mrf.mxu0
  %v971 = vadd.f32 0.0, %v970
  %v972 = vpop.f32.mrf.mxu0
  %v973 = vadd.f32 0.0, %v972
  %974 = vmatmul.bf16.gmra.mxu0 %v470
  %v975 = vpop.f32.mrf.mxu0
  %v976 = vadd.f32 0.0, %v975
  %v977 = vpop.f32.mrf.mxu0
  %v978 = vadd.f32 0.0, %v977
  %979 = vmatmul.bf16.gmra.mxu0 %v473
  %v980 = vpop.f32.mrf.mxu0
  %v981 = vadd.f32 0.0, %v980
  %v982 = vpop.f32.mrf.mxu0
  %v983 = vadd.f32 0.0, %v982
  %984 = vmatmul.bf16.gmra.mxu0 %v476
  %v985 = vpop.f32.mrf.mxu0
  %v986 = vadd.f32 0.0, %v985
  %v987 = vpop.f32.mrf.mxu0
  %v988 = vadd.f32 0.0, %v987
  %989 = vmatmul.bf16.gmra.mxu0 %v479
  %v990 = vpop.f32.mrf.mxu0
  %v991 = vadd.f32 0.0, %v990
  %v992 = vpop.f32.mrf.mxu0
  %v993 = vadd.f32 0.0, %v992
  %994 = vmatmul.bf16.gmra.mxu0 %v482
  %v995 = vpop.f32.mrf.mxu0
  %v996 = vadd.f32 0.0, %v995
  %v997 = vpop.f32.mrf.mxu0
  %v998 = vadd.f32 0.0, %v997
  %999 = vmatmul.bf16.gmra.mxu0 %v485
  %v1000 = vpop.f32.mrf.mxu0
  %v1001 = vadd.f32 0.0, %v1000
  %v1002 = vpop.f32.mrf.mxu0
  %v1003 = vadd.f32 0.0, %v1002
  %1004 = vmatmul.bf16.gmra.mxu0 %v488
  %v1005 = vpop.f32.mrf.mxu0
  %v1006 = vadd.f32 0.0, %v1005
  %v1007 = vpop.f32.mrf.mxu0
  %v1008 = vadd.f32 0.0, %v1007
  %1009 = vmatmul.bf16.gmra.mxu0 %v491
  %v1010 = vpop.f32.mrf.mxu0
  %v1011 = vadd.f32 0.0, %v1010
  %v1012 = vpop.f32.mrf.mxu0
  %v1013 = vadd.f32 0.0, %v1012
  %1014 = vmatmul.bf16.gmra.mxu0 %v494
  %v1015 = vpop.f32.mrf.mxu0
  %v1016 = vadd.f32 0.0, %v1015
  %v1017 = vpop.f32.mrf.mxu0
  %v1018 = vadd.f32 0.0, %v1017
  %1019 = vmatmul.bf16.gmra.mxu0 %v497
  %v1020 = vpop.f32.mrf.mxu0
  %v1021 = vadd.f32 0.0, %v1020
  %v1022 = vpop.f32.mrf.mxu0
  %v1023 = vadd.f32 0.0, %v1022
  %1024 = vmatmul.bf16.gmra.mxu0 %v500
  %v1025 = vpop.f32.mrf.mxu0
  %v1026 = vadd.f32 0.0, %v1025
  %v1027 = vpop.f32.mrf.mxu0
  %v1028 = vadd.f32 0.0, %v1027
  %1029 = vmatmul.bf16.gmra.mxu0 %v503
  %v1030 = vpop.f32.mrf.mxu0
  %v1031 = vadd.f32 0.0, %v1030
  %v1032 = vpop.f32.mrf.mxu0
  %v1033 = vadd.f32 0.0, %v1032
  %1034 = vmatmul.bf16.gmra.mxu0 %v506
  %v1035 = vpop.f32.mrf.mxu0
  %v1036 = vadd.f32 0.0, %v1035
  %v1037 = vpop.f32.mrf.mxu0
  %v1038 = vadd.f32 0.0, %v1037
  %1039 = vmatmul.bf16.gmra.mxu0 %v509
  %v1040 = vpop.f32.mrf.mxu0
  %v1041 = vadd.f32 0.0, %v1040
  %v1042 = vpop.f32.mrf.mxu0
  %v1043 = vadd.f32 0.0, %v1042
  %1044 = vmatmul.bf16.gmra.mxu0 %v512
  %v1045 = vpop.f32.mrf.mxu0
  %v1046 = vadd.f32 0.0, %v1045
  %v1047 = vpop.f32.mrf.mxu0
  %v1048 = vadd.f32 0.0, %v1047
  %1049 = vmatmul.bf16.gmra.mxu0 %v515
  %v1050 = vpop.f32.mrf.mxu0
  %v1051 = vadd.f32 0.0, %v1050
  %v1052 = vpop.f32.mrf.mxu0
  %v1053 = vadd.f32 0.0, %v1052
  %1054 = vmatmul.bf16.gmra.mxu0 %v518
  %v1055 = vpop.f32.mrf.mxu0
  %v1056 = vadd.f32 0.0, %v1055
  %v1057 = vpop.f32.mrf.mxu0
  %v1058 = vadd.f32 0.0, %v1057
  %1059 = vmatmul.bf16.gmra.mxu0 %v521
  %v1060 = vpop.f32.mrf.mxu0
  %v1061 = vadd.f32 0.0, %v1060
  %v1062 = vpop.f32.mrf.mxu0
  %v1063 = vadd.f32 0.0, %v1062
  %1064 = vmatmul.bf16.gmra.mxu0 %v524
  %v1065 = vpop.f32.mrf.mxu0
  %v1066 = vadd.f32 0.0, %v1065
  %v1067 = vpop.f32.mrf.mxu0
  %v1068 = vadd.f32 0.0, %v1067
  %1069 = vmatmul.bf16.gmra.mxu0 %v527
  %v1070 = vpop.f32.mrf.mxu0
  %v1071 = vadd.f32 0.0, %v1070
  %v1072 = vpop.f32.mrf.mxu0
  %v1073 = vadd.f32 0.0, %v1072
  %1074 = vmatmul.bf16.gmra.mxu0 %v530
  %v1075 = vpop.f32.mrf.mxu0
  %v1076 = vadd.f32 0.0, %v1075
  %v1077 = vpop.f32.mrf.mxu0
  %v1078 = vadd.f32 0.0, %v1077
  %1079 = vmatmul.bf16.gmra.mxu0 %v533
  %v1080 = vpop.f32.mrf.mxu0
  %v1081 = vadd.f32 0.0, %v1080
  %v1082 = vpop.f32.mrf.mxu0
  %v1083 = vadd.f32 0.0, %v1082
  %1084 = vmatmul.bf16.gmra.mxu0 %v536
  %v1085 = vpop.f32.mrf.mxu0
  %v1086 = vadd.f32 0.0, %v1085
  %v1087 = vpop.f32.mrf.mxu0
  %v1088 = vadd.f32 0.0, %v1087
  %1089 = vmatmul.bf16.gmra.mxu0 %v539
  %v1090 = vpop.f32.mrf.mxu0
  %v1091 = vadd.f32 0.0, %v1090
  %v1092 = vpop.f32.mrf.mxu0
  %v1093 = vadd.f32 0.0, %v1092
  %1094 = vmatmul.bf16.gmra.mxu0 %v542
  %v1095 = vpop.f32.mrf.mxu0
  %v1096 = vadd.f32 0.0, %v1095
  %v1097 = vpop.f32.mrf.mxu0
  %v1098 = vadd.f32 0.0, %v1097
  %1099 = vdwg.mxu0
  %v1100 = vmax.f32 %v560, %v851
  %v1101 = vmax.f32 %v562, %v853
  %v1102 = vmax.f32 %v565, %v856
  %v1103 = vmax.f32 %v567, %v858
  %v1104 = vmax.f32 %v570, %v861
  %v1105 = vmax.f32 %v572, %v863
  %v1106 = vmax.f32 %v575, %v866
  %v1107 = vmax.f32 %v577, %v868
  %v1108 = vmax.f32 %v580, %v871
  %v1109 = vmax.f32 %v582, %v873
  %v1110 = vmax.f32 %v585, %v876
  %v1111 = vmax.f32 %v587, %v878
  %v1112 = vmax.f32 %v590, %v881
  %v1113 = vmax.f32 %v592, %v883
  %v1114 = vmax.f32 %v595, %v886
  %v1115 = vmax.f32 %v597, %v888
  %v1116 = vmax.f32 %v600, %v891
  %v1117 = vmax.f32 %v602, %v893
  %v1118 = vmax.f32 %v605, %v896
  %v1119 = vmax.f32 %v607, %v898
  %v1120 = vmax.f32 %v610, %v901
  %v1121 = vmax.f32 %v612, %v903
  %v1122 = vmax.f32 %v615, %v906
  %v1123 = vmax.f32 %v617, %v908
  %v1124 = vmax.f32 %v620, %v911
  %v1125 = vmax.f32 %v622, %v913
  %v1126 = vmax.f32 %v625, %v916
  %v1127 = vmax.f32 %v627, %v918
  %v1128 = vmax.f32 %v630, %v921
  %v1129 = vmax.f32 %v632, %v923
  %v1130 = vmax.f32 %v635, %v926
  %v1131 = vmax.f32 %v637, %v928
  %v1132 = vmax.f32 %v640, %v931
  %v1133 = vmax.f32 %v642, %v933
  %v1134 = vmax.f32 %v645, %v936
  %v1135 = vmax.f32 %v647, %v938
  %v1136 = vmax.f32 %v650, %v941
  %v1137 = vmax.f32 %v652, %v943
  %v1138 = vmax.f32 %v655, %v946
  %v1139 = vmax.f32 %v657, %v948
  %v1140 = vmax.f32 %v660, %v951
  %v1141 = vmax.f32 %v662, %v953
  %v1142 = vmax.f32 %v665, %v956
  %v1143 = vmax.f32 %v667, %v958
  %v1144 = vmax.f32 %v670, %v961
  %v1145 = vmax.f32 %v672, %v963
  %v1146 = vmax.f32 %v675, %v966
  %v1147 = vmax.f32 %v677, %v968
  %v1148 = vmax.f32 %v680, %v971
  %v1149 = vmax.f32 %v682, %v973
  %v1150 = vmax.f32 %v685, %v976
  %v1151 = vmax.f32 %v687, %v978
  %v1152 = vmax.f32 %v690, %v981
  %v1153 = vmax.f32 %v692, %v983
  %v1154 = vmax.f32 %v695, %v986
  %v1155 = vmax.f32 %v697, %v988
  %v1156 = vmax.f32 %v700, %v991
  %v1157 = vmax.f32 %v702, %v993
  %v1158 = vmax.f32 %v705, %v996
  %v1159 = vmax.f32 %v707, %v998
  %v1160 = vmax.f32 %v710, %v1001
  %v1161 = vmax.f32 %v712, %v1003
  %v1162 = vmax.f32 %v715, %v1006
  %v1163 = vmax.f32 %v717, %v1008
  %v1164 = vmax.f32 %v720, %v1011
  %v1165 = vmax.f32 %v722, %v1013
  %v1166 = vmax.f32 %v725, %v1016
  %v1167 = vmax.f32 %v727, %v1018
  %v1168 = vmax.f32 %v730, %v1021
  %v1169 = vmax.f32 %v732, %v1023
  %v1170 = vmax.f32 %v735, %v1026
  %v1171 = vmax.f32 %v737, %v1028
  %v1172 = vmax.f32 %v740, %v1031
  %v1173 = vmax.f32 %v742, %v1033
  %v1174 = vmax.f32 %v745, %v1036
  %v1175 = vmax.f32 %v747, %v1038
  %v1176 = vmax.f32 %v750, %v1041
  %v1177 = vmax.f32 %v752, %v1043
  %v1178 = vmax.f32 %v755, %v1046
  %v1179 = vmax.f32 %v757, %v1048
  %v1180 = vmax.f32 %v760, %v1051
  %v1181 = vmax.f32 %v762, %v1053
  %v1182 = vmax.f32 %v765, %v1056
  %v1183 = vmax.f32 %v767, %v1058
  %v1184 = vmax.f32 %v770, %v1061
  %v1185 = vmax.f32 %v772, %v1063
  %v1186 = vmax.f32 %v775, %v1066
  %v1187 = vmax.f32 %v777, %v1068
  %v1188 = vmax.f32 %v780, %v1071
  %v1189 = vmax.f32 %v782, %v1073
  %v1190 = vmax.f32 %v785, %v1076
  %v1191 = vmax.f32 %v787, %v1078
  %v1192 = vmax.f32 %v790, %v1081
  %v1193 = vmax.f32 %v792, %v1083
  %v1194 = vmax.f32 %v795, %v1086
  %v1195 = vmax.f32 %v797, %v1088
  %v1196 = vmax.f32 %v800, %v1091
  %v1197 = vmax.f32 %v802, %v1093
  %v1198 = vmax.f32 %v805, %v1096
  %v1199 = vmax.f32 %v807, %v1098
  %s1200 = scalar_lea.vmem %s1, 56
  %v1201 = vld [vmem:[%s1200] sm:$0xf]
  %v1202 = vld [vmem:[%s1200 + $0x4] sm:$0xf]
  %v1203 = vld [vmem:[%s1200 + $0x8] sm:$0xf]
  %v1204 = vld [vmem:[%s1200 + $0xc] sm:$0xf]
  %v1205 = vld [vmem:[%s1200 + $0x10] sm:$0xf]
  %v1206 = vld [vmem:[%s1200 + $0x14] sm:$0xf]
  %v1207 = vld [vmem:[%s1200 + $0x18] sm:$0x1]
  %v1215 = vunpack.c.l.b16 %v1201
  %v1216 = vunpack.c.l.b16 %v1202
  %v1217 = vunpack.c.l.b16 %v1203
  %v1218 = vunpack.c.l.b16 %v1204
  %v1219 = vunpack.c.l.b16 %v1205
  %v1220 = vunpack.c.l.b16 %v1206
  %v1221 = vunpack.c.l.b16 %v1207
  %v1222 = vpack.c.b16 %v1216, %v1215
  %v1223 = vpack.c.b16 %v1218, %v1217
  %v1224 = vpack.c.b16 %v1220, %v1219
  %v1225 = vpack.c.b16 %v1221, %v1221
  %v1230 = vand.u32 %v1225, %v546
  %1232 = vmatpush.bf16.msra.mxu0 0
  %1233 = vmatpush.bf16.msra.mxu0 0
  %1234 = vmatpush.bf16.msra.mxu0 0
  %1235 = vmatpush.bf16.msra.mxu0 0
  %1236 = vmatpush.bf16.msra.mxu0 %v1230
  %1237 = vmatpush.bf16.msra.mxu0 %v1224
  %1238 = vmatpush.bf16.msra.mxu0 %v1223
  %1239 = vmatpush.bf16.msra.mxu0 %v1222
  %1240 = vmatmul.bf16.gmra.mxu0 %v395
  %v1241 = vpop.f32.mrf.mxu0
  %v1242 = vadd.f32 0.0, %v1241
  %v1243 = vpop.f32.mrf.mxu0
  %v1244 = vadd.f32 0.0, %v1243
  %1245 = vmatmul.bf16.gmra.mxu0 %v398
  %v1246 = vpop.f32.mrf.mxu0
  %v1247 = vadd.f32 0.0, %v1246
  %v1248 = vpop.f32.mrf.mxu0
  %v1249 = vadd.f32 0.0, %v1248
  %1250 = vmatmul.bf16.gmra.mxu0 %v401
  %v1251 = vpop.f32.mrf.mxu0
  %v1252 = vadd.f32 0.0, %v1251
  %v1253 = vpop.f32.mrf.mxu0
  %v1254 = vadd.f32 0.0, %v1253
  %1255 = vmatmul.bf16.gmra.mxu0 %v404
  %v1256 = vpop.f32.mrf.mxu0
  %v1257 = vadd.f32 0.0, %v1256
  %v1258 = vpop.f32.mrf.mxu0
  %v1259 = vadd.f32 0.0, %v1258
  %1260 = vmatmul.bf16.gmra.mxu0 %v407
  %v1261 = vpop.f32.mrf.mxu0
  %v1262 = vadd.f32 0.0, %v1261
  %v1263 = vpop.f32.mrf.mxu0
  %v1264 = vadd.f32 0.0, %v1263
  %1265 = vmatmul.bf16.gmra.mxu0 %v410
  %v1266 = vpop.f32.mrf.mxu0
  %v1267 = vadd.f32 0.0, %v1266
  %v1268 = vpop.f32.mrf.mxu0
  %v1269 = vadd.f32 0.0, %v1268
  %1270 = vmatmul.bf16.gmra.mxu0 %v413
  %v1271 = vpop.f32.mrf.mxu0
  %v1272 = vadd.f32 0.0, %v1271
  %v1273 = vpop.f32.mrf.mxu0
  %v1274 = vadd.f32 0.0, %v1273
  %1275 = vmatmul.bf16.gmra.mxu0 %v416
  %v1276 = vpop.f32.mrf.mxu0
  %v1277 = vadd.f32 0.0, %v1276
  %v1278 = vpop.f32.mrf.mxu0
  %v1279 = vadd.f32 0.0, %v1278
  %1280 = vmatmul.bf16.gmra.mxu0 %v419
  %v1281 = vpop.f32.mrf.mxu0
  %v1282 = vadd.f32 0.0, %v1281
  %v1283 = vpop.f32.mrf.mxu0
  %v1284 = vadd.f32 0.0, %v1283
  %1285 = vmatmul.bf16.gmra.mxu0 %v422
  %v1286 = vpop.f32.mrf.mxu0
  %v1287 = vadd.f32 0.0, %v1286
  %v1288 = vpop.f32.mrf.mxu0
  %v1289 = vadd.f32 0.0, %v1288
  %1290 = vmatmul.bf16.gmra.mxu0 %v425
  %v1291 = vpop.f32.mrf.mxu0
  %v1292 = vadd.f32 0.0, %v1291
  %v1293 = vpop.f32.mrf.mxu0
  %v1294 = vadd.f32 0.0, %v1293
  %1295 = vmatmul.bf16.gmra.mxu0 %v428
  %v1296 = vpop.f32.mrf.mxu0
  %v1297 = vadd.f32 0.0, %v1296
  %v1298 = vpop.f32.mrf.mxu0
  %v1299 = vadd.f32 0.0, %v1298
  %1300 = vmatmul.bf16.gmra.mxu0 %v431
  %v1301 = vpop.f32.mrf.mxu0
  %v1302 = vadd.f32 0.0, %v1301
  %v1303 = vpop.f32.mrf.mxu0
  %v1304 = vadd.f32 0.0, %v1303
  %1305 = vmatmul.bf16.gmra.mxu0 %v434
  %v1306 = vpop.f32.mrf.mxu0
  %v1307 = vadd.f32 0.0, %v1306
  %v1308 = vpop.f32.mrf.mxu0
  %v1309 = vadd.f32 0.0, %v1308
  %1310 = vmatmul.bf16.gmra.mxu0 %v437
  %v1311 = vpop.f32.mrf.mxu0
  %v1312 = vadd.f32 0.0, %v1311
  %v1313 = vpop.f32.mrf.mxu0
  %v1314 = vadd.f32 0.0, %v1313
  %1315 = vmatmul.bf16.gmra.mxu0 %v440
  %v1316 = vpop.f32.mrf.mxu0
  %v1317 = vadd.f32 0.0, %v1316
  %v1318 = vpop.f32.mrf.mxu0
  %v1319 = vadd.f32 0.0, %v1318
  %1320 = vmatmul.bf16.gmra.mxu0 %v443
  %v1321 = vpop.f32.mrf.mxu0
  %v1322 = vadd.f32 0.0, %v1321
  %v1323 = vpop.f32.mrf.mxu0
  %v1324 = vadd.f32 0.0, %v1323
  %1325 = vmatmul.bf16.gmra.mxu0 %v446
  %v1326 = vpop.f32.mrf.mxu0
  %v1327 = vadd.f32 0.0, %v1326
  %v1328 = vpop.f32.mrf.mxu0
  %v1329 = vadd.f32 0.0, %v1328
  %1330 = vmatmul.bf16.gmra.mxu0 %v449
  %v1331 = vpop.f32.mrf.mxu0
  %v1332 = vadd.f32 0.0, %v1331
  %v1333 = vpop.f32.mrf.mxu0
  %v1334 = vadd.f32 0.0, %v1333
  %1335 = vmatmul.bf16.gmra.mxu0 %v452
  %v1336 = vpop.f32.mrf.mxu0
  %v1337 = vadd.f32 0.0, %v1336
  %v1338 = vpop.f32.mrf.mxu0
  %v1339 = vadd.f32 0.0, %v1338
  %1340 = vmatmul.bf16.gmra.mxu0 %v455
  %v1341 = vpop.f32.mrf.mxu0
  %v1342 = vadd.f32 0.0, %v1341
  %v1343 = vpop.f32.mrf.mxu0
  %v1344 = vadd.f32 0.0, %v1343
  %1345 = vmatmul.bf16.gmra.mxu0 %v458
  %v1346 = vpop.f32.mrf.mxu0
  %v1347 = vadd.f32 0.0, %v1346
  %v1348 = vpop.f32.mrf.mxu0
  %v1349 = vadd.f32 0.0, %v1348
  %1350 = vmatmul.bf16.gmra.mxu0 %v461
  %v1351 = vpop.f32.mrf.mxu0
  %v1352 = vadd.f32 0.0, %v1351
  %v1353 = vpop.f32.mrf.mxu0
  %v1354 = vadd.f32 0.0, %v1353
  %1355 = vmatmul.bf16.gmra.mxu0 %v464
  %v1356 = vpop.f32.mrf.mxu0
  %v1357 = vadd.f32 0.0, %v1356
  %v1358 = vpop.f32.mrf.mxu0
  %v1359 = vadd.f32 0.0, %v1358
  %1360 = vmatmul.bf16.gmra.mxu0 %v467
  %v1361 = vpop.f32.mrf.mxu0
  %v1362 = vadd.f32 0.0, %v1361
  %v1363 = vpop.f32.mrf.mxu0
  %v1364 = vadd.f32 0.0, %v1363
  %1365 = vmatmul.bf16.gmra.mxu0 %v470
  %v1366 = vpop.f32.mrf.mxu0
  %v1367 = vadd.f32 0.0, %v1366
  %v1368 = vpop.f32.mrf.mxu0
  %v1369 = vadd.f32 0.0, %v1368
  %1370 = vmatmul.bf16.gmra.mxu0 %v473
  %v1371 = vpop.f32.mrf.mxu0
  %v1372 = vadd.f32 0.0, %v1371
  %v1373 = vpop.f32.mrf.mxu0
  %v1374 = vadd.f32 0.0, %v1373
  %1375 = vmatmul.bf16.gmra.mxu0 %v476
  %v1376 = vpop.f32.mrf.mxu0
  %v1377 = vadd.f32 0.0, %v1376
  %v1378 = vpop.f32.mrf.mxu0
  %v1379 = vadd.f32 0.0, %v1378
  %1380 = vmatmul.bf16.gmra.mxu0 %v479
  %v1381 = vpop.f32.mrf.mxu0
  %v1382 = vadd.f32 0.0, %v1381
  %v1383 = vpop.f32.mrf.mxu0
  %v1384 = vadd.f32 0.0, %v1383
  %1385 = vmatmul.bf16.gmra.mxu0 %v482
  %v1386 = vpop.f32.mrf.mxu0
  %v1387 = vadd.f32 0.0, %v1386
  %v1388 = vpop.f32.mrf.mxu0
  %v1389 = vadd.f32 0.0, %v1388
  %1390 = vmatmul.bf16.gmra.mxu0 %v485
  %v1391 = vpop.f32.mrf.mxu0
  %v1392 = vadd.f32 0.0, %v1391
  %v1393 = vpop.f32.mrf.mxu0
  %v1394 = vadd.f32 0.0, %v1393
  %1395 = vmatmul.bf16.gmra.mxu0 %v488
  %v1396 = vpop.f32.mrf.mxu0
  %v1397 = vadd.f32 0.0, %v1396
  %v1398 = vpop.f32.mrf.mxu0
  %v1399 = vadd.f32 0.0, %v1398
  %1400 = vmatmul.bf16.gmra.mxu0 %v491
  %v1401 = vpop.f32.mrf.mxu0
  %v1402 = vadd.f32 0.0, %v1401
  %v1403 = vpop.f32.mrf.mxu0
  %v1404 = vadd.f32 0.0, %v1403
  %1405 = vmatmul.bf16.gmra.mxu0 %v494
  %v1406 = vpop.f32.mrf.mxu0
  %v1407 = vadd.f32 0.0, %v1406
  %v1408 = vpop.f32.mrf.mxu0
  %v1409 = vadd.f32 0.0, %v1408
  %1410 = vmatmul.bf16.gmra.mxu0 %v497
  %v1411 = vpop.f32.mrf.mxu0
  %v1412 = vadd.f32 0.0, %v1411
  %v1413 = vpop.f32.mrf.mxu0
  %v1414 = vadd.f32 0.0, %v1413
  %1415 = vmatmul.bf16.gmra.mxu0 %v500
  %v1416 = vpop.f32.mrf.mxu0
  %v1417 = vadd.f32 0.0, %v1416
  %v1418 = vpop.f32.mrf.mxu0
  %v1419 = vadd.f32 0.0, %v1418
  %1420 = vmatmul.bf16.gmra.mxu0 %v503
  %v1421 = vpop.f32.mrf.mxu0
  %v1422 = vadd.f32 0.0, %v1421
  %v1423 = vpop.f32.mrf.mxu0
  %v1424 = vadd.f32 0.0, %v1423
  %1425 = vmatmul.bf16.gmra.mxu0 %v506
  %v1426 = vpop.f32.mrf.mxu0
  %v1427 = vadd.f32 0.0, %v1426
  %v1428 = vpop.f32.mrf.mxu0
  %v1429 = vadd.f32 0.0, %v1428
  %1430 = vmatmul.bf16.gmra.mxu0 %v509
  %v1431 = vpop.f32.mrf.mxu0
  %v1432 = vadd.f32 0.0, %v1431
  %v1433 = vpop.f32.mrf.mxu0
  %v1434 = vadd.f32 0.0, %v1433
  %1435 = vmatmul.bf16.gmra.mxu0 %v512
  %v1436 = vpop.f32.mrf.mxu0
  %v1437 = vadd.f32 0.0, %v1436
  %v1438 = vpop.f32.mrf.mxu0
  %v1439 = vadd.f32 0.0, %v1438
  %1440 = vmatmul.bf16.gmra.mxu0 %v515
  %v1441 = vpop.f32.mrf.mxu0
  %v1442 = vadd.f32 0.0, %v1441
  %v1443 = vpop.f32.mrf.mxu0
  %v1444 = vadd.f32 0.0, %v1443
  %1445 = vmatmul.bf16.gmra.mxu0 %v518
  %v1446 = vpop.f32.mrf.mxu0
  %v1447 = vadd.f32 0.0, %v1446
  %v1448 = vpop.f32.mrf.mxu0
  %v1449 = vadd.f32 0.0, %v1448
  %1450 = vmatmul.bf16.gmra.mxu0 %v521
  %v1451 = vpop.f32.mrf.mxu0
  %v1452 = vadd.f32 0.0, %v1451
  %v1453 = vpop.f32.mrf.mxu0
  %v1454 = vadd.f32 0.0, %v1453
  %1455 = vmatmul.bf16.gmra.mxu0 %v524
  %v1456 = vpop.f32.mrf.mxu0
  %v1457 = vadd.f32 0.0, %v1456
  %v1458 = vpop.f32.mrf.mxu0
  %v1459 = vadd.f32 0.0, %v1458
  %1460 = vmatmul.bf16.gmra.mxu0 %v527
  %v1461 = vpop.f32.mrf.mxu0
  %v1462 = vadd.f32 0.0, %v1461
  %v1463 = vpop.f32.mrf.mxu0
  %v1464 = vadd.f32 0.0, %v1463
  %1465 = vmatmul.bf16.gmra.mxu0 %v530
  %v1466 = vpop.f32.mrf.mxu0
  %v1467 = vadd.f32 0.0, %v1466
  %v1468 = vpop.f32.mrf.mxu0
  %v1469 = vadd.f32 0.0, %v1468
  %1470 = vmatmul.bf16.gmra.mxu0 %v533
  %v1471 = vpop.f32.mrf.mxu0
  %v1472 = vadd.f32 0.0, %v1471
  %v1473 = vpop.f32.mrf.mxu0
  %v1474 = vadd.f32 0.0, %v1473
  %1475 = vmatmul.bf16.gmra.mxu0 %v536
  %v1476 = vpop.f32.mrf.mxu0
  %v1477 = vadd.f32 0.0, %v1476
  %v1478 = vpop.f32.mrf.mxu0
  %v1479 = vadd.f32 0.0, %v1478
  %1480 = vmatmul.bf16.gmra.mxu0 %v539
  %v1481 = vpop.f32.mrf.mxu0
  %v1482 = vadd.f32 0.0, %v1481
  %v1483 = vpop.f32.mrf.mxu0
  %v1484 = vadd.f32 0.0, %v1483
  %1485 = vmatmul.bf16.gmra.mxu0 %v542
  %v1486 = vpop.f32.mrf.mxu0
  %v1487 = vadd.f32 0.0, %v1486
  %v1488 = vpop.f32.mrf.mxu0
  %v1489 = vadd.f32 0.0, %v1488
  %1490 = vdwg.mxu0
  %v1491 = vmax.f32 %v1100, %v1242
  %v1492 = vmax.f32 %v1101, %v1244
  %v1493 = vmax.f32 %v1102, %v1247
  %v1494 = vmax.f32 %v1103, %v1249
  %v1495 = vmax.f32 %v1104, %v1252
  %v1496 = vmax.f32 %v1105, %v1254
  %v1497 = vmax.f32 %v1106, %v1257
  %v1498 = vmax.f32 %v1107, %v1259
  %v1499 = vmax.f32 %v1108, %v1262
  %v1500 = vmax.f32 %v1109, %v1264
  %v1501 = vmax.f32 %v1110, %v1267
  %v1502 = vmax.f32 %v1111, %v1269
  %v1503 = vmax.f32 %v1112, %v1272
  %v1504 = vmax.f32 %v1113, %v1274
  %v1505 = vmax.f32 %v1114, %v1277
  %v1506 = vmax.f32 %v1115, %v1279
  %v1507 = vmax.f32 %v1116, %v1282
  %v1508 = vmax.f32 %v1117, %v1284
  %v1509 = vmax.f32 %v1118, %v1287
  %v1510 = vmax.f32 %v1119, %v1289
  %v1511 = vmax.f32 %v1120, %v1292
  %v1512 = vmax.f32 %v1121, %v1294
  %v1513 = vmax.f32 %v1122, %v1297
  %v1514 = vmax.f32 %v1123, %v1299
  %v1515 = vmax.f32 %v1124, %v1302
  %v1516 = vmax.f32 %v1125, %v1304
  %v1517 = vmax.f32 %v1126, %v1307
  %v1518 = vmax.f32 %v1127, %v1309
  %v1519 = vmax.f32 %v1128, %v1312
  %v1520 = vmax.f32 %v1129, %v1314
  %v1521 = vmax.f32 %v1130, %v1317
  %v1522 = vmax.f32 %v1131, %v1319
  %v1523 = vmax.f32 %v1132, %v1322
  %v1524 = vmax.f32 %v1133, %v1324
  %v1525 = vmax.f32 %v1134, %v1327
  %v1526 = vmax.f32 %v1135, %v1329
  %v1527 = vmax.f32 %v1136, %v1332
  %v1528 = vmax.f32 %v1137, %v1334
  %v1529 = vmax.f32 %v1138, %v1337
  %v1530 = vmax.f32 %v1139, %v1339
  %v1531 = vmax.f32 %v1140, %v1342
  %v1532 = vmax.f32 %v1141, %v1344
  %v1533 = vmax.f32 %v1142, %v1347
  %v1534 = vmax.f32 %v1143, %v1349
  %v1535 = vmax.f32 %v1144, %v1352
  %v1536 = vmax.f32 %v1145, %v1354
  %v1537 = vmax.f32 %v1146, %v1357
  %v1538 = vmax.f32 %v1147, %v1359
  %v1539 = vmax.f32 %v1148, %v1362
  %v1540 = vmax.f32 %v1149, %v1364
  %v1541 = vmax.f32 %v1150, %v1367
  %v1542 = vmax.f32 %v1151, %v1369
  %v1543 = vmax.f32 %v1152, %v1372
  %v1544 = vmax.f32 %v1153, %v1374
  %v1545 = vmax.f32 %v1154, %v1377
  %v1546 = vmax.f32 %v1155, %v1379
  %v1547 = vmax.f32 %v1156, %v1382
  %v1548 = vmax.f32 %v1157, %v1384
  %v1549 = vmax.f32 %v1158, %v1387
  %v1550 = vmax.f32 %v1159, %v1389
  %v1551 = vmax.f32 %v1160, %v1392
  %v1552 = vmax.f32 %v1161, %v1394
  %v1553 = vmax.f32 %v1162, %v1397
  %v1554 = vmax.f32 %v1163, %v1399
  %v1555 = vmax.f32 %v1164, %v1402
  %v1556 = vmax.f32 %v1165, %v1404
  %v1557 = vmax.f32 %v1166, %v1407
  %v1558 = vmax.f32 %v1167, %v1409
  %v1559 = vmax.f32 %v1168, %v1412
  %v1560 = vmax.f32 %v1169, %v1414
  %v1561 = vmax.f32 %v1170, %v1417
  %v1562 = vmax.f32 %v1171, %v1419
  %v1563 = vmax.f32 %v1172, %v1422
  %v1564 = vmax.f32 %v1173, %v1424
  %v1565 = vmax.f32 %v1174, %v1427
  %v1566 = vmax.f32 %v1175, %v1429
  %v1567 = vmax.f32 %v1176, %v1432
  %v1568 = vmax.f32 %v1177, %v1434
  %v1569 = vmax.f32 %v1178, %v1437
  %v1570 = vmax.f32 %v1179, %v1439
  %v1571 = vmax.f32 %v1180, %v1442
  %v1572 = vmax.f32 %v1181, %v1444
  %v1573 = vmax.f32 %v1182, %v1447
  %v1574 = vmax.f32 %v1183, %v1449
  %v1575 = vmax.f32 %v1184, %v1452
  %v1576 = vmax.f32 %v1185, %v1454
  %v1577 = vmax.f32 %v1186, %v1457
  %v1578 = vmax.f32 %v1187, %v1459
  %v1579 = vmax.f32 %v1188, %v1462
  %v1580 = vmax.f32 %v1189, %v1464
  %v1581 = vmax.f32 %v1190, %v1467
  %v1582 = vmax.f32 %v1191, %v1469
  %v1583 = vmax.f32 %v1192, %v1472
  %v1584 = vmax.f32 %v1193, %v1474
  %v1585 = vmax.f32 %v1194, %v1477
  %v1586 = vmax.f32 %v1195, %v1479
  %v1587 = vmax.f32 %v1196, %v1482
  %v1588 = vmax.f32 %v1197, %v1484
  %v1589 = vmax.f32 %v1198, %v1487
  %v1590 = vmax.f32 %v1199, %v1489
  %s1591 = scalar_lea.vmem %s1, 84
  %v1592 = vld [vmem:[%s1591] sm:$0xf]
  %v1593 = vld [vmem:[%s1591 + $0x4] sm:$0xf]
  %v1594 = vld [vmem:[%s1591 + $0x8] sm:$0xf]
  %v1595 = vld [vmem:[%s1591 + $0xc] sm:$0xf]
  %v1596 = vld [vmem:[%s1591 + $0x10] sm:$0xf]
  %v1597 = vld [vmem:[%s1591 + $0x14] sm:$0xf]
  %v1598 = vld [vmem:[%s1591 + $0x18] sm:$0x1]
  %v1606 = vunpack.c.l.b16 %v1592
  %v1607 = vunpack.c.l.b16 %v1593
  %v1608 = vunpack.c.l.b16 %v1594
  %v1609 = vunpack.c.l.b16 %v1595
  %v1610 = vunpack.c.l.b16 %v1596
  %v1611 = vunpack.c.l.b16 %v1597
  %v1612 = vunpack.c.l.b16 %v1598
  %v1613 = vpack.c.b16 %v1607, %v1606
  %v1614 = vpack.c.b16 %v1609, %v1608
  %v1615 = vpack.c.b16 %v1611, %v1610
  %v1616 = vpack.c.b16 %v1612, %v1612
  %v1621 = vand.u32 %v1616, %v546
  %1623 = vmatpush.bf16.msra.mxu0 0
  %1624 = vmatpush.bf16.msra.mxu0 0
  %1625 = vmatpush.bf16.msra.mxu0 0
  %1626 = vmatpush.bf16.msra.mxu0 0
  %1627 = vmatpush.bf16.msra.mxu0 %v1621
  %1628 = vmatpush.bf16.msra.mxu0 %v1615
  %1629 = vmatpush.bf16.msra.mxu0 %v1614
  %1630 = vmatpush.bf16.msra.mxu0 %v1613
  %1631 = vmatmul.bf16.gmra.mxu0 %v395
  %v1632 = vpop.f32.mrf.mxu0
  %v1633 = vadd.f32 0.0, %v1632
  %v1634 = vpop.f32.mrf.mxu0
  %v1635 = vadd.f32 0.0, %v1634
  %1636 = vmatmul.bf16.gmra.mxu0 %v398
  %v1637 = vpop.f32.mrf.mxu0
  %v1638 = vadd.f32 0.0, %v1637
  %v1639 = vpop.f32.mrf.mxu0
  %v1640 = vadd.f32 0.0, %v1639
  %1641 = vmatmul.bf16.gmra.mxu0 %v401
  %v1642 = vpop.f32.mrf.mxu0
  %v1643 = vadd.f32 0.0, %v1642
  %v1644 = vpop.f32.mrf.mxu0
  %v1645 = vadd.f32 0.0, %v1644
  %1646 = vmatmul.bf16.gmra.mxu0 %v404
  %v1647 = vpop.f32.mrf.mxu0
  %v1648 = vadd.f32 0.0, %v1647
  %v1649 = vpop.f32.mrf.mxu0
  %v1650 = vadd.f32 0.0, %v1649
  %1651 = vmatmul.bf16.gmra.mxu0 %v407
  %v1652 = vpop.f32.mrf.mxu0
  %v1653 = vadd.f32 0.0, %v1652
  %v1654 = vpop.f32.mrf.mxu0
  %v1655 = vadd.f32 0.0, %v1654
  %1656 = vmatmul.bf16.gmra.mxu0 %v410
  %v1657 = vpop.f32.mrf.mxu0
  %v1658 = vadd.f32 0.0, %v1657
  %v1659 = vpop.f32.mrf.mxu0
  %v1660 = vadd.f32 0.0, %v1659
  %1661 = vmatmul.bf16.gmra.mxu0 %v413
  %v1662 = vpop.f32.mrf.mxu0
  %v1663 = vadd.f32 0.0, %v1662
  %v1664 = vpop.f32.mrf.mxu0
  %v1665 = vadd.f32 0.0, %v1664
  %1666 = vmatmul.bf16.gmra.mxu0 %v416
  %v1667 = vpop.f32.mrf.mxu0
  %v1668 = vadd.f32 0.0, %v1667
  %v1669 = vpop.f32.mrf.mxu0
  %v1670 = vadd.f32 0.0, %v1669
  %1671 = vmatmul.bf16.gmra.mxu0 %v419
  %v1672 = vpop.f32.mrf.mxu0
  %v1673 = vadd.f32 0.0, %v1672
  %v1674 = vpop.f32.mrf.mxu0
  %v1675 = vadd.f32 0.0, %v1674
  %1676 = vmatmul.bf16.gmra.mxu0 %v422
  %v1677 = vpop.f32.mrf.mxu0
  %v1678 = vadd.f32 0.0, %v1677
  %v1679 = vpop.f32.mrf.mxu0
  %v1680 = vadd.f32 0.0, %v1679
  %1681 = vmatmul.bf16.gmra.mxu0 %v425
  %v1682 = vpop.f32.mrf.mxu0
  %v1683 = vadd.f32 0.0, %v1682
  %v1684 = vpop.f32.mrf.mxu0
  %v1685 = vadd.f32 0.0, %v1684
  %1686 = vmatmul.bf16.gmra.mxu0 %v428
  %v1687 = vpop.f32.mrf.mxu0
  %v1688 = vadd.f32 0.0, %v1687
  %v1689 = vpop.f32.mrf.mxu0
  %v1690 = vadd.f32 0.0, %v1689
  %1691 = vmatmul.bf16.gmra.mxu0 %v431
  %v1692 = vpop.f32.mrf.mxu0
  %v1693 = vadd.f32 0.0, %v1692
  %v1694 = vpop.f32.mrf.mxu0
  %v1695 = vadd.f32 0.0, %v1694
  %1696 = vmatmul.bf16.gmra.mxu0 %v434
  %v1697 = vpop.f32.mrf.mxu0
  %v1698 = vadd.f32 0.0, %v1697
  %v1699 = vpop.f32.mrf.mxu0
  %v1700 = vadd.f32 0.0, %v1699
  %1701 = vmatmul.bf16.gmra.mxu0 %v437
  %v1702 = vpop.f32.mrf.mxu0
  %v1703 = vadd.f32 0.0, %v1702
  %v1704 = vpop.f32.mrf.mxu0
  %v1705 = vadd.f32 0.0, %v1704
  %1706 = vmatmul.bf16.gmra.mxu0 %v440
  %v1707 = vpop.f32.mrf.mxu0
  %v1708 = vadd.f32 0.0, %v1707
  %v1709 = vpop.f32.mrf.mxu0
  %v1710 = vadd.f32 0.0, %v1709
  %1711 = vmatmul.bf16.gmra.mxu0 %v443
  %v1712 = vpop.f32.mrf.mxu0
  %v1713 = vadd.f32 0.0, %v1712
  %v1714 = vpop.f32.mrf.mxu0
  %v1715 = vadd.f32 0.0, %v1714
  %1716 = vmatmul.bf16.gmra.mxu0 %v446
  %v1717 = vpop.f32.mrf.mxu0
  %v1718 = vadd.f32 0.0, %v1717
  %v1719 = vpop.f32.mrf.mxu0
  %v1720 = vadd.f32 0.0, %v1719
  %1721 = vmatmul.bf16.gmra.mxu0 %v449
  %v1722 = vpop.f32.mrf.mxu0
  %v1723 = vadd.f32 0.0, %v1722
  %v1724 = vpop.f32.mrf.mxu0
  %v1725 = vadd.f32 0.0, %v1724
  %1726 = vmatmul.bf16.gmra.mxu0 %v452
  %v1727 = vpop.f32.mrf.mxu0
  %v1728 = vadd.f32 0.0, %v1727
  %v1729 = vpop.f32.mrf.mxu0
  %v1730 = vadd.f32 0.0, %v1729
  %1731 = vmatmul.bf16.gmra.mxu0 %v455
  %v1732 = vpop.f32.mrf.mxu0
  %v1733 = vadd.f32 0.0, %v1732
  %v1734 = vpop.f32.mrf.mxu0
  %v1735 = vadd.f32 0.0, %v1734
  %1736 = vmatmul.bf16.gmra.mxu0 %v458
  %v1737 = vpop.f32.mrf.mxu0
  %v1738 = vadd.f32 0.0, %v1737
  %v1739 = vpop.f32.mrf.mxu0
  %v1740 = vadd.f32 0.0, %v1739
  %1741 = vmatmul.bf16.gmra.mxu0 %v461
  %v1742 = vpop.f32.mrf.mxu0
  %v1743 = vadd.f32 0.0, %v1742
  %v1744 = vpop.f32.mrf.mxu0
  %v1745 = vadd.f32 0.0, %v1744
  %1746 = vmatmul.bf16.gmra.mxu0 %v464
  %v1747 = vpop.f32.mrf.mxu0
  %v1748 = vadd.f32 0.0, %v1747
  %v1749 = vpop.f32.mrf.mxu0
  %v1750 = vadd.f32 0.0, %v1749
  %1751 = vmatmul.bf16.gmra.mxu0 %v467
  %v1752 = vpop.f32.mrf.mxu0
  %v1753 = vadd.f32 0.0, %v1752
  %v1754 = vpop.f32.mrf.mxu0
  %v1755 = vadd.f32 0.0, %v1754
  %1756 = vmatmul.bf16.gmra.mxu0 %v470
  %v1757 = vpop.f32.mrf.mxu0
  %v1758 = vadd.f32 0.0, %v1757
  %v1759 = vpop.f32.mrf.mxu0
  %v1760 = vadd.f32 0.0, %v1759
  %1761 = vmatmul.bf16.gmra.mxu0 %v473
  %v1762 = vpop.f32.mrf.mxu0
  %v1763 = vadd.f32 0.0, %v1762
  %v1764 = vpop.f32.mrf.mxu0
  %v1765 = vadd.f32 0.0, %v1764
  %1766 = vmatmul.bf16.gmra.mxu0 %v476
  %v1767 = vpop.f32.mrf.mxu0
  %v1768 = vadd.f32 0.0, %v1767
  %v1769 = vpop.f32.mrf.mxu0
  %v1770 = vadd.f32 0.0, %v1769
  %1771 = vmatmul.bf16.gmra.mxu0 %v479
  %v1772 = vpop.f32.mrf.mxu0
  %v1773 = vadd.f32 0.0, %v1772
  %v1774 = vpop.f32.mrf.mxu0
  %v1775 = vadd.f32 0.0, %v1774
  %1776 = vmatmul.bf16.gmra.mxu0 %v482
  %v1777 = vpop.f32.mrf.mxu0
  %v1778 = vadd.f32 0.0, %v1777
  %v1779 = vpop.f32.mrf.mxu0
  %v1780 = vadd.f32 0.0, %v1779
  %1781 = vmatmul.bf16.gmra.mxu0 %v485
  %v1782 = vpop.f32.mrf.mxu0
  %v1783 = vadd.f32 0.0, %v1782
  %v1784 = vpop.f32.mrf.mxu0
  %v1785 = vadd.f32 0.0, %v1784
  %1786 = vmatmul.bf16.gmra.mxu0 %v488
  %v1787 = vpop.f32.mrf.mxu0
  %v1788 = vadd.f32 0.0, %v1787
  %v1789 = vpop.f32.mrf.mxu0
  %v1790 = vadd.f32 0.0, %v1789
  %1791 = vmatmul.bf16.gmra.mxu0 %v491
  %v1792 = vpop.f32.mrf.mxu0
  %v1793 = vadd.f32 0.0, %v1792
  %v1794 = vpop.f32.mrf.mxu0
  %v1795 = vadd.f32 0.0, %v1794
  %1796 = vmatmul.bf16.gmra.mxu0 %v494
  %v1797 = vpop.f32.mrf.mxu0
  %v1798 = vadd.f32 0.0, %v1797
  %v1799 = vpop.f32.mrf.mxu0
  %v1800 = vadd.f32 0.0, %v1799
  %1801 = vmatmul.bf16.gmra.mxu0 %v497
  %v1802 = vpop.f32.mrf.mxu0
  %v1803 = vadd.f32 0.0, %v1802
  %v1804 = vpop.f32.mrf.mxu0
  %v1805 = vadd.f32 0.0, %v1804
  %1806 = vmatmul.bf16.gmra.mxu0 %v500
  %v1807 = vpop.f32.mrf.mxu0
  %v1808 = vadd.f32 0.0, %v1807
  %v1809 = vpop.f32.mrf.mxu0
  %v1810 = vadd.f32 0.0, %v1809
  %1811 = vmatmul.bf16.gmra.mxu0 %v503
  %v1812 = vpop.f32.mrf.mxu0
  %v1813 = vadd.f32 0.0, %v1812
  %v1814 = vpop.f32.mrf.mxu0
  %v1815 = vadd.f32 0.0, %v1814
  %1816 = vmatmul.bf16.gmra.mxu0 %v506
  %v1817 = vpop.f32.mrf.mxu0
  %v1818 = vadd.f32 0.0, %v1817
  %v1819 = vpop.f32.mrf.mxu0
  %v1820 = vadd.f32 0.0, %v1819
  %1821 = vmatmul.bf16.gmra.mxu0 %v509
  %v1822 = vpop.f32.mrf.mxu0
  %v1823 = vadd.f32 0.0, %v1822
  %v1824 = vpop.f32.mrf.mxu0
  %v1825 = vadd.f32 0.0, %v1824
  %1826 = vmatmul.bf16.gmra.mxu0 %v512
  %v1827 = vpop.f32.mrf.mxu0
  %v1828 = vadd.f32 0.0, %v1827
  %v1829 = vpop.f32.mrf.mxu0
  %v1830 = vadd.f32 0.0, %v1829
  %1831 = vmatmul.bf16.gmra.mxu0 %v515
  %v1832 = vpop.f32.mrf.mxu0
  %v1833 = vadd.f32 0.0, %v1832
  %v1834 = vpop.f32.mrf.mxu0
  %v1835 = vadd.f32 0.0, %v1834
  %1836 = vmatmul.bf16.gmra.mxu0 %v518
  %v1837 = vpop.f32.mrf.mxu0
  %v1838 = vadd.f32 0.0, %v1837
  %v1839 = vpop.f32.mrf.mxu0
  %v1840 = vadd.f32 0.0, %v1839
  %1841 = vmatmul.bf16.gmra.mxu0 %v521
  %v1842 = vpop.f32.mrf.mxu0
  %v1843 = vadd.f32 0.0, %v1842
  %v1844 = vpop.f32.mrf.mxu0
  %v1845 = vadd.f32 0.0, %v1844
  %1846 = vmatmul.bf16.gmra.mxu0 %v524
  %v1847 = vpop.f32.mrf.mxu0
  %v1848 = vadd.f32 0.0, %v1847
  %v1849 = vpop.f32.mrf.mxu0
  %v1850 = vadd.f32 0.0, %v1849
  %1851 = vmatmul.bf16.gmra.mxu0 %v527
  %v1852 = vpop.f32.mrf.mxu0
  %v1853 = vadd.f32 0.0, %v1852
  %v1854 = vpop.f32.mrf.mxu0
  %v1855 = vadd.f32 0.0, %v1854
  %1856 = vmatmul.bf16.gmra.mxu0 %v530
  %v1857 = vpop.f32.mrf.mxu0
  %v1858 = vadd.f32 0.0, %v1857
  %v1859 = vpop.f32.mrf.mxu0
  %v1860 = vadd.f32 0.0, %v1859
  %1861 = vmatmul.bf16.gmra.mxu0 %v533
  %v1862 = vpop.f32.mrf.mxu0
  %v1863 = vadd.f32 0.0, %v1862
  %v1864 = vpop.f32.mrf.mxu0
  %v1865 = vadd.f32 0.0, %v1864
  %1866 = vmatmul.bf16.gmra.mxu0 %v536
  %v1867 = vpop.f32.mrf.mxu0
  %v1868 = vadd.f32 0.0, %v1867
  %v1869 = vpop.f32.mrf.mxu0
  %v1870 = vadd.f32 0.0, %v1869
  %1871 = vmatmul.bf16.gmra.mxu0 %v539
  %v1872 = vpop.f32.mrf.mxu0
  %v1873 = vadd.f32 0.0, %v1872
  %v1874 = vpop.f32.mrf.mxu0
  %v1875 = vadd.f32 0.0, %v1874
  %1876 = vmatmul.bf16.gmra.mxu0 %v542
  %v1877 = vpop.f32.mrf.mxu0
  %v1878 = vadd.f32 0.0, %v1877
  %v1879 = vpop.f32.mrf.mxu0
  %v1880 = vadd.f32 0.0, %v1879
  %1881 = vdwg.mxu0
  %v1882 = vmax.f32 %v1491, %v1633
  %v1883 = vmax.f32 %v1492, %v1635
  %v1884 = vmax.f32 %v1493, %v1638
  %v1885 = vmax.f32 %v1494, %v1640
  %v1886 = vmax.f32 %v1495, %v1643
  %v1887 = vmax.f32 %v1496, %v1645
  %v1888 = vmax.f32 %v1497, %v1648
  %v1889 = vmax.f32 %v1498, %v1650
  %v1890 = vmax.f32 %v1499, %v1653
  %v1891 = vmax.f32 %v1500, %v1655
  %v1892 = vmax.f32 %v1501, %v1658
  %v1893 = vmax.f32 %v1502, %v1660
  %v1894 = vmax.f32 %v1503, %v1663
  %v1895 = vmax.f32 %v1504, %v1665
  %v1896 = vmax.f32 %v1505, %v1668
  %v1897 = vmax.f32 %v1506, %v1670
  %v1898 = vmax.f32 %v1507, %v1673
  %v1899 = vmax.f32 %v1508, %v1675
  %v1900 = vmax.f32 %v1509, %v1678
  %v1901 = vmax.f32 %v1510, %v1680
  %v1902 = vmax.f32 %v1511, %v1683
  %v1903 = vmax.f32 %v1512, %v1685
  %v1904 = vmax.f32 %v1513, %v1688
  %v1905 = vmax.f32 %v1514, %v1690
  %v1906 = vmax.f32 %v1515, %v1693
  %v1907 = vmax.f32 %v1516, %v1695
  %v1908 = vmax.f32 %v1517, %v1698
  %v1909 = vmax.f32 %v1518, %v1700
  %v1910 = vmax.f32 %v1519, %v1703
  %v1911 = vmax.f32 %v1520, %v1705
  %v1912 = vmax.f32 %v1521, %v1708
  %v1913 = vmax.f32 %v1522, %v1710
  %v1914 = vmax.f32 %v1523, %v1713
  %v1915 = vmax.f32 %v1524, %v1715
  %v1916 = vmax.f32 %v1525, %v1718
  %v1917 = vmax.f32 %v1526, %v1720
  %v1918 = vmax.f32 %v1527, %v1723
  %v1919 = vmax.f32 %v1528, %v1725
  %v1920 = vmax.f32 %v1529, %v1728
  %v1921 = vmax.f32 %v1530, %v1730
  %v1922 = vmax.f32 %v1531, %v1733
  %v1923 = vmax.f32 %v1532, %v1735
  %v1924 = vmax.f32 %v1533, %v1738
  %v1925 = vmax.f32 %v1534, %v1740
  %v1926 = vmax.f32 %v1535, %v1743
  %v1927 = vmax.f32 %v1536, %v1745
  %v1928 = vmax.f32 %v1537, %v1748
  %v1929 = vmax.f32 %v1538, %v1750
  %v1930 = vmax.f32 %v1539, %v1753
  %v1931 = vmax.f32 %v1540, %v1755
  %v1932 = vmax.f32 %v1541, %v1758
  %v1933 = vmax.f32 %v1542, %v1760
  %v1934 = vmax.f32 %v1543, %v1763
  %v1935 = vmax.f32 %v1544, %v1765
  %v1936 = vmax.f32 %v1545, %v1768
  %v1937 = vmax.f32 %v1546, %v1770
  %v1938 = vmax.f32 %v1547, %v1773
  %v1939 = vmax.f32 %v1548, %v1775
  %v1940 = vmax.f32 %v1549, %v1778
  %v1941 = vmax.f32 %v1550, %v1780
  %v1942 = vmax.f32 %v1551, %v1783
  %v1943 = vmax.f32 %v1552, %v1785
  %v1944 = vmax.f32 %v1553, %v1788
  %v1945 = vmax.f32 %v1554, %v1790
  %v1946 = vmax.f32 %v1555, %v1793
  %v1947 = vmax.f32 %v1556, %v1795
  %v1948 = vmax.f32 %v1557, %v1798
  %v1949 = vmax.f32 %v1558, %v1800
  %v1950 = vmax.f32 %v1559, %v1803
  %v1951 = vmax.f32 %v1560, %v1805
  %v1952 = vmax.f32 %v1561, %v1808
  %v1953 = vmax.f32 %v1562, %v1810
  %v1954 = vmax.f32 %v1563, %v1813
  %v1955 = vmax.f32 %v1564, %v1815
  %v1956 = vmax.f32 %v1565, %v1818
  %v1957 = vmax.f32 %v1566, %v1820
  %v1958 = vmax.f32 %v1567, %v1823
  %v1959 = vmax.f32 %v1568, %v1825
  %v1960 = vmax.f32 %v1569, %v1828
  %v1961 = vmax.f32 %v1570, %v1830
  %v1962 = vmax.f32 %v1571, %v1833
  %v1963 = vmax.f32 %v1572, %v1835
  %v1964 = vmax.f32 %v1573, %v1838
  %v1965 = vmax.f32 %v1574, %v1840
  %v1966 = vmax.f32 %v1575, %v1843
  %v1967 = vmax.f32 %v1576, %v1845
  %v1968 = vmax.f32 %v1577, %v1848
  %v1969 = vmax.f32 %v1578, %v1850
  %v1970 = vmax.f32 %v1579, %v1853
  %v1971 = vmax.f32 %v1580, %v1855
  %v1972 = vmax.f32 %v1581, %v1858
  %v1973 = vmax.f32 %v1582, %v1860
  %v1974 = vmax.f32 %v1583, %v1863
  %v1975 = vmax.f32 %v1584, %v1865
  %v1976 = vmax.f32 %v1585, %v1868
  %v1977 = vmax.f32 %v1586, %v1870
  %v1978 = vmax.f32 %v1587, %v1873
  %v1979 = vmax.f32 %v1588, %v1875
  %v1980 = vmax.f32 %v1589, %v1878
  %v1981 = vmax.f32 %v1590, %v1880
  %s1982 = scalar_lea.vmem %s1, 112
  %v1983 = vld [vmem:[%s1982] sm:$0xf]
  %v1984 = vld [vmem:[%s1982 + $0x4] sm:$0xf]
  %v1985 = vld [vmem:[%s1982 + $0x8] sm:$0xf]
  %v1986 = vld [vmem:[%s1982 + $0xc] sm:$0xf]
  %v1987 = vld [vmem:[%s1982 + $0x10] sm:$0xf]
  %v1988 = vld [vmem:[%s1982 + $0x14] sm:$0xf]
  %v1989 = vld [vmem:[%s1982 + $0x18] sm:$0x1]
  %v1997 = vunpack.c.l.b16 %v1983
  %v1998 = vunpack.c.l.b16 %v1984
  %v1999 = vunpack.c.l.b16 %v1985
  %v2000 = vunpack.c.l.b16 %v1986
  %v2001 = vunpack.c.l.b16 %v1987
  %v2002 = vunpack.c.l.b16 %v1988
  %v2003 = vunpack.c.l.b16 %v1989
  %v2004 = vpack.c.b16 %v1998, %v1997
  %v2005 = vpack.c.b16 %v2000, %v1999
  %v2006 = vpack.c.b16 %v2002, %v2001
  %v2007 = vpack.c.b16 %v2003, %v2003
  %v2012 = vand.u32 %v2007, %v546
  %2014 = vmatpush.bf16.msra.mxu0 0
  %2015 = vmatpush.bf16.msra.mxu0 0
  %2016 = vmatpush.bf16.msra.mxu0 0
  %2017 = vmatpush.bf16.msra.mxu0 0
  %2018 = vmatpush.bf16.msra.mxu0 %v2012
  %2019 = vmatpush.bf16.msra.mxu0 %v2006
  %2020 = vmatpush.bf16.msra.mxu0 %v2005
  %2021 = vmatpush.bf16.msra.mxu0 %v2004
  %2022 = vmatmul.bf16.gmra.mxu0 %v395
  %v2023 = vpop.f32.mrf.mxu0
  %v2024 = vadd.f32 0.0, %v2023
  %v2025 = vpop.f32.mrf.mxu0
  %v2026 = vadd.f32 0.0, %v2025
  %2027 = vmatmul.bf16.gmra.mxu0 %v398
  %v2028 = vpop.f32.mrf.mxu0
  %v2029 = vadd.f32 0.0, %v2028
  %v2030 = vpop.f32.mrf.mxu0
  %v2031 = vadd.f32 0.0, %v2030
  %2032 = vmatmul.bf16.gmra.mxu0 %v401
  %v2033 = vpop.f32.mrf.mxu0
  %v2034 = vadd.f32 0.0, %v2033
  %v2035 = vpop.f32.mrf.mxu0
  %v2036 = vadd.f32 0.0, %v2035
  %2037 = vmatmul.bf16.gmra.mxu0 %v404
  %v2038 = vpop.f32.mrf.mxu0
  %v2039 = vadd.f32 0.0, %v2038
  %v2040 = vpop.f32.mrf.mxu0
  %v2041 = vadd.f32 0.0, %v2040
  %2042 = vmatmul.bf16.gmra.mxu0 %v407
  %v2043 = vpop.f32.mrf.mxu0
  %v2044 = vadd.f32 0.0, %v2043
  %v2045 = vpop.f32.mrf.mxu0
  %v2046 = vadd.f32 0.0, %v2045
  %2047 = vmatmul.bf16.gmra.mxu0 %v410
  %v2048 = vpop.f32.mrf.mxu0
  %v2049 = vadd.f32 0.0, %v2048
  %v2050 = vpop.f32.mrf.mxu0
  %v2051 = vadd.f32 0.0, %v2050
  %2052 = vmatmul.bf16.gmra.mxu0 %v413
  %v2053 = vpop.f32.mrf.mxu0
  %v2054 = vadd.f32 0.0, %v2053
  %v2055 = vpop.f32.mrf.mxu0
  %v2056 = vadd.f32 0.0, %v2055
  %2057 = vmatmul.bf16.gmra.mxu0 %v416
  %v2058 = vpop.f32.mrf.mxu0
  %v2059 = vadd.f32 0.0, %v2058
  %v2060 = vpop.f32.mrf.mxu0
  %v2061 = vadd.f32 0.0, %v2060
  %2062 = vmatmul.bf16.gmra.mxu0 %v419
  %v2063 = vpop.f32.mrf.mxu0
  %v2064 = vadd.f32 0.0, %v2063
  %v2065 = vpop.f32.mrf.mxu0
  %v2066 = vadd.f32 0.0, %v2065
  %2067 = vmatmul.bf16.gmra.mxu0 %v422
  %v2068 = vpop.f32.mrf.mxu0
  %v2069 = vadd.f32 0.0, %v2068
  %v2070 = vpop.f32.mrf.mxu0
  %v2071 = vadd.f32 0.0, %v2070
  %2072 = vmatmul.bf16.gmra.mxu0 %v425
  %v2073 = vpop.f32.mrf.mxu0
  %v2074 = vadd.f32 0.0, %v2073
  %v2075 = vpop.f32.mrf.mxu0
  %v2076 = vadd.f32 0.0, %v2075
  %2077 = vmatmul.bf16.gmra.mxu0 %v428
  %v2078 = vpop.f32.mrf.mxu0
  %v2079 = vadd.f32 0.0, %v2078
  %v2080 = vpop.f32.mrf.mxu0
  %v2081 = vadd.f32 0.0, %v2080
  %2082 = vmatmul.bf16.gmra.mxu0 %v431
  %v2083 = vpop.f32.mrf.mxu0
  %v2084 = vadd.f32 0.0, %v2083
  %v2085 = vpop.f32.mrf.mxu0
  %v2086 = vadd.f32 0.0, %v2085
  %2087 = vmatmul.bf16.gmra.mxu0 %v434
  %v2088 = vpop.f32.mrf.mxu0
  %v2089 = vadd.f32 0.0, %v2088
  %v2090 = vpop.f32.mrf.mxu0
  %v2091 = vadd.f32 0.0, %v2090
  %2092 = vmatmul.bf16.gmra.mxu0 %v437
  %v2093 = vpop.f32.mrf.mxu0
  %v2094 = vadd.f32 0.0, %v2093
  %v2095 = vpop.f32.mrf.mxu0
  %v2096 = vadd.f32 0.0, %v2095
  %2097 = vmatmul.bf16.gmra.mxu0 %v440
  %v2098 = vpop.f32.mrf.mxu0
  %v2099 = vadd.f32 0.0, %v2098
  %v2100 = vpop.f32.mrf.mxu0
  %v2101 = vadd.f32 0.0, %v2100
  %2102 = vmatmul.bf16.gmra.mxu0 %v443
  %v2103 = vpop.f32.mrf.mxu0
  %v2104 = vadd.f32 0.0, %v2103
  %v2105 = vpop.f32.mrf.mxu0
  %v2106 = vadd.f32 0.0, %v2105
  %2107 = vmatmul.bf16.gmra.mxu0 %v446
  %v2108 = vpop.f32.mrf.mxu0
  %v2109 = vadd.f32 0.0, %v2108
  %v2110 = vpop.f32.mrf.mxu0
  %v2111 = vadd.f32 0.0, %v2110
  %2112 = vmatmul.bf16.gmra.mxu0 %v449
  %v2113 = vpop.f32.mrf.mxu0
  %v2114 = vadd.f32 0.0, %v2113
  %v2115 = vpop.f32.mrf.mxu0
  %v2116 = vadd.f32 0.0, %v2115
  %2117 = vmatmul.bf16.gmra.mxu0 %v452
  %v2118 = vpop.f32.mrf.mxu0
  %v2119 = vadd.f32 0.0, %v2118
  %v2120 = vpop.f32.mrf.mxu0
  %v2121 = vadd.f32 0.0, %v2120
  %2122 = vmatmul.bf16.gmra.mxu0 %v455
  %v2123 = vpop.f32.mrf.mxu0
  %v2124 = vadd.f32 0.0, %v2123
  %v2125 = vpop.f32.mrf.mxu0
  %v2126 = vadd.f32 0.0, %v2125
  %2127 = vmatmul.bf16.gmra.mxu0 %v458
  %v2128 = vpop.f32.mrf.mxu0
  %v2129 = vadd.f32 0.0, %v2128
  %v2130 = vpop.f32.mrf.mxu0
  %v2131 = vadd.f32 0.0, %v2130
  %2132 = vmatmul.bf16.gmra.mxu0 %v461
  %v2133 = vpop.f32.mrf.mxu0
  %v2134 = vadd.f32 0.0, %v2133
  %v2135 = vpop.f32.mrf.mxu0
  %v2136 = vadd.f32 0.0, %v2135
  %2137 = vmatmul.bf16.gmra.mxu0 %v464
  %v2138 = vpop.f32.mrf.mxu0
  %v2139 = vadd.f32 0.0, %v2138
  %v2140 = vpop.f32.mrf.mxu0
  %v2141 = vadd.f32 0.0, %v2140
  %2142 = vmatmul.bf16.gmra.mxu0 %v467
  %v2143 = vpop.f32.mrf.mxu0
  %v2144 = vadd.f32 0.0, %v2143
  %v2145 = vpop.f32.mrf.mxu0
  %v2146 = vadd.f32 0.0, %v2145
  %2147 = vmatmul.bf16.gmra.mxu0 %v470
  %v2148 = vpop.f32.mrf.mxu0
  %v2149 = vadd.f32 0.0, %v2148
  %v2150 = vpop.f32.mrf.mxu0
  %v2151 = vadd.f32 0.0, %v2150
  %2152 = vmatmul.bf16.gmra.mxu0 %v473
  %v2153 = vpop.f32.mrf.mxu0
  %v2154 = vadd.f32 0.0, %v2153
  %v2155 = vpop.f32.mrf.mxu0
  %v2156 = vadd.f32 0.0, %v2155
  %2157 = vmatmul.bf16.gmra.mxu0 %v476
  %v2158 = vpop.f32.mrf.mxu0
  %v2159 = vadd.f32 0.0, %v2158
  %v2160 = vpop.f32.mrf.mxu0
  %v2161 = vadd.f32 0.0, %v2160
  %2162 = vmatmul.bf16.gmra.mxu0 %v479
  %v2163 = vpop.f32.mrf.mxu0
  %v2164 = vadd.f32 0.0, %v2163
  %v2165 = vpop.f32.mrf.mxu0
  %v2166 = vadd.f32 0.0, %v2165
  %2167 = vmatmul.bf16.gmra.mxu0 %v482
  %v2168 = vpop.f32.mrf.mxu0
  %v2169 = vadd.f32 0.0, %v2168
  %v2170 = vpop.f32.mrf.mxu0
  %v2171 = vadd.f32 0.0, %v2170
  %2172 = vmatmul.bf16.gmra.mxu0 %v485
  %v2173 = vpop.f32.mrf.mxu0
  %v2174 = vadd.f32 0.0, %v2173
  %v2175 = vpop.f32.mrf.mxu0
  %v2176 = vadd.f32 0.0, %v2175
  %2177 = vmatmul.bf16.gmra.mxu0 %v488
  %v2178 = vpop.f32.mrf.mxu0
  %v2179 = vadd.f32 0.0, %v2178
  %v2180 = vpop.f32.mrf.mxu0
  %v2181 = vadd.f32 0.0, %v2180
  %2182 = vmatmul.bf16.gmra.mxu0 %v491
  %v2183 = vpop.f32.mrf.mxu0
  %v2184 = vadd.f32 0.0, %v2183
  %v2185 = vpop.f32.mrf.mxu0
  %v2186 = vadd.f32 0.0, %v2185
  %2187 = vmatmul.bf16.gmra.mxu0 %v494
  %v2188 = vpop.f32.mrf.mxu0
  %v2189 = vadd.f32 0.0, %v2188
  %v2190 = vpop.f32.mrf.mxu0
  %v2191 = vadd.f32 0.0, %v2190
  %2192 = vmatmul.bf16.gmra.mxu0 %v497
  %v2193 = vpop.f32.mrf.mxu0
  %v2194 = vadd.f32 0.0, %v2193
  %v2195 = vpop.f32.mrf.mxu0
  %v2196 = vadd.f32 0.0, %v2195
  %2197 = vmatmul.bf16.gmra.mxu0 %v500
  %v2198 = vpop.f32.mrf.mxu0
  %v2199 = vadd.f32 0.0, %v2198
  %v2200 = vpop.f32.mrf.mxu0
  %v2201 = vadd.f32 0.0, %v2200
  %2202 = vmatmul.bf16.gmra.mxu0 %v503
  %v2203 = vpop.f32.mrf.mxu0
  %v2204 = vadd.f32 0.0, %v2203
  %v2205 = vpop.f32.mrf.mxu0
  %v2206 = vadd.f32 0.0, %v2205
  %2207 = vmatmul.bf16.gmra.mxu0 %v506
  %v2208 = vpop.f32.mrf.mxu0
  %v2209 = vadd.f32 0.0, %v2208
  %v2210 = vpop.f32.mrf.mxu0
  %v2211 = vadd.f32 0.0, %v2210
  %2212 = vmatmul.bf16.gmra.mxu0 %v509
  %v2213 = vpop.f32.mrf.mxu0
  %v2214 = vadd.f32 0.0, %v2213
  %v2215 = vpop.f32.mrf.mxu0
  %v2216 = vadd.f32 0.0, %v2215
  %2217 = vmatmul.bf16.gmra.mxu0 %v512
  %v2218 = vpop.f32.mrf.mxu0
  %v2219 = vadd.f32 0.0, %v2218
  %v2220 = vpop.f32.mrf.mxu0
  %v2221 = vadd.f32 0.0, %v2220
  %2222 = vmatmul.bf16.gmra.mxu0 %v515
  %v2223 = vpop.f32.mrf.mxu0
  %v2224 = vadd.f32 0.0, %v2223
  %v2225 = vpop.f32.mrf.mxu0
  %v2226 = vadd.f32 0.0, %v2225
  %2227 = vmatmul.bf16.gmra.mxu0 %v518
  %v2228 = vpop.f32.mrf.mxu0
  %v2229 = vadd.f32 0.0, %v2228
  %v2230 = vpop.f32.mrf.mxu0
  %v2231 = vadd.f32 0.0, %v2230
  %2232 = vmatmul.bf16.gmra.mxu0 %v521
  %v2233 = vpop.f32.mrf.mxu0
  %v2234 = vadd.f32 0.0, %v2233
  %v2235 = vpop.f32.mrf.mxu0
  %v2236 = vadd.f32 0.0, %v2235
  %2237 = vmatmul.bf16.gmra.mxu0 %v524
  %v2238 = vpop.f32.mrf.mxu0
  %v2239 = vadd.f32 0.0, %v2238
  %v2240 = vpop.f32.mrf.mxu0
  %v2241 = vadd.f32 0.0, %v2240
  %2242 = vmatmul.bf16.gmra.mxu0 %v527
  %v2243 = vpop.f32.mrf.mxu0
  %v2244 = vadd.f32 0.0, %v2243
  %v2245 = vpop.f32.mrf.mxu0
  %v2246 = vadd.f32 0.0, %v2245
  %2247 = vmatmul.bf16.gmra.mxu0 %v530
  %v2248 = vpop.f32.mrf.mxu0
  %v2249 = vadd.f32 0.0, %v2248
  %v2250 = vpop.f32.mrf.mxu0
  %v2251 = vadd.f32 0.0, %v2250
  %2252 = vmatmul.bf16.gmra.mxu0 %v533
  %v2253 = vpop.f32.mrf.mxu0
  %v2254 = vadd.f32 0.0, %v2253
  %v2255 = vpop.f32.mrf.mxu0
  %v2256 = vadd.f32 0.0, %v2255
  %2257 = vmatmul.bf16.gmra.mxu0 %v536
  %v2258 = vpop.f32.mrf.mxu0
  %v2259 = vadd.f32 0.0, %v2258
  %v2260 = vpop.f32.mrf.mxu0
  %v2261 = vadd.f32 0.0, %v2260
  %2262 = vmatmul.bf16.gmra.mxu0 %v539
  %v2263 = vpop.f32.mrf.mxu0
  %v2264 = vadd.f32 0.0, %v2263
  %v2265 = vpop.f32.mrf.mxu0
  %v2266 = vadd.f32 0.0, %v2265
  %2267 = vmatmul.bf16.gmra.mxu0 %v542
  %v2268 = vpop.f32.mrf.mxu0
  %v2269 = vadd.f32 0.0, %v2268
  %v2270 = vpop.f32.mrf.mxu0
  %v2271 = vadd.f32 0.0, %v2270
  %2272 = vdwg.mxu0
  %v2273 = vmax.f32 %v1882, %v2024
  %v2274 = vmax.f32 %v1883, %v2026
  %v2275 = vmax.f32 %v1884, %v2029
  %v2276 = vmax.f32 %v1885, %v2031
  %v2277 = vmax.f32 %v1886, %v2034
  %v2278 = vmax.f32 %v1887, %v2036
  %v2279 = vmax.f32 %v1888, %v2039
  %v2280 = vmax.f32 %v1889, %v2041
  %v2281 = vmax.f32 %v1890, %v2044
  %v2282 = vmax.f32 %v1891, %v2046
  %v2283 = vmax.f32 %v1892, %v2049
  %v2284 = vmax.f32 %v1893, %v2051
  %v2285 = vmax.f32 %v1894, %v2054
  %v2286 = vmax.f32 %v1895, %v2056
  %v2287 = vmax.f32 %v1896, %v2059
  %v2288 = vmax.f32 %v1897, %v2061
  %v2289 = vmax.f32 %v1898, %v2064
  %v2290 = vmax.f32 %v1899, %v2066
  %v2291 = vmax.f32 %v1900, %v2069
  %v2292 = vmax.f32 %v1901, %v2071
  %v2293 = vmax.f32 %v1902, %v2074
  %v2294 = vmax.f32 %v1903, %v2076
  %v2295 = vmax.f32 %v1904, %v2079
  %v2296 = vmax.f32 %v1905, %v2081
  %v2297 = vmax.f32 %v1906, %v2084
  %v2298 = vmax.f32 %v1907, %v2086
  %v2299 = vmax.f32 %v1908, %v2089
  %v2300 = vmax.f32 %v1909, %v2091
  %v2301 = vmax.f32 %v1910, %v2094
  %v2302 = vmax.f32 %v1911, %v2096
  %v2303 = vmax.f32 %v1912, %v2099
  %v2304 = vmax.f32 %v1913, %v2101
  %v2305 = vmax.f32 %v1914, %v2104
  %v2306 = vmax.f32 %v1915, %v2106
  %v2307 = vmax.f32 %v1916, %v2109
  %v2308 = vmax.f32 %v1917, %v2111
  %v2309 = vmax.f32 %v1918, %v2114
  %v2310 = vmax.f32 %v1919, %v2116
  %v2311 = vmax.f32 %v1920, %v2119
  %v2312 = vmax.f32 %v1921, %v2121
  %v2313 = vmax.f32 %v1922, %v2124
  %v2314 = vmax.f32 %v1923, %v2126
  %v2315 = vmax.f32 %v1924, %v2129
  %v2316 = vmax.f32 %v1925, %v2131
  %v2317 = vmax.f32 %v1926, %v2134
  %v2318 = vmax.f32 %v1927, %v2136
  %v2319 = vmax.f32 %v1928, %v2139
  %v2320 = vmax.f32 %v1929, %v2141
  %v2321 = vmax.f32 %v1930, %v2144
  %v2322 = vmax.f32 %v1931, %v2146
  %v2323 = vmax.f32 %v1932, %v2149
  %v2324 = vmax.f32 %v1933, %v2151
  %v2325 = vmax.f32 %v1934, %v2154
  %v2326 = vmax.f32 %v1935, %v2156
  %v2327 = vmax.f32 %v1936, %v2159
  %v2328 = vmax.f32 %v1937, %v2161
  %v2329 = vmax.f32 %v1938, %v2164
  %v2330 = vmax.f32 %v1939, %v2166
  %v2331 = vmax.f32 %v1940, %v2169
  %v2332 = vmax.f32 %v1941, %v2171
  %v2333 = vmax.f32 %v1942, %v2174
  %v2334 = vmax.f32 %v1943, %v2176
  %v2335 = vmax.f32 %v1944, %v2179
  %v2336 = vmax.f32 %v1945, %v2181
  %v2337 = vmax.f32 %v1946, %v2184
  %v2338 = vmax.f32 %v1947, %v2186
  %v2339 = vmax.f32 %v1948, %v2189
  %v2340 = vmax.f32 %v1949, %v2191
  %v2341 = vmax.f32 %v1950, %v2194
  %v2342 = vmax.f32 %v1951, %v2196
  %v2343 = vmax.f32 %v1952, %v2199
  %v2344 = vmax.f32 %v1953, %v2201
  %v2345 = vmax.f32 %v1954, %v2204
  %v2346 = vmax.f32 %v1955, %v2206
  %v2347 = vmax.f32 %v1956, %v2209
  %v2348 = vmax.f32 %v1957, %v2211
  %v2349 = vmax.f32 %v1958, %v2214
  %v2350 = vmax.f32 %v1959, %v2216
  %v2351 = vmax.f32 %v1960, %v2219
  %v2352 = vmax.f32 %v1961, %v2221
  %v2353 = vmax.f32 %v1962, %v2224
  %v2354 = vmax.f32 %v1963, %v2226
  %v2355 = vmax.f32 %v1964, %v2229
  %v2356 = vmax.f32 %v1965, %v2231
  %v2357 = vmax.f32 %v1966, %v2234
  %v2358 = vmax.f32 %v1967, %v2236
  %v2359 = vmax.f32 %v1968, %v2239
  %v2360 = vmax.f32 %v1969, %v2241
  %v2361 = vmax.f32 %v1970, %v2244
  %v2362 = vmax.f32 %v1971, %v2246
  %v2363 = vmax.f32 %v1972, %v2249
  %v2364 = vmax.f32 %v1973, %v2251
  %v2365 = vmax.f32 %v1974, %v2254
  %v2366 = vmax.f32 %v1975, %v2256
  %v2367 = vmax.f32 %v1976, %v2259
  %v2368 = vmax.f32 %v1977, %v2261
  %v2369 = vmax.f32 %v1978, %v2264
  %v2370 = vmax.f32 %v1979, %v2266
  %v2371 = vmax.f32 %v1980, %v2269
  %v2372 = vmax.f32 %v1981, %v2271
  %s2373 = scalar_lea.vmem %s1, 140
  %v2374 = vld [vmem:[%s2373] sm:$0xf]
  %v2375 = vld [vmem:[%s2373 + $0x4] sm:$0xf]
  %v2376 = vld [vmem:[%s2373 + $0x8] sm:$0xf]
  %v2377 = vld [vmem:[%s2373 + $0xc] sm:$0xf]
  %v2378 = vld [vmem:[%s2373 + $0x10] sm:$0xf]
  %v2379 = vld [vmem:[%s2373 + $0x14] sm:$0xf]
  %v2380 = vld [vmem:[%s2373 + $0x18] sm:$0x1]
  %v2388 = vunpack.c.l.b16 %v2374
  %v2389 = vunpack.c.l.b16 %v2375
  %v2390 = vunpack.c.l.b16 %v2376
  %v2391 = vunpack.c.l.b16 %v2377
  %v2392 = vunpack.c.l.b16 %v2378
  %v2393 = vunpack.c.l.b16 %v2379
  %v2394 = vunpack.c.l.b16 %v2380
  %v2395 = vpack.c.b16 %v2389, %v2388
  %v2396 = vpack.c.b16 %v2391, %v2390
  %v2397 = vpack.c.b16 %v2393, %v2392
  %v2398 = vpack.c.b16 %v2394, %v2394
  %v2403 = vand.u32 %v2398, %v546
  %2405 = vmatpush.bf16.msra.mxu0 0
  %2406 = vmatpush.bf16.msra.mxu0 0
  %2407 = vmatpush.bf16.msra.mxu0 0
  %2408 = vmatpush.bf16.msra.mxu0 0
  %2409 = vmatpush.bf16.msra.mxu0 %v2403
  %2410 = vmatpush.bf16.msra.mxu0 %v2397
  %2411 = vmatpush.bf16.msra.mxu0 %v2396
  %2412 = vmatpush.bf16.msra.mxu0 %v2395
  %2413 = vmatmul.bf16.gmra.mxu0 %v395
  %v2414 = vpop.f32.mrf.mxu0
  %v2415 = vadd.f32 0.0, %v2414
  %v2416 = vpop.f32.mrf.mxu0
  %v2417 = vadd.f32 0.0, %v2416
  %2418 = vmatmul.bf16.gmra.mxu0 %v398
  %v2419 = vpop.f32.mrf.mxu0
  %v2420 = vadd.f32 0.0, %v2419
  %v2421 = vpop.f32.mrf.mxu0
  %v2422 = vadd.f32 0.0, %v2421
  %2423 = vmatmul.bf16.gmra.mxu0 %v401
  %v2424 = vpop.f32.mrf.mxu0
  %v2425 = vadd.f32 0.0, %v2424
  %v2426 = vpop.f32.mrf.mxu0
  %v2427 = vadd.f32 0.0, %v2426
  %2428 = vmatmul.bf16.gmra.mxu0 %v404
  %v2429 = vpop.f32.mrf.mxu0
  %v2430 = vadd.f32 0.0, %v2429
  %v2431 = vpop.f32.mrf.mxu0
  %v2432 = vadd.f32 0.0, %v2431
  %2433 = vmatmul.bf16.gmra.mxu0 %v407
  %v2434 = vpop.f32.mrf.mxu0
  %v2435 = vadd.f32 0.0, %v2434
  %v2436 = vpop.f32.mrf.mxu0
  %v2437 = vadd.f32 0.0, %v2436
  %2438 = vmatmul.bf16.gmra.mxu0 %v410
  %v2439 = vpop.f32.mrf.mxu0
  %v2440 = vadd.f32 0.0, %v2439
  %v2441 = vpop.f32.mrf.mxu0
  %v2442 = vadd.f32 0.0, %v2441
  %2443 = vmatmul.bf16.gmra.mxu0 %v413
  %v2444 = vpop.f32.mrf.mxu0
  %v2445 = vadd.f32 0.0, %v2444
  %v2446 = vpop.f32.mrf.mxu0
  %v2447 = vadd.f32 0.0, %v2446
  %2448 = vmatmul.bf16.gmra.mxu0 %v416
  %v2449 = vpop.f32.mrf.mxu0
  %v2450 = vadd.f32 0.0, %v2449
  %v2451 = vpop.f32.mrf.mxu0
  %v2452 = vadd.f32 0.0, %v2451
  %2453 = vmatmul.bf16.gmra.mxu0 %v419
  %v2454 = vpop.f32.mrf.mxu0
  %v2455 = vadd.f32 0.0, %v2454
  %v2456 = vpop.f32.mrf.mxu0
  %v2457 = vadd.f32 0.0, %v2456
  %2458 = vmatmul.bf16.gmra.mxu0 %v422
  %v2459 = vpop.f32.mrf.mxu0
  %v2460 = vadd.f32 0.0, %v2459
  %v2461 = vpop.f32.mrf.mxu0
  %v2462 = vadd.f32 0.0, %v2461
  %2463 = vmatmul.bf16.gmra.mxu0 %v425
  %v2464 = vpop.f32.mrf.mxu0
  %v2465 = vadd.f32 0.0, %v2464
  %v2466 = vpop.f32.mrf.mxu0
  %v2467 = vadd.f32 0.0, %v2466
  %2468 = vmatmul.bf16.gmra.mxu0 %v428
  %v2469 = vpop.f32.mrf.mxu0
  %v2470 = vadd.f32 0.0, %v2469
  %v2471 = vpop.f32.mrf.mxu0
  %v2472 = vadd.f32 0.0, %v2471
  %2473 = vmatmul.bf16.gmra.mxu0 %v431
  %v2474 = vpop.f32.mrf.mxu0
  %v2475 = vadd.f32 0.0, %v2474
  %v2476 = vpop.f32.mrf.mxu0
  %v2477 = vadd.f32 0.0, %v2476
  %2478 = vmatmul.bf16.gmra.mxu0 %v434
  %v2479 = vpop.f32.mrf.mxu0
  %v2480 = vadd.f32 0.0, %v2479
  %v2481 = vpop.f32.mrf.mxu0
  %v2482 = vadd.f32 0.0, %v2481
  %2483 = vmatmul.bf16.gmra.mxu0 %v437
  %v2484 = vpop.f32.mrf.mxu0
  %v2485 = vadd.f32 0.0, %v2484
  %v2486 = vpop.f32.mrf.mxu0
  %v2487 = vadd.f32 0.0, %v2486
  %2488 = vmatmul.bf16.gmra.mxu0 %v440
  %v2489 = vpop.f32.mrf.mxu0
  %v2490 = vadd.f32 0.0, %v2489
  %v2491 = vpop.f32.mrf.mxu0
  %v2492 = vadd.f32 0.0, %v2491
  %2493 = vmatmul.bf16.gmra.mxu0 %v443
  %v2494 = vpop.f32.mrf.mxu0
  %v2495 = vadd.f32 0.0, %v2494
  %v2496 = vpop.f32.mrf.mxu0
  %v2497 = vadd.f32 0.0, %v2496
  %2498 = vmatmul.bf16.gmra.mxu0 %v446
  %v2499 = vpop.f32.mrf.mxu0
  %v2500 = vadd.f32 0.0, %v2499
  %v2501 = vpop.f32.mrf.mxu0
  %v2502 = vadd.f32 0.0, %v2501
  %2503 = vmatmul.bf16.gmra.mxu0 %v449
  %v2504 = vpop.f32.mrf.mxu0
  %v2505 = vadd.f32 0.0, %v2504
  %v2506 = vpop.f32.mrf.mxu0
  %v2507 = vadd.f32 0.0, %v2506
  %2508 = vmatmul.bf16.gmra.mxu0 %v452
  %v2509 = vpop.f32.mrf.mxu0
  %v2510 = vadd.f32 0.0, %v2509
  %v2511 = vpop.f32.mrf.mxu0
  %v2512 = vadd.f32 0.0, %v2511
  %2513 = vmatmul.bf16.gmra.mxu0 %v455
  %v2514 = vpop.f32.mrf.mxu0
  %v2515 = vadd.f32 0.0, %v2514
  %v2516 = vpop.f32.mrf.mxu0
  %v2517 = vadd.f32 0.0, %v2516
  %2518 = vmatmul.bf16.gmra.mxu0 %v458
  %v2519 = vpop.f32.mrf.mxu0
  %v2520 = vadd.f32 0.0, %v2519
  %v2521 = vpop.f32.mrf.mxu0
  %v2522 = vadd.f32 0.0, %v2521
  %2523 = vmatmul.bf16.gmra.mxu0 %v461
  %v2524 = vpop.f32.mrf.mxu0
  %v2525 = vadd.f32 0.0, %v2524
  %v2526 = vpop.f32.mrf.mxu0
  %v2527 = vadd.f32 0.0, %v2526
  %2528 = vmatmul.bf16.gmra.mxu0 %v464
  %v2529 = vpop.f32.mrf.mxu0
  %v2530 = vadd.f32 0.0, %v2529
  %v2531 = vpop.f32.mrf.mxu0
  %v2532 = vadd.f32 0.0, %v2531
  %2533 = vmatmul.bf16.gmra.mxu0 %v467
  %v2534 = vpop.f32.mrf.mxu0
  %v2535 = vadd.f32 0.0, %v2534
  %v2536 = vpop.f32.mrf.mxu0
  %v2537 = vadd.f32 0.0, %v2536
  %2538 = vmatmul.bf16.gmra.mxu0 %v470
  %v2539 = vpop.f32.mrf.mxu0
  %v2540 = vadd.f32 0.0, %v2539
  %v2541 = vpop.f32.mrf.mxu0
  %v2542 = vadd.f32 0.0, %v2541
  %2543 = vmatmul.bf16.gmra.mxu0 %v473
  %v2544 = vpop.f32.mrf.mxu0
  %v2545 = vadd.f32 0.0, %v2544
  %v2546 = vpop.f32.mrf.mxu0
  %v2547 = vadd.f32 0.0, %v2546
  %2548 = vmatmul.bf16.gmra.mxu0 %v476
  %v2549 = vpop.f32.mrf.mxu0
  %v2550 = vadd.f32 0.0, %v2549
  %v2551 = vpop.f32.mrf.mxu0
  %v2552 = vadd.f32 0.0, %v2551
  %2553 = vmatmul.bf16.gmra.mxu0 %v479
  %v2554 = vpop.f32.mrf.mxu0
  %v2555 = vadd.f32 0.0, %v2554
  %v2556 = vpop.f32.mrf.mxu0
  %v2557 = vadd.f32 0.0, %v2556
  %2558 = vmatmul.bf16.gmra.mxu0 %v482
  %v2559 = vpop.f32.mrf.mxu0
  %v2560 = vadd.f32 0.0, %v2559
  %v2561 = vpop.f32.mrf.mxu0
  %v2562 = vadd.f32 0.0, %v2561
  %2563 = vmatmul.bf16.gmra.mxu0 %v485
  %v2564 = vpop.f32.mrf.mxu0
  %v2565 = vadd.f32 0.0, %v2564
  %v2566 = vpop.f32.mrf.mxu0
  %v2567 = vadd.f32 0.0, %v2566
  %2568 = vmatmul.bf16.gmra.mxu0 %v488
  %v2569 = vpop.f32.mrf.mxu0
  %v2570 = vadd.f32 0.0, %v2569
  %v2571 = vpop.f32.mrf.mxu0
  %v2572 = vadd.f32 0.0, %v2571
  %2573 = vmatmul.bf16.gmra.mxu0 %v491
  %v2574 = vpop.f32.mrf.mxu0
  %v2575 = vadd.f32 0.0, %v2574
  %v2576 = vpop.f32.mrf.mxu0
  %v2577 = vadd.f32 0.0, %v2576
  %2578 = vmatmul.bf16.gmra.mxu0 %v494
  %v2579 = vpop.f32.mrf.mxu0
  %v2580 = vadd.f32 0.0, %v2579
  %v2581 = vpop.f32.mrf.mxu0
  %v2582 = vadd.f32 0.0, %v2581
  %2583 = vmatmul.bf16.gmra.mxu0 %v497
  %v2584 = vpop.f32.mrf.mxu0
  %v2585 = vadd.f32 0.0, %v2584
  %v2586 = vpop.f32.mrf.mxu0
  %v2587 = vadd.f32 0.0, %v2586
  %2588 = vmatmul.bf16.gmra.mxu0 %v500
  %v2589 = vpop.f32.mrf.mxu0
  %v2590 = vadd.f32 0.0, %v2589
  %v2591 = vpop.f32.mrf.mxu0
  %v2592 = vadd.f32 0.0, %v2591
  %2593 = vmatmul.bf16.gmra.mxu0 %v503
  %v2594 = vpop.f32.mrf.mxu0
  %v2595 = vadd.f32 0.0, %v2594
  %v2596 = vpop.f32.mrf.mxu0
  %v2597 = vadd.f32 0.0, %v2596
  %2598 = vmatmul.bf16.gmra.mxu0 %v506
  %v2599 = vpop.f32.mrf.mxu0
  %v2600 = vadd.f32 0.0, %v2599
  %v2601 = vpop.f32.mrf.mxu0
  %v2602 = vadd.f32 0.0, %v2601
  %2603 = vmatmul.bf16.gmra.mxu0 %v509
  %v2604 = vpop.f32.mrf.mxu0
  %v2605 = vadd.f32 0.0, %v2604
  %v2606 = vpop.f32.mrf.mxu0
  %v2607 = vadd.f32 0.0, %v2606
  %2608 = vmatmul.bf16.gmra.mxu0 %v512
  %v2609 = vpop.f32.mrf.mxu0
  %v2610 = vadd.f32 0.0, %v2609
  %v2611 = vpop.f32.mrf.mxu0
  %v2612 = vadd.f32 0.0, %v2611
  %2613 = vmatmul.bf16.gmra.mxu0 %v515
  %v2614 = vpop.f32.mrf.mxu0
  %v2615 = vadd.f32 0.0, %v2614
  %v2616 = vpop.f32.mrf.mxu0
  %v2617 = vadd.f32 0.0, %v2616
  %2618 = vmatmul.bf16.gmra.mxu0 %v518
  %v2619 = vpop.f32.mrf.mxu0
  %v2620 = vadd.f32 0.0, %v2619
  %v2621 = vpop.f32.mrf.mxu0
  %v2622 = vadd.f32 0.0, %v2621
  %2623 = vmatmul.bf16.gmra.mxu0 %v521
  %v2624 = vpop.f32.mrf.mxu0
  %v2625 = vadd.f32 0.0, %v2624
  %v2626 = vpop.f32.mrf.mxu0
  %v2627 = vadd.f32 0.0, %v2626
  %2628 = vmatmul.bf16.gmra.mxu0 %v524
  %v2629 = vpop.f32.mrf.mxu0
  %v2630 = vadd.f32 0.0, %v2629
  %v2631 = vpop.f32.mrf.mxu0
  %v2632 = vadd.f32 0.0, %v2631
  %2633 = vmatmul.bf16.gmra.mxu0 %v527
  %v2634 = vpop.f32.mrf.mxu0
  %v2635 = vadd.f32 0.0, %v2634
  %v2636 = vpop.f32.mrf.mxu0
  %v2637 = vadd.f32 0.0, %v2636
  %2638 = vmatmul.bf16.gmra.mxu0 %v530
  %v2639 = vpop.f32.mrf.mxu0
  %v2640 = vadd.f32 0.0, %v2639
  %v2641 = vpop.f32.mrf.mxu0
  %v2642 = vadd.f32 0.0, %v2641
  %2643 = vmatmul.bf16.gmra.mxu0 %v533
  %v2644 = vpop.f32.mrf.mxu0
  %v2645 = vadd.f32 0.0, %v2644
  %v2646 = vpop.f32.mrf.mxu0
  %v2647 = vadd.f32 0.0, %v2646
  %2648 = vmatmul.bf16.gmra.mxu0 %v536
  %v2649 = vpop.f32.mrf.mxu0
  %v2650 = vadd.f32 0.0, %v2649
  %v2651 = vpop.f32.mrf.mxu0
  %v2652 = vadd.f32 0.0, %v2651
  %2653 = vmatmul.bf16.gmra.mxu0 %v539
  %v2654 = vpop.f32.mrf.mxu0
  %v2655 = vadd.f32 0.0, %v2654
  %v2656 = vpop.f32.mrf.mxu0
  %v2657 = vadd.f32 0.0, %v2656
  %2658 = vmatmul.bf16.gmra.mxu0 %v542
  %v2659 = vpop.f32.mrf.mxu0
  %v2660 = vadd.f32 0.0, %v2659
  %v2661 = vpop.f32.mrf.mxu0
  %v2662 = vadd.f32 0.0, %v2661
  %2663 = vdwg.mxu0
  %v2664 = vmax.f32 %v2273, %v2415
  %v2665 = vmax.f32 %v2274, %v2417
  %v2666 = vmax.f32 %v2275, %v2420
  %v2667 = vmax.f32 %v2276, %v2422
  %v2668 = vmax.f32 %v2277, %v2425
  %v2669 = vmax.f32 %v2278, %v2427
  %v2670 = vmax.f32 %v2279, %v2430
  %v2671 = vmax.f32 %v2280, %v2432
  %v2672 = vmax.f32 %v2281, %v2435
  %v2673 = vmax.f32 %v2282, %v2437
  %v2674 = vmax.f32 %v2283, %v2440
  %v2675 = vmax.f32 %v2284, %v2442
  %v2676 = vmax.f32 %v2285, %v2445
  %v2677 = vmax.f32 %v2286, %v2447
  %v2678 = vmax.f32 %v2287, %v2450
  %v2679 = vmax.f32 %v2288, %v2452
  %v2680 = vmax.f32 %v2289, %v2455
  %v2681 = vmax.f32 %v2290, %v2457
  %v2682 = vmax.f32 %v2291, %v2460
  %v2683 = vmax.f32 %v2292, %v2462
  %v2684 = vmax.f32 %v2293, %v2465
  %v2685 = vmax.f32 %v2294, %v2467
  %v2686 = vmax.f32 %v2295, %v2470
  %v2687 = vmax.f32 %v2296, %v2472
  %v2688 = vmax.f32 %v2297, %v2475
  %v2689 = vmax.f32 %v2298, %v2477
  %v2690 = vmax.f32 %v2299, %v2480
  %v2691 = vmax.f32 %v2300, %v2482
  %v2692 = vmax.f32 %v2301, %v2485
  %v2693 = vmax.f32 %v2302, %v2487
  %v2694 = vmax.f32 %v2303, %v2490
  %v2695 = vmax.f32 %v2304, %v2492
  %v2696 = vmax.f32 %v2305, %v2495
  %v2697 = vmax.f32 %v2306, %v2497
  %v2698 = vmax.f32 %v2307, %v2500
  %v2699 = vmax.f32 %v2308, %v2502
  %v2700 = vmax.f32 %v2309, %v2505
  %v2701 = vmax.f32 %v2310, %v2507
  %v2702 = vmax.f32 %v2311, %v2510
  %v2703 = vmax.f32 %v2312, %v2512
  %v2704 = vmax.f32 %v2313, %v2515
  %v2705 = vmax.f32 %v2314, %v2517
  %v2706 = vmax.f32 %v2315, %v2520
  %v2707 = vmax.f32 %v2316, %v2522
  %v2708 = vmax.f32 %v2317, %v2525
  %v2709 = vmax.f32 %v2318, %v2527
  %v2710 = vmax.f32 %v2319, %v2530
  %v2711 = vmax.f32 %v2320, %v2532
  %v2712 = vmax.f32 %v2321, %v2535
  %v2713 = vmax.f32 %v2322, %v2537
  %v2714 = vmax.f32 %v2323, %v2540
  %v2715 = vmax.f32 %v2324, %v2542
  %v2716 = vmax.f32 %v2325, %v2545
  %v2717 = vmax.f32 %v2326, %v2547
  %v2718 = vmax.f32 %v2327, %v2550
  %v2719 = vmax.f32 %v2328, %v2552
  %v2720 = vmax.f32 %v2329, %v2555
  %v2721 = vmax.f32 %v2330, %v2557
  %v2722 = vmax.f32 %v2331, %v2560
  %v2723 = vmax.f32 %v2332, %v2562
  %v2724 = vmax.f32 %v2333, %v2565
  %v2725 = vmax.f32 %v2334, %v2567
  %v2726 = vmax.f32 %v2335, %v2570
  %v2727 = vmax.f32 %v2336, %v2572
  %v2728 = vmax.f32 %v2337, %v2575
  %v2729 = vmax.f32 %v2338, %v2577
  %v2730 = vmax.f32 %v2339, %v2580
  %v2731 = vmax.f32 %v2340, %v2582
  %v2732 = vmax.f32 %v2341, %v2585
  %v2733 = vmax.f32 %v2342, %v2587
  %v2734 = vmax.f32 %v2343, %v2590
  %v2735 = vmax.f32 %v2344, %v2592
  %v2736 = vmax.f32 %v2345, %v2595
  %v2737 = vmax.f32 %v2346, %v2597
  %v2738 = vmax.f32 %v2347, %v2600
  %v2739 = vmax.f32 %v2348, %v2602
  %v2740 = vmax.f32 %v2349, %v2605
  %v2741 = vmax.f32 %v2350, %v2607
  %v2742 = vmax.f32 %v2351, %v2610
  %v2743 = vmax.f32 %v2352, %v2612
  %v2744 = vmax.f32 %v2353, %v2615
  %v2745 = vmax.f32 %v2354, %v2617
  %v2746 = vmax.f32 %v2355, %v2620
  %v2747 = vmax.f32 %v2356, %v2622
  %v2748 = vmax.f32 %v2357, %v2625
  %v2749 = vmax.f32 %v2358, %v2627
  %v2750 = vmax.f32 %v2359, %v2630
  %v2751 = vmax.f32 %v2360, %v2632
  %v2752 = vmax.f32 %v2361, %v2635
  %v2753 = vmax.f32 %v2362, %v2637
  %v2754 = vmax.f32 %v2363, %v2640
  %v2755 = vmax.f32 %v2364, %v2642
  %v2756 = vmax.f32 %v2365, %v2645
  %v2757 = vmax.f32 %v2366, %v2647
  %v2758 = vmax.f32 %v2367, %v2650
  %v2759 = vmax.f32 %v2368, %v2652
  %v2760 = vmax.f32 %v2369, %v2655
  %v2761 = vmax.f32 %v2370, %v2657
  %v2762 = vmax.f32 %v2371, %v2660
  %v2763 = vmax.f32 %v2372, %v2662
  %s2764 = scalar_lea.vmem %s1, 168
  %v2765 = vld [vmem:[%s2764] sm:$0xf]
  %v2766 = vld [vmem:[%s2764 + $0x4] sm:$0xf]
  %v2767 = vld [vmem:[%s2764 + $0x8] sm:$0xf]
  %v2768 = vld [vmem:[%s2764 + $0xc] sm:$0xf]
  %v2769 = vld [vmem:[%s2764 + $0x10] sm:$0xf]
  %v2770 = vld [vmem:[%s2764 + $0x14] sm:$0xf]
  %v2771 = vld [vmem:[%s2764 + $0x18] sm:$0x1]
  %v2779 = vunpack.c.l.b16 %v2765
  %v2780 = vunpack.c.l.b16 %v2766
  %v2781 = vunpack.c.l.b16 %v2767
  %v2782 = vunpack.c.l.b16 %v2768
  %v2783 = vunpack.c.l.b16 %v2769
  %v2784 = vunpack.c.l.b16 %v2770
  %v2785 = vunpack.c.l.b16 %v2771
  %v2786 = vpack.c.b16 %v2780, %v2779
  %v2787 = vpack.c.b16 %v2782, %v2781
  %v2788 = vpack.c.b16 %v2784, %v2783
  %v2789 = vpack.c.b16 %v2785, %v2785
  %v2794 = vand.u32 %v2789, %v546
  %2796 = vmatpush.bf16.msra.mxu0 0
  %2797 = vmatpush.bf16.msra.mxu0 0
  %2798 = vmatpush.bf16.msra.mxu0 0
  %2799 = vmatpush.bf16.msra.mxu0 0
  %2800 = vmatpush.bf16.msra.mxu0 %v2794
  %2801 = vmatpush.bf16.msra.mxu0 %v2788
  %2802 = vmatpush.bf16.msra.mxu0 %v2787
  %2803 = vmatpush.bf16.msra.mxu0 %v2786
  %2804 = vmatmul.bf16.gmra.mxu0 %v395
  %v2805 = vpop.f32.mrf.mxu0
  %v2806 = vadd.f32 0.0, %v2805
  %v2807 = vpop.f32.mrf.mxu0
  %v2808 = vadd.f32 0.0, %v2807
  %2809 = vmatmul.bf16.gmra.mxu0 %v398
  %v2810 = vpop.f32.mrf.mxu0
  %v2811 = vadd.f32 0.0, %v2810
  %v2812 = vpop.f32.mrf.mxu0
  %v2813 = vadd.f32 0.0, %v2812
  %2814 = vmatmul.bf16.gmra.mxu0 %v401
  %v2815 = vpop.f32.mrf.mxu0
  %v2816 = vadd.f32 0.0, %v2815
  %v2817 = vpop.f32.mrf.mxu0
  %v2818 = vadd.f32 0.0, %v2817
  %2819 = vmatmul.bf16.gmra.mxu0 %v404
  %v2820 = vpop.f32.mrf.mxu0
  %v2821 = vadd.f32 0.0, %v2820
  %v2822 = vpop.f32.mrf.mxu0
  %v2823 = vadd.f32 0.0, %v2822
  %2824 = vmatmul.bf16.gmra.mxu0 %v407
  %v2825 = vpop.f32.mrf.mxu0
  %v2826 = vadd.f32 0.0, %v2825
  %v2827 = vpop.f32.mrf.mxu0
  %v2828 = vadd.f32 0.0, %v2827
  %2829 = vmatmul.bf16.gmra.mxu0 %v410
  %v2830 = vpop.f32.mrf.mxu0
  %v2831 = vadd.f32 0.0, %v2830
  %v2832 = vpop.f32.mrf.mxu0
  %v2833 = vadd.f32 0.0, %v2832
  %2834 = vmatmul.bf16.gmra.mxu0 %v413
  %v2835 = vpop.f32.mrf.mxu0
  %v2836 = vadd.f32 0.0, %v2835
  %v2837 = vpop.f32.mrf.mxu0
  %v2838 = vadd.f32 0.0, %v2837
  %2839 = vmatmul.bf16.gmra.mxu0 %v416
  %v2840 = vpop.f32.mrf.mxu0
  %v2841 = vadd.f32 0.0, %v2840
  %v2842 = vpop.f32.mrf.mxu0
  %v2843 = vadd.f32 0.0, %v2842
  %2844 = vmatmul.bf16.gmra.mxu0 %v419
  %v2845 = vpop.f32.mrf.mxu0
  %v2846 = vadd.f32 0.0, %v2845
  %v2847 = vpop.f32.mrf.mxu0
  %v2848 = vadd.f32 0.0, %v2847
  %2849 = vmatmul.bf16.gmra.mxu0 %v422
  %v2850 = vpop.f32.mrf.mxu0
  %v2851 = vadd.f32 0.0, %v2850
  %v2852 = vpop.f32.mrf.mxu0
  %v2853 = vadd.f32 0.0, %v2852
  %2854 = vmatmul.bf16.gmra.mxu0 %v425
  %v2855 = vpop.f32.mrf.mxu0
  %v2856 = vadd.f32 0.0, %v2855
  %v2857 = vpop.f32.mrf.mxu0
  %v2858 = vadd.f32 0.0, %v2857
  %2859 = vmatmul.bf16.gmra.mxu0 %v428
  %v2860 = vpop.f32.mrf.mxu0
  %v2861 = vadd.f32 0.0, %v2860
  %v2862 = vpop.f32.mrf.mxu0
  %v2863 = vadd.f32 0.0, %v2862
  %2864 = vmatmul.bf16.gmra.mxu0 %v431
  %v2865 = vpop.f32.mrf.mxu0
  %v2866 = vadd.f32 0.0, %v2865
  %v2867 = vpop.f32.mrf.mxu0
  %v2868 = vadd.f32 0.0, %v2867
  %2869 = vmatmul.bf16.gmra.mxu0 %v434
  %v2870 = vpop.f32.mrf.mxu0
  %v2871 = vadd.f32 0.0, %v2870
  %v2872 = vpop.f32.mrf.mxu0
  %v2873 = vadd.f32 0.0, %v2872
  %2874 = vmatmul.bf16.gmra.mxu0 %v437
  %v2875 = vpop.f32.mrf.mxu0
  %v2876 = vadd.f32 0.0, %v2875
  %v2877 = vpop.f32.mrf.mxu0
  %v2878 = vadd.f32 0.0, %v2877
  %2879 = vmatmul.bf16.gmra.mxu0 %v440
  %v2880 = vpop.f32.mrf.mxu0
  %v2881 = vadd.f32 0.0, %v2880
  %v2882 = vpop.f32.mrf.mxu0
  %v2883 = vadd.f32 0.0, %v2882
  %2884 = vmatmul.bf16.gmra.mxu0 %v443
  %v2885 = vpop.f32.mrf.mxu0
  %v2886 = vadd.f32 0.0, %v2885
  %v2887 = vpop.f32.mrf.mxu0
  %v2888 = vadd.f32 0.0, %v2887
  %2889 = vmatmul.bf16.gmra.mxu0 %v446
  %v2890 = vpop.f32.mrf.mxu0
  %v2891 = vadd.f32 0.0, %v2890
  %v2892 = vpop.f32.mrf.mxu0
  %v2893 = vadd.f32 0.0, %v2892
  %2894 = vmatmul.bf16.gmra.mxu0 %v449
  %v2895 = vpop.f32.mrf.mxu0
  %v2896 = vadd.f32 0.0, %v2895
  %v2897 = vpop.f32.mrf.mxu0
  %v2898 = vadd.f32 0.0, %v2897
  %2899 = vmatmul.bf16.gmra.mxu0 %v452
  %v2900 = vpop.f32.mrf.mxu0
  %v2901 = vadd.f32 0.0, %v2900
  %v2902 = vpop.f32.mrf.mxu0
  %v2903 = vadd.f32 0.0, %v2902
  %2904 = vmatmul.bf16.gmra.mxu0 %v455
  %v2905 = vpop.f32.mrf.mxu0
  %v2906 = vadd.f32 0.0, %v2905
  %v2907 = vpop.f32.mrf.mxu0
  %v2908 = vadd.f32 0.0, %v2907
  %2909 = vmatmul.bf16.gmra.mxu0 %v458
  %v2910 = vpop.f32.mrf.mxu0
  %v2911 = vadd.f32 0.0, %v2910
  %v2912 = vpop.f32.mrf.mxu0
  %v2913 = vadd.f32 0.0, %v2912
  %2914 = vmatmul.bf16.gmra.mxu0 %v461
  %v2915 = vpop.f32.mrf.mxu0
  %v2916 = vadd.f32 0.0, %v2915
  %v2917 = vpop.f32.mrf.mxu0
  %v2918 = vadd.f32 0.0, %v2917
  %2919 = vmatmul.bf16.gmra.mxu0 %v464
  %v2920 = vpop.f32.mrf.mxu0
  %v2921 = vadd.f32 0.0, %v2920
  %v2922 = vpop.f32.mrf.mxu0
  %v2923 = vadd.f32 0.0, %v2922
  %2924 = vmatmul.bf16.gmra.mxu0 %v467
  %v2925 = vpop.f32.mrf.mxu0
  %v2926 = vadd.f32 0.0, %v2925
  %v2927 = vpop.f32.mrf.mxu0
  %v2928 = vadd.f32 0.0, %v2927
  %2929 = vmatmul.bf16.gmra.mxu0 %v470
  %v2930 = vpop.f32.mrf.mxu0
  %v2931 = vadd.f32 0.0, %v2930
  %v2932 = vpop.f32.mrf.mxu0
  %v2933 = vadd.f32 0.0, %v2932
  %2934 = vmatmul.bf16.gmra.mxu0 %v473
  %v2935 = vpop.f32.mrf.mxu0
  %v2936 = vadd.f32 0.0, %v2935
  %v2937 = vpop.f32.mrf.mxu0
  %v2938 = vadd.f32 0.0, %v2937
  %2939 = vmatmul.bf16.gmra.mxu0 %v476
  %v2940 = vpop.f32.mrf.mxu0
  %v2941 = vadd.f32 0.0, %v2940
  %v2942 = vpop.f32.mrf.mxu0
  %v2943 = vadd.f32 0.0, %v2942
  %2944 = vmatmul.bf16.gmra.mxu0 %v479
  %v2945 = vpop.f32.mrf.mxu0
  %v2946 = vadd.f32 0.0, %v2945
  %v2947 = vpop.f32.mrf.mxu0
  %v2948 = vadd.f32 0.0, %v2947
  %2949 = vmatmul.bf16.gmra.mxu0 %v482
  %v2950 = vpop.f32.mrf.mxu0
  %v2951 = vadd.f32 0.0, %v2950
  %v2952 = vpop.f32.mrf.mxu0
  %v2953 = vadd.f32 0.0, %v2952
  %2954 = vmatmul.bf16.gmra.mxu0 %v485
  %v2955 = vpop.f32.mrf.mxu0
  %v2956 = vadd.f32 0.0, %v2955
  %v2957 = vpop.f32.mrf.mxu0
  %v2958 = vadd.f32 0.0, %v2957
  %2959 = vmatmul.bf16.gmra.mxu0 %v488
  %v2960 = vpop.f32.mrf.mxu0
  %v2961 = vadd.f32 0.0, %v2960
  %v2962 = vpop.f32.mrf.mxu0
  %v2963 = vadd.f32 0.0, %v2962
  %2964 = vmatmul.bf16.gmra.mxu0 %v491
  %v2965 = vpop.f32.mrf.mxu0
  %v2966 = vadd.f32 0.0, %v2965
  %v2967 = vpop.f32.mrf.mxu0
  %v2968 = vadd.f32 0.0, %v2967
  %2969 = vmatmul.bf16.gmra.mxu0 %v494
  %v2970 = vpop.f32.mrf.mxu0
  %v2971 = vadd.f32 0.0, %v2970
  %v2972 = vpop.f32.mrf.mxu0
  %v2973 = vadd.f32 0.0, %v2972
  %2974 = vmatmul.bf16.gmra.mxu0 %v497
  %v2975 = vpop.f32.mrf.mxu0
  %v2976 = vadd.f32 0.0, %v2975
  %v2977 = vpop.f32.mrf.mxu0
  %v2978 = vadd.f32 0.0, %v2977
  %2979 = vmatmul.bf16.gmra.mxu0 %v500
  %v2980 = vpop.f32.mrf.mxu0
  %v2981 = vadd.f32 0.0, %v2980
  %v2982 = vpop.f32.mrf.mxu0
  %v2983 = vadd.f32 0.0, %v2982
  %2984 = vmatmul.bf16.gmra.mxu0 %v503
  %v2985 = vpop.f32.mrf.mxu0
  %v2986 = vadd.f32 0.0, %v2985
  %v2987 = vpop.f32.mrf.mxu0
  %v2988 = vadd.f32 0.0, %v2987
  %2989 = vmatmul.bf16.gmra.mxu0 %v506
  %v2990 = vpop.f32.mrf.mxu0
  %v2991 = vadd.f32 0.0, %v2990
  %v2992 = vpop.f32.mrf.mxu0
  %v2993 = vadd.f32 0.0, %v2992
  %2994 = vmatmul.bf16.gmra.mxu0 %v509
  %v2995 = vpop.f32.mrf.mxu0
  %v2996 = vadd.f32 0.0, %v2995
  %v2997 = vpop.f32.mrf.mxu0
  %v2998 = vadd.f32 0.0, %v2997
  %2999 = vmatmul.bf16.gmra.mxu0 %v512
  %v3000 = vpop.f32.mrf.mxu0
  %v3001 = vadd.f32 0.0, %v3000
  %v3002 = vpop.f32.mrf.mxu0
  %v3003 = vadd.f32 0.0, %v3002
  %3004 = vmatmul.bf16.gmra.mxu0 %v515
  %v3005 = vpop.f32.mrf.mxu0
  %v3006 = vadd.f32 0.0, %v3005
  %v3007 = vpop.f32.mrf.mxu0
  %v3008 = vadd.f32 0.0, %v3007
  %3009 = vmatmul.bf16.gmra.mxu0 %v518
  %v3010 = vpop.f32.mrf.mxu0
  %v3011 = vadd.f32 0.0, %v3010
  %v3012 = vpop.f32.mrf.mxu0
  %v3013 = vadd.f32 0.0, %v3012
  %3014 = vmatmul.bf16.gmra.mxu0 %v521
  %v3015 = vpop.f32.mrf.mxu0
  %v3016 = vadd.f32 0.0, %v3015
  %v3017 = vpop.f32.mrf.mxu0
  %v3018 = vadd.f32 0.0, %v3017
  %3019 = vmatmul.bf16.gmra.mxu0 %v524
  %v3020 = vpop.f32.mrf.mxu0
  %v3021 = vadd.f32 0.0, %v3020
  %v3022 = vpop.f32.mrf.mxu0
  %v3023 = vadd.f32 0.0, %v3022
  %3024 = vmatmul.bf16.gmra.mxu0 %v527
  %v3025 = vpop.f32.mrf.mxu0
  %v3026 = vadd.f32 0.0, %v3025
  %v3027 = vpop.f32.mrf.mxu0
  %v3028 = vadd.f32 0.0, %v3027
  %3029 = vmatmul.bf16.gmra.mxu0 %v530
  %v3030 = vpop.f32.mrf.mxu0
  %v3031 = vadd.f32 0.0, %v3030
  %v3032 = vpop.f32.mrf.mxu0
  %v3033 = vadd.f32 0.0, %v3032
  %3034 = vmatmul.bf16.gmra.mxu0 %v533
  %v3035 = vpop.f32.mrf.mxu0
  %v3036 = vadd.f32 0.0, %v3035
  %v3037 = vpop.f32.mrf.mxu0
  %v3038 = vadd.f32 0.0, %v3037
  %3039 = vmatmul.bf16.gmra.mxu0 %v536
  %v3040 = vpop.f32.mrf.mxu0
  %v3041 = vadd.f32 0.0, %v3040
  %v3042 = vpop.f32.mrf.mxu0
  %v3043 = vadd.f32 0.0, %v3042
  %3044 = vmatmul.bf16.gmra.mxu0 %v539
  %v3045 = vpop.f32.mrf.mxu0
  %v3046 = vadd.f32 0.0, %v3045
  %v3047 = vpop.f32.mrf.mxu0
  %v3048 = vadd.f32 0.0, %v3047
  %3049 = vmatmul.bf16.gmra.mxu0 %v542
  %v3050 = vpop.f32.mrf.mxu0
  %v3051 = vadd.f32 0.0, %v3050
  %v3052 = vpop.f32.mrf.mxu0
  %v3053 = vadd.f32 0.0, %v3052
  %3054 = vdwg.mxu0
  %v3055 = vmax.f32 %v2664, %v2806
  %v3056 = vmax.f32 %v2665, %v2808
  %v3057 = vmax.f32 %v2666, %v2811
  %v3058 = vmax.f32 %v2667, %v2813
  %v3059 = vmax.f32 %v2668, %v2816
  %v3060 = vmax.f32 %v2669, %v2818
  %v3061 = vmax.f32 %v2670, %v2821
  %v3062 = vmax.f32 %v2671, %v2823
  %v3063 = vmax.f32 %v2672, %v2826
  %v3064 = vmax.f32 %v2673, %v2828
  %v3065 = vmax.f32 %v2674, %v2831
  %v3066 = vmax.f32 %v2675, %v2833
  %v3067 = vmax.f32 %v2676, %v2836
  %v3068 = vmax.f32 %v2677, %v2838
  %v3069 = vmax.f32 %v2678, %v2841
  %v3070 = vmax.f32 %v2679, %v2843
  %v3071 = vmax.f32 %v2680, %v2846
  %v3072 = vmax.f32 %v2681, %v2848
  %v3073 = vmax.f32 %v2682, %v2851
  %v3074 = vmax.f32 %v2683, %v2853
  %v3075 = vmax.f32 %v2684, %v2856
  %v3076 = vmax.f32 %v2685, %v2858
  %v3077 = vmax.f32 %v2686, %v2861
  %v3078 = vmax.f32 %v2687, %v2863
  %v3079 = vmax.f32 %v2688, %v2866
  %v3080 = vmax.f32 %v2689, %v2868
  %v3081 = vmax.f32 %v2690, %v2871
  %v3082 = vmax.f32 %v2691, %v2873
  %v3083 = vmax.f32 %v2692, %v2876
  %v3084 = vmax.f32 %v2693, %v2878
  %v3085 = vmax.f32 %v2694, %v2881
  %v3086 = vmax.f32 %v2695, %v2883
  %v3087 = vmax.f32 %v2696, %v2886
  %v3088 = vmax.f32 %v2697, %v2888
  %v3089 = vmax.f32 %v2698, %v2891
  %v3090 = vmax.f32 %v2699, %v2893
  %v3091 = vmax.f32 %v2700, %v2896
  %v3092 = vmax.f32 %v2701, %v2898
  %v3093 = vmax.f32 %v2702, %v2901
  %v3094 = vmax.f32 %v2703, %v2903
  %v3095 = vmax.f32 %v2704, %v2906
  %v3096 = vmax.f32 %v2705, %v2908
  %v3097 = vmax.f32 %v2706, %v2911
  %v3098 = vmax.f32 %v2707, %v2913
  %v3099 = vmax.f32 %v2708, %v2916
  %v3100 = vmax.f32 %v2709, %v2918
  %v3101 = vmax.f32 %v2710, %v2921
  %v3102 = vmax.f32 %v2711, %v2923
  %v3103 = vmax.f32 %v2712, %v2926
  %v3104 = vmax.f32 %v2713, %v2928
  %v3105 = vmax.f32 %v2714, %v2931
  %v3106 = vmax.f32 %v2715, %v2933
  %v3107 = vmax.f32 %v2716, %v2936
  %v3108 = vmax.f32 %v2717, %v2938
  %v3109 = vmax.f32 %v2718, %v2941
  %v3110 = vmax.f32 %v2719, %v2943
  %v3111 = vmax.f32 %v2720, %v2946
  %v3112 = vmax.f32 %v2721, %v2948
  %v3113 = vmax.f32 %v2722, %v2951
  %v3114 = vmax.f32 %v2723, %v2953
  %v3115 = vmax.f32 %v2724, %v2956
  %v3116 = vmax.f32 %v2725, %v2958
  %v3117 = vmax.f32 %v2726, %v2961
  %v3118 = vmax.f32 %v2727, %v2963
  %v3119 = vmax.f32 %v2728, %v2966
  %v3120 = vmax.f32 %v2729, %v2968
  %v3121 = vmax.f32 %v2730, %v2971
  %v3122 = vmax.f32 %v2731, %v2973
  %v3123 = vmax.f32 %v2732, %v2976
  %v3124 = vmax.f32 %v2733, %v2978
  %v3125 = vmax.f32 %v2734, %v2981
  %v3126 = vmax.f32 %v2735, %v2983
  %v3127 = vmax.f32 %v2736, %v2986
  %v3128 = vmax.f32 %v2737, %v2988
  %v3129 = vmax.f32 %v2738, %v2991
  %v3130 = vmax.f32 %v2739, %v2993
  %v3131 = vmax.f32 %v2740, %v2996
  %v3132 = vmax.f32 %v2741, %v2998
  %v3133 = vmax.f32 %v2742, %v3001
  %v3134 = vmax.f32 %v2743, %v3003
  %v3135 = vmax.f32 %v2744, %v3006
  %v3136 = vmax.f32 %v2745, %v3008
  %v3137 = vmax.f32 %v2746, %v3011
  %v3138 = vmax.f32 %v2747, %v3013
  %v3139 = vmax.f32 %v2748, %v3016
  %v3140 = vmax.f32 %v2749, %v3018
  %v3141 = vmax.f32 %v2750, %v3021
  %v3142 = vmax.f32 %v2751, %v3023
  %v3143 = vmax.f32 %v2752, %v3026
  %v3144 = vmax.f32 %v2753, %v3028
  %v3145 = vmax.f32 %v2754, %v3031
  %v3146 = vmax.f32 %v2755, %v3033
  %v3147 = vmax.f32 %v2756, %v3036
  %v3148 = vmax.f32 %v2757, %v3038
  %v3149 = vmax.f32 %v2758, %v3041
  %v3150 = vmax.f32 %v2759, %v3043
  %v3151 = vmax.f32 %v2760, %v3046
  %v3152 = vmax.f32 %v2761, %v3048
  %v3153 = vmax.f32 %v2762, %v3051
  %v3154 = vmax.f32 %v2763, %v3053
  %s3155 = scalar_lea.vmem %s1, 196
  %v3156 = vld [vmem:[%s3155] sm:$0xf]
  %v3157 = vld [vmem:[%s3155 + $0x4] sm:$0xf]
  %v3158 = vld [vmem:[%s3155 + $0x8] sm:$0xf]
  %v3159 = vld [vmem:[%s3155 + $0xc] sm:$0xf]
  %v3160 = vld [vmem:[%s3155 + $0x10] sm:$0xf]
  %v3161 = vld [vmem:[%s3155 + $0x14] sm:$0xf]
  %v3162 = vld [vmem:[%s3155 + $0x18] sm:$0x1]
  %v3170 = vunpack.c.l.b16 %v3156
  %v3171 = vunpack.c.l.b16 %v3157
  %v3172 = vunpack.c.l.b16 %v3158
  %v3173 = vunpack.c.l.b16 %v3159
  %v3174 = vunpack.c.l.b16 %v3160
  %v3175 = vunpack.c.l.b16 %v3161
  %v3176 = vunpack.c.l.b16 %v3162
  %v3177 = vpack.c.b16 %v3171, %v3170
  %v3178 = vpack.c.b16 %v3173, %v3172
  %v3179 = vpack.c.b16 %v3175, %v3174
  %v3180 = vpack.c.b16 %v3176, %v3176
  %v3185 = vand.u32 %v3180, %v546
  %3187 = vmatpush.bf16.msra.mxu0 0
  %3188 = vmatpush.bf16.msra.mxu0 0
  %3189 = vmatpush.bf16.msra.mxu0 0
  %3190 = vmatpush.bf16.msra.mxu0 0
  %3191 = vmatpush.bf16.msra.mxu0 %v3185
  %3192 = vmatpush.bf16.msra.mxu0 %v3179
  %3193 = vmatpush.bf16.msra.mxu0 %v3178
  %3194 = vmatpush.bf16.msra.mxu0 %v3177
  %3195 = vmatmul.bf16.gmra.mxu0 %v395
  %v3196 = vpop.f32.mrf.mxu0
  %v3197 = vadd.f32 0.0, %v3196
  %v3198 = vpop.f32.mrf.mxu0
  %v3199 = vadd.f32 0.0, %v3198
  %3200 = vmatmul.bf16.gmra.mxu0 %v398
  %v3201 = vpop.f32.mrf.mxu0
  %v3202 = vadd.f32 0.0, %v3201
  %v3203 = vpop.f32.mrf.mxu0
  %v3204 = vadd.f32 0.0, %v3203
  %3205 = vmatmul.bf16.gmra.mxu0 %v401
  %v3206 = vpop.f32.mrf.mxu0
  %v3207 = vadd.f32 0.0, %v3206
  %v3208 = vpop.f32.mrf.mxu0
  %v3209 = vadd.f32 0.0, %v3208
  %3210 = vmatmul.bf16.gmra.mxu0 %v404
  %v3211 = vpop.f32.mrf.mxu0
  %v3212 = vadd.f32 0.0, %v3211
  %v3213 = vpop.f32.mrf.mxu0
  %v3214 = vadd.f32 0.0, %v3213
  %3215 = vmatmul.bf16.gmra.mxu0 %v407
  %v3216 = vpop.f32.mrf.mxu0
  %v3217 = vadd.f32 0.0, %v3216
  %v3218 = vpop.f32.mrf.mxu0
  %v3219 = vadd.f32 0.0, %v3218
  %3220 = vmatmul.bf16.gmra.mxu0 %v410
  %v3221 = vpop.f32.mrf.mxu0
  %v3222 = vadd.f32 0.0, %v3221
  %v3223 = vpop.f32.mrf.mxu0
  %v3224 = vadd.f32 0.0, %v3223
  %3225 = vmatmul.bf16.gmra.mxu0 %v413
  %v3226 = vpop.f32.mrf.mxu0
  %v3227 = vadd.f32 0.0, %v3226
  %v3228 = vpop.f32.mrf.mxu0
  %v3229 = vadd.f32 0.0, %v3228
  %3230 = vmatmul.bf16.gmra.mxu0 %v416
  %v3231 = vpop.f32.mrf.mxu0
  %v3232 = vadd.f32 0.0, %v3231
  %v3233 = vpop.f32.mrf.mxu0
  %v3234 = vadd.f32 0.0, %v3233
  %3235 = vmatmul.bf16.gmra.mxu0 %v419
  %v3236 = vpop.f32.mrf.mxu0
  %v3237 = vadd.f32 0.0, %v3236
  %v3238 = vpop.f32.mrf.mxu0
  %v3239 = vadd.f32 0.0, %v3238
  %3240 = vmatmul.bf16.gmra.mxu0 %v422
  %v3241 = vpop.f32.mrf.mxu0
  %v3242 = vadd.f32 0.0, %v3241
  %v3243 = vpop.f32.mrf.mxu0
  %v3244 = vadd.f32 0.0, %v3243
  %3245 = vmatmul.bf16.gmra.mxu0 %v425
  %v3246 = vpop.f32.mrf.mxu0
  %v3247 = vadd.f32 0.0, %v3246
  %v3248 = vpop.f32.mrf.mxu0
  %v3249 = vadd.f32 0.0, %v3248
  %3250 = vmatmul.bf16.gmra.mxu0 %v428
  %v3251 = vpop.f32.mrf.mxu0
  %v3252 = vadd.f32 0.0, %v3251
  %v3253 = vpop.f32.mrf.mxu0
  %v3254 = vadd.f32 0.0, %v3253
  %3255 = vmatmul.bf16.gmra.mxu0 %v431
  %v3256 = vpop.f32.mrf.mxu0
  %v3257 = vadd.f32 0.0, %v3256
  %v3258 = vpop.f32.mrf.mxu0
  %v3259 = vadd.f32 0.0, %v3258
  %3260 = vmatmul.bf16.gmra.mxu0 %v434
  %v3261 = vpop.f32.mrf.mxu0
  %v3262 = vadd.f32 0.0, %v3261
  %v3263 = vpop.f32.mrf.mxu0
  %v3264 = vadd.f32 0.0, %v3263
  %3265 = vmatmul.bf16.gmra.mxu0 %v437
  %v3266 = vpop.f32.mrf.mxu0
  %v3267 = vadd.f32 0.0, %v3266
  %v3268 = vpop.f32.mrf.mxu0
  %v3269 = vadd.f32 0.0, %v3268
  %3270 = vmatmul.bf16.gmra.mxu0 %v440
  %v3271 = vpop.f32.mrf.mxu0
  %v3272 = vadd.f32 0.0, %v3271
  %v3273 = vpop.f32.mrf.mxu0
  %v3274 = vadd.f32 0.0, %v3273
  %3275 = vmatmul.bf16.gmra.mxu0 %v443
  %v3276 = vpop.f32.mrf.mxu0
  %v3277 = vadd.f32 0.0, %v3276
  %v3278 = vpop.f32.mrf.mxu0
  %v3279 = vadd.f32 0.0, %v3278
  %3280 = vmatmul.bf16.gmra.mxu0 %v446
  %v3281 = vpop.f32.mrf.mxu0
  %v3282 = vadd.f32 0.0, %v3281
  %v3283 = vpop.f32.mrf.mxu0
  %v3284 = vadd.f32 0.0, %v3283
  %3285 = vmatmul.bf16.gmra.mxu0 %v449
  %v3286 = vpop.f32.mrf.mxu0
  %v3287 = vadd.f32 0.0, %v3286
  %v3288 = vpop.f32.mrf.mxu0
  %v3289 = vadd.f32 0.0, %v3288
  %3290 = vmatmul.bf16.gmra.mxu0 %v452
  %v3291 = vpop.f32.mrf.mxu0
  %v3292 = vadd.f32 0.0, %v3291
  %v3293 = vpop.f32.mrf.mxu0
  %v3294 = vadd.f32 0.0, %v3293
  %3295 = vmatmul.bf16.gmra.mxu0 %v455
  %v3296 = vpop.f32.mrf.mxu0
  %v3297 = vadd.f32 0.0, %v3296
  %v3298 = vpop.f32.mrf.mxu0
  %v3299 = vadd.f32 0.0, %v3298
  %3300 = vmatmul.bf16.gmra.mxu0 %v458
  %v3301 = vpop.f32.mrf.mxu0
  %v3302 = vadd.f32 0.0, %v3301
  %v3303 = vpop.f32.mrf.mxu0
  %v3304 = vadd.f32 0.0, %v3303
  %3305 = vmatmul.bf16.gmra.mxu0 %v461
  %v3306 = vpop.f32.mrf.mxu0
  %v3307 = vadd.f32 0.0, %v3306
  %v3308 = vpop.f32.mrf.mxu0
  %v3309 = vadd.f32 0.0, %v3308
  %3310 = vmatmul.bf16.gmra.mxu0 %v464
  %v3311 = vpop.f32.mrf.mxu0
  %v3312 = vadd.f32 0.0, %v3311
  %v3313 = vpop.f32.mrf.mxu0
  %v3314 = vadd.f32 0.0, %v3313
  %3315 = vmatmul.bf16.gmra.mxu0 %v467
  %v3316 = vpop.f32.mrf.mxu0
  %v3317 = vadd.f32 0.0, %v3316
  %v3318 = vpop.f32.mrf.mxu0
  %v3319 = vadd.f32 0.0, %v3318
  %3320 = vmatmul.bf16.gmra.mxu0 %v470
  %v3321 = vpop.f32.mrf.mxu0
  %v3322 = vadd.f32 0.0, %v3321
  %v3323 = vpop.f32.mrf.mxu0
  %v3324 = vadd.f32 0.0, %v3323
  %3325 = vmatmul.bf16.gmra.mxu0 %v473
  %v3326 = vpop.f32.mrf.mxu0
  %v3327 = vadd.f32 0.0, %v3326
  %v3328 = vpop.f32.mrf.mxu0
  %v3329 = vadd.f32 0.0, %v3328
  %3330 = vmatmul.bf16.gmra.mxu0 %v476
  %v3331 = vpop.f32.mrf.mxu0
  %v3332 = vadd.f32 0.0, %v3331
  %v3333 = vpop.f32.mrf.mxu0
  %v3334 = vadd.f32 0.0, %v3333
  %3335 = vmatmul.bf16.gmra.mxu0 %v479
  %v3336 = vpop.f32.mrf.mxu0
  %v3337 = vadd.f32 0.0, %v3336
  %v3338 = vpop.f32.mrf.mxu0
  %v3339 = vadd.f32 0.0, %v3338
  %3340 = vmatmul.bf16.gmra.mxu0 %v482
  %v3341 = vpop.f32.mrf.mxu0
  %v3342 = vadd.f32 0.0, %v3341
  %v3343 = vpop.f32.mrf.mxu0
  %v3344 = vadd.f32 0.0, %v3343
  %3345 = vmatmul.bf16.gmra.mxu0 %v485
  %v3346 = vpop.f32.mrf.mxu0
  %v3347 = vadd.f32 0.0, %v3346
  %v3348 = vpop.f32.mrf.mxu0
  %v3349 = vadd.f32 0.0, %v3348
  %3350 = vmatmul.bf16.gmra.mxu0 %v488
  %v3351 = vpop.f32.mrf.mxu0
  %v3352 = vadd.f32 0.0, %v3351
  %v3353 = vpop.f32.mrf.mxu0
  %v3354 = vadd.f32 0.0, %v3353
  %3355 = vmatmul.bf16.gmra.mxu0 %v491
  %v3356 = vpop.f32.mrf.mxu0
  %v3357 = vadd.f32 0.0, %v3356
  %v3358 = vpop.f32.mrf.mxu0
  %v3359 = vadd.f32 0.0, %v3358
  %3360 = vmatmul.bf16.gmra.mxu0 %v494
  %v3361 = vpop.f32.mrf.mxu0
  %v3362 = vadd.f32 0.0, %v3361
  %v3363 = vpop.f32.mrf.mxu0
  %v3364 = vadd.f32 0.0, %v3363
  %3365 = vmatmul.bf16.gmra.mxu0 %v497
  %v3366 = vpop.f32.mrf.mxu0
  %v3367 = vadd.f32 0.0, %v3366
  %v3368 = vpop.f32.mrf.mxu0
  %v3369 = vadd.f32 0.0, %v3368
  %3370 = vmatmul.bf16.gmra.mxu0 %v500
  %v3371 = vpop.f32.mrf.mxu0
  %v3372 = vadd.f32 0.0, %v3371
  %v3373 = vpop.f32.mrf.mxu0
  %v3374 = vadd.f32 0.0, %v3373
  %3375 = vmatmul.bf16.gmra.mxu0 %v503
  %v3376 = vpop.f32.mrf.mxu0
  %v3377 = vadd.f32 0.0, %v3376
  %v3378 = vpop.f32.mrf.mxu0
  %v3379 = vadd.f32 0.0, %v3378
  %3380 = vmatmul.bf16.gmra.mxu0 %v506
  %v3381 = vpop.f32.mrf.mxu0
  %v3382 = vadd.f32 0.0, %v3381
  %v3383 = vpop.f32.mrf.mxu0
  %v3384 = vadd.f32 0.0, %v3383
  %3385 = vmatmul.bf16.gmra.mxu0 %v509
  %v3386 = vpop.f32.mrf.mxu0
  %v3387 = vadd.f32 0.0, %v3386
  %v3388 = vpop.f32.mrf.mxu0
  %v3389 = vadd.f32 0.0, %v3388
  %3390 = vmatmul.bf16.gmra.mxu0 %v512
  %v3391 = vpop.f32.mrf.mxu0
  %v3392 = vadd.f32 0.0, %v3391
  %v3393 = vpop.f32.mrf.mxu0
  %v3394 = vadd.f32 0.0, %v3393
  %3395 = vmatmul.bf16.gmra.mxu0 %v515
  %v3396 = vpop.f32.mrf.mxu0
  %v3397 = vadd.f32 0.0, %v3396
  %v3398 = vpop.f32.mrf.mxu0
  %v3399 = vadd.f32 0.0, %v3398
  %3400 = vmatmul.bf16.gmra.mxu0 %v518
  %v3401 = vpop.f32.mrf.mxu0
  %v3402 = vadd.f32 0.0, %v3401
  %v3403 = vpop.f32.mrf.mxu0
  %v3404 = vadd.f32 0.0, %v3403
  %3405 = vmatmul.bf16.gmra.mxu0 %v521
  %v3406 = vpop.f32.mrf.mxu0
  %v3407 = vadd.f32 0.0, %v3406
  %v3408 = vpop.f32.mrf.mxu0
  %v3409 = vadd.f32 0.0, %v3408
  %3410 = vmatmul.bf16.gmra.mxu0 %v524
  %v3411 = vpop.f32.mrf.mxu0
  %v3412 = vadd.f32 0.0, %v3411
  %v3413 = vpop.f32.mrf.mxu0
  %v3414 = vadd.f32 0.0, %v3413
  %3415 = vmatmul.bf16.gmra.mxu0 %v527
  %v3416 = vpop.f32.mrf.mxu0
  %v3417 = vadd.f32 0.0, %v3416
  %v3418 = vpop.f32.mrf.mxu0
  %v3419 = vadd.f32 0.0, %v3418
  %3420 = vmatmul.bf16.gmra.mxu0 %v530
  %v3421 = vpop.f32.mrf.mxu0
  %v3422 = vadd.f32 0.0, %v3421
  %v3423 = vpop.f32.mrf.mxu0
  %v3424 = vadd.f32 0.0, %v3423
  %3425 = vmatmul.bf16.gmra.mxu0 %v533
  %v3426 = vpop.f32.mrf.mxu0
  %v3427 = vadd.f32 0.0, %v3426
  %v3428 = vpop.f32.mrf.mxu0
  %v3429 = vadd.f32 0.0, %v3428
  %3430 = vmatmul.bf16.gmra.mxu0 %v536
  %v3431 = vpop.f32.mrf.mxu0
  %v3432 = vadd.f32 0.0, %v3431
  %v3433 = vpop.f32.mrf.mxu0
  %v3434 = vadd.f32 0.0, %v3433
  %3435 = vmatmul.bf16.gmra.mxu0 %v539
  %v3436 = vpop.f32.mrf.mxu0
  %v3437 = vadd.f32 0.0, %v3436
  %v3438 = vpop.f32.mrf.mxu0
  %v3439 = vadd.f32 0.0, %v3438
  %3440 = vmatmul.bf16.gmra.mxu0 %v542
  %v3441 = vpop.f32.mrf.mxu0
  %v3442 = vadd.f32 0.0, %v3441
  %v3443 = vpop.f32.mrf.mxu0
  %v3444 = vadd.f32 0.0, %v3443
  %3445 = vdwg.mxu0
  %v3446 = vmax.f32 %v3055, %v3197
  %v3447 = vmax.f32 %v3056, %v3199
  %v3448 = vmax.f32 %v3057, %v3202
  %v3449 = vmax.f32 %v3058, %v3204
  %v3450 = vmax.f32 %v3059, %v3207
  %v3451 = vmax.f32 %v3060, %v3209
  %v3452 = vmax.f32 %v3061, %v3212
  %v3453 = vmax.f32 %v3062, %v3214
  %v3454 = vmax.f32 %v3063, %v3217
  %v3455 = vmax.f32 %v3064, %v3219
  %v3456 = vmax.f32 %v3065, %v3222
  %v3457 = vmax.f32 %v3066, %v3224
  %v3458 = vmax.f32 %v3067, %v3227
  %v3459 = vmax.f32 %v3068, %v3229
  %v3460 = vmax.f32 %v3069, %v3232
  %v3461 = vmax.f32 %v3070, %v3234
  %v3462 = vmax.f32 %v3071, %v3237
  %v3463 = vmax.f32 %v3072, %v3239
  %v3464 = vmax.f32 %v3073, %v3242
  %v3465 = vmax.f32 %v3074, %v3244
  %v3466 = vmax.f32 %v3075, %v3247
  %v3467 = vmax.f32 %v3076, %v3249
  %v3468 = vmax.f32 %v3077, %v3252
  %v3469 = vmax.f32 %v3078, %v3254
  %v3470 = vmax.f32 %v3079, %v3257
  %v3471 = vmax.f32 %v3080, %v3259
  %v3472 = vmax.f32 %v3081, %v3262
  %v3473 = vmax.f32 %v3082, %v3264
  %v3474 = vmax.f32 %v3083, %v3267
  %v3475 = vmax.f32 %v3084, %v3269
  %v3476 = vmax.f32 %v3085, %v3272
  %v3477 = vmax.f32 %v3086, %v3274
  %v3478 = vmax.f32 %v3087, %v3277
  %v3479 = vmax.f32 %v3088, %v3279
  %v3480 = vmax.f32 %v3089, %v3282
  %v3481 = vmax.f32 %v3090, %v3284
  %v3482 = vmax.f32 %v3091, %v3287
  %v3483 = vmax.f32 %v3092, %v3289
  %v3484 = vmax.f32 %v3093, %v3292
  %v3485 = vmax.f32 %v3094, %v3294
  %v3486 = vmax.f32 %v3095, %v3297
  %v3487 = vmax.f32 %v3096, %v3299
  %v3488 = vmax.f32 %v3097, %v3302
  %v3489 = vmax.f32 %v3098, %v3304
  %v3490 = vmax.f32 %v3099, %v3307
  %v3491 = vmax.f32 %v3100, %v3309
  %v3492 = vmax.f32 %v3101, %v3312
  %v3493 = vmax.f32 %v3102, %v3314
  %v3494 = vmax.f32 %v3103, %v3317
  %v3495 = vmax.f32 %v3104, %v3319
  %v3496 = vmax.f32 %v3105, %v3322
  %v3497 = vmax.f32 %v3106, %v3324
  %v3498 = vmax.f32 %v3107, %v3327
  %v3499 = vmax.f32 %v3108, %v3329
  %v3500 = vmax.f32 %v3109, %v3332
  %v3501 = vmax.f32 %v3110, %v3334
  %v3502 = vmax.f32 %v3111, %v3337
  %v3503 = vmax.f32 %v3112, %v3339
  %v3504 = vmax.f32 %v3113, %v3342
  %v3505 = vmax.f32 %v3114, %v3344
  %v3506 = vmax.f32 %v3115, %v3347
  %v3507 = vmax.f32 %v3116, %v3349
  %v3508 = vmax.f32 %v3117, %v3352
  %v3509 = vmax.f32 %v3118, %v3354
  %v3510 = vmax.f32 %v3119, %v3357
  %v3511 = vmax.f32 %v3120, %v3359
  %v3512 = vmax.f32 %v3121, %v3362
  %v3513 = vmax.f32 %v3122, %v3364
  %v3514 = vmax.f32 %v3123, %v3367
  %v3515 = vmax.f32 %v3124, %v3369
  %v3516 = vmax.f32 %v3125, %v3372
  %v3517 = vmax.f32 %v3126, %v3374
  %v3518 = vmax.f32 %v3127, %v3377
  %v3519 = vmax.f32 %v3128, %v3379
  %v3520 = vmax.f32 %v3129, %v3382
  %v3521 = vmax.f32 %v3130, %v3384
  %v3522 = vmax.f32 %v3131, %v3387
  %v3523 = vmax.f32 %v3132, %v3389
  %v3524 = vmax.f32 %v3133, %v3392
  %v3525 = vmax.f32 %v3134, %v3394
  %v3526 = vmax.f32 %v3135, %v3397
  %v3527 = vmax.f32 %v3136, %v3399
  %v3528 = vmax.f32 %v3137, %v3402
  %v3529 = vmax.f32 %v3138, %v3404
  %v3530 = vmax.f32 %v3139, %v3407
  %v3531 = vmax.f32 %v3140, %v3409
  %v3532 = vmax.f32 %v3141, %v3412
  %v3533 = vmax.f32 %v3142, %v3414
  %v3534 = vmax.f32 %v3143, %v3417
  %v3535 = vmax.f32 %v3144, %v3419
  %v3536 = vmax.f32 %v3145, %v3422
  %v3537 = vmax.f32 %v3146, %v3424
  %v3538 = vmax.f32 %v3147, %v3427
  %v3539 = vmax.f32 %v3148, %v3429
  %v3540 = vmax.f32 %v3149, %v3432
  %v3541 = vmax.f32 %v3150, %v3434
  %v3542 = vmax.f32 %v3151, %v3437
  %v3543 = vmax.f32 %v3152, %v3439
  %v3544 = vmax.f32 %v3153, %v3442
  %v3545 = vmax.f32 %v3154, %v3444
  %s3546 = scalar_lea.vmem %s1, 224
  %v3547 = vld [vmem:[%s3546] sm:$0xf]
  %v3548 = vld [vmem:[%s3546 + $0x4] sm:$0xf]
  %v3549 = vld [vmem:[%s3546 + $0x8] sm:$0xf]
  %v3550 = vld [vmem:[%s3546 + $0xc] sm:$0xf]
  %v3551 = vld [vmem:[%s3546 + $0x10] sm:$0xf]
  %v3552 = vld [vmem:[%s3546 + $0x14] sm:$0xf]
  %v3553 = vld [vmem:[%s3546 + $0x18] sm:$0x1]
  %v3561 = vunpack.c.l.b16 %v3547
  %v3562 = vunpack.c.l.b16 %v3548
  %v3563 = vunpack.c.l.b16 %v3549
  %v3564 = vunpack.c.l.b16 %v3550
  %v3565 = vunpack.c.l.b16 %v3551
  %v3566 = vunpack.c.l.b16 %v3552
  %v3567 = vunpack.c.l.b16 %v3553
  %v3568 = vpack.c.b16 %v3562, %v3561
  %v3569 = vpack.c.b16 %v3564, %v3563
  %v3570 = vpack.c.b16 %v3566, %v3565
  %v3571 = vpack.c.b16 %v3567, %v3567
  %v3576 = vand.u32 %v3571, %v546
  %3578 = vmatpush.bf16.msra.mxu0 0
  %3579 = vmatpush.bf16.msra.mxu0 0
  %3580 = vmatpush.bf16.msra.mxu0 0
  %3581 = vmatpush.bf16.msra.mxu0 0
  %3582 = vmatpush.bf16.msra.mxu0 %v3576
  %3583 = vmatpush.bf16.msra.mxu0 %v3570
  %3584 = vmatpush.bf16.msra.mxu0 %v3569
  %3585 = vmatpush.bf16.msra.mxu0 %v3568
  %3586 = vmatmul.bf16.gmra.mxu0 %v395
  %v3587 = vpop.f32.mrf.mxu0
  %v3588 = vadd.f32 0.0, %v3587
  %v3589 = vpop.f32.mrf.mxu0
  %v3590 = vadd.f32 0.0, %v3589
  %3591 = vmatmul.bf16.gmra.mxu0 %v398
  %v3592 = vpop.f32.mrf.mxu0
  %v3593 = vadd.f32 0.0, %v3592
  %v3594 = vpop.f32.mrf.mxu0
  %v3595 = vadd.f32 0.0, %v3594
  %3596 = vmatmul.bf16.gmra.mxu0 %v401
  %v3597 = vpop.f32.mrf.mxu0
  %v3598 = vadd.f32 0.0, %v3597
  %v3599 = vpop.f32.mrf.mxu0
  %v3600 = vadd.f32 0.0, %v3599
  %3601 = vmatmul.bf16.gmra.mxu0 %v404
  %v3602 = vpop.f32.mrf.mxu0
  %v3603 = vadd.f32 0.0, %v3602
  %v3604 = vpop.f32.mrf.mxu0
  %v3605 = vadd.f32 0.0, %v3604
  %3606 = vmatmul.bf16.gmra.mxu0 %v407
  %v3607 = vpop.f32.mrf.mxu0
  %v3608 = vadd.f32 0.0, %v3607
  %v3609 = vpop.f32.mrf.mxu0
  %v3610 = vadd.f32 0.0, %v3609
  %3611 = vmatmul.bf16.gmra.mxu0 %v410
  %v3612 = vpop.f32.mrf.mxu0
  %v3613 = vadd.f32 0.0, %v3612
  %v3614 = vpop.f32.mrf.mxu0
  %v3615 = vadd.f32 0.0, %v3614
  %3616 = vmatmul.bf16.gmra.mxu0 %v413
  %v3617 = vpop.f32.mrf.mxu0
  %v3618 = vadd.f32 0.0, %v3617
  %v3619 = vpop.f32.mrf.mxu0
  %v3620 = vadd.f32 0.0, %v3619
  %3621 = vmatmul.bf16.gmra.mxu0 %v416
  %v3622 = vpop.f32.mrf.mxu0
  %v3623 = vadd.f32 0.0, %v3622
  %v3624 = vpop.f32.mrf.mxu0
  %v3625 = vadd.f32 0.0, %v3624
  %3626 = vmatmul.bf16.gmra.mxu0 %v419
  %v3627 = vpop.f32.mrf.mxu0
  %v3628 = vadd.f32 0.0, %v3627
  %v3629 = vpop.f32.mrf.mxu0
  %v3630 = vadd.f32 0.0, %v3629
  %3631 = vmatmul.bf16.gmra.mxu0 %v422
  %v3632 = vpop.f32.mrf.mxu0
  %v3633 = vadd.f32 0.0, %v3632
  %v3634 = vpop.f32.mrf.mxu0
  %v3635 = vadd.f32 0.0, %v3634
  %3636 = vmatmul.bf16.gmra.mxu0 %v425
  %v3637 = vpop.f32.mrf.mxu0
  %v3638 = vadd.f32 0.0, %v3637
  %v3639 = vpop.f32.mrf.mxu0
  %v3640 = vadd.f32 0.0, %v3639
  %3641 = vmatmul.bf16.gmra.mxu0 %v428
  %v3642 = vpop.f32.mrf.mxu0
  %v3643 = vadd.f32 0.0, %v3642
  %v3644 = vpop.f32.mrf.mxu0
  %v3645 = vadd.f32 0.0, %v3644
  %3646 = vmatmul.bf16.gmra.mxu0 %v431
  %v3647 = vpop.f32.mrf.mxu0
  %v3648 = vadd.f32 0.0, %v3647
  %v3649 = vpop.f32.mrf.mxu0
  %v3650 = vadd.f32 0.0, %v3649
  %3651 = vmatmul.bf16.gmra.mxu0 %v434
  %v3652 = vpop.f32.mrf.mxu0
  %v3653 = vadd.f32 0.0, %v3652
  %v3654 = vpop.f32.mrf.mxu0
  %v3655 = vadd.f32 0.0, %v3654
  %3656 = vmatmul.bf16.gmra.mxu0 %v437
  %v3657 = vpop.f32.mrf.mxu0
  %v3658 = vadd.f32 0.0, %v3657
  %v3659 = vpop.f32.mrf.mxu0
  %v3660 = vadd.f32 0.0, %v3659
  %3661 = vmatmul.bf16.gmra.mxu0 %v440
  %v3662 = vpop.f32.mrf.mxu0
  %v3663 = vadd.f32 0.0, %v3662
  %v3664 = vpop.f32.mrf.mxu0
  %v3665 = vadd.f32 0.0, %v3664
  %3666 = vmatmul.bf16.gmra.mxu0 %v443
  %v3667 = vpop.f32.mrf.mxu0
  %v3668 = vadd.f32 0.0, %v3667
  %v3669 = vpop.f32.mrf.mxu0
  %v3670 = vadd.f32 0.0, %v3669
  %3671 = vmatmul.bf16.gmra.mxu0 %v446
  %v3672 = vpop.f32.mrf.mxu0
  %v3673 = vadd.f32 0.0, %v3672
  %v3674 = vpop.f32.mrf.mxu0
  %v3675 = vadd.f32 0.0, %v3674
  %3676 = vmatmul.bf16.gmra.mxu0 %v449
  %v3677 = vpop.f32.mrf.mxu0
  %v3678 = vadd.f32 0.0, %v3677
  %v3679 = vpop.f32.mrf.mxu0
  %v3680 = vadd.f32 0.0, %v3679
  %3681 = vmatmul.bf16.gmra.mxu0 %v452
  %v3682 = vpop.f32.mrf.mxu0
  %v3683 = vadd.f32 0.0, %v3682
  %v3684 = vpop.f32.mrf.mxu0
  %v3685 = vadd.f32 0.0, %v3684
  %3686 = vmatmul.bf16.gmra.mxu0 %v455
  %v3687 = vpop.f32.mrf.mxu0
  %v3688 = vadd.f32 0.0, %v3687
  %v3689 = vpop.f32.mrf.mxu0
  %v3690 = vadd.f32 0.0, %v3689
  %3691 = vmatmul.bf16.gmra.mxu0 %v458
  %v3692 = vpop.f32.mrf.mxu0
  %v3693 = vadd.f32 0.0, %v3692
  %v3694 = vpop.f32.mrf.mxu0
  %v3695 = vadd.f32 0.0, %v3694
  %3696 = vmatmul.bf16.gmra.mxu0 %v461
  %v3697 = vpop.f32.mrf.mxu0
  %v3698 = vadd.f32 0.0, %v3697
  %v3699 = vpop.f32.mrf.mxu0
  %v3700 = vadd.f32 0.0, %v3699
  %3701 = vmatmul.bf16.gmra.mxu0 %v464
  %v3702 = vpop.f32.mrf.mxu0
  %v3703 = vadd.f32 0.0, %v3702
  %v3704 = vpop.f32.mrf.mxu0
  %v3705 = vadd.f32 0.0, %v3704
  %3706 = vmatmul.bf16.gmra.mxu0 %v467
  %v3707 = vpop.f32.mrf.mxu0
  %v3708 = vadd.f32 0.0, %v3707
  %v3709 = vpop.f32.mrf.mxu0
  %v3710 = vadd.f32 0.0, %v3709
  %3711 = vmatmul.bf16.gmra.mxu0 %v470
  %v3712 = vpop.f32.mrf.mxu0
  %v3713 = vadd.f32 0.0, %v3712
  %v3714 = vpop.f32.mrf.mxu0
  %v3715 = vadd.f32 0.0, %v3714
  %3716 = vmatmul.bf16.gmra.mxu0 %v473
  %v3717 = vpop.f32.mrf.mxu0
  %v3718 = vadd.f32 0.0, %v3717
  %v3719 = vpop.f32.mrf.mxu0
  %v3720 = vadd.f32 0.0, %v3719
  %3721 = vmatmul.bf16.gmra.mxu0 %v476
  %v3722 = vpop.f32.mrf.mxu0
  %v3723 = vadd.f32 0.0, %v3722
  %v3724 = vpop.f32.mrf.mxu0
  %v3725 = vadd.f32 0.0, %v3724
  %3726 = vmatmul.bf16.gmra.mxu0 %v479
  %v3727 = vpop.f32.mrf.mxu0
  %v3728 = vadd.f32 0.0, %v3727
  %v3729 = vpop.f32.mrf.mxu0
  %v3730 = vadd.f32 0.0, %v3729
  %3731 = vmatmul.bf16.gmra.mxu0 %v482
  %v3732 = vpop.f32.mrf.mxu0
  %v3733 = vadd.f32 0.0, %v3732
  %v3734 = vpop.f32.mrf.mxu0
  %v3735 = vadd.f32 0.0, %v3734
  %3736 = vmatmul.bf16.gmra.mxu0 %v485
  %v3737 = vpop.f32.mrf.mxu0
  %v3738 = vadd.f32 0.0, %v3737
  %v3739 = vpop.f32.mrf.mxu0
  %v3740 = vadd.f32 0.0, %v3739
  %3741 = vmatmul.bf16.gmra.mxu0 %v488
  %v3742 = vpop.f32.mrf.mxu0
  %v3743 = vadd.f32 0.0, %v3742
  %v3744 = vpop.f32.mrf.mxu0
  %v3745 = vadd.f32 0.0, %v3744
  %3746 = vmatmul.bf16.gmra.mxu0 %v491
  %v3747 = vpop.f32.mrf.mxu0
  %v3748 = vadd.f32 0.0, %v3747
  %v3749 = vpop.f32.mrf.mxu0
  %v3750 = vadd.f32 0.0, %v3749
  %3751 = vmatmul.bf16.gmra.mxu0 %v494
  %v3752 = vpop.f32.mrf.mxu0
  %v3753 = vadd.f32 0.0, %v3752
  %v3754 = vpop.f32.mrf.mxu0
  %v3755 = vadd.f32 0.0, %v3754
  %3756 = vmatmul.bf16.gmra.mxu0 %v497
  %v3757 = vpop.f32.mrf.mxu0
  %v3758 = vadd.f32 0.0, %v3757
  %v3759 = vpop.f32.mrf.mxu0
  %v3760 = vadd.f32 0.0, %v3759
  %3761 = vmatmul.bf16.gmra.mxu0 %v500
  %v3762 = vpop.f32.mrf.mxu0
  %v3763 = vadd.f32 0.0, %v3762
  %v3764 = vpop.f32.mrf.mxu0
  %v3765 = vadd.f32 0.0, %v3764
  %3766 = vmatmul.bf16.gmra.mxu0 %v503
  %v3767 = vpop.f32.mrf.mxu0
  %v3768 = vadd.f32 0.0, %v3767
  %v3769 = vpop.f32.mrf.mxu0
  %v3770 = vadd.f32 0.0, %v3769
  %3771 = vmatmul.bf16.gmra.mxu0 %v506
  %v3772 = vpop.f32.mrf.mxu0
  %v3773 = vadd.f32 0.0, %v3772
  %v3774 = vpop.f32.mrf.mxu0
  %v3775 = vadd.f32 0.0, %v3774
  %3776 = vmatmul.bf16.gmra.mxu0 %v509
  %v3777 = vpop.f32.mrf.mxu0
  %v3778 = vadd.f32 0.0, %v3777
  %v3779 = vpop.f32.mrf.mxu0
  %v3780 = vadd.f32 0.0, %v3779
  %3781 = vmatmul.bf16.gmra.mxu0 %v512
  %v3782 = vpop.f32.mrf.mxu0
  %v3783 = vadd.f32 0.0, %v3782
  %v3784 = vpop.f32.mrf.mxu0
  %v3785 = vadd.f32 0.0, %v3784
  %3786 = vmatmul.bf16.gmra.mxu0 %v515
  %v3787 = vpop.f32.mrf.mxu0
  %v3788 = vadd.f32 0.0, %v3787
  %v3789 = vpop.f32.mrf.mxu0
  %v3790 = vadd.f32 0.0, %v3789
  %3791 = vmatmul.bf16.gmra.mxu0 %v518
  %v3792 = vpop.f32.mrf.mxu0
  %v3793 = vadd.f32 0.0, %v3792
  %v3794 = vpop.f32.mrf.mxu0
  %v3795 = vadd.f32 0.0, %v3794
  %3796 = vmatmul.bf16.gmra.mxu0 %v521
  %v3797 = vpop.f32.mrf.mxu0
  %v3798 = vadd.f32 0.0, %v3797
  %v3799 = vpop.f32.mrf.mxu0
  %v3800 = vadd.f32 0.0, %v3799
  %3801 = vmatmul.bf16.gmra.mxu0 %v524
  %v3802 = vpop.f32.mrf.mxu0
  %v3803 = vadd.f32 0.0, %v3802
  %v3804 = vpop.f32.mrf.mxu0
  %v3805 = vadd.f32 0.0, %v3804
  %3806 = vmatmul.bf16.gmra.mxu0 %v527
  %v3807 = vpop.f32.mrf.mxu0
  %v3808 = vadd.f32 0.0, %v3807
  %v3809 = vpop.f32.mrf.mxu0
  %v3810 = vadd.f32 0.0, %v3809
  %3811 = vmatmul.bf16.gmra.mxu0 %v530
  %v3812 = vpop.f32.mrf.mxu0
  %v3813 = vadd.f32 0.0, %v3812
  %v3814 = vpop.f32.mrf.mxu0
  %v3815 = vadd.f32 0.0, %v3814
  %3816 = vmatmul.bf16.gmra.mxu0 %v533
  %v3817 = vpop.f32.mrf.mxu0
  %v3818 = vadd.f32 0.0, %v3817
  %v3819 = vpop.f32.mrf.mxu0
  %v3820 = vadd.f32 0.0, %v3819
  %3821 = vmatmul.bf16.gmra.mxu0 %v536
  %v3822 = vpop.f32.mrf.mxu0
  %v3823 = vadd.f32 0.0, %v3822
  %v3824 = vpop.f32.mrf.mxu0
  %v3825 = vadd.f32 0.0, %v3824
  %3826 = vmatmul.bf16.gmra.mxu0 %v539
  %v3827 = vpop.f32.mrf.mxu0
  %v3828 = vadd.f32 0.0, %v3827
  %v3829 = vpop.f32.mrf.mxu0
  %v3830 = vadd.f32 0.0, %v3829
  %3831 = vmatmul.bf16.gmra.mxu0 %v542
  %v3832 = vpop.f32.mrf.mxu0
  %v3833 = vadd.f32 0.0, %v3832
  %v3834 = vpop.f32.mrf.mxu0
  %v3835 = vadd.f32 0.0, %v3834
  %3836 = vdwg.mxu0
  %v3837 = vmax.f32 %v3446, %v3588
  %v3838 = vmax.f32 %v3447, %v3590
  %v3839 = vmax.f32 %v3448, %v3593
  %v3840 = vmax.f32 %v3449, %v3595
  %v3841 = vmax.f32 %v3450, %v3598
  %v3842 = vmax.f32 %v3451, %v3600
  %v3843 = vmax.f32 %v3452, %v3603
  %v3844 = vmax.f32 %v3453, %v3605
  %v3845 = vmax.f32 %v3454, %v3608
  %v3846 = vmax.f32 %v3455, %v3610
  %v3847 = vmax.f32 %v3456, %v3613
  %v3848 = vmax.f32 %v3457, %v3615
  %v3849 = vmax.f32 %v3458, %v3618
  %v3850 = vmax.f32 %v3459, %v3620
  %v3851 = vmax.f32 %v3460, %v3623
  %v3852 = vmax.f32 %v3461, %v3625
  %v3853 = vmax.f32 %v3462, %v3628
  %v3854 = vmax.f32 %v3463, %v3630
  %v3855 = vmax.f32 %v3464, %v3633
  %v3856 = vmax.f32 %v3465, %v3635
  %v3857 = vmax.f32 %v3466, %v3638
  %v3858 = vmax.f32 %v3467, %v3640
  %v3859 = vmax.f32 %v3468, %v3643
  %v3860 = vmax.f32 %v3469, %v3645
  %v3861 = vmax.f32 %v3470, %v3648
  %v3862 = vmax.f32 %v3471, %v3650
  %v3863 = vmax.f32 %v3472, %v3653
  %v3864 = vmax.f32 %v3473, %v3655
  %v3865 = vmax.f32 %v3474, %v3658
  %v3866 = vmax.f32 %v3475, %v3660
  %v3867 = vmax.f32 %v3476, %v3663
  %v3868 = vmax.f32 %v3477, %v3665
  %v3869 = vmax.f32 %v3478, %v3668
  %v3870 = vmax.f32 %v3479, %v3670
  %v3871 = vmax.f32 %v3480, %v3673
  %v3872 = vmax.f32 %v3481, %v3675
  %v3873 = vmax.f32 %v3482, %v3678
  %v3874 = vmax.f32 %v3483, %v3680
  %v3875 = vmax.f32 %v3484, %v3683
  %v3876 = vmax.f32 %v3485, %v3685
  %v3877 = vmax.f32 %v3486, %v3688
  %v3878 = vmax.f32 %v3487, %v3690
  %v3879 = vmax.f32 %v3488, %v3693
  %v3880 = vmax.f32 %v3489, %v3695
  %v3881 = vmax.f32 %v3490, %v3698
  %v3882 = vmax.f32 %v3491, %v3700
  %v3883 = vmax.f32 %v3492, %v3703
  %v3884 = vmax.f32 %v3493, %v3705
  %v3885 = vmax.f32 %v3494, %v3708
  %v3886 = vmax.f32 %v3495, %v3710
  %v3887 = vmax.f32 %v3496, %v3713
  %v3888 = vmax.f32 %v3497, %v3715
  %v3889 = vmax.f32 %v3498, %v3718
  %v3890 = vmax.f32 %v3499, %v3720
  %v3891 = vmax.f32 %v3500, %v3723
  %v3892 = vmax.f32 %v3501, %v3725
  %v3893 = vmax.f32 %v3502, %v3728
  %v3894 = vmax.f32 %v3503, %v3730
  %v3895 = vmax.f32 %v3504, %v3733
  %v3896 = vmax.f32 %v3505, %v3735
  %v3897 = vmax.f32 %v3506, %v3738
  %v3898 = vmax.f32 %v3507, %v3740
  %v3899 = vmax.f32 %v3508, %v3743
  %v3900 = vmax.f32 %v3509, %v3745
  %v3901 = vmax.f32 %v3510, %v3748
  %v3902 = vmax.f32 %v3511, %v3750
  %v3903 = vmax.f32 %v3512, %v3753
  %v3904 = vmax.f32 %v3513, %v3755
  %v3905 = vmax.f32 %v3514, %v3758
  %v3906 = vmax.f32 %v3515, %v3760
  %v3907 = vmax.f32 %v3516, %v3763
  %v3908 = vmax.f32 %v3517, %v3765
  %v3909 = vmax.f32 %v3518, %v3768
  %v3910 = vmax.f32 %v3519, %v3770
  %v3911 = vmax.f32 %v3520, %v3773
  %v3912 = vmax.f32 %v3521, %v3775
  %v3913 = vmax.f32 %v3522, %v3778
  %v3914 = vmax.f32 %v3523, %v3780
  %v3915 = vmax.f32 %v3524, %v3783
  %v3916 = vmax.f32 %v3525, %v3785
  %v3917 = vmax.f32 %v3526, %v3788
  %v3918 = vmax.f32 %v3527, %v3790
  %v3919 = vmax.f32 %v3528, %v3793
  %v3920 = vmax.f32 %v3529, %v3795
  %v3921 = vmax.f32 %v3530, %v3798
  %v3922 = vmax.f32 %v3531, %v3800
  %v3923 = vmax.f32 %v3532, %v3803
  %v3924 = vmax.f32 %v3533, %v3805
  %v3925 = vmax.f32 %v3534, %v3808
  %v3926 = vmax.f32 %v3535, %v3810
  %v3927 = vmax.f32 %v3536, %v3813
  %v3928 = vmax.f32 %v3537, %v3815
  %v3929 = vmax.f32 %v3538, %v3818
  %v3930 = vmax.f32 %v3539, %v3820
  %v3931 = vmax.f32 %v3540, %v3823
  %v3932 = vmax.f32 %v3541, %v3825
  %v3933 = vmax.f32 %v3542, %v3828
  %v3934 = vmax.f32 %v3543, %v3830
  %v3935 = vmax.f32 %v3544, %v3833
  %v3936 = vmax.f32 %v3545, %v3835
  %v3937 = vld [vmem:[%s2] sm:$0x1]
  %v3939 = vperm.slane %v3937, 0
  %v3941 = vadd.f32 %v3837, %v3939
  %v3942 = vadd.f32 %v3838, %v3939
  %v3943 = vadd.f32 %v3839, %v3939
  %v3944 = vadd.f32 %v3840, %v3939
  %v3945 = vadd.f32 %v3841, %v3939
  %v3946 = vadd.f32 %v3842, %v3939
  %v3947 = vadd.f32 %v3843, %v3939
  %v3948 = vadd.f32 %v3844, %v3939
  %v3949 = vadd.f32 %v3845, %v3939
  %v3950 = vadd.f32 %v3846, %v3939
  %v3951 = vadd.f32 %v3847, %v3939
  %v3952 = vadd.f32 %v3848, %v3939
  %v3953 = vadd.f32 %v3849, %v3939
  %v3954 = vadd.f32 %v3850, %v3939
  %v3955 = vadd.f32 %v3851, %v3939
  %v3956 = vadd.f32 %v3852, %v3939
  %v3957 = vadd.f32 %v3853, %v3939
  %v3958 = vadd.f32 %v3854, %v3939
  %v3959 = vadd.f32 %v3855, %v3939
  %v3960 = vadd.f32 %v3856, %v3939
  %v3961 = vadd.f32 %v3857, %v3939
  %v3962 = vadd.f32 %v3858, %v3939
  %v3963 = vadd.f32 %v3859, %v3939
  %v3964 = vadd.f32 %v3860, %v3939
  %v3965 = vadd.f32 %v3861, %v3939
  %v3966 = vadd.f32 %v3862, %v3939
  %v3967 = vadd.f32 %v3863, %v3939
  %v3968 = vadd.f32 %v3864, %v3939
  %v3969 = vadd.f32 %v3865, %v3939
  %v3970 = vadd.f32 %v3866, %v3939
  %v3971 = vadd.f32 %v3867, %v3939
  %v3972 = vadd.f32 %v3868, %v3939
  %v3973 = vadd.f32 %v3869, %v3939
  %v3974 = vadd.f32 %v3870, %v3939
  %v3975 = vadd.f32 %v3871, %v3939
  %v3976 = vadd.f32 %v3872, %v3939
  %v3977 = vadd.f32 %v3873, %v3939
  %v3978 = vadd.f32 %v3874, %v3939
  %v3979 = vadd.f32 %v3875, %v3939
  %v3980 = vadd.f32 %v3876, %v3939
  %v3981 = vadd.f32 %v3877, %v3939
  %v3982 = vadd.f32 %v3878, %v3939
  %v3983 = vadd.f32 %v3879, %v3939
  %v3984 = vadd.f32 %v3880, %v3939
  %v3985 = vadd.f32 %v3881, %v3939
  %v3986 = vadd.f32 %v3882, %v3939
  %v3987 = vadd.f32 %v3883, %v3939
  %v3988 = vadd.f32 %v3884, %v3939
  %v3989 = vadd.f32 %v3885, %v3939
  %v3990 = vadd.f32 %v3886, %v3939
  %v3991 = vadd.f32 %v3887, %v3939
  %v3992 = vadd.f32 %v3888, %v3939
  %v3993 = vadd.f32 %v3889, %v3939
  %v3994 = vadd.f32 %v3890, %v3939
  %v3995 = vadd.f32 %v3891, %v3939
  %v3996 = vadd.f32 %v3892, %v3939
  %v3997 = vadd.f32 %v3893, %v3939
  %v3998 = vadd.f32 %v3894, %v3939
  %v3999 = vadd.f32 %v3895, %v3939
  %v4000 = vadd.f32 %v3896, %v3939
  %v4001 = vadd.f32 %v3897, %v3939
  %v4002 = vadd.f32 %v3898, %v3939
  %v4003 = vadd.f32 %v3899, %v3939
  %v4004 = vadd.f32 %v3900, %v3939
  %v4005 = vadd.f32 %v3901, %v3939
  %v4006 = vadd.f32 %v3902, %v3939
  %v4007 = vadd.f32 %v3903, %v3939
  %v4008 = vadd.f32 %v3904, %v3939
  %v4009 = vadd.f32 %v3905, %v3939
  %v4010 = vadd.f32 %v3906, %v3939
  %v4011 = vadd.f32 %v3907, %v3939
  %v4012 = vadd.f32 %v3908, %v3939
  %v4013 = vadd.f32 %v3909, %v3939
  %v4014 = vadd.f32 %v3910, %v3939
  %v4015 = vadd.f32 %v3911, %v3939
  %v4016 = vadd.f32 %v3912, %v3939
  %v4017 = vadd.f32 %v3913, %v3939
  %v4018 = vadd.f32 %v3914, %v3939
  %v4019 = vadd.f32 %v3915, %v3939
  %v4020 = vadd.f32 %v3916, %v3939
  %v4021 = vadd.f32 %v3917, %v3939
  %v4022 = vadd.f32 %v3918, %v3939
  %v4023 = vadd.f32 %v3919, %v3939
  %v4024 = vadd.f32 %v3920, %v3939
  %v4025 = vadd.f32 %v3921, %v3939
  %v4026 = vadd.f32 %v3922, %v3939
  %v4027 = vadd.f32 %v3923, %v3939
  %v4028 = vadd.f32 %v3924, %v3939
  %v4029 = vadd.f32 %v3925, %v3939
  %v4030 = vadd.f32 %v3926, %v3939
  %v4031 = vadd.f32 %v3927, %v3939
  %v4032 = vadd.f32 %v3928, %v3939
  %v4033 = vadd.f32 %v3929, %v3939
  %v4034 = vadd.f32 %v3930, %v3939
  %v4035 = vadd.f32 %v3931, %v3939
  %v4036 = vadd.f32 %v3932, %v3939
  %v4037 = vadd.f32 %v3933, %v3939
  %v4038 = vadd.f32 %v3934, %v3939
  %v4039 = vadd.f32 %v3935, %v3939
  %v4040 = vadd.f32 %v3936, %v3939
  %v4041 = vmax.f32 %v3941, 0.0
  %v4042 = vmax.f32 %v3942, 0.0
  %v4043 = vmax.f32 %v3943, 0.0
  %v4044 = vmax.f32 %v3944, 0.0
  %v4045 = vmax.f32 %v3945, 0.0
  %v4046 = vmax.f32 %v3946, 0.0
  %v4047 = vmax.f32 %v3947, 0.0
  %v4048 = vmax.f32 %v3948, 0.0
  %v4049 = vmax.f32 %v3949, 0.0
  %v4050 = vmax.f32 %v3950, 0.0
  %v4051 = vmax.f32 %v3951, 0.0
  %v4052 = vmax.f32 %v3952, 0.0
  %v4053 = vmax.f32 %v3953, 0.0
  %v4054 = vmax.f32 %v3954, 0.0
  %v4055 = vmax.f32 %v3955, 0.0
  %v4056 = vmax.f32 %v3956, 0.0
  %v4057 = vmax.f32 %v3957, 0.0
  %v4058 = vmax.f32 %v3958, 0.0
  %v4059 = vmax.f32 %v3959, 0.0
  %v4060 = vmax.f32 %v3960, 0.0
  %v4061 = vmax.f32 %v3961, 0.0
  %v4062 = vmax.f32 %v3962, 0.0
  %v4063 = vmax.f32 %v3963, 0.0
  %v4064 = vmax.f32 %v3964, 0.0
  %v4065 = vmax.f32 %v3965, 0.0
  %v4066 = vmax.f32 %v3966, 0.0
  %v4067 = vmax.f32 %v3967, 0.0
  %v4068 = vmax.f32 %v3968, 0.0
  %v4069 = vmax.f32 %v3969, 0.0
  %v4070 = vmax.f32 %v3970, 0.0
  %v4071 = vmax.f32 %v3971, 0.0
  %v4072 = vmax.f32 %v3972, 0.0
  %v4073 = vmax.f32 %v3973, 0.0
  %v4074 = vmax.f32 %v3974, 0.0
  %v4075 = vmax.f32 %v3975, 0.0
  %v4076 = vmax.f32 %v3976, 0.0
  %v4077 = vmax.f32 %v3977, 0.0
  %v4078 = vmax.f32 %v3978, 0.0
  %v4079 = vmax.f32 %v3979, 0.0
  %v4080 = vmax.f32 %v3980, 0.0
  %v4081 = vmax.f32 %v3981, 0.0
  %v4082 = vmax.f32 %v3982, 0.0
  %v4083 = vmax.f32 %v3983, 0.0
  %v4084 = vmax.f32 %v3984, 0.0
  %v4085 = vmax.f32 %v3985, 0.0
  %v4086 = vmax.f32 %v3986, 0.0
  %v4087 = vmax.f32 %v3987, 0.0
  %v4088 = vmax.f32 %v3988, 0.0
  %v4089 = vmax.f32 %v3989, 0.0
  %v4090 = vmax.f32 %v3990, 0.0
  %v4091 = vmax.f32 %v3991, 0.0
  %v4092 = vmax.f32 %v3992, 0.0
  %v4093 = vmax.f32 %v3993, 0.0
  %v4094 = vmax.f32 %v3994, 0.0
  %v4095 = vmax.f32 %v3995, 0.0
  %v4096 = vmax.f32 %v3996, 0.0
  %v4097 = vmax.f32 %v3997, 0.0
  %v4098 = vmax.f32 %v3998, 0.0
  %v4099 = vmax.f32 %v3999, 0.0
  %v4100 = vmax.f32 %v4000, 0.0
  %v4101 = vmax.f32 %v4001, 0.0
  %v4102 = vmax.f32 %v4002, 0.0
  %v4103 = vmax.f32 %v4003, 0.0
  %v4104 = vmax.f32 %v4004, 0.0
  %v4105 = vmax.f32 %v4005, 0.0
  %v4106 = vmax.f32 %v4006, 0.0
  %v4107 = vmax.f32 %v4007, 0.0
  %v4108 = vmax.f32 %v4008, 0.0
  %v4109 = vmax.f32 %v4009, 0.0
  %v4110 = vmax.f32 %v4010, 0.0
  %v4111 = vmax.f32 %v4011, 0.0
  %v4112 = vmax.f32 %v4012, 0.0
  %v4113 = vmax.f32 %v4013, 0.0
  %v4114 = vmax.f32 %v4014, 0.0
  %v4115 = vmax.f32 %v4015, 0.0
  %v4116 = vmax.f32 %v4016, 0.0
  %v4117 = vmax.f32 %v4017, 0.0
  %v4118 = vmax.f32 %v4018, 0.0
  %v4119 = vmax.f32 %v4019, 0.0
  %v4120 = vmax.f32 %v4020, 0.0
  %v4121 = vmax.f32 %v4021, 0.0
  %v4122 = vmax.f32 %v4022, 0.0
  %v4123 = vmax.f32 %v4023, 0.0
  %v4124 = vmax.f32 %v4024, 0.0
  %v4125 = vmax.f32 %v4025, 0.0
  %v4126 = vmax.f32 %v4026, 0.0
  %v4127 = vmax.f32 %v4027, 0.0
  %v4128 = vmax.f32 %v4028, 0.0
  %v4129 = vmax.f32 %v4029, 0.0
  %v4130 = vmax.f32 %v4030, 0.0
  %v4131 = vmax.f32 %v4031, 0.0
  %v4132 = vmax.f32 %v4032, 0.0
  %v4133 = vmax.f32 %v4033, 0.0
  %v4134 = vmax.f32 %v4034, 0.0
  %v4135 = vmax.f32 %v4035, 0.0
  %v4136 = vmax.f32 %v4036, 0.0
  %v4137 = vmax.f32 %v4037, 0.0
  %v4138 = vmax.f32 %v4038, 0.0
  %v4139 = vmax.f32 %v4039, 0.0
  %v4140 = vmax.f32 %v4040, 0.0
  %v4141 = vpack.c.bf16 %v4041, %v4041
  %v4142 = vpack.c.bf16 %v4042, %v4042
  %v4143 = vpack.c.bf16 %v4043, %v4043
  %v4144 = vpack.c.bf16 %v4044, %v4044
  %v4145 = vpack.c.bf16 %v4045, %v4045
  %v4146 = vpack.c.bf16 %v4046, %v4046
  %v4147 = vpack.c.bf16 %v4047, %v4047
  %v4148 = vpack.c.bf16 %v4048, %v4048
  %v4149 = vpack.c.bf16 %v4049, %v4049
  %v4150 = vpack.c.bf16 %v4050, %v4050
  %v4151 = vpack.c.bf16 %v4051, %v4051
  %v4152 = vpack.c.bf16 %v4052, %v4052
  %v4153 = vpack.c.bf16 %v4053, %v4053
  %v4154 = vpack.c.bf16 %v4054, %v4054
  %v4155 = vpack.c.bf16 %v4055, %v4055
  %v4156 = vpack.c.bf16 %v4056, %v4056
  %v4157 = vpack.c.bf16 %v4057, %v4057
  %v4158 = vpack.c.bf16 %v4058, %v4058
  %v4159 = vpack.c.bf16 %v4059, %v4059
  %v4160 = vpack.c.bf16 %v4060, %v4060
  %v4161 = vpack.c.bf16 %v4061, %v4061
  %v4162 = vpack.c.bf16 %v4062, %v4062
  %v4163 = vpack.c.bf16 %v4063, %v4063
  %v4164 = vpack.c.bf16 %v4064, %v4064
  %v4165 = vpack.c.bf16 %v4065, %v4065
  %v4166 = vpack.c.bf16 %v4066, %v4066
  %v4167 = vpack.c.bf16 %v4067, %v4067
  %v4168 = vpack.c.bf16 %v4068, %v4068
  %v4169 = vpack.c.bf16 %v4069, %v4069
  %v4170 = vpack.c.bf16 %v4070, %v4070
  %v4171 = vpack.c.bf16 %v4071, %v4071
  %v4172 = vpack.c.bf16 %v4072, %v4072
  %v4173 = vpack.c.bf16 %v4073, %v4073
  %v4174 = vpack.c.bf16 %v4074, %v4074
  %v4175 = vpack.c.bf16 %v4075, %v4075
  %v4176 = vpack.c.bf16 %v4076, %v4076
  %v4177 = vpack.c.bf16 %v4077, %v4077
  %v4178 = vpack.c.bf16 %v4078, %v4078
  %v4179 = vpack.c.bf16 %v4079, %v4079
  %v4180 = vpack.c.bf16 %v4080, %v4080
  %v4181 = vpack.c.bf16 %v4081, %v4081
  %v4182 = vpack.c.bf16 %v4082, %v4082
  %v4183 = vpack.c.bf16 %v4083, %v4083
  %v4184 = vpack.c.bf16 %v4084, %v4084
  %v4185 = vpack.c.bf16 %v4085, %v4085
  %v4186 = vpack.c.bf16 %v4086, %v4086
  %v4187 = vpack.c.bf16 %v4087, %v4087
  %v4188 = vpack.c.bf16 %v4088, %v4088
  %v4189 = vpack.c.bf16 %v4089, %v4089
  %v4190 = vpack.c.bf16 %v4090, %v4090
  %v4191 = vpack.c.bf16 %v4091, %v4091
  %v4192 = vpack.c.bf16 %v4092, %v4092
  %v4193 = vpack.c.bf16 %v4093, %v4093
  %v4194 = vpack.c.bf16 %v4094, %v4094
  %v4195 = vpack.c.bf16 %v4095, %v4095
  %v4196 = vpack.c.bf16 %v4096, %v4096
  %v4197 = vpack.c.bf16 %v4097, %v4097
  %v4198 = vpack.c.bf16 %v4098, %v4098
  %v4199 = vpack.c.bf16 %v4099, %v4099
  %v4200 = vpack.c.bf16 %v4100, %v4100
  %v4201 = vpack.c.bf16 %v4101, %v4101
  %v4202 = vpack.c.bf16 %v4102, %v4102
  %v4203 = vpack.c.bf16 %v4103, %v4103
  %v4204 = vpack.c.bf16 %v4104, %v4104
  %v4205 = vpack.c.bf16 %v4105, %v4105
  %v4206 = vpack.c.bf16 %v4106, %v4106
  %v4207 = vpack.c.bf16 %v4107, %v4107
  %v4208 = vpack.c.bf16 %v4108, %v4108
  %v4209 = vpack.c.bf16 %v4109, %v4109
  %v4210 = vpack.c.bf16 %v4110, %v4110
  %v4211 = vpack.c.bf16 %v4111, %v4111
  %v4212 = vpack.c.bf16 %v4112, %v4112
  %v4213 = vpack.c.bf16 %v4113, %v4113
  %v4214 = vpack.c.bf16 %v4114, %v4114
  %v4215 = vpack.c.bf16 %v4115, %v4115
  %v4216 = vpack.c.bf16 %v4116, %v4116
  %v4217 = vpack.c.bf16 %v4117, %v4117
  %v4218 = vpack.c.bf16 %v4118, %v4118
  %v4219 = vpack.c.bf16 %v4119, %v4119
  %v4220 = vpack.c.bf16 %v4120, %v4120
  %v4221 = vpack.c.bf16 %v4121, %v4121
  %v4222 = vpack.c.bf16 %v4122, %v4122
  %v4223 = vpack.c.bf16 %v4123, %v4123
  %v4224 = vpack.c.bf16 %v4124, %v4124
  %v4225 = vpack.c.bf16 %v4125, %v4125
  %v4226 = vpack.c.bf16 %v4126, %v4126
  %v4227 = vpack.c.bf16 %v4127, %v4127
  %v4228 = vpack.c.bf16 %v4128, %v4128
  %v4229 = vpack.c.bf16 %v4129, %v4129
  %v4230 = vpack.c.bf16 %v4130, %v4130
  %v4231 = vpack.c.bf16 %v4131, %v4131
  %v4232 = vpack.c.bf16 %v4132, %v4132
  %v4233 = vpack.c.bf16 %v4133, %v4133
  %v4234 = vpack.c.bf16 %v4134, %v4134
  %v4235 = vpack.c.bf16 %v4135, %v4135
  %v4236 = vpack.c.bf16 %v4136, %v4136
  %v4237 = vpack.c.bf16 %v4137, %v4137
  %v4238 = vpack.c.bf16 %v4138, %v4138
  %v4239 = vpack.c.bf16 %v4139, %v4139
  %v4240 = vpack.c.bf16 %v4140, %v4140
  %vm4241 = vcmask 76800
  %4242 = vst.msk [vmem:[%s3] sm:$0xf] %vm4241, %v4141
  %4243 = vst.msk [vmem:[%s3 + $0x4] sm:$0xf] %vm4241, %v4142
  %4244 = vst.msk [vmem:[%s3 + $0x8] sm:$0xf] %vm4241, %v4143
  %4245 = vst.msk [vmem:[%s3 + $0xc] sm:$0xf] %vm4241, %v4144
  %4246 = vst.msk [vmem:[%s3 + $0x10] sm:$0xf] %vm4241, %v4145
  %4247 = vst.msk [vmem:[%s3 + $0x14] sm:$0xf] %vm4241, %v4146
  %4248 = vst.msk [vmem:[%s3 + $0x18] sm:$0xf] %vm4241, %v4147
  %4249 = vst.msk [vmem:[%s3 + $0x1c] sm:$0xf] %vm4241, %v4148
  %4250 = vst.msk [vmem:[%s3 + $0x20] sm:$0xf] %vm4241, %v4149
  %4251 = vst.msk [vmem:[%s3 + $0x24] sm:$0xf] %vm4241, %v4150
  %4252 = vst.msk [vmem:[%s3 + $0x28] sm:$0xf] %vm4241, %v4151
  %4253 = vst.msk [vmem:[%s3 + $0x2c] sm:$0xf] %vm4241, %v4152
  %4254 = vst.msk [vmem:[%s3 + $0x30] sm:$0xf] %vm4241, %v4153
  %4255 = vst.msk [vmem:[%s3 + $0x34] sm:$0xf] %vm4241, %v4154
  %4256 = vst.msk [vmem:[%s3 + $0x38] sm:$0xf] %vm4241, %v4155
  %4257 = vst.msk [vmem:[%s3 + $0x3c] sm:$0xf] %vm4241, %v4156
  %4258 = vst.msk [vmem:[%s3 + $0x40] sm:$0xf] %vm4241, %v4157
  %4259 = vst.msk [vmem:[%s3 + $0x44] sm:$0xf] %vm4241, %v4158
  %4260 = vst.msk [vmem:[%s3 + $0x48] sm:$0xf] %vm4241, %v4159
  %4261 = vst.msk [vmem:[%s3 + $0x4c] sm:$0xf] %vm4241, %v4160
  %4262 = vst.msk [vmem:[%s3 + $0x50] sm:$0xf] %vm4241, %v4161
  %4263 = vst.msk [vmem:[%s3 + $0x54] sm:$0xf] %vm4241, %v4162
  %4264 = vst.msk [vmem:[%s3 + $0x58] sm:$0xf] %vm4241, %v4163
  %4265 = vst.msk [vmem:[%s3 + $0x5c] sm:$0xf] %vm4241, %v4164
  %4266 = vst.msk [vmem:[%s3 + $0x60] sm:$0xf] %vm4241, %v4165
  %4267 = vst.msk [vmem:[%s3 + $0x64] sm:$0xf] %vm4241, %v4166
  %4268 = vst.msk [vmem:[%s3 + $0x68] sm:$0xf] %vm4241, %v4167
  %4269 = vst.msk [vmem:[%s3 + $0x6c] sm:$0xf] %vm4241, %v4168
  %4270 = vst.msk [vmem:[%s3 + $0x70] sm:$0xf] %vm4241, %v4169
  %4271 = vst.msk [vmem:[%s3 + $0x74] sm:$0xf] %vm4241, %v4170
  %4272 = vst.msk [vmem:[%s3 + $0x78] sm:$0xf] %vm4241, %v4171
  %4273 = vst.msk [vmem:[%s3 + $0x7c] sm:$0xf] %vm4241, %v4172
  %4274 = vst.msk [vmem:[%s3 + $0x80] sm:$0xf] %vm4241, %v4173
  %4275 = vst.msk [vmem:[%s3 + $0x84] sm:$0xf] %vm4241, %v4174
  %4276 = vst.msk [vmem:[%s3 + $0x88] sm:$0xf] %vm4241, %v4175
  %4277 = vst.msk [vmem:[%s3 + $0x8c] sm:$0xf] %vm4241, %v4176
  %4278 = vst.msk [vmem:[%s3 + $0x90] sm:$0xf] %vm4241, %v4177
  %4279 = vst.msk [vmem:[%s3 + $0x94] sm:$0xf] %vm4241, %v4178
  %4280 = vst.msk [vmem:[%s3 + $0x98] sm:$0xf] %vm4241, %v4179
  %4281 = vst.msk [vmem:[%s3 + $0x9c] sm:$0xf] %vm4241, %v4180
  %4282 = vst.msk [vmem:[%s3 + $0xa0] sm:$0xf] %vm4241, %v4181
  %4283 = vst.msk [vmem:[%s3 + $0xa4] sm:$0xf] %vm4241, %v4182
  %4284 = vst.msk [vmem:[%s3 + $0xa8] sm:$0xf] %vm4241, %v4183
  %4285 = vst.msk [vmem:[%s3 + $0xac] sm:$0xf] %vm4241, %v4184
  %4286 = vst.msk [vmem:[%s3 + $0xb0] sm:$0xf] %vm4241, %v4185
  %4287 = vst.msk [vmem:[%s3 + $0xb4] sm:$0xf] %vm4241, %v4186
  %4288 = vst.msk [vmem:[%s3 + $0xb8] sm:$0xf] %vm4241, %v4187
  %4289 = vst.msk [vmem:[%s3 + $0xbc] sm:$0xf] %vm4241, %v4188
  %4290 = vst.msk [vmem:[%s3 + $0xc0] sm:$0xf] %vm4241, %v4189
  %4291 = vst.msk [vmem:[%s3 + $0xc4] sm:$0xf] %vm4241, %v4190
  %4292 = vst.msk [vmem:[%s3 + $0xc8] sm:$0xf] %vm4241, %v4191
  %4293 = vst.msk [vmem:[%s3 + $0xcc] sm:$0xf] %vm4241, %v4192
  %4294 = vst.msk [vmem:[%s3 + $0xd0] sm:$0xf] %vm4241, %v4193
  %4295 = vst.msk [vmem:[%s3 + $0xd4] sm:$0xf] %vm4241, %v4194
  %4296 = vst.msk [vmem:[%s3 + $0xd8] sm:$0xf] %vm4241, %v4195
  %4297 = vst.msk [vmem:[%s3 + $0xdc] sm:$0xf] %vm4241, %v4196
  %4298 = vst.msk [vmem:[%s3 + $0xe0] sm:$0xf] %vm4241, %v4197
  %4299 = vst.msk [vmem:[%s3 + $0xe4] sm:$0xf] %vm4241, %v4198
  %4300 = vst.msk [vmem:[%s3 + $0xe8] sm:$0xf] %vm4241, %v4199
  %4301 = vst.msk [vmem:[%s3 + $0xec] sm:$0xf] %vm4241, %v4200
  %4302 = vst.msk [vmem:[%s3 + $0xf0] sm:$0xf] %vm4241, %v4201
  %4303 = vst.msk [vmem:[%s3 + $0xf4] sm:$0xf] %vm4241, %v4202
  %4304 = vst.msk [vmem:[%s3 + $0xf8] sm:$0xf] %vm4241, %v4203
  %4305 = vst.msk [vmem:[%s3 + $0xfc] sm:$0xf] %vm4241, %v4204
  %4306 = vst.msk [vmem:[%s3 + $0x100] sm:$0xf] %vm4241, %v4205
  %4307 = vst.msk [vmem:[%s3 + $0x104] sm:$0xf] %vm4241, %v4206
  %4308 = vst.msk [vmem:[%s3 + $0x108] sm:$0xf] %vm4241, %v4207
  %4309 = vst.msk [vmem:[%s3 + $0x10c] sm:$0xf] %vm4241, %v4208
  %4310 = vst.msk [vmem:[%s3 + $0x110] sm:$0xf] %vm4241, %v4209
  %4311 = vst.msk [vmem:[%s3 + $0x114] sm:$0xf] %vm4241, %v4210
  %4312 = vst.msk [vmem:[%s3 + $0x118] sm:$0xf] %vm4241, %v4211
  %4313 = vst.msk [vmem:[%s3 + $0x11c] sm:$0xf] %vm4241, %v4212
  %4314 = vst.msk [vmem:[%s3 + $0x120] sm:$0xf] %vm4241, %v4213
  %4315 = vst.msk [vmem:[%s3 + $0x124] sm:$0xf] %vm4241, %v4214
  %4316 = vst.msk [vmem:[%s3 + $0x128] sm:$0xf] %vm4241, %v4215
  %4317 = vst.msk [vmem:[%s3 + $0x12c] sm:$0xf] %vm4241, %v4216
  %4318 = vst.msk [vmem:[%s3 + $0x130] sm:$0xf] %vm4241, %v4217
  %4319 = vst.msk [vmem:[%s3 + $0x134] sm:$0xf] %vm4241, %v4218
  %4320 = vst.msk [vmem:[%s3 + $0x138] sm:$0xf] %vm4241, %v4219
  %4321 = vst.msk [vmem:[%s3 + $0x13c] sm:$0xf] %vm4241, %v4220
  %4322 = vst.msk [vmem:[%s3 + $0x140] sm:$0xf] %vm4241, %v4221
  %4323 = vst.msk [vmem:[%s3 + $0x144] sm:$0xf] %vm4241, %v4222
  %4324 = vst.msk [vmem:[%s3 + $0x148] sm:$0xf] %vm4241, %v4223
  %4325 = vst.msk [vmem:[%s3 + $0x14c] sm:$0xf] %vm4241, %v4224
  %4326 = vst.msk [vmem:[%s3 + $0x150] sm:$0xf] %vm4241, %v4225
  %4327 = vst.msk [vmem:[%s3 + $0x154] sm:$0xf] %vm4241, %v4226
  %4328 = vst.msk [vmem:[%s3 + $0x158] sm:$0xf] %vm4241, %v4227
  %4329 = vst.msk [vmem:[%s3 + $0x15c] sm:$0xf] %vm4241, %v4228
  %4330 = vst.msk [vmem:[%s3 + $0x160] sm:$0xf] %vm4241, %v4229
  %4331 = vst.msk [vmem:[%s3 + $0x164] sm:$0xf] %vm4241, %v4230
  %4332 = vst.msk [vmem:[%s3 + $0x168] sm:$0xf] %vm4241, %v4231
  %4333 = vst.msk [vmem:[%s3 + $0x16c] sm:$0xf] %vm4241, %v4232
  %4334 = vst.msk [vmem:[%s3 + $0x170] sm:$0xf] %vm4241, %v4233
  %4335 = vst.msk [vmem:[%s3 + $0x174] sm:$0xf] %vm4241, %v4234
  %4336 = vst.msk [vmem:[%s3 + $0x178] sm:$0xf] %vm4241, %v4235
  %4337 = vst.msk [vmem:[%s3 + $0x17c] sm:$0xf] %vm4241, %v4236
  %4338 = vst.msk [vmem:[%s3 + $0x180] sm:$0xf] %vm4241, %v4237
  %4339 = vst.msk [vmem:[%s3 + $0x184] sm:$0xf] %vm4241, %v4238
  %4340 = vst.msk [vmem:[%s3 + $0x188] sm:$0xf] %vm4241, %v4239
  %4341 = vst.msk [vmem:[%s3 + $0x18c] sm:$0xf] %vm4241, %v4240
  // Predicated region
  $region14: #{simple_net_dropout_forward.2} parent=0 // pred_check
    _
  $region15: #{simple_net_dropout_forward.2} parent=0 // pred_check_branch
    %4343 = sbr.rel (0) target = $region17
  $region16: #{simple_net_dropout_forward.2} parent=0 // pred_region
    _
  $region17: #{simple_net_dropout_forward.2} parent=0 // pred_fallthru
    _
  // Predicated region
  $region18: #{simple_net_dropout_forward.2} parent=0 // pred_check
    _
  $region19: #{simple_net_dropout_forward.2} parent=0 // pred_check_branch
    %4345 = sbr.rel (0) target = $region21
  $region20: #{simple_net_dropout_forward.2} parent=0 // pred_region
    _
  $region21: #{simple_net_dropout_forward.2} parent=0 // pred_fallthru
    _

// kernel: simple_net_dropout_forward.3
$region0: #{simple_net_dropout_forward.3}
  #allocation0 [shape = 'u32[]', space=smem, size = 0x4, offset = 0x4, fixed_abs, tag = 'smem constant byte address 0x4 - core index']
  #allocation1 [shape = 'u32[72,128]{1,0:T(1,128)}', space=vmem, size = 0x9000, scoped, tag = 'internal scratch']
  %s0 = inlined_call_operand.vmem [shape: bf16[200,490], index: 0, kind: input, shape index: {}]
  %s1 = inlined_call_operand.vmem [shape: bf16[9,490,20], index: 1, kind: input, shape index: {}]
  %s2 = inlined_call_operand.vmem [shape: f32[1,20], index: 2, kind: input, shape index: {}]
  %s3 = inlined_call_operand.vmem [shape: f32[25,20,100], index: 3, kind: input, shape index: {}]
  %s4 = inlined_call_operand.vmem [shape: f32[1,100], index: 4, kind: input, shape index: {}]
  %s5 = inlined_call_operand.vmem [shape: f32[100,15], index: 5, kind: input, shape index: {}]
  %s6 = inlined_call_operand.vmem [shape: f32[1,15], index: 6, kind: input, shape index: {}]
  %s7 = inlined_call_operand.hbm [shape: f32[2,15], index: 7, kind: output, shape index: {}]
  %s8 = sld [smem:[#allocation0]]
  $region38: #{simple_net_dropout_forward.3} parent=0
    _
  %s10 = ssub.s32 1, %s8
  %s11 = scalar_select 0, %s10, %s8
  $region1: #{simple_net_dropout_forward.3} parent=0
    #allocation2 [shape = 'u8[1024]{0}', space=vmem, size = 0x400, scoped, tag = 'output window, operand 0, single buffered']
    #allocation3 [shape = 's32[1]{0}', space=sflag, size = 0x4, scoped, tag = 'scoped memory for simple_net_dropout_forward.3']
    %12 = vsyncpa [#allocation3], 0
    // Predicated region
    $region2: #{simple_net_dropout_forward.3} parent=1 // pred_check
      _
    $region3: #{simple_net_dropout_forward.3} parent=1 // pred_check_branch
      %14 = sbr.rel (0) target = $region5
    $region4: #{simple_net_dropout_forward.3} parent=1 // pred_region
      _
    $region5: #{simple_net_dropout_forward.3} parent=1 // pred_fallthru
      _
    // Predicated region
    $region6: #{simple_net_dropout_forward.3} parent=1 // pred_check
      _
    $region7: #{simple_net_dropout_forward.3} parent=1 // pred_check_branch
      %16 = sbr.rel (0) target = $region9
    $region8: #{simple_net_dropout_forward.3} parent=1 // pred_region
      _
    $region9: #{simple_net_dropout_forward.3} parent=1 // pred_fallthru
      _
    // Predicated region
    $region10: #{simple_net_dropout_forward.3} parent=1 // pred_check
      _
    $region11: #{simple_net_dropout_forward.3} parent=1 // pred_check_branch
      %18 = sbr.rel (0) target = $region13
    $region12: #{simple_net_dropout_forward.3} parent=1 // pred_region
      _
    $region13: #{simple_net_dropout_forward.3} parent=1 // pred_fallthru
      _
    // Predicated region
    $region14: #{simple_net_dropout_forward.3} parent=1 // pred_check
      _
    $region15: #{simple_net_dropout_forward.3} parent=1 // pred_check_branch
      %20 = sbr.rel (0) target = $region17
    $region16: #{simple_net_dropout_forward.3} parent=1 // pred_region
      _
    $region17: #{simple_net_dropout_forward.3} parent=1 // pred_fallthru
      _
    // Predicated region
    $region18: #{simple_net_dropout_forward.3} parent=1 // pred_check
      _
    $region19: #{simple_net_dropout_forward.3} parent=1 // pred_check_branch
      %22 = sbr.rel (0) target = $region21
    $region20: #{simple_net_dropout_forward.3} parent=1 // pred_region
      _
    $region21: #{simple_net_dropout_forward.3} parent=1 // pred_fallthru
      _
    // Predicated region
    $region22: #{simple_net_dropout_forward.3} parent=1 // pred_check
      _
    $region23: #{simple_net_dropout_forward.3} parent=1 // pred_check_branch
      %24 = sbr.rel (0) target = $region25
    $region24: #{simple_net_dropout_forward.3} parent=1 // pred_region
      _
    $region25: #{simple_net_dropout_forward.3} parent=1 // pred_fallthru
      _
    // Predicated region
    $region26: #{simple_net_dropout_forward.3} parent=1 // pred_check
      _
    $region27: #{simple_net_dropout_forward.3} parent=1 // pred_check_branch
      %26 = sbr.rel (0) target = $region29
    $region28: #{simple_net_dropout_forward.3} parent=1 // pred_region
      _
    $region29: #{simple_net_dropout_forward.3} parent=1 // pred_fallthru
      _
    %v28 = vld [vmem:[%s0] sm:$0xff]
    %v29 = vld [vmem:[%s0 + $0x8] sm:$0xff]
    %v30 = vld [vmem:[%s0 + $0x10] sm:$0xff]
    %v31 = vld [vmem:[%s0 + $0x18] sm:$0xff]
    %v32 = vld [vmem:[%s0 + $0x20] sm:$0xff]
    %v33 = vld [vmem:[%s0 + $0x28] sm:$0xff]
    %v34 = vld [vmem:[%s0 + $0x30] sm:$0xff]
    %v35 = vld [vmem:[%s0 + $0x38] sm:$0xff]
    %v36 = vld [vmem:[%s0 + $0x40] sm:$0xff]
    %v37 = vld [vmem:[%s0 + $0x48] sm:$0xff]
    %v38 = vld [vmem:[%s0 + $0x50] sm:$0xff]
    %v39 = vld [vmem:[%s0 + $0x58] sm:$0xff]
    %v40 = vld [vmem:[%s0 + $0x60] sm:$0xff]
    %v41 = vld [vmem:[%s0 + $0x68] sm:$0xff]
    %v42 = vld [vmem:[%s0 + $0x70] sm:$0xff]
    %v43 = vld [vmem:[%s0 + $0x78] sm:$0xff]
    %v44 = vld [vmem:[%s0 + $0x80] sm:$0xff]
    %v45 = vld [vmem:[%s0 + $0x88] sm:$0xff]
    %v46 = vld [vmem:[%s0 + $0x90] sm:$0xff]
    %v47 = vld [vmem:[%s0 + $0x98] sm:$0xff]
    %v48 = vld [vmem:[%s0 + $0xa0] sm:$0xff]
    %v49 = vld [vmem:[%s0 + $0xa8] sm:$0xff]
    %v50 = vld [vmem:[%s0 + $0xb0] sm:$0xff]
    %v51 = vld [vmem:[%s0 + $0xb8] sm:$0xff]
    %v52 = vld [vmem:[%s0 + $0xc0] sm:$0xff]
    %v53 = vld [vmem:[%s0 + $0xc8] sm:$0xff]
    %v54 = vld [vmem:[%s0 + $0xd0] sm:$0xff]
    %v55 = vld [vmem:[%s0 + $0xd8] sm:$0xff]
    %v56 = vld [vmem:[%s0 + $0xe0] sm:$0xff]
    %v57 = vld [vmem:[%s0 + $0xe8] sm:$0xff]
    %v58 = vld [vmem:[%s0 + $0xf0] sm:$0xff]
    %v59 = vld [vmem:[%s0 + $0xf8] sm:$0xff]
    %v60 = vld [vmem:[%s0 + $0x100] sm:$0xff]
    %v61 = vld [vmem:[%s0 + $0x108] sm:$0xff]
    %v62 = vld [vmem:[%s0 + $0x110] sm:$0xff]
    %v63 = vld [vmem:[%s0 + $0x118] sm:$0xff]
    %v64 = vld [vmem:[%s0 + $0x120] sm:$0xff]
    %v65 = vld [vmem:[%s0 + $0x128] sm:$0xff]
    %v66 = vld [vmem:[%s0 + $0x130] sm:$0xff]
    %v67 = vld [vmem:[%s0 + $0x138] sm:$0xff]
    %v68 = vld [vmem:[%s0 + $0x140] sm:$0xff]
    %v69 = vld [vmem:[%s0 + $0x148] sm:$0xff]
    %v70 = vld [vmem:[%s0 + $0x150] sm:$0xff]
    %v71 = vld [vmem:[%s0 + $0x158] sm:$0xff]
    %v72 = vld [vmem:[%s0 + $0x160] sm:$0xff]
    %v73 = vld [vmem:[%s0 + $0x168] sm:$0xff]
    %v74 = vld [vmem:[%s0 + $0x170] sm:$0xff]
    %v75 = vld [vmem:[%s0 + $0x178] sm:$0xff]
    %v76 = vld [vmem:[%s0 + $0x180] sm:$0xff]
    %v77 = vld [vmem:[%s0 + $0x188] sm:$0xff]
    %v78 = vld [vmem:[%s1] sm:$0xf]
    %v79 = vld [vmem:[%s1 + $0x4] sm:$0xf]
    %v80 = vld [vmem:[%s1 + $0x8] sm:$0xf]
    %v81 = vld [vmem:[%s1 + $0xc] sm:$0xf]
    %v82 = vld [vmem:[%s1 + $0x10] sm:$0xf]
    %v83 = vld [vmem:[%s1 + $0x14] sm:$0xf]
    %v84 = vld [vmem:[%s1 + $0x18] sm:$0xf]
    %v85 = vld [vmem:[%s1 + $0x1c] sm:$0xf]
    %v86 = vld [vmem:[%s1 + $0x20] sm:$0xf]
    %v87 = vld [vmem:[%s1 + $0x24] sm:$0xf]
    %v88 = vld [vmem:[%s1 + $0x28] sm:$0xf]
    %v89 = vld [vmem:[%s1 + $0x2c] sm:$0xf]
    %v90 = vld [vmem:[%s1 + $0x30] sm:$0xf]
    %v91 = vld [vmem:[%s1 + $0x34] sm:$0xf]
    %v92 = vld [vmem:[%s1 + $0x38] sm:$0xf]
    %v93 = vld [vmem:[%s1 + $0x3c] sm:$0xf]
    %v94 = vld [vmem:[%s1 + $0x40] sm:$0xf]
    %v95 = vld [vmem:[%s1 + $0x44] sm:$0xf]
    %v96 = vld [vmem:[%s1 + $0x48] sm:$0xf]
    %v97 = vld [vmem:[%s1 + $0x4c] sm:$0xf]
    %v98 = vld [vmem:[%s1 + $0x50] sm:$0xf]
    %v99 = vld [vmem:[%s1 + $0x54] sm:$0xf]
    %v100 = vld [vmem:[%s1 + $0x58] sm:$0xf]
    %v101 = vld [vmem:[%s1 + $0x5c] sm:$0xf]
    %v102 = vld [vmem:[%s1 + $0x60] sm:$0xf]
    %v103 = vld [vmem:[%s1 + $0x64] sm:$0xf]
    %v104 = vld [vmem:[%s1 + $0x68] sm:$0xf]
    %v105 = vld [vmem:[%s1 + $0x6c] sm:$0xf]
    %v106 = vld [vmem:[%s1 + $0x70] sm:$0xf]
    %v107 = vld [vmem:[%s1 + $0x74] sm:$0xf]
    %v108 = vld [vmem:[%s1 + $0x78] sm:$0xf]
    %v109 = vld [vmem:[%s1 + $0x7c] sm:$0xf]
    %v110 = vld [vmem:[%s1 + $0x80] sm:$0xf]
    %v111 = vld [vmem:[%s1 + $0x84] sm:$0xf]
    %v112 = vld [vmem:[%s1 + $0x88] sm:$0xf]
    %v113 = vld [vmem:[%s1 + $0x8c] sm:$0xf]
    %v114 = vld [vmem:[%s1 + $0x90] sm:$0xf]
    %v115 = vld [vmem:[%s1 + $0x94] sm:$0xf]
    %v116 = vld [vmem:[%s1 + $0x98] sm:$0xf]
    %v117 = vld [vmem:[%s1 + $0x9c] sm:$0xf]
    %v118 = vld [vmem:[%s1 + $0xa0] sm:$0xf]
    %v119 = vld [vmem:[%s1 + $0xa4] sm:$0xf]
    %v120 = vld [vmem:[%s1 + $0xa8] sm:$0xf]
    %v121 = vld [vmem:[%s1 + $0xac] sm:$0xf]
    %v122 = vld [vmem:[%s1 + $0xb0] sm:$0xf]
    %v123 = vld [vmem:[%s1 + $0xb4] sm:$0xf]
    %v124 = vld [vmem:[%s1 + $0xb8] sm:$0xf]
    %v125 = vld [vmem:[%s1 + $0xbc] sm:$0xf]
    %v126 = vld [vmem:[%s1 + $0xc0] sm:$0xf]
    %v127 = vld [vmem:[%s1 + $0xc4] sm:$0xf]
    %v128 = vld [vmem:[%s1 + $0xc8] sm:$0xf]
    %v129 = vld [vmem:[%s1 + $0xcc] sm:$0xf]
    %v130 = vld [vmem:[%s1 + $0xd0] sm:$0xf]
    %v131 = vld [vmem:[%s1 + $0xd4] sm:$0xf]
    %v132 = vld [vmem:[%s1 + $0xd8] sm:$0xf]
    %v133 = vld [vmem:[%s1 + $0xdc] sm:$0xf]
    %v134 = vld [vmem:[%s1 + $0xe0] sm:$0xf]
    %v135 = vld [vmem:[%s1 + $0xe4] sm:$0xf]
    %v136 = vld [vmem:[%s1 + $0xe8] sm:$0xf]
    %v137 = vld [vmem:[%s1 + $0xec] sm:$0xf]
    %v138 = vld [vmem:[%s1 + $0xf0] sm:$0xf]
    %v139 = vld [vmem:[%s1 + $0xf4] sm:$0x1]
    %v190 = vunpack.c.l.b16 %v28
    %v191 = vunpack.c.h.b16 %v28
    %v192 = vunpack.c.l.b16 %v29
    %v193 = vunpack.c.h.b16 %v29
    %v194 = vunpack.c.l.b16 %v30
    %v195 = vunpack.c.h.b16 %v30
    %v196 = vunpack.c.l.b16 %v31
    %v197 = vunpack.c.h.b16 %v31
    %v198 = vunpack.c.l.b16 %v32
    %v199 = vunpack.c.h.b16 %v32
    %v200 = vunpack.c.l.b16 %v33
    %v201 = vunpack.c.h.b16 %v33
    %v202 = vunpack.c.l.b16 %v34
    %v203 = vunpack.c.h.b16 %v34
    %v204 = vunpack.c.l.b16 %v35
    %v205 = vunpack.c.h.b16 %v35
    %v206 = vunpack.c.l.b16 %v36
    %v207 = vunpack.c.h.b16 %v36
    %v208 = vunpack.c.l.b16 %v37
    %v209 = vunpack.c.h.b16 %v37
    %v210 = vunpack.c.l.b16 %v38
    %v211 = vunpack.c.h.b16 %v38
    %v212 = vunpack.c.l.b16 %v39
    %v213 = vunpack.c.h.b16 %v39
    %v214 = vunpack.c.l.b16 %v40
    %v215 = vunpack.c.h.b16 %v40
    %v216 = vunpack.c.l.b16 %v41
    %v217 = vunpack.c.h.b16 %v41
    %v218 = vunpack.c.l.b16 %v42
    %v219 = vunpack.c.h.b16 %v42
    %v220 = vunpack.c.l.b16 %v43
    %v221 = vunpack.c.h.b16 %v43
    %v222 = vunpack.c.l.b16 %v44
    %v223 = vunpack.c.h.b16 %v44
    %v224 = vunpack.c.l.b16 %v45
    %v225 = vunpack.c.h.b16 %v45
    %v226 = vunpack.c.l.b16 %v46
    %v227 = vunpack.c.h.b16 %v46
    %v228 = vunpack.c.l.b16 %v47
    %v229 = vunpack.c.h.b16 %v47
    %v230 = vunpack.c.l.b16 %v48
    %v231 = vunpack.c.h.b16 %v48
    %v232 = vunpack.c.l.b16 %v49
    %v233 = vunpack.c.h.b16 %v49
    %v234 = vunpack.c.l.b16 %v50
    %v235 = vunpack.c.h.b16 %v50
    %v236 = vunpack.c.l.b16 %v51
    %v237 = vunpack.c.h.b16 %v51
    %v238 = vunpack.c.l.b16 %v52
    %v239 = vunpack.c.h.b16 %v52
    %v240 = vunpack.c.l.b16 %v53
    %v241 = vunpack.c.h.b16 %v53
    %v242 = vunpack.c.l.b16 %v54
    %v243 = vunpack.c.h.b16 %v54
    %v244 = vunpack.c.l.b16 %v55
    %v245 = vunpack.c.h.b16 %v55
    %v246 = vunpack.c.l.b16 %v56
    %v247 = vunpack.c.h.b16 %v56
    %v248 = vunpack.c.l.b16 %v57
    %v249 = vunpack.c.h.b16 %v57
    %v250 = vunpack.c.l.b16 %v58
    %v251 = vunpack.c.h.b16 %v58
    %v252 = vunpack.c.l.b16 %v59
    %v253 = vunpack.c.h.b16 %v59
    %v254 = vunpack.c.l.b16 %v60
    %v255 = vunpack.c.h.b16 %v60
    %v256 = vunpack.c.l.b16 %v61
    %v257 = vunpack.c.h.b16 %v61
    %v258 = vunpack.c.l.b16 %v62
    %v259 = vunpack.c.h.b16 %v62
    %v260 = vunpack.c.l.b16 %v63
    %v261 = vunpack.c.h.b16 %v63
    %v262 = vunpack.c.l.b16 %v64
    %v263 = vunpack.c.h.b16 %v64
    %v264 = vunpack.c.l.b16 %v65
    %v265 = vunpack.c.h.b16 %v65
    %v266 = vunpack.c.l.b16 %v66
    %v267 = vunpack.c.h.b16 %v66
    %v268 = vunpack.c.l.b16 %v67
    %v269 = vunpack.c.h.b16 %v67
    %v270 = vunpack.c.l.b16 %v68
    %v271 = vunpack.c.h.b16 %v68
    %v272 = vunpack.c.l.b16 %v69
    %v273 = vunpack.c.h.b16 %v69
    %v274 = vunpack.c.l.b16 %v70
    %v275 = vunpack.c.h.b16 %v70
    %v276 = vunpack.c.l.b16 %v71
    %v277 = vunpack.c.h.b16 %v71
    %v278 = vunpack.c.l.b16 %v72
    %v279 = vunpack.c.h.b16 %v72
    %v280 = vunpack.c.l.b16 %v73
    %v281 = vunpack.c.h.b16 %v73
    %v282 = vunpack.c.l.b16 %v74
    %v283 = vunpack.c.h.b16 %v74
    %v284 = vunpack.c.l.b16 %v75
    %v285 = vunpack.c.h.b16 %v75
    %v286 = vunpack.c.l.b16 %v76
    %v287 = vunpack.c.h.b16 %v76
    %v288 = vunpack.c.l.b16 %v77
    %v289 = vunpack.c.h.b16 %v77
    %v290 = vpack.c.b16 %v194, %v190
    %v291 = vpack.c.b16 %v195, %v191
    %v292 = vpack.c.b16 %v196, %v192
    %v293 = vpack.c.b16 %v197, %v193
    %v294 = vpack.c.b16 %v202, %v198
    %v295 = vpack.c.b16 %v203, %v199
    %v296 = vpack.c.b16 %v204, %v200
    %v297 = vpack.c.b16 %v205, %v201
    %v298 = vpack.c.b16 %v210, %v206
    %v299 = vpack.c.b16 %v211, %v207
    %v300 = vpack.c.b16 %v212, %v208
    %v301 = vpack.c.b16 %v213, %v209
    %v302 = vpack.c.b16 %v218, %v214
    %v303 = vpack.c.b16 %v219, %v215
    %v304 = vpack.c.b16 %v220, %v216
    %v305 = vpack.c.b16 %v221, %v217
    %v306 = vpack.c.b16 %v226, %v222
    %v307 = vpack.c.b16 %v227, %v223
    %v308 = vpack.c.b16 %v228, %v224
    %v309 = vpack.c.b16 %v229, %v225
    %v310 = vpack.c.b16 %v234, %v230
    %v311 = vpack.c.b16 %v235, %v231
    %v312 = vpack.c.b16 %v236, %v232
    %v313 = vpack.c.b16 %v237, %v233
    %v314 = vpack.c.b16 %v242, %v238
    %v315 = vpack.c.b16 %v243, %v239
    %v316 = vpack.c.b16 %v244, %v240
    %v317 = vpack.c.b16 %v245, %v241
    %v318 = vpack.c.b16 %v250, %v246
    %v319 = vpack.c.b16 %v251, %v247
    %v320 = vpack.c.b16 %v252, %v248
    %v321 = vpack.c.b16 %v253, %v249
    %v322 = vpack.c.b16 %v258, %v254
    %v323 = vpack.c.b16 %v259, %v255
    %v324 = vpack.c.b16 %v260, %v256
    %v325 = vpack.c.b16 %v261, %v257
    %v326 = vpack.c.b16 %v266, %v262
    %v327 = vpack.c.b16 %v267, %v263
    %v328 = vpack.c.b16 %v268, %v264
    %v329 = vpack.c.b16 %v269, %v265
    %v330 = vpack.c.b16 %v274, %v270
    %v331 = vpack.c.b16 %v275, %v271
    %v332 = vpack.c.b16 %v276, %v272
    %v333 = vpack.c.b16 %v277, %v273
    %v334 = vpack.c.b16 %v282, %v278
    %v335 = vpack.c.b16 %v283, %v279
    %v336 = vpack.c.b16 %v284, %v280
    %v337 = vpack.c.b16 %v285, %v281
    %v338 = vpack.c.b16 %v286, %v286
    %v339 = vpack.c.b16 %v287, %v287
    %v340 = vpack.c.b16 %v288, %v288
    %v341 = vpack.c.b16 %v289, %v289
    %v443 = vunpack.c.l.b16 %v78
    %v444 = vunpack.c.l.b16 %v79
    %v445 = vunpack.c.l.b16 %v80
    %v446 = vunpack.c.l.b16 %v81
    %v447 = vunpack.c.l.b16 %v82
    %v448 = vunpack.c.l.b16 %v83
    %v449 = vunpack.c.l.b16 %v84
    %v450 = vunpack.c.l.b16 %v85
    %v451 = vunpack.c.l.b16 %v86
    %v452 = vunpack.c.l.b16 %v87
    %v453 = vunpack.c.l.b16 %v88
    %v454 = vunpack.c.l.b16 %v89
    %v455 = vunpack.c.l.b16 %v90
    %v456 = vunpack.c.l.b16 %v91
    %v457 = vunpack.c.l.b16 %v92
    %v458 = vunpack.c.l.b16 %v93
    %v459 = vunpack.c.l.b16 %v94
    %v460 = vunpack.c.l.b16 %v95
    %v461 = vunpack.c.l.b16 %v96
    %v462 = vunpack.c.l.b16 %v97
    %v463 = vunpack.c.l.b16 %v98
    %v464 = vunpack.c.l.b16 %v99
    %v465 = vunpack.c.l.b16 %v100
    %v466 = vunpack.c.l.b16 %v101
    %v467 = vunpack.c.l.b16 %v102
    %v468 = vunpack.c.l.b16 %v103
    %v469 = vunpack.c.l.b16 %v104
    %v470 = vunpack.c.l.b16 %v105
    %v471 = vunpack.c.l.b16 %v106
    %v472 = vunpack.c.l.b16 %v107
    %v473 = vunpack.c.l.b16 %v108
    %v474 = vunpack.c.l.b16 %v109
    %v475 = vunpack.c.l.b16 %v110
    %v476 = vunpack.c.l.b16 %v111
    %v477 = vunpack.c.l.b16 %v112
    %v478 = vunpack.c.l.b16 %v113
    %v479 = vunpack.c.l.b16 %v114
    %v480 = vunpack.c.l.b16 %v115
    %v481 = vunpack.c.l.b16 %v116
    %v482 = vunpack.c.l.b16 %v117
    %v483 = vunpack.c.l.b16 %v118
    %v484 = vunpack.c.l.b16 %v119
    %v485 = vunpack.c.l.b16 %v120
    %v486 = vunpack.c.l.b16 %v121
    %v487 = vunpack.c.l.b16 %v122
    %v488 = vunpack.c.l.b16 %v123
    %v489 = vunpack.c.l.b16 %v124
    %v490 = vunpack.c.l.b16 %v125
    %v491 = vunpack.c.l.b16 %v126
    %v492 = vunpack.c.l.b16 %v127
    %v493 = vunpack.c.l.b16 %v128
    %v494 = vunpack.c.l.b16 %v129
    %v495 = vunpack.c.l.b16 %v130
    %v496 = vunpack.c.l.b16 %v131
    %v497 = vunpack.c.l.b16 %v132
    %v498 = vunpack.c.l.b16 %v133
    %v499 = vunpack.c.l.b16 %v134
    %v500 = vunpack.c.l.b16 %v135
    %v501 = vunpack.c.l.b16 %v136
    %v502 = vunpack.c.l.b16 %v137
    %v503 = vunpack.c.l.b16 %v138
    %v504 = vunpack.c.l.b16 %v139
    %v505 = vpack.c.b16 %v444, %v443
    %v506 = vpack.c.b16 %v446, %v445
    %v507 = vpack.c.b16 %v448, %v447
    %v508 = vpack.c.b16 %v450, %v449
    %v509 = vpack.c.b16 %v452, %v451
    %v510 = vpack.c.b16 %v454, %v453
    %v511 = vpack.c.b16 %v456, %v455
    %v512 = vpack.c.b16 %v458, %v457
    %v513 = vpack.c.b16 %v460, %v459
    %v514 = vpack.c.b16 %v462, %v461
    %v515 = vpack.c.b16 %v464, %v463
    %v516 = vpack.c.b16 %v466, %v465
    %v517 = vpack.c.b16 %v468, %v467
    %v518 = vpack.c.b16 %v470, %v469
    %v519 = vpack.c.b16 %v472, %v471
    %v520 = vpack.c.b16 %v474, %v473
    %v521 = vpack.c.b16 %v476, %v475
    %v522 = vpack.c.b16 %v478, %v477
    %v523 = vpack.c.b16 %v480, %v479
    %v524 = vpack.c.b16 %v482, %v481
    %v525 = vpack.c.b16 %v484, %v483
    %v526 = vpack.c.b16 %v486, %v485
    %v527 = vpack.c.b16 %v488, %v487
    %v528 = vpack.c.b16 %v490, %v489
    %v529 = vpack.c.b16 %v492, %v491
    %v530 = vpack.c.b16 %v494, %v493
    %v531 = vpack.c.b16 %v496, %v495
    %v532 = vpack.c.b16 %v498, %v497
    %v533 = vpack.c.b16 %v500, %v499
    %v534 = vpack.c.b16 %v502, %v501
    %v535 = vpack.c.b16 %v504, %v503
    %vm566 = vcmask 867328
    %v568 = vsel %vm566, %v293, 0
    %v571 = vsel %vm566, %v297, 0
    %v574 = vsel %vm566, %v301, 0
    %v577 = vsel %vm566, %v305, 0
    %v580 = vsel %vm566, %v309, 0
    %v583 = vsel %vm566, %v313, 0
    %v586 = vsel %vm566, %v317, 0
    %v589 = vsel %vm566, %v321, 0
    %v592 = vsel %vm566, %v325, 0
    %v595 = vsel %vm566, %v329, 0
    %v598 = vsel %vm566, %v333, 0
    %v601 = vsel %vm566, %v337, 0
    %v604 = vsel %vm566, %v341, 0
    %vm606 = vcmask 1044480
    %v608 = vsel %vm606, %v535, 0
    %610 = vmatpush.bf16.msra.mxu0 %v512
    %611 = vmatpush.bf16.msra.mxu0 %v511
    %612 = vmatpush.bf16.msra.mxu0 %v510
    %613 = vmatpush.bf16.msra.mxu0 %v509
    %614 = vmatpush.bf16.msra.mxu0 %v508
    %615 = vmatpush.bf16.msra.mxu0 %v507
    %616 = vmatpush.bf16.msra.mxu0 %v506
    %617 = vmatpush.bf16.msra.mxu0 %v505
    %618 = vmatmul.bf16.gmra.mxu0 %v290
    %v619 = vpop.f32.mrf.mxu0
    %v620 = vadd.f32 0.0, %v619
    %v621 = vpop.f32.mrf.mxu0
    %v622 = vadd.f32 0.0, %v621
    %623 = vmatmul.bf16.gmra.mxu0 %v294
    %v624 = vpop.f32.mrf.mxu0
    %v625 = vadd.f32 0.0, %v624
    %v626 = vpop.f32.mrf.mxu0
    %v627 = vadd.f32 0.0, %v626
    %628 = vmatmul.bf16.gmra.mxu0 %v298
    %v629 = vpop.f32.mrf.mxu0
    %v630 = vadd.f32 0.0, %v629
    %v631 = vpop.f32.mrf.mxu0
    %v632 = vadd.f32 0.0, %v631
    %633 = vmatmul.bf16.gmra.mxu0 %v302
    %v634 = vpop.f32.mrf.mxu0
    %v635 = vadd.f32 0.0, %v634
    %v636 = vpop.f32.mrf.mxu0
    %v637 = vadd.f32 0.0, %v636
    %638 = vmatmul.bf16.gmra.mxu0 %v306
    %v639 = vpop.f32.mrf.mxu0
    %v640 = vadd.f32 0.0, %v639
    %v641 = vpop.f32.mrf.mxu0
    %v642 = vadd.f32 0.0, %v641
    %643 = vmatmul.bf16.gmra.mxu0 %v310
    %v644 = vpop.f32.mrf.mxu0
    %v645 = vadd.f32 0.0, %v644
    %v646 = vpop.f32.mrf.mxu0
    %v647 = vadd.f32 0.0, %v646
    %648 = vmatmul.bf16.gmra.mxu0 %v314
    %v649 = vpop.f32.mrf.mxu0
    %v650 = vadd.f32 0.0, %v649
    %v651 = vpop.f32.mrf.mxu0
    %v652 = vadd.f32 0.0, %v651
    %653 = vmatmul.bf16.gmra.mxu0 %v318
    %v654 = vpop.f32.mrf.mxu0
    %v655 = vadd.f32 0.0, %v654
    %v656 = vpop.f32.mrf.mxu0
    %v657 = vadd.f32 0.0, %v656
    %658 = vmatmul.bf16.gmra.mxu0 %v322
    %v659 = vpop.f32.mrf.mxu0
    %v660 = vadd.f32 0.0, %v659
    %v661 = vpop.f32.mrf.mxu0
    %v662 = vadd.f32 0.0, %v661
    %663 = vmatmul.bf16.gmra.mxu0 %v326
    %v664 = vpop.f32.mrf.mxu0
    %v665 = vadd.f32 0.0, %v664
    %v666 = vpop.f32.mrf.mxu0
    %v667 = vadd.f32 0.0, %v666
    %668 = vmatmul.bf16.gmra.mxu0 %v330
    %v669 = vpop.f32.mrf.mxu0
    %v670 = vadd.f32 0.0, %v669
    %v671 = vpop.f32.mrf.mxu0
    %v672 = vadd.f32 0.0, %v671
    %673 = vmatmul.bf16.gmra.mxu0 %v334
    %v674 = vpop.f32.mrf.mxu0
    %v675 = vadd.f32 0.0, %v674
    %v676 = vpop.f32.mrf.mxu0
    %v677 = vadd.f32 0.0, %v676
    %678 = vmatmul.bf16.gmra.mxu0 %v338
    %v679 = vpop.f32.mrf.mxu0
    %v680 = vadd.f32 0.0, %v679
    %v681 = vpop.f32.mrf.mxu0
    %682 = vdwg.mxu0
    %683 = vmatpush.bf16.msra.mxu0 %v520
    %684 = vmatpush.bf16.msra.mxu0 %v519
    %685 = vmatpush.bf16.msra.mxu0 %v518
    %686 = vmatpush.bf16.msra.mxu0 %v517
    %687 = vmatpush.bf16.msra.mxu0 %v516
    %688 = vmatpush.bf16.msra.mxu0 %v515
    %689 = vmatpush.bf16.msra.mxu0 %v514
    %690 = vmatpush.bf16.msra.mxu0 %v513
    %691 = vmatmul.bf16.gmra.mxu0 %v291
    %v692 = vpop.f32.mrf.mxu0
    %v693 = vadd.f32 %v620, %v692
    %v694 = vpop.f32.mrf.mxu0
    %v695 = vadd.f32 %v622, %v694
    %696 = vmatmul.bf16.gmra.mxu0 %v295
    %v697 = vpop.f32.mrf.mxu0
    %v698 = vadd.f32 %v625, %v697
    %v699 = vpop.f32.mrf.mxu0
    %v700 = vadd.f32 %v627, %v699
    %701 = vmatmul.bf16.gmra.mxu0 %v299
    %v702 = vpop.f32.mrf.mxu0
    %v703 = vadd.f32 %v630, %v702
    %v704 = vpop.f32.mrf.mxu0
    %v705 = vadd.f32 %v632, %v704
    %706 = vmatmul.bf16.gmra.mxu0 %v303
    %v707 = vpop.f32.mrf.mxu0
    %v708 = vadd.f32 %v635, %v707
    %v709 = vpop.f32.mrf.mxu0
    %v710 = vadd.f32 %v637, %v709
    %711 = vmatmul.bf16.gmra.mxu0 %v307
    %v712 = vpop.f32.mrf.mxu0
    %v713 = vadd.f32 %v640, %v712
    %v714 = vpop.f32.mrf.mxu0
    %v715 = vadd.f32 %v642, %v714
    %716 = vmatmul.bf16.gmra.mxu0 %v311
    %v717 = vpop.f32.mrf.mxu0
    %v718 = vadd.f32 %v645, %v717
    %v719 = vpop.f32.mrf.mxu0
    %v720 = vadd.f32 %v647, %v719
    %721 = vmatmul.bf16.gmra.mxu0 %v315
    %v722 = vpop.f32.mrf.mxu0
    %v723 = vadd.f32 %v650, %v722
    %v724 = vpop.f32.mrf.mxu0
    %v725 = vadd.f32 %v652, %v724
    %726 = vmatmul.bf16.gmra.mxu0 %v319
    %v727 = vpop.f32.mrf.mxu0
    %v728 = vadd.f32 %v655, %v727
    %v729 = vpop.f32.mrf.mxu0
    %v730 = vadd.f32 %v657, %v729
    %731 = vmatmul.bf16.gmra.mxu0 %v323
    %v732 = vpop.f32.mrf.mxu0
    %v733 = vadd.f32 %v660, %v732
    %v734 = vpop.f32.mrf.mxu0
    %v735 = vadd.f32 %v662, %v734
    %736 = vmatmul.bf16.gmra.mxu0 %v327
    %v737 = vpop.f32.mrf.mxu0
    %v738 = vadd.f32 %v665, %v737
    %v739 = vpop.f32.mrf.mxu0
    %v740 = vadd.f32 %v667, %v739
    %741 = vmatmul.bf16.gmra.mxu0 %v331
    %v742 = vpop.f32.mrf.mxu0
    %v743 = vadd.f32 %v670, %v742
    %v744 = vpop.f32.mrf.mxu0
    %v745 = vadd.f32 %v672, %v744
    %746 = vmatmul.bf16.gmra.mxu0 %v335
    %v747 = vpop.f32.mrf.mxu0
    %v748 = vadd.f32 %v675, %v747
    %v749 = vpop.f32.mrf.mxu0
    %v750 = vadd.f32 %v677, %v749
    %751 = vmatmul.bf16.gmra.mxu0 %v339
    %v752 = vpop.f32.mrf.mxu0
    %v753 = vadd.f32 %v680, %v752
    %v754 = vpop.f32.mrf.mxu0
    %755 = vdwg.mxu0
    %756 = vmatpush.bf16.msra.mxu0 %v528
    %757 = vmatpush.bf16.msra.mxu0 %v527
    %758 = vmatpush.bf16.msra.mxu0 %v526
    %759 = vmatpush.bf16.msra.mxu0 %v525
    %760 = vmatpush.bf16.msra.mxu0 %v524
    %761 = vmatpush.bf16.msra.mxu0 %v523
    %762 = vmatpush.bf16.msra.mxu0 %v522
    %763 = vmatpush.bf16.msra.mxu0 %v521
    %764 = vmatmul.bf16.gmra.mxu0 %v292
    %v765 = vpop.f32.mrf.mxu0
    %v766 = vadd.f32 %v693, %v765
    %v767 = vpop.f32.mrf.mxu0
    %v768 = vadd.f32 %v695, %v767
    %769 = vmatmul.bf16.gmra.mxu0 %v296
    %v770 = vpop.f32.mrf.mxu0
    %v771 = vadd.f32 %v698, %v770
    %v772 = vpop.f32.mrf.mxu0
    %v773 = vadd.f32 %v700, %v772
    %774 = vmatmul.bf16.gmra.mxu0 %v300
    %v775 = vpop.f32.mrf.mxu0
    %v776 = vadd.f32 %v703, %v775
    %v777 = vpop.f32.mrf.mxu0
    %v778 = vadd.f32 %v705, %v777
    %779 = vmatmul.bf16.gmra.mxu0 %v304
    %v780 = vpop.f32.mrf.mxu0
    %v781 = vadd.f32 %v708, %v780
    %v782 = vpop.f32.mrf.mxu0
    %v783 = vadd.f32 %v710, %v782
    %784 = vmatmul.bf16.gmra.mxu0 %v308
    %v785 = vpop.f32.mrf.mxu0
    %v786 = vadd.f32 %v713, %v785
    %v787 = vpop.f32.mrf.mxu0
    %v788 = vadd.f32 %v715, %v787
    %789 = vmatmul.bf16.gmra.mxu0 %v312
    %v790 = vpop.f32.mrf.mxu0
    %v791 = vadd.f32 %v718, %v790
    %v792 = vpop.f32.mrf.mxu0
    %v793 = vadd.f32 %v720, %v792
    %794 = vmatmul.bf16.gmra.mxu0 %v316
    %v795 = vpop.f32.mrf.mxu0
    %v796 = vadd.f32 %v723, %v795
    %v797 = vpop.f32.mrf.mxu0
    %v798 = vadd.f32 %v725, %v797
    %799 = vmatmul.bf16.gmra.mxu0 %v320
    %v800 = vpop.f32.mrf.mxu0
    %v801 = vadd.f32 %v728, %v800
    %v802 = vpop.f32.mrf.mxu0
    %v803 = vadd.f32 %v730, %v802
    %804 = vmatmul.bf16.gmra.mxu0 %v324
    %v805 = vpop.f32.mrf.mxu0
    %v806 = vadd.f32 %v733, %v805
    %v807 = vpop.f32.mrf.mxu0
    %v808 = vadd.f32 %v735, %v807
    %809 = vmatmul.bf16.gmra.mxu0 %v328
    %v810 = vpop.f32.mrf.mxu0
    %v811 = vadd.f32 %v738, %v810
    %v812 = vpop.f32.mrf.mxu0
    %v813 = vadd.f32 %v740, %v812
    %814 = vmatmul.bf16.gmra.mxu0 %v332
    %v815 = vpop.f32.mrf.mxu0
    %v816 = vadd.f32 %v743, %v815
    %v817 = vpop.f32.mrf.mxu0
    %v818 = vadd.f32 %v745, %v817
    %819 = vmatmul.bf16.gmra.mxu0 %v336
    %v820 = vpop.f32.mrf.mxu0
    %v821 = vadd.f32 %v748, %v820
    %v822 = vpop.f32.mrf.mxu0
    %v823 = vadd.f32 %v750, %v822
    %824 = vmatmul.bf16.gmra.mxu0 %v340
    %v825 = vpop.f32.mrf.mxu0
    %v826 = vadd.f32 %v753, %v825
    %v827 = vpop.f32.mrf.mxu0
    %828 = vdwg.mxu0
    %829 = vmatpush.bf16.msra.mxu0 0
    %830 = vmatpush.bf16.msra.mxu0 %v608
    %831 = vmatpush.bf16.msra.mxu0 %v534
    %832 = vmatpush.bf16.msra.mxu0 %v533
    %833 = vmatpush.bf16.msra.mxu0 %v532
    %834 = vmatpush.bf16.msra.mxu0 %v531
    %835 = vmatpush.bf16.msra.mxu0 %v530
    %836 = vmatpush.bf16.msra.mxu0 %v529
    %837 = vmatmul.bf16.gmra.mxu0 %v568
    %v838 = vpop.f32.mrf.mxu0
    %v839 = vadd.f32 %v766, %v838
    %v840 = vpop.f32.mrf.mxu0
    %v841 = vadd.f32 %v768, %v840
    %842 = vmatmul.bf16.gmra.mxu0 %v571
    %v843 = vpop.f32.mrf.mxu0
    %v844 = vadd.f32 %v771, %v843
    %v845 = vpop.f32.mrf.mxu0
    %v846 = vadd.f32 %v773, %v845
    %847 = vmatmul.bf16.gmra.mxu0 %v574
    %v848 = vpop.f32.mrf.mxu0
    %v849 = vadd.f32 %v776, %v848
    %v850 = vpop.f32.mrf.mxu0
    %v851 = vadd.f32 %v778, %v850
    %852 = vmatmul.bf16.gmra.mxu0 %v577
    %v853 = vpop.f32.mrf.mxu0
    %v854 = vadd.f32 %v781, %v853
    %v855 = vpop.f32.mrf.mxu0
    %v856 = vadd.f32 %v783, %v855
    %857 = vmatmul.bf16.gmra.mxu0 %v580
    %v858 = vpop.f32.mrf.mxu0
    %v859 = vadd.f32 %v786, %v858
    %v860 = vpop.f32.mrf.mxu0
    %v861 = vadd.f32 %v788, %v860
    %862 = vmatmul.bf16.gmra.mxu0 %v583
    %v863 = vpop.f32.mrf.mxu0
    %v864 = vadd.f32 %v791, %v863
    %v865 = vpop.f32.mrf.mxu0
    %v866 = vadd.f32 %v793, %v865
    %867 = vmatmul.bf16.gmra.mxu0 %v586
    %v868 = vpop.f32.mrf.mxu0
    %v869 = vadd.f32 %v796, %v868
    %v870 = vpop.f32.mrf.mxu0
    %v871 = vadd.f32 %v798, %v870
    %872 = vmatmul.bf16.gmra.mxu0 %v589
    %v873 = vpop.f32.mrf.mxu0
    %v874 = vadd.f32 %v801, %v873
    %v875 = vpop.f32.mrf.mxu0
    %v876 = vadd.f32 %v803, %v875
    %877 = vmatmul.bf16.gmra.mxu0 %v592
    %v878 = vpop.f32.mrf.mxu0
    %v879 = vadd.f32 %v806, %v878
    %v880 = vpop.f32.mrf.mxu0
    %v881 = vadd.f32 %v808, %v880
    %882 = vmatmul.bf16.gmra.mxu0 %v595
    %v883 = vpop.f32.mrf.mxu0
    %v884 = vadd.f32 %v811, %v883
    %v885 = vpop.f32.mrf.mxu0
    %v886 = vadd.f32 %v813, %v885
    %887 = vmatmul.bf16.gmra.mxu0 %v598
    %v888 = vpop.f32.mrf.mxu0
    %v889 = vadd.f32 %v816, %v888
    %v890 = vpop.f32.mrf.mxu0
    %v891 = vadd.f32 %v818, %v890
    %892 = vmatmul.bf16.gmra.mxu0 %v601
    %v893 = vpop.f32.mrf.mxu0
    %v894 = vadd.f32 %v821, %v893
    %v895 = vpop.f32.mrf.mxu0
    %v896 = vadd.f32 %v823, %v895
    %897 = vmatmul.bf16.gmra.mxu0 %v604
    %v898 = vpop.f32.mrf.mxu0
    %v899 = vadd.f32 %v826, %v898
    %v900 = vpop.f32.mrf.mxu0
    %901 = vdwg.mxu0
    %s902 = scalar_lea.vmem %s1, 248
    %v903 = vld [vmem:[%s902] sm:$0xf]
    %v904 = vld [vmem:[%s902 + $0x4] sm:$0xf]
    %v905 = vld [vmem:[%s902 + $0x8] sm:$0xf]
    %v906 = vld [vmem:[%s902 + $0xc] sm:$0xf]
    %v907 = vld [vmem:[%s902 + $0x10] sm:$0xf]
    %v908 = vld [vmem:[%s902 + $0x14] sm:$0xf]
    %v909 = vld [vmem:[%s902 + $0x18] sm:$0xf]
    %v910 = vld [vmem:[%s902 + $0x1c] sm:$0xf]
    %v911 = vld [vmem:[%s902 + $0x20] sm:$0xf]
    %v912 = vld [vmem:[%s902 + $0x24] sm:$0xf]
    %v913 = vld [vmem:[%s902 + $0x28] sm:$0xf]
    %v914 = vld [vmem:[%s902 + $0x2c] sm:$0xf]
    %v915 = vld [vmem:[%s902 + $0x30] sm:$0xf]
    %v916 = vld [vmem:[%s902 + $0x34] sm:$0xf]
    %v917 = vld [vmem:[%s902 + $0x38] sm:$0xf]
    %v918 = vld [vmem:[%s902 + $0x3c] sm:$0xf]
    %v919 = vld [vmem:[%s902 + $0x40] sm:$0xf]
    %v920 = vld [vmem:[%s902 + $0x44] sm:$0xf]
    %v921 = vld [vmem:[%s902 + $0x48] sm:$0xf]
    %v922 = vld [vmem:[%s902 + $0x4c] sm:$0xf]
    %v923 = vld [vmem:[%s902 + $0x50] sm:$0xf]
    %v924 = vld [vmem:[%s902 + $0x54] sm:$0xf]
    %v925 = vld [vmem:[%s902 + $0x58] sm:$0xf]
    %v926 = vld [vmem:[%s902 + $0x5c] sm:$0xf]
    %v927 = vld [vmem:[%s902 + $0x60] sm:$0xf]
    %v928 = vld [vmem:[%s902 + $0x64] sm:$0xf]
    %v929 = vld [vmem:[%s902 + $0x68] sm:$0xf]
    %v930 = vld [vmem:[%s902 + $0x6c] sm:$0xf]
    %v931 = vld [vmem:[%s902 + $0x70] sm:$0xf]
    %v932 = vld [vmem:[%s902 + $0x74] sm:$0xf]
    %v933 = vld [vmem:[%s902 + $0x78] sm:$0xf]
    %v934 = vld [vmem:[%s902 + $0x7c] sm:$0xf]
    %v935 = vld [vmem:[%s902 + $0x80] sm:$0xf]
    %v936 = vld [vmem:[%s902 + $0x84] sm:$0xf]
    %v937 = vld [vmem:[%s902 + $0x88] sm:$0xf]
    %v938 = vld [vmem:[%s902 + $0x8c] sm:$0xf]
    %v939 = vld [vmem:[%s902 + $0x90] sm:$0xf]
    %v940 = vld [vmem:[%s902 + $0x94] sm:$0xf]
    %v941 = vld [vmem:[%s902 + $0x98] sm:$0xf]
    %v942 = vld [vmem:[%s902 + $0x9c] sm:$0xf]
    %v943 = vld [vmem:[%s902 + $0xa0] sm:$0xf]
    %v944 = vld [vmem:[%s902 + $0xa4] sm:$0xf]
    %v945 = vld [vmem:[%s902 + $0xa8] sm:$0xf]
    %v946 = vld [vmem:[%s902 + $0xac] sm:$0xf]
    %v947 = vld [vmem:[%s902 + $0xb0] sm:$0xf]
    %v948 = vld [vmem:[%s902 + $0xb4] sm:$0xf]
    %v949 = vld [vmem:[%s902 + $0xb8] sm:$0xf]
    %v950 = vld [vmem:[%s902 + $0xbc] sm:$0xf]
    %v951 = vld [vmem:[%s902 + $0xc0] sm:$0xf]
    %v952 = vld [vmem:[%s902 + $0xc4] sm:$0xf]
    %v953 = vld [vmem:[%s902 + $0xc8] sm:$0xf]
    %v954 = vld [vmem:[%s902 + $0xcc] sm:$0xf]
    %v955 = vld [vmem:[%s902 + $0xd0] sm:$0xf]
    %v956 = vld [vmem:[%s902 + $0xd4] sm:$0xf]
    %v957 = vld [vmem:[%s902 + $0xd8] sm:$0xf]
    %v958 = vld [vmem:[%s902 + $0xdc] sm:$0xf]
    %v959 = vld [vmem:[%s902 + $0xe0] sm:$0xf]
    %v960 = vld [vmem:[%s902 + $0xe4] sm:$0xf]
    %v961 = vld [vmem:[%s902 + $0xe8] sm:$0xf]
    %v962 = vld [vmem:[%s902 + $0xec] sm:$0xf]
    %v963 = vld [vmem:[%s902 + $0xf0] sm:$0xf]
    %v964 = vld [vmem:[%s902 + $0xf4] sm:$0x1]
    %v1027 = vunpack.c.l.b16 %v903
    %v1028 = vunpack.c.l.b16 %v904
    %v1029 = vunpack.c.l.b16 %v905
    %v1030 = vunpack.c.l.b16 %v906
    %v1031 = vunpack.c.l.b16 %v907
    %v1032 = vunpack.c.l.b16 %v908
    %v1033 = vunpack.c.l.b16 %v909
    %v1034 = vunpack.c.l.b16 %v910
    %v1035 = vunpack.c.l.b16 %v911
    %v1036 = vunpack.c.l.b16 %v912
    %v1037 = vunpack.c.l.b16 %v913
    %v1038 = vunpack.c.l.b16 %v914
    %v1039 = vunpack.c.l.b16 %v915
    %v1040 = vunpack.c.l.b16 %v916
    %v1041 = vunpack.c.l.b16 %v917
    %v1042 = vunpack.c.l.b16 %v918
    %v1043 = vunpack.c.l.b16 %v919
    %v1044 = vunpack.c.l.b16 %v920
    %v1045 = vunpack.c.l.b16 %v921
    %v1046 = vunpack.c.l.b16 %v922
    %v1047 = vunpack.c.l.b16 %v923
    %v1048 = vunpack.c.l.b16 %v924
    %v1049 = vunpack.c.l.b16 %v925
    %v1050 = vunpack.c.l.b16 %v926
    %v1051 = vunpack.c.l.b16 %v927
    %v1052 = vunpack.c.l.b16 %v928
    %v1053 = vunpack.c.l.b16 %v929
    %v1054 = vunpack.c.l.b16 %v930
    %v1055 = vunpack.c.l.b16 %v931
    %v1056 = vunpack.c.l.b16 %v932
    %v1057 = vunpack.c.l.b16 %v933
    %v1058 = vunpack.c.l.b16 %v934
    %v1059 = vunpack.c.l.b16 %v935
    %v1060 = vunpack.c.l.b16 %v936
    %v1061 = vunpack.c.l.b16 %v937
    %v1062 = vunpack.c.l.b16 %v938
    %v1063 = vunpack.c.l.b16 %v939
    %v1064 = vunpack.c.l.b16 %v940
    %v1065 = vunpack.c.l.b16 %v941
    %v1066 = vunpack.c.l.b16 %v942
    %v1067 = vunpack.c.l.b16 %v943
    %v1068 = vunpack.c.l.b16 %v944
    %v1069 = vunpack.c.l.b16 %v945
    %v1070 = vunpack.c.l.b16 %v946
    %v1071 = vunpack.c.l.b16 %v947
    %v1072 = vunpack.c.l.b16 %v948
    %v1073 = vunpack.c.l.b16 %v949
    %v1074 = vunpack.c.l.b16 %v950
    %v1075 = vunpack.c.l.b16 %v951
    %v1076 = vunpack.c.l.b16 %v952
    %v1077 = vunpack.c.l.b16 %v953
    %v1078 = vunpack.c.l.b16 %v954
    %v1079 = vunpack.c.l.b16 %v955
    %v1080 = vunpack.c.l.b16 %v956
    %v1081 = vunpack.c.l.b16 %v957
    %v1082 = vunpack.c.l.b16 %v958
    %v1083 = vunpack.c.l.b16 %v959
    %v1084 = vunpack.c.l.b16 %v960
    %v1085 = vunpack.c.l.b16 %v961
    %v1086 = vunpack.c.l.b16 %v962
    %v1087 = vunpack.c.l.b16 %v963
    %v1088 = vunpack.c.l.b16 %v964
    %v1089 = vpack.c.b16 %v1028, %v1027
    %v1090 = vpack.c.b16 %v1030, %v1029
    %v1091 = vpack.c.b16 %v1032, %v1031
    %v1092 = vpack.c.b16 %v1034, %v1033
    %v1093 = vpack.c.b16 %v1036, %v1035
    %v1094 = vpack.c.b16 %v1038, %v1037
    %v1095 = vpack.c.b16 %v1040, %v1039
    %v1096 = vpack.c.b16 %v1042, %v1041
    %v1097 = vpack.c.b16 %v1044, %v1043
    %v1098 = vpack.c.b16 %v1046, %v1045
    %v1099 = vpack.c.b16 %v1048, %v1047
    %v1100 = vpack.c.b16 %v1050, %v1049
    %v1101 = vpack.c.b16 %v1052, %v1051
    %v1102 = vpack.c.b16 %v1054, %v1053
    %v1103 = vpack.c.b16 %v1056, %v1055
    %v1104 = vpack.c.b16 %v1058, %v1057
    %v1105 = vpack.c.b16 %v1060, %v1059
    %v1106 = vpack.c.b16 %v1062, %v1061
    %v1107 = vpack.c.b16 %v1064, %v1063
    %v1108 = vpack.c.b16 %v1066, %v1065
    %v1109 = vpack.c.b16 %v1068, %v1067
    %v1110 = vpack.c.b16 %v1070, %v1069
    %v1111 = vpack.c.b16 %v1072, %v1071
    %v1112 = vpack.c.b16 %v1074, %v1073
    %v1113 = vpack.c.b16 %v1076, %v1075
    %v1114 = vpack.c.b16 %v1078, %v1077
    %v1115 = vpack.c.b16 %v1080, %v1079
    %v1116 = vpack.c.b16 %v1082, %v1081
    %v1117 = vpack.c.b16 %v1084, %v1083
    %v1118 = vpack.c.b16 %v1086, %v1085
    %v1119 = vpack.c.b16 %v1088, %v1087
    %v1151 = vsel %vm606, %v1119, 0
    %1153 = vmatpush.bf16.msra.mxu0 %v1096
    %1154 = vmatpush.bf16.msra.mxu0 %v1095
    %1155 = vmatpush.bf16.msra.mxu0 %v1094
    %1156 = vmatpush.bf16.msra.mxu0 %v1093
    %1157 = vmatpush.bf16.msra.mxu0 %v1092
    %1158 = vmatpush.bf16.msra.mxu0 %v1091
    %1159 = vmatpush.bf16.msra.mxu0 %v1090
    %1160 = vmatpush.bf16.msra.mxu0 %v1089
    %1161 = vmatmul.bf16.gmra.mxu0 %v290
    %v1162 = vpop.f32.mrf.mxu0
    %v1163 = vadd.f32 0.0, %v1162
    %v1164 = vpop.f32.mrf.mxu0
    %v1165 = vadd.f32 0.0, %v1164
    %1166 = vmatmul.bf16.gmra.mxu0 %v294
    %v1167 = vpop.f32.mrf.mxu0
    %v1168 = vadd.f32 0.0, %v1167
    %v1169 = vpop.f32.mrf.mxu0
    %v1170 = vadd.f32 0.0, %v1169
    %1171 = vmatmul.bf16.gmra.mxu0 %v298
    %v1172 = vpop.f32.mrf.mxu0
    %v1173 = vadd.f32 0.0, %v1172
    %v1174 = vpop.f32.mrf.mxu0
    %v1175 = vadd.f32 0.0, %v1174
    %1176 = vmatmul.bf16.gmra.mxu0 %v302
    %v1177 = vpop.f32.mrf.mxu0
    %v1178 = vadd.f32 0.0, %v1177
    %v1179 = vpop.f32.mrf.mxu0
    %v1180 = vadd.f32 0.0, %v1179
    %1181 = vmatmul.bf16.gmra.mxu0 %v306
    %v1182 = vpop.f32.mrf.mxu0
    %v1183 = vadd.f32 0.0, %v1182
    %v1184 = vpop.f32.mrf.mxu0
    %v1185 = vadd.f32 0.0, %v1184
    %1186 = vmatmul.bf16.gmra.mxu0 %v310
    %v1187 = vpop.f32.mrf.mxu0
    %v1188 = vadd.f32 0.0, %v1187
    %v1189 = vpop.f32.mrf.mxu0
    %v1190 = vadd.f32 0.0, %v1189
    %1191 = vmatmul.bf16.gmra.mxu0 %v314
    %v1192 = vpop.f32.mrf.mxu0
    %v1193 = vadd.f32 0.0, %v1192
    %v1194 = vpop.f32.mrf.mxu0
    %v1195 = vadd.f32 0.0, %v1194
    %1196 = vmatmul.bf16.gmra.mxu0 %v318
    %v1197 = vpop.f32.mrf.mxu0
    %v1198 = vadd.f32 0.0, %v1197
    %v1199 = vpop.f32.mrf.mxu0
    %v1200 = vadd.f32 0.0, %v1199
    %1201 = vmatmul.bf16.gmra.mxu0 %v322
    %v1202 = vpop.f32.mrf.mxu0
    %v1203 = vadd.f32 0.0, %v1202
    %v1204 = vpop.f32.mrf.mxu0
    %v1205 = vadd.f32 0.0, %v1204
    %1206 = vmatmul.bf16.gmra.mxu0 %v326
    %v1207 = vpop.f32.mrf.mxu0
    %v1208 = vadd.f32 0.0, %v1207
    %v1209 = vpop.f32.mrf.mxu0
    %v1210 = vadd.f32 0.0, %v1209
    %1211 = vmatmul.bf16.gmra.mxu0 %v330
    %v1212 = vpop.f32.mrf.mxu0
    %v1213 = vadd.f32 0.0, %v1212
    %v1214 = vpop.f32.mrf.mxu0
    %v1215 = vadd.f32 0.0, %v1214
    %1216 = vmatmul.bf16.gmra.mxu0 %v334
    %v1217 = vpop.f32.mrf.mxu0
    %v1218 = vadd.f32 0.0, %v1217
    %v1219 = vpop.f32.mrf.mxu0
    %v1220 = vadd.f32 0.0, %v1219
    %1221 = vmatmul.bf16.gmra.mxu0 %v338
    %v1222 = vpop.f32.mrf.mxu0
    %v1223 = vadd.f32 0.0, %v1222
    %v1224 = vpop.f32.mrf.mxu0
    %1225 = vdwg.mxu0
    %1226 = vmatpush.bf16.msra.mxu0 %v1104
    %1227 = vmatpush.bf16.msra.mxu0 %v1103
    %1228 = vmatpush.bf16.msra.mxu0 %v1102
    %1229 = vmatpush.bf16.msra.mxu0 %v1101
    %1230 = vmatpush.bf16.msra.mxu0 %v1100
    %1231 = vmatpush.bf16.msra.mxu0 %v1099
    %1232 = vmatpush.bf16.msra.mxu0 %v1098
    %1233 = vmatpush.bf16.msra.mxu0 %v1097
    %1234 = vmatmul.bf16.gmra.mxu0 %v291
    %v1235 = vpop.f32.mrf.mxu0
    %v1236 = vadd.f32 %v1163, %v1235
    %v1237 = vpop.f32.mrf.mxu0
    %v1238 = vadd.f32 %v1165, %v1237
    %1239 = vmatmul.bf16.gmra.mxu0 %v295
    %v1240 = vpop.f32.mrf.mxu0
    %v1241 = vadd.f32 %v1168, %v1240
    %v1242 = vpop.f32.mrf.mxu0
    %v1243 = vadd.f32 %v1170, %v1242
    %1244 = vmatmul.bf16.gmra.mxu0 %v299
    %v1245 = vpop.f32.mrf.mxu0
    %v1246 = vadd.f32 %v1173, %v1245
    %v1247 = vpop.f32.mrf.mxu0
    %v1248 = vadd.f32 %v1175, %v1247
    %1249 = vmatmul.bf16.gmra.mxu0 %v303
    %v1250 = vpop.f32.mrf.mxu0
    %v1251 = vadd.f32 %v1178, %v1250
    %v1252 = vpop.f32.mrf.mxu0
    %v1253 = vadd.f32 %v1180, %v1252
    %1254 = vmatmul.bf16.gmra.mxu0 %v307
    %v1255 = vpop.f32.mrf.mxu0
    %v1256 = vadd.f32 %v1183, %v1255
    %v1257 = vpop.f32.mrf.mxu0
    %v1258 = vadd.f32 %v1185, %v1257
    %1259 = vmatmul.bf16.gmra.mxu0 %v311
    %v1260 = vpop.f32.mrf.mxu0
    %v1261 = vadd.f32 %v1188, %v1260
    %v1262 = vpop.f32.mrf.mxu0
    %v1263 = vadd.f32 %v1190, %v1262
    %1264 = vmatmul.bf16.gmra.mxu0 %v315
    %v1265 = vpop.f32.mrf.mxu0
    %v1266 = vadd.f32 %v1193, %v1265
    %v1267 = vpop.f32.mrf.mxu0
    %v1268 = vadd.f32 %v1195, %v1267
    %1269 = vmatmul.bf16.gmra.mxu0 %v319
    %v1270 = vpop.f32.mrf.mxu0
    %v1271 = vadd.f32 %v1198, %v1270
    %v1272 = vpop.f32.mrf.mxu0
    %v1273 = vadd.f32 %v1200, %v1272
    %1274 = vmatmul.bf16.gmra.mxu0 %v323
    %v1275 = vpop.f32.mrf.mxu0
    %v1276 = vadd.f32 %v1203, %v1275
    %v1277 = vpop.f32.mrf.mxu0
    %v1278 = vadd.f32 %v1205, %v1277
    %1279 = vmatmul.bf16.gmra.mxu0 %v327
    %v1280 = vpop.f32.mrf.mxu0
    %v1281 = vadd.f32 %v1208, %v1280
    %v1282 = vpop.f32.mrf.mxu0
    %v1283 = vadd.f32 %v1210, %v1282
    %1284 = vmatmul.bf16.gmra.mxu0 %v331
    %v1285 = vpop.f32.mrf.mxu0
    %v1286 = vadd.f32 %v1213, %v1285
    %v1287 = vpop.f32.mrf.mxu0
    %v1288 = vadd.f32 %v1215, %v1287
    %1289 = vmatmul.bf16.gmra.mxu0 %v335
    %v1290 = vpop.f32.mrf.mxu0
    %v1291 = vadd.f32 %v1218, %v1290
    %v1292 = vpop.f32.mrf.mxu0
    %v1293 = vadd.f32 %v1220, %v1292
    %1294 = vmatmul.bf16.gmra.mxu0 %v339
    %v1295 = vpop.f32.mrf.mxu0
    %v1296 = vadd.f32 %v1223, %v1295
    %v1297 = vpop.f32.mrf.mxu0
    %1298 = vdwg.mxu0
    %1299 = vmatpush.bf16.msra.mxu0 %v1112
    %1300 = vmatpush.bf16.msra.mxu0 %v1111
    %1301 = vmatpush.bf16.msra.mxu0 %v1110
    %1302 = vmatpush.bf16.msra.mxu0 %v1109
    %1303 = vmatpush.bf16.msra.mxu0 %v1108
    %1304 = vmatpush.bf16.msra.mxu0 %v1107
    %1305 = vmatpush.bf16.msra.mxu0 %v1106
    %1306 = vmatpush.bf16.msra.mxu0 %v1105
    %1307 = vmatmul.bf16.gmra.mxu0 %v292
    %v1308 = vpop.f32.mrf.mxu0
    %v1309 = vadd.f32 %v1236, %v1308
    %v1310 = vpop.f32.mrf.mxu0
    %v1311 = vadd.f32 %v1238, %v1310
    %1312 = vmatmul.bf16.gmra.mxu0 %v296
    %v1313 = vpop.f32.mrf.mxu0
    %v1314 = vadd.f32 %v1241, %v1313
    %v1315 = vpop.f32.mrf.mxu0
    %v1316 = vadd.f32 %v1243, %v1315
    %1317 = vmatmul.bf16.gmra.mxu0 %v300
    %v1318 = vpop.f32.mrf.mxu0
    %v1319 = vadd.f32 %v1246, %v1318
    %v1320 = vpop.f32.mrf.mxu0
    %v1321 = vadd.f32 %v1248, %v1320
    %1322 = vmatmul.bf16.gmra.mxu0 %v304
    %v1323 = vpop.f32.mrf.mxu0
    %v1324 = vadd.f32 %v1251, %v1323
    %v1325 = vpop.f32.mrf.mxu0
    %v1326 = vadd.f32 %v1253, %v1325
    %1327 = vmatmul.bf16.gmra.mxu0 %v308
    %v1328 = vpop.f32.mrf.mxu0
    %v1329 = vadd.f32 %v1256, %v1328
    %v1330 = vpop.f32.mrf.mxu0
    %v1331 = vadd.f32 %v1258, %v1330
    %1332 = vmatmul.bf16.gmra.mxu0 %v312
    %v1333 = vpop.f32.mrf.mxu0
    %v1334 = vadd.f32 %v1261, %v1333
    %v1335 = vpop.f32.mrf.mxu0
    %v1336 = vadd.f32 %v1263, %v1335
    %1337 = vmatmul.bf16.gmra.mxu0 %v316
    %v1338 = vpop.f32.mrf.mxu0
    %v1339 = vadd.f32 %v1266, %v1338
    %v1340 = vpop.f32.mrf.mxu0
    %v1341 = vadd.f32 %v1268, %v1340
    %1342 = vmatmul.bf16.gmra.mxu0 %v320
    %v1343 = vpop.f32.mrf.mxu0
    %v1344 = vadd.f32 %v1271, %v1343
    %v1345 = vpop.f32.mrf.mxu0
    %v1346 = vadd.f32 %v1273, %v1345
    %1347 = vmatmul.bf16.gmra.mxu0 %v324
    %v1348 = vpop.f32.mrf.mxu0
    %v1349 = vadd.f32 %v1276, %v1348
    %v1350 = vpop.f32.mrf.mxu0
    %v1351 = vadd.f32 %v1278, %v1350
    %1352 = vmatmul.bf16.gmra.mxu0 %v328
    %v1353 = vpop.f32.mrf.mxu0
    %v1354 = vadd.f32 %v1281, %v1353
    %v1355 = vpop.f32.mrf.mxu0
    %v1356 = vadd.f32 %v1283, %v1355
    %1357 = vmatmul.bf16.gmra.mxu0 %v332
    %v1358 = vpop.f32.mrf.mxu0
    %v1359 = vadd.f32 %v1286, %v1358
    %v1360 = vpop.f32.mrf.mxu0
    %v1361 = vadd.f32 %v1288, %v1360
    %1362 = vmatmul.bf16.gmra.mxu0 %v336
    %v1363 = vpop.f32.mrf.mxu0
    %v1364 = vadd.f32 %v1291, %v1363
    %v1365 = vpop.f32.mrf.mxu0
    %v1366 = vadd.f32 %v1293, %v1365
    %1367 = vmatmul.bf16.gmra.mxu0 %v340
    %v1368 = vpop.f32.mrf.mxu0
    %v1369 = vadd.f32 %v1296, %v1368
    %v1370 = vpop.f32.mrf.mxu0
    %1371 = vdwg.mxu0
    %1372 = vmatpush.bf16.msra.mxu0 0
    %1373 = vmatpush.bf16.msra.mxu0 %v1151
    %1374 = vmatpush.bf16.msra.mxu0 %v1118
    %1375 = vmatpush.bf16.msra.mxu0 %v1117
    %1376 = vmatpush.bf16.msra.mxu0 %v1116
    %1377 = vmatpush.bf16.msra.mxu0 %v1115
    %1378 = vmatpush.bf16.msra.mxu0 %v1114
    %1379 = vmatpush.bf16.msra.mxu0 %v1113
    %1380 = vmatmul.bf16.gmra.mxu0 %v568
    %v1381 = vpop.f32.mrf.mxu0
    %v1382 = vadd.f32 %v1309, %v1381
    %v1383 = vpop.f32.mrf.mxu0
    %v1384 = vadd.f32 %v1311, %v1383
    %1385 = vmatmul.bf16.gmra.mxu0 %v571
    %v1386 = vpop.f32.mrf.mxu0
    %v1387 = vadd.f32 %v1314, %v1386
    %v1388 = vpop.f32.mrf.mxu0
    %v1389 = vadd.f32 %v1316, %v1388
    %1390 = vmatmul.bf16.gmra.mxu0 %v574
    %v1391 = vpop.f32.mrf.mxu0
    %v1392 = vadd.f32 %v1319, %v1391
    %v1393 = vpop.f32.mrf.mxu0
    %v1394 = vadd.f32 %v1321, %v1393
    %1395 = vmatmul.bf16.gmra.mxu0 %v577
    %v1396 = vpop.f32.mrf.mxu0
    %v1397 = vadd.f32 %v1324, %v1396
    %v1398 = vpop.f32.mrf.mxu0
    %v1399 = vadd.f32 %v1326, %v1398
    %1400 = vmatmul.bf16.gmra.mxu0 %v580
    %v1401 = vpop.f32.mrf.mxu0
    %v1402 = vadd.f32 %v1329, %v1401
    %v1403 = vpop.f32.mrf.mxu0
    %v1404 = vadd.f32 %v1331, %v1403
    %1405 = vmatmul.bf16.gmra.mxu0 %v583
    %v1406 = vpop.f32.mrf.mxu0
    %v1407 = vadd.f32 %v1334, %v1406
    %v1408 = vpop.f32.mrf.mxu0
    %v1409 = vadd.f32 %v1336, %v1408
    %1410 = vmatmul.bf16.gmra.mxu0 %v586
    %v1411 = vpop.f32.mrf.mxu0
    %v1412 = vadd.f32 %v1339, %v1411
    %v1413 = vpop.f32.mrf.mxu0
    %v1414 = vadd.f32 %v1341, %v1413
    %1415 = vmatmul.bf16.gmra.mxu0 %v589
    %v1416 = vpop.f32.mrf.mxu0
    %v1417 = vadd.f32 %v1344, %v1416
    %v1418 = vpop.f32.mrf.mxu0
    %v1419 = vadd.f32 %v1346, %v1418
    %1420 = vmatmul.bf16.gmra.mxu0 %v592
    %v1421 = vpop.f32.mrf.mxu0
    %v1422 = vadd.f32 %v1349, %v1421
    %v1423 = vpop.f32.mrf.mxu0
    %v1424 = vadd.f32 %v1351, %v1423
    %1425 = vmatmul.bf16.gmra.mxu0 %v595
    %v1426 = vpop.f32.mrf.mxu0
    %v1427 = vadd.f32 %v1354, %v1426
    %v1428 = vpop.f32.mrf.mxu0
    %v1429 = vadd.f32 %v1356, %v1428
    %1430 = vmatmul.bf16.gmra.mxu0 %v598
    %v1431 = vpop.f32.mrf.mxu0
    %v1432 = vadd.f32 %v1359, %v1431
    %v1433 = vpop.f32.mrf.mxu0
    %v1434 = vadd.f32 %v1361, %v1433
    %1435 = vmatmul.bf16.gmra.mxu0 %v601
    %v1436 = vpop.f32.mrf.mxu0
    %v1437 = vadd.f32 %v1364, %v1436
    %v1438 = vpop.f32.mrf.mxu0
    %v1439 = vadd.f32 %v1366, %v1438
    %1440 = vmatmul.bf16.gmra.mxu0 %v604
    %v1441 = vpop.f32.mrf.mxu0
    %v1442 = vadd.f32 %v1369, %v1441
    %v1443 = vpop.f32.mrf.mxu0
    %1444 = vdwg.mxu0
    %v1445 = vmax.f32 %v839, %v1382
    %v1446 = vmax.f32 %v841, %v1384
    %v1447 = vmax.f32 %v844, %v1387
    %v1448 = vmax.f32 %v846, %v1389
    %v1449 = vmax.f32 %v849, %v1392
    %v1450 = vmax.f32 %v851, %v1394
    %v1451 = vmax.f32 %v854, %v1397
    %v1452 = vmax.f32 %v856, %v1399
    %v1453 = vmax.f32 %v859, %v1402
    %v1454 = vmax.f32 %v861, %v1404
    %v1455 = vmax.f32 %v864, %v1407
    %v1456 = vmax.f32 %v866, %v1409
    %v1457 = vmax.f32 %v869, %v1412
    %v1458 = vmax.f32 %v871, %v1414
    %v1459 = vmax.f32 %v874, %v1417
    %v1460 = vmax.f32 %v876, %v1419
    %v1461 = vmax.f32 %v879, %v1422
    %v1462 = vmax.f32 %v881, %v1424
    %v1463 = vmax.f32 %v884, %v1427
    %v1464 = vmax.f32 %v886, %v1429
    %v1465 = vmax.f32 %v889, %v1432
    %v1466 = vmax.f32 %v891, %v1434
    %v1467 = vmax.f32 %v894, %v1437
    %v1468 = vmax.f32 %v896, %v1439
    %v1469 = vmax.f32 %v899, %v1442
    %s1470 = scalar_lea.vmem %s1, 496
    %v1471 = vld [vmem:[%s1470] sm:$0xf]
    %v1472 = vld [vmem:[%s1470 + $0x4] sm:$0xf]
    %v1473 = vld [vmem:[%s1470 + $0x8] sm:$0xf]
    %v1474 = vld [vmem:[%s1470 + $0xc] sm:$0xf]
    %v1475 = vld [vmem:[%s1470 + $0x10] sm:$0xf]
    %v1476 = vld [vmem:[%s1470 + $0x14] sm:$0xf]
    %v1477 = vld [vmem:[%s1470 + $0x18] sm:$0xf]
    %v1478 = vld [vmem:[%s1470 + $0x1c] sm:$0xf]
    %v1479 = vld [vmem:[%s1470 + $0x20] sm:$0xf]
    %v1480 = vld [vmem:[%s1470 + $0x24] sm:$0xf]
    %v1481 = vld [vmem:[%s1470 + $0x28] sm:$0xf]
    %v1482 = vld [vmem:[%s1470 + $0x2c] sm:$0xf]
    %v1483 = vld [vmem:[%s1470 + $0x30] sm:$0xf]
    %v1484 = vld [vmem:[%s1470 + $0x34] sm:$0xf]
    %v1485 = vld [vmem:[%s1470 + $0x38] sm:$0xf]
    %v1486 = vld [vmem:[%s1470 + $0x3c] sm:$0xf]
    %v1487 = vld [vmem:[%s1470 + $0x40] sm:$0xf]
    %v1488 = vld [vmem:[%s1470 + $0x44] sm:$0xf]
    %v1489 = vld [vmem:[%s1470 + $0x48] sm:$0xf]
    %v1490 = vld [vmem:[%s1470 + $0x4c] sm:$0xf]
    %v1491 = vld [vmem:[%s1470 + $0x50] sm:$0xf]
    %v1492 = vld [vmem:[%s1470 + $0x54] sm:$0xf]
    %v1493 = vld [vmem:[%s1470 + $0x58] sm:$0xf]
    %v1494 = vld [vmem:[%s1470 + $0x5c] sm:$0xf]
    %v1495 = vld [vmem:[%s1470 + $0x60] sm:$0xf]
    %v1496 = vld [vmem:[%s1470 + $0x64] sm:$0xf]
    %v1497 = vld [vmem:[%s1470 + $0x68] sm:$0xf]
    %v1498 = vld [vmem:[%s1470 + $0x6c] sm:$0xf]
    %v1499 = vld [vmem:[%s1470 + $0x70] sm:$0xf]
    %v1500 = vld [vmem:[%s1470 + $0x74] sm:$0xf]
    %v1501 = vld [vmem:[%s1470 + $0x78] sm:$0xf]
    %v1502 = vld [vmem:[%s1470 + $0x7c] sm:$0xf]
    %v1503 = vld [vmem:[%s1470 + $0x80] sm:$0xf]
    %v1504 = vld [vmem:[%s1470 + $0x84] sm:$0xf]
    %v1505 = vld [vmem:[%s1470 + $0x88] sm:$0xf]
    %v1506 = vld [vmem:[%s1470 + $0x8c] sm:$0xf]
    %v1507 = vld [vmem:[%s1470 + $0x90] sm:$0xf]
    %v1508 = vld [vmem:[%s1470 + $0x94] sm:$0xf]
    %v1509 = vld [vmem:[%s1470 + $0x98] sm:$0xf]
    %v1510 = vld [vmem:[%s1470 + $0x9c] sm:$0xf]
    %v1511 = vld [vmem:[%s1470 + $0xa0] sm:$0xf]
    %v1512 = vld [vmem:[%s1470 + $0xa4] sm:$0xf]
    %v1513 = vld [vmem:[%s1470 + $0xa8] sm:$0xf]
    %v1514 = vld [vmem:[%s1470 + $0xac] sm:$0xf]
    %v1515 = vld [vmem:[%s1470 + $0xb0] sm:$0xf]
    %v1516 = vld [vmem:[%s1470 + $0xb4] sm:$0xf]
    %v1517 = vld [vmem:[%s1470 + $0xb8] sm:$0xf]
    %v1518 = vld [vmem:[%s1470 + $0xbc] sm:$0xf]
    %v1519 = vld [vmem:[%s1470 + $0xc0] sm:$0xf]
    %v1520 = vld [vmem:[%s1470 + $0xc4] sm:$0xf]
    %v1521 = vld [vmem:[%s1470 + $0xc8] sm:$0xf]
    %v1522 = vld [vmem:[%s1470 + $0xcc] sm:$0xf]
    %v1523 = vld [vmem:[%s1470 + $0xd0] sm:$0xf]
    %v1524 = vld [vmem:[%s1470 + $0xd4] sm:$0xf]
    %v1525 = vld [vmem:[%s1470 + $0xd8] sm:$0xf]
    %v1526 = vld [vmem:[%s1470 + $0xdc] sm:$0xf]
    %v1527 = vld [vmem:[%s1470 + $0xe0] sm:$0xf]
    %v1528 = vld [vmem:[%s1470 + $0xe4] sm:$0xf]
    %v1529 = vld [vmem:[%s1470 + $0xe8] sm:$0xf]
    %v1530 = vld [vmem:[%s1470 + $0xec] sm:$0xf]
    %v1531 = vld [vmem:[%s1470 + $0xf0] sm:$0xf]
    %v1532 = vld [vmem:[%s1470 + $0xf4] sm:$0x1]
    %v1595 = vunpack.c.l.b16 %v1471
    %v1596 = vunpack.c.l.b16 %v1472
    %v1597 = vunpack.c.l.b16 %v1473
    %v1598 = vunpack.c.l.b16 %v1474
    %v1599 = vunpack.c.l.b16 %v1475
    %v1600 = vunpack.c.l.b16 %v1476
    %v1601 = vunpack.c.l.b16 %v1477
    %v1602 = vunpack.c.l.b16 %v1478
    %v1603 = vunpack.c.l.b16 %v1479
    %v1604 = vunpack.c.l.b16 %v1480
    %v1605 = vunpack.c.l.b16 %v1481
    %v1606 = vunpack.c.l.b16 %v1482
    %v1607 = vunpack.c.l.b16 %v1483
    %v1608 = vunpack.c.l.b16 %v1484
    %v1609 = vunpack.c.l.b16 %v1485
    %v1610 = vunpack.c.l.b16 %v1486
    %v1611 = vunpack.c.l.b16 %v1487
    %v1612 = vunpack.c.l.b16 %v1488
    %v1613 = vunpack.c.l.b16 %v1489
    %v1614 = vunpack.c.l.b16 %v1490
    %v1615 = vunpack.c.l.b16 %v1491
    %v1616 = vunpack.c.l.b16 %v1492
    %v1617 = vunpack.c.l.b16 %v1493
    %v1618 = vunpack.c.l.b16 %v1494
    %v1619 = vunpack.c.l.b16 %v1495
    %v1620 = vunpack.c.l.b16 %v1496
    %v1621 = vunpack.c.l.b16 %v1497
    %v1622 = vunpack.c.l.b16 %v1498
    %v1623 = vunpack.c.l.b16 %v1499
    %v1624 = vunpack.c.l.b16 %v1500
    %v1625 = vunpack.c.l.b16 %v1501
    %v1626 = vunpack.c.l.b16 %v1502
    %v1627 = vunpack.c.l.b16 %v1503
    %v1628 = vunpack.c.l.b16 %v1504
    %v1629 = vunpack.c.l.b16 %v1505
    %v1630 = vunpack.c.l.b16 %v1506
    %v1631 = vunpack.c.l.b16 %v1507
    %v1632 = vunpack.c.l.b16 %v1508
    %v1633 = vunpack.c.l.b16 %v1509
    %v1634 = vunpack.c.l.b16 %v1510
    %v1635 = vunpack.c.l.b16 %v1511
    %v1636 = vunpack.c.l.b16 %v1512
    %v1637 = vunpack.c.l.b16 %v1513
    %v1638 = vunpack.c.l.b16 %v1514
    %v1639 = vunpack.c.l.b16 %v1515
    %v1640 = vunpack.c.l.b16 %v1516
    %v1641 = vunpack.c.l.b16 %v1517
    %v1642 = vunpack.c.l.b16 %v1518
    %v1643 = vunpack.c.l.b16 %v1519
    %v1644 = vunpack.c.l.b16 %v1520
    %v1645 = vunpack.c.l.b16 %v1521
    %v1646 = vunpack.c.l.b16 %v1522
    %v1647 = vunpack.c.l.b16 %v1523
    %v1648 = vunpack.c.l.b16 %v1524
    %v1649 = vunpack.c.l.b16 %v1525
    %v1650 = vunpack.c.l.b16 %v1526
    %v1651 = vunpack.c.l.b16 %v1527
    %v1652 = vunpack.c.l.b16 %v1528
    %v1653 = vunpack.c.l.b16 %v1529
    %v1654 = vunpack.c.l.b16 %v1530
    %v1655 = vunpack.c.l.b16 %v1531
    %v1656 = vunpack.c.l.b16 %v1532
    %v1657 = vpack.c.b16 %v1596, %v1595
    %v1658 = vpack.c.b16 %v1598, %v1597
    %v1659 = vpack.c.b16 %v1600, %v1599
    %v1660 = vpack.c.b16 %v1602, %v1601
    %v1661 = vpack.c.b16 %v1604, %v1603
    %v1662 = vpack.c.b16 %v1606, %v1605
    %v1663 = vpack.c.b16 %v1608, %v1607
    %v1664 = vpack.c.b16 %v1610, %v1609
    %v1665 = vpack.c.b16 %v1612, %v1611
    %v1666 = vpack.c.b16 %v1614, %v1613
    %v1667 = vpack.c.b16 %v1616, %v1615
    %v1668 = vpack.c.b16 %v1618, %v1617
    %v1669 = vpack.c.b16 %v1620, %v1619
    %v1670 = vpack.c.b16 %v1622, %v1621
    %v1671 = vpack.c.b16 %v1624, %v1623
    %v1672 = vpack.c.b16 %v1626, %v1625
    %v1673 = vpack.c.b16 %v1628, %v1627
    %v1674 = vpack.c.b16 %v1630, %v1629
    %v1675 = vpack.c.b16 %v1632, %v1631
    %v1676 = vpack.c.b16 %v1634, %v1633
    %v1677 = vpack.c.b16 %v1636, %v1635
    %v1678 = vpack.c.b16 %v1638, %v1637
    %v1679 = vpack.c.b16 %v1640, %v1639
    %v1680 = vpack.c.b16 %v1642, %v1641
    %v1681 = vpack.c.b16 %v1644, %v1643
    %v1682 = vpack.c.b16 %v1646, %v1645
    %v1683 = vpack.c.b16 %v1648, %v1647
    %v1684 = vpack.c.b16 %v1650, %v1649
    %v1685 = vpack.c.b16 %v1652, %v1651
    %v1686 = vpack.c.b16 %v1654, %v1653
    %v1687 = vpack.c.b16 %v1656, %v1655
    %v1719 = vsel %vm606, %v1687, 0
    %1721 = vmatpush.bf16.msra.mxu0 %v1664
    %1722 = vmatpush.bf16.msra.mxu0 %v1663
    %1723 = vmatpush.bf16.msra.mxu0 %v1662
    %1724 = vmatpush.bf16.msra.mxu0 %v1661
    %1725 = vmatpush.bf16.msra.mxu0 %v1660
    %1726 = vmatpush.bf16.msra.mxu0 %v1659
    %1727 = vmatpush.bf16.msra.mxu0 %v1658
    %1728 = vmatpush.bf16.msra.mxu0 %v1657
    %1729 = vmatmul.bf16.gmra.mxu0 %v290
    %v1730 = vpop.f32.mrf.mxu0
    %v1731 = vadd.f32 0.0, %v1730
    %v1732 = vpop.f32.mrf.mxu0
    %v1733 = vadd.f32 0.0, %v1732
    %1734 = vmatmul.bf16.gmra.mxu0 %v294
    %v1735 = vpop.f32.mrf.mxu0
    %v1736 = vadd.f32 0.0, %v1735
    %v1737 = vpop.f32.mrf.mxu0
    %v1738 = vadd.f32 0.0, %v1737
    %1739 = vmatmul.bf16.gmra.mxu0 %v298
    %v1740 = vpop.f32.mrf.mxu0
    %v1741 = vadd.f32 0.0, %v1740
    %v1742 = vpop.f32.mrf.mxu0
    %v1743 = vadd.f32 0.0, %v1742
    %1744 = vmatmul.bf16.gmra.mxu0 %v302
    %v1745 = vpop.f32.mrf.mxu0
    %v1746 = vadd.f32 0.0, %v1745
    %v1747 = vpop.f32.mrf.mxu0
    %v1748 = vadd.f32 0.0, %v1747
    %1749 = vmatmul.bf16.gmra.mxu0 %v306
    %v1750 = vpop.f32.mrf.mxu0
    %v1751 = vadd.f32 0.0, %v1750
    %v1752 = vpop.f32.mrf.mxu0
    %v1753 = vadd.f32 0.0, %v1752
    %1754 = vmatmul.bf16.gmra.mxu0 %v310
    %v1755 = vpop.f32.mrf.mxu0
    %v1756 = vadd.f32 0.0, %v1755
    %v1757 = vpop.f32.mrf.mxu0
    %v1758 = vadd.f32 0.0, %v1757
    %1759 = vmatmul.bf16.gmra.mxu0 %v314
    %v1760 = vpop.f32.mrf.mxu0
    %v1761 = vadd.f32 0.0, %v1760
    %v1762 = vpop.f32.mrf.mxu0
    %v1763 = vadd.f32 0.0, %v1762
    %1764 = vmatmul.bf16.gmra.mxu0 %v318
    %v1765 = vpop.f32.mrf.mxu0
    %v1766 = vadd.f32 0.0, %v1765
    %v1767 = vpop.f32.mrf.mxu0
    %v1768 = vadd.f32 0.0, %v1767
    %1769 = vmatmul.bf16.gmra.mxu0 %v322
    %v1770 = vpop.f32.mrf.mxu0
    %v1771 = vadd.f32 0.0, %v1770
    %v1772 = vpop.f32.mrf.mxu0
    %v1773 = vadd.f32 0.0, %v1772
    %1774 = vmatmul.bf16.gmra.mxu0 %v326
    %v1775 = vpop.f32.mrf.mxu0
    %v1776 = vadd.f32 0.0, %v1775
    %v1777 = vpop.f32.mrf.mxu0
    %v1778 = vadd.f32 0.0, %v1777
    %1779 = vmatmul.bf16.gmra.mxu0 %v330
    %v1780 = vpop.f32.mrf.mxu0
    %v1781 = vadd.f32 0.0, %v1780
    %v1782 = vpop.f32.mrf.mxu0
    %v1783 = vadd.f32 0.0, %v1782
    %1784 = vmatmul.bf16.gmra.mxu0 %v334
    %v1785 = vpop.f32.mrf.mxu0
    %v1786 = vadd.f32 0.0, %v1785
    %v1787 = vpop.f32.mrf.mxu0
    %v1788 = vadd.f32 0.0, %v1787
    %1789 = vmatmul.bf16.gmra.mxu0 %v338
    %v1790 = vpop.f32.mrf.mxu0
    %v1791 = vadd.f32 0.0, %v1790
    %v1792 = vpop.f32.mrf.mxu0
    %1793 = vdwg.mxu0
    %1794 = vmatpush.bf16.msra.mxu0 %v1672
    %1795 = vmatpush.bf16.msra.mxu0 %v1671
    %1796 = vmatpush.bf16.msra.mxu0 %v1670
    %1797 = vmatpush.bf16.msra.mxu0 %v1669
    %1798 = vmatpush.bf16.msra.mxu0 %v1668
    %1799 = vmatpush.bf16.msra.mxu0 %v1667
    %1800 = vmatpush.bf16.msra.mxu0 %v1666
    %1801 = vmatpush.bf16.msra.mxu0 %v1665
    %1802 = vmatmul.bf16.gmra.mxu0 %v291
    %v1803 = vpop.f32.mrf.mxu0
    %v1804 = vadd.f32 %v1731, %v1803
    %v1805 = vpop.f32.mrf.mxu0
    %v1806 = vadd.f32 %v1733, %v1805
    %1807 = vmatmul.bf16.gmra.mxu0 %v295
    %v1808 = vpop.f32.mrf.mxu0
    %v1809 = vadd.f32 %v1736, %v1808
    %v1810 = vpop.f32.mrf.mxu0
    %v1811 = vadd.f32 %v1738, %v1810
    %1812 = vmatmul.bf16.gmra.mxu0 %v299
    %v1813 = vpop.f32.mrf.mxu0
    %v1814 = vadd.f32 %v1741, %v1813
    %v1815 = vpop.f32.mrf.mxu0
    %v1816 = vadd.f32 %v1743, %v1815
    %1817 = vmatmul.bf16.gmra.mxu0 %v303
    %v1818 = vpop.f32.mrf.mxu0
    %v1819 = vadd.f32 %v1746, %v1818
    %v1820 = vpop.f32.mrf.mxu0
    %v1821 = vadd.f32 %v1748, %v1820
    %1822 = vmatmul.bf16.gmra.mxu0 %v307
    %v1823 = vpop.f32.mrf.mxu0
    %v1824 = vadd.f32 %v1751, %v1823
    %v1825 = vpop.f32.mrf.mxu0
    %v1826 = vadd.f32 %v1753, %v1825
    %1827 = vmatmul.bf16.gmra.mxu0 %v311
    %v1828 = vpop.f32.mrf.mxu0
    %v1829 = vadd.f32 %v1756, %v1828
    %v1830 = vpop.f32.mrf.mxu0
    %v1831 = vadd.f32 %v1758, %v1830
    %1832 = vmatmul.bf16.gmra.mxu0 %v315
    %v1833 = vpop.f32.mrf.mxu0
    %v1834 = vadd.f32 %v1761, %v1833
    %v1835 = vpop.f32.mrf.mxu0
    %v1836 = vadd.f32 %v1763, %v1835
    %1837 = vmatmul.bf16.gmra.mxu0 %v319
    %v1838 = vpop.f32.mrf.mxu0
    %v1839 = vadd.f32 %v1766, %v1838
    %v1840 = vpop.f32.mrf.mxu0
    %v1841 = vadd.f32 %v1768, %v1840
    %1842 = vmatmul.bf16.gmra.mxu0 %v323
    %v1843 = vpop.f32.mrf.mxu0
    %v1844 = vadd.f32 %v1771, %v1843
    %v1845 = vpop.f32.mrf.mxu0
    %v1846 = vadd.f32 %v1773, %v1845
    %1847 = vmatmul.bf16.gmra.mxu0 %v327
    %v1848 = vpop.f32.mrf.mxu0
    %v1849 = vadd.f32 %v1776, %v1848
    %v1850 = vpop.f32.mrf.mxu0
    %v1851 = vadd.f32 %v1778, %v1850
    %1852 = vmatmul.bf16.gmra.mxu0 %v331
    %v1853 = vpop.f32.mrf.mxu0
    %v1854 = vadd.f32 %v1781, %v1853
    %v1855 = vpop.f32.mrf.mxu0
    %v1856 = vadd.f32 %v1783, %v1855
    %1857 = vmatmul.bf16.gmra.mxu0 %v335
    %v1858 = vpop.f32.mrf.mxu0
    %v1859 = vadd.f32 %v1786, %v1858
    %v1860 = vpop.f32.mrf.mxu0
    %v1861 = vadd.f32 %v1788, %v1860
    %1862 = vmatmul.bf16.gmra.mxu0 %v339
    %v1863 = vpop.f32.mrf.mxu0
    %v1864 = vadd.f32 %v1791, %v1863
    %v1865 = vpop.f32.mrf.mxu0
    %1866 = vdwg.mxu0
    %1867 = vmatpush.bf16.msra.mxu0 %v1680
    %1868 = vmatpush.bf16.msra.mxu0 %v1679
    %1869 = vmatpush.bf16.msra.mxu0 %v1678
    %1870 = vmatpush.bf16.msra.mxu0 %v1677
    %1871 = vmatpush.bf16.msra.mxu0 %v1676
    %1872 = vmatpush.bf16.msra.mxu0 %v1675
    %1873 = vmatpush.bf16.msra.mxu0 %v1674
    %1874 = vmatpush.bf16.msra.mxu0 %v1673
    %1875 = vmatmul.bf16.gmra.mxu0 %v292
    %v1876 = vpop.f32.mrf.mxu0
    %v1877 = vadd.f32 %v1804, %v1876
    %v1878 = vpop.f32.mrf.mxu0
    %v1879 = vadd.f32 %v1806, %v1878
    %1880 = vmatmul.bf16.gmra.mxu0 %v296
    %v1881 = vpop.f32.mrf.mxu0
    %v1882 = vadd.f32 %v1809, %v1881
    %v1883 = vpop.f32.mrf.mxu0
    %v1884 = vadd.f32 %v1811, %v1883
    %1885 = vmatmul.bf16.gmra.mxu0 %v300
    %v1886 = vpop.f32.mrf.mxu0
    %v1887 = vadd.f32 %v1814, %v1886
    %v1888 = vpop.f32.mrf.mxu0
    %v1889 = vadd.f32 %v1816, %v1888
    %1890 = vmatmul.bf16.gmra.mxu0 %v304
    %v1891 = vpop.f32.mrf.mxu0
    %v1892 = vadd.f32 %v1819, %v1891
    %v1893 = vpop.f32.mrf.mxu0
    %v1894 = vadd.f32 %v1821, %v1893
    %1895 = vmatmul.bf16.gmra.mxu0 %v308
    %v1896 = vpop.f32.mrf.mxu0
    %v1897 = vadd.f32 %v1824, %v1896
    %v1898 = vpop.f32.mrf.mxu0
    %v1899 = vadd.f32 %v1826, %v1898
    %1900 = vmatmul.bf16.gmra.mxu0 %v312
    %v1901 = vpop.f32.mrf.mxu0
    %v1902 = vadd.f32 %v1829, %v1901
    %v1903 = vpop.f32.mrf.mxu0
    %v1904 = vadd.f32 %v1831, %v1903
    %1905 = vmatmul.bf16.gmra.mxu0 %v316
    %v1906 = vpop.f32.mrf.mxu0
    %v1907 = vadd.f32 %v1834, %v1906
    %v1908 = vpop.f32.mrf.mxu0
    %v1909 = vadd.f32 %v1836, %v1908
    %1910 = vmatmul.bf16.gmra.mxu0 %v320
    %v1911 = vpop.f32.mrf.mxu0
    %v1912 = vadd.f32 %v1839, %v1911
    %v1913 = vpop.f32.mrf.mxu0
    %v1914 = vadd.f32 %v1841, %v1913
    %1915 = vmatmul.bf16.gmra.mxu0 %v324
    %v1916 = vpop.f32.mrf.mxu0
    %v1917 = vadd.f32 %v1844, %v1916
    %v1918 = vpop.f32.mrf.mxu0
    %v1919 = vadd.f32 %v1846, %v1918
    %1920 = vmatmul.bf16.gmra.mxu0 %v328
    %v1921 = vpop.f32.mrf.mxu0
    %v1922 = vadd.f32 %v1849, %v1921
    %v1923 = vpop.f32.mrf.mxu0
    %v1924 = vadd.f32 %v1851, %v1923
    %1925 = vmatmul.bf16.gmra.mxu0 %v332
    %v1926 = vpop.f32.mrf.mxu0
    %v1927 = vadd.f32 %v1854, %v1926
    %v1928 = vpop.f32.mrf.mxu0
    %v1929 = vadd.f32 %v1856, %v1928
    %1930 = vmatmul.bf16.gmra.mxu0 %v336
    %v1931 = vpop.f32.mrf.mxu0
    %v1932 = vadd.f32 %v1859, %v1931
    %v1933 = vpop.f32.mrf.mxu0
    %v1934 = vadd.f32 %v1861, %v1933
    %1935 = vmatmul.bf16.gmra.mxu0 %v340
    %v1936 = vpop.f32.mrf.mxu0
    %v1937 = vadd.f32 %v1864, %v1936
    %v1938 = vpop.f32.mrf.mxu0
    %1939 = vdwg.mxu0
    %1940 = vmatpush.bf16.msra.mxu0 0
    %1941 = vmatpush.bf16.msra.mxu0 %v1719
    %1942 = vmatpush.bf16.msra.mxu0 %v1686
    %1943 = vmatpush.bf16.msra.mxu0 %v1685
    %1944 = vmatpush.bf16.msra.mxu0 %v1684
    %1945 = vmatpush.bf16.msra.mxu0 %v1683
    %1946 = vmatpush.bf16.msra.mxu0 %v1682
    %1947 = vmatpush.bf16.msra.mxu0 %v1681
    %1948 = vmatmul.bf16.gmra.mxu0 %v568
    %v1949 = vpop.f32.mrf.mxu0
    %v1950 = vadd.f32 %v1877, %v1949
    %v1951 = vpop.f32.mrf.mxu0
    %v1952 = vadd.f32 %v1879, %v1951
    %1953 = vmatmul.bf16.gmra.mxu0 %v571
    %v1954 = vpop.f32.mrf.mxu0
    %v1955 = vadd.f32 %v1882, %v1954
    %v1956 = vpop.f32.mrf.mxu0
    %v1957 = vadd.f32 %v1884, %v1956
    %1958 = vmatmul.bf16.gmra.mxu0 %v574
    %v1959 = vpop.f32.mrf.mxu0
    %v1960 = vadd.f32 %v1887, %v1959
    %v1961 = vpop.f32.mrf.mxu0
    %v1962 = vadd.f32 %v1889, %v1961
    %1963 = vmatmul.bf16.gmra.mxu0 %v577
    %v1964 = vpop.f32.mrf.mxu0
    %v1965 = vadd.f32 %v1892, %v1964
    %v1966 = vpop.f32.mrf.mxu0
    %v1967 = vadd.f32 %v1894, %v1966
    %1968 = vmatmul.bf16.gmra.mxu0 %v580
    %v1969 = vpop.f32.mrf.mxu0
    %v1970 = vadd.f32 %v1897, %v1969
    %v1971 = vpop.f32.mrf.mxu0
    %v1972 = vadd.f32 %v1899, %v1971
    %1973 = vmatmul.bf16.gmra.mxu0 %v583
    %v1974 = vpop.f32.mrf.mxu0
    %v1975 = vadd.f32 %v1902, %v1974
    %v1976 = vpop.f32.mrf.mxu0
    %v1977 = vadd.f32 %v1904, %v1976
    %1978 = vmatmul.bf16.gmra.mxu0 %v586
    %v1979 = vpop.f32.mrf.mxu0
    %v1980 = vadd.f32 %v1907, %v1979
    %v1981 = vpop.f32.mrf.mxu0
    %v1982 = vadd.f32 %v1909, %v1981
    %1983 = vmatmul.bf16.gmra.mxu0 %v589
    %v1984 = vpop.f32.mrf.mxu0
    %v1985 = vadd.f32 %v1912, %v1984
    %v1986 = vpop.f32.mrf.mxu0
    %v1987 = vadd.f32 %v1914, %v1986
    %1988 = vmatmul.bf16.gmra.mxu0 %v592
    %v1989 = vpop.f32.mrf.mxu0
    %v1990 = vadd.f32 %v1917, %v1989
    %v1991 = vpop.f32.mrf.mxu0
    %v1992 = vadd.f32 %v1919, %v1991
    %1993 = vmatmul.bf16.gmra.mxu0 %v595
    %v1994 = vpop.f32.mrf.mxu0
    %v1995 = vadd.f32 %v1922, %v1994
    %v1996 = vpop.f32.mrf.mxu0
    %v1997 = vadd.f32 %v1924, %v1996
    %1998 = vmatmul.bf16.gmra.mxu0 %v598
    %v1999 = vpop.f32.mrf.mxu0
    %v2000 = vadd.f32 %v1927, %v1999
    %v2001 = vpop.f32.mrf.mxu0
    %v2002 = vadd.f32 %v1929, %v2001
    %2003 = vmatmul.bf16.gmra.mxu0 %v601
    %v2004 = vpop.f32.mrf.mxu0
    %v2005 = vadd.f32 %v1932, %v2004
    %v2006 = vpop.f32.mrf.mxu0
    %v2007 = vadd.f32 %v1934, %v2006
    %2008 = vmatmul.bf16.gmra.mxu0 %v604
    %v2009 = vpop.f32.mrf.mxu0
    %v2010 = vadd.f32 %v1937, %v2009
    %v2011 = vpop.f32.mrf.mxu0
    %2012 = vdwg.mxu0
    %v2013 = vmax.f32 %v1445, %v1950
    %v2014 = vmax.f32 %v1446, %v1952
    %v2015 = vmax.f32 %v1447, %v1955
    %v2016 = vmax.f32 %v1448, %v1957
    %v2017 = vmax.f32 %v1449, %v1960
    %v2018 = vmax.f32 %v1450, %v1962
    %v2019 = vmax.f32 %v1451, %v1965
    %v2020 = vmax.f32 %v1452, %v1967
    %v2021 = vmax.f32 %v1453, %v1970
    %v2022 = vmax.f32 %v1454, %v1972
    %v2023 = vmax.f32 %v1455, %v1975
    %v2024 = vmax.f32 %v1456, %v1977
    %v2025 = vmax.f32 %v1457, %v1980
    %v2026 = vmax.f32 %v1458, %v1982
    %v2027 = vmax.f32 %v1459, %v1985
    %v2028 = vmax.f32 %v1460, %v1987
    %v2029 = vmax.f32 %v1461, %v1990
    %v2030 = vmax.f32 %v1462, %v1992
    %v2031 = vmax.f32 %v1463, %v1995
    %v2032 = vmax.f32 %v1464, %v1997
    %v2033 = vmax.f32 %v1465, %v2000
    %v2034 = vmax.f32 %v1466, %v2002
    %v2035 = vmax.f32 %v1467, %v2005
    %v2036 = vmax.f32 %v1468, %v2007
    %v2037 = vmax.f32 %v1469, %v2010
    %s2038 = scalar_lea.vmem %s1, 744
    %v2039 = vld [vmem:[%s2038] sm:$0xf]
    %v2040 = vld [vmem:[%s2038 + $0x4] sm:$0xf]
    %v2041 = vld [vmem:[%s2038 + $0x8] sm:$0xf]
    %v2042 = vld [vmem:[%s2038 + $0xc] sm:$0xf]
    %v2043 = vld [vmem:[%s2038 + $0x10] sm:$0xf]
    %v2044 = vld [vmem:[%s2038 + $0x14] sm:$0xf]
    %v2045 = vld [vmem:[%s2038 + $0x18] sm:$0xf]
    %v2046 = vld [vmem:[%s2038 + $0x1c] sm:$0xf]
    %v2047 = vld [vmem:[%s2038 + $0x20] sm:$0xf]
    %v2048 = vld [vmem:[%s2038 + $0x24] sm:$0xf]
    %v2049 = vld [vmem:[%s2038 + $0x28] sm:$0xf]
    %v2050 = vld [vmem:[%s2038 + $0x2c] sm:$0xf]
    %v2051 = vld [vmem:[%s2038 + $0x30] sm:$0xf]
    %v2052 = vld [vmem:[%s2038 + $0x34] sm:$0xf]
    %v2053 = vld [vmem:[%s2038 + $0x38] sm:$0xf]
    %v2054 = vld [vmem:[%s2038 + $0x3c] sm:$0xf]
    %v2055 = vld [vmem:[%s2038 + $0x40] sm:$0xf]
    %v2056 = vld [vmem:[%s2038 + $0x44] sm:$0xf]
    %v2057 = vld [vmem:[%s2038 + $0x48] sm:$0xf]
    %v2058 = vld [vmem:[%s2038 + $0x4c] sm:$0xf]
    %v2059 = vld [vmem:[%s2038 + $0x50] sm:$0xf]
    %v2060 = vld [vmem:[%s2038 + $0x54] sm:$0xf]
    %v2061 = vld [vmem:[%s2038 + $0x58] sm:$0xf]
    %v2062 = vld [vmem:[%s2038 + $0x5c] sm:$0xf]
    %v2063 = vld [vmem:[%s2038 + $0x60] sm:$0xf]
    %v2064 = vld [vmem:[%s2038 + $0x64] sm:$0xf]
    %v2065 = vld [vmem:[%s2038 + $0x68] sm:$0xf]
    %v2066 = vld [vmem:[%s2038 + $0x6c] sm:$0xf]
    %v2067 = vld [vmem:[%s2038 + $0x70] sm:$0xf]
    %v2068 = vld [vmem:[%s2038 + $0x74] sm:$0xf]
    %v2069 = vld [vmem:[%s2038 + $0x78] sm:$0xf]
    %v2070 = vld [vmem:[%s2038 + $0x7c] sm:$0xf]
    %v2071 = vld [vmem:[%s2038 + $0x80] sm:$0xf]
    %v2072 = vld [vmem:[%s2038 + $0x84] sm:$0xf]
    %v2073 = vld [vmem:[%s2038 + $0x88] sm:$0xf]
    %v2074 = vld [vmem:[%s2038 + $0x8c] sm:$0xf]
    %v2075 = vld [vmem:[%s2038 + $0x90] sm:$0xf]
    %v2076 = vld [vmem:[%s2038 + $0x94] sm:$0xf]
    %v2077 = vld [vmem:[%s2038 + $0x98] sm:$0xf]
    %v2078 = vld [vmem:[%s2038 + $0x9c] sm:$0xf]
    %v2079 = vld [vmem:[%s2038 + $0xa0] sm:$0xf]
    %v2080 = vld [vmem:[%s2038 + $0xa4] sm:$0xf]
    %v2081 = vld [vmem:[%s2038 + $0xa8] sm:$0xf]
    %v2082 = vld [vmem:[%s2038 + $0xac] sm:$0xf]
    %v2083 = vld [vmem:[%s2038 + $0xb0] sm:$0xf]
    %v2084 = vld [vmem:[%s2038 + $0xb4] sm:$0xf]
    %v2085 = vld [vmem:[%s2038 + $0xb8] sm:$0xf]
    %v2086 = vld [vmem:[%s2038 + $0xbc] sm:$0xf]
    %v2087 = vld [vmem:[%s2038 + $0xc0] sm:$0xf]
    %v2088 = vld [vmem:[%s2038 + $0xc4] sm:$0xf]
    %v2089 = vld [vmem:[%s2038 + $0xc8] sm:$0xf]
    %v2090 = vld [vmem:[%s2038 + $0xcc] sm:$0xf]
    %v2091 = vld [vmem:[%s2038 + $0xd0] sm:$0xf]
    %v2092 = vld [vmem:[%s2038 + $0xd4] sm:$0xf]
    %v2093 = vld [vmem:[%s2038 + $0xd8] sm:$0xf]
    %v2094 = vld [vmem:[%s2038 + $0xdc] sm:$0xf]
    %v2095 = vld [vmem:[%s2038 + $0xe0] sm:$0xf]
    %v2096 = vld [vmem:[%s2038 + $0xe4] sm:$0xf]
    %v2097 = vld [vmem:[%s2038 + $0xe8] sm:$0xf]
    %v2098 = vld [vmem:[%s2038 + $0xec] sm:$0xf]
    %v2099 = vld [vmem:[%s2038 + $0xf0] sm:$0xf]
    %v2100 = vld [vmem:[%s2038 + $0xf4] sm:$0x1]
    %v2163 = vunpack.c.l.b16 %v2039
    %v2164 = vunpack.c.l.b16 %v2040
    %v2165 = vunpack.c.l.b16 %v2041
    %v2166 = vunpack.c.l.b16 %v2042
    %v2167 = vunpack.c.l.b16 %v2043
    %v2168 = vunpack.c.l.b16 %v2044
    %v2169 = vunpack.c.l.b16 %v2045
    %v2170 = vunpack.c.l.b16 %v2046
    %v2171 = vunpack.c.l.b16 %v2047
    %v2172 = vunpack.c.l.b16 %v2048
    %v2173 = vunpack.c.l.b16 %v2049
    %v2174 = vunpack.c.l.b16 %v2050
    %v2175 = vunpack.c.l.b16 %v2051
    %v2176 = vunpack.c.l.b16 %v2052
    %v2177 = vunpack.c.l.b16 %v2053
    %v2178 = vunpack.c.l.b16 %v2054
    %v2179 = vunpack.c.l.b16 %v2055
    %v2180 = vunpack.c.l.b16 %v2056
    %v2181 = vunpack.c.l.b16 %v2057
    %v2182 = vunpack.c.l.b16 %v2058
    %v2183 = vunpack.c.l.b16 %v2059
    %v2184 = vunpack.c.l.b16 %v2060
    %v2185 = vunpack.c.l.b16 %v2061
    %v2186 = vunpack.c.l.b16 %v2062
    %v2187 = vunpack.c.l.b16 %v2063
    %v2188 = vunpack.c.l.b16 %v2064
    %v2189 = vunpack.c.l.b16 %v2065
    %v2190 = vunpack.c.l.b16 %v2066
    %v2191 = vunpack.c.l.b16 %v2067
    %v2192 = vunpack.c.l.b16 %v2068
    %v2193 = vunpack.c.l.b16 %v2069
    %v2194 = vunpack.c.l.b16 %v2070
    %v2195 = vunpack.c.l.b16 %v2071
    %v2196 = vunpack.c.l.b16 %v2072
    %v2197 = vunpack.c.l.b16 %v2073
    %v2198 = vunpack.c.l.b16 %v2074
    %v2199 = vunpack.c.l.b16 %v2075
    %v2200 = vunpack.c.l.b16 %v2076
    %v2201 = vunpack.c.l.b16 %v2077
    %v2202 = vunpack.c.l.b16 %v2078
    %v2203 = vunpack.c.l.b16 %v2079
    %v2204 = vunpack.c.l.b16 %v2080
    %v2205 = vunpack.c.l.b16 %v2081
    %v2206 = vunpack.c.l.b16 %v2082
    %v2207 = vunpack.c.l.b16 %v2083
    %v2208 = vunpack.c.l.b16 %v2084
    %v2209 = vunpack.c.l.b16 %v2085
    %v2210 = vunpack.c.l.b16 %v2086
    %v2211 = vunpack.c.l.b16 %v2087
    %v2212 = vunpack.c.l.b16 %v2088
    %v2213 = vunpack.c.l.b16 %v2089
    %v2214 = vunpack.c.l.b16 %v2090
    %v2215 = vunpack.c.l.b16 %v2091
    %v2216 = vunpack.c.l.b16 %v2092
    %v2217 = vunpack.c.l.b16 %v2093
    %v2218 = vunpack.c.l.b16 %v2094
    %v2219 = vunpack.c.l.b16 %v2095
    %v2220 = vunpack.c.l.b16 %v2096
    %v2221 = vunpack.c.l.b16 %v2097
    %v2222 = vunpack.c.l.b16 %v2098
    %v2223 = vunpack.c.l.b16 %v2099
    %v2224 = vunpack.c.l.b16 %v2100
    %v2225 = vpack.c.b16 %v2164, %v2163
    %v2226 = vpack.c.b16 %v2166, %v2165
    %v2227 = vpack.c.b16 %v2168, %v2167
    %v2228 = vpack.c.b16 %v2170, %v2169
    %v2229 = vpack.c.b16 %v2172, %v2171
    %v2230 = vpack.c.b16 %v2174, %v2173
    %v2231 = vpack.c.b16 %v2176, %v2175
    %v2232 = vpack.c.b16 %v2178, %v2177
    %v2233 = vpack.c.b16 %v2180, %v2179
    %v2234 = vpack.c.b16 %v2182, %v2181
    %v2235 = vpack.c.b16 %v2184, %v2183
    %v2236 = vpack.c.b16 %v2186, %v2185
    %v2237 = vpack.c.b16 %v2188, %v2187
    %v2238 = vpack.c.b16 %v2190, %v2189
    %v2239 = vpack.c.b16 %v2192, %v2191
    %v2240 = vpack.c.b16 %v2194, %v2193
    %v2241 = vpack.c.b16 %v2196, %v2195
    %v2242 = vpack.c.b16 %v2198, %v2197
    %v2243 = vpack.c.b16 %v2200, %v2199
    %v2244 = vpack.c.b16 %v2202, %v2201
    %v2245 = vpack.c.b16 %v2204, %v2203
    %v2246 = vpack.c.b16 %v2206, %v2205
    %v2247 = vpack.c.b16 %v2208, %v2207
    %v2248 = vpack.c.b16 %v2210, %v2209
    %v2249 = vpack.c.b16 %v2212, %v2211
    %v2250 = vpack.c.b16 %v2214, %v2213
    %v2251 = vpack.c.b16 %v2216, %v2215
    %v2252 = vpack.c.b16 %v2218, %v2217
    %v2253 = vpack.c.b16 %v2220, %v2219
    %v2254 = vpack.c.b16 %v2222, %v2221
    %v2255 = vpack.c.b16 %v2224, %v2223
    %v2287 = vsel %vm606, %v2255, 0
    %2289 = vmatpush.bf16.msra.mxu0 %v2232
    %2290 = vmatpush.bf16.msra.mxu0 %v2231
    %2291 = vmatpush.bf16.msra.mxu0 %v2230
    %2292 = vmatpush.bf16.msra.mxu0 %v2229
    %2293 = vmatpush.bf16.msra.mxu0 %v2228
    %2294 = vmatpush.bf16.msra.mxu0 %v2227
    %2295 = vmatpush.bf16.msra.mxu0 %v2226
    %2296 = vmatpush.bf16.msra.mxu0 %v2225
    %2297 = vmatmul.bf16.gmra.mxu0 %v290
    %v2298 = vpop.f32.mrf.mxu0
    %v2299 = vadd.f32 0.0, %v2298
    %v2300 = vpop.f32.mrf.mxu0
    %v2301 = vadd.f32 0.0, %v2300
    %2302 = vmatmul.bf16.gmra.mxu0 %v294
    %v2303 = vpop.f32.mrf.mxu0
    %v2304 = vadd.f32 0.0, %v2303
    %v2305 = vpop.f32.mrf.mxu0
    %v2306 = vadd.f32 0.0, %v2305
    %2307 = vmatmul.bf16.gmra.mxu0 %v298
    %v2308 = vpop.f32.mrf.mxu0
    %v2309 = vadd.f32 0.0, %v2308
    %v2310 = vpop.f32.mrf.mxu0
    %v2311 = vadd.f32 0.0, %v2310
    %2312 = vmatmul.bf16.gmra.mxu0 %v302
    %v2313 = vpop.f32.mrf.mxu0
    %v2314 = vadd.f32 0.0, %v2313
    %v2315 = vpop.f32.mrf.mxu0
    %v2316 = vadd.f32 0.0, %v2315
    %2317 = vmatmul.bf16.gmra.mxu0 %v306
    %v2318 = vpop.f32.mrf.mxu0
    %v2319 = vadd.f32 0.0, %v2318
    %v2320 = vpop.f32.mrf.mxu0
    %v2321 = vadd.f32 0.0, %v2320
    %2322 = vmatmul.bf16.gmra.mxu0 %v310
    %v2323 = vpop.f32.mrf.mxu0
    %v2324 = vadd.f32 0.0, %v2323
    %v2325 = vpop.f32.mrf.mxu0
    %v2326 = vadd.f32 0.0, %v2325
    %2327 = vmatmul.bf16.gmra.mxu0 %v314
    %v2328 = vpop.f32.mrf.mxu0
    %v2329 = vadd.f32 0.0, %v2328
    %v2330 = vpop.f32.mrf.mxu0
    %v2331 = vadd.f32 0.0, %v2330
    %2332 = vmatmul.bf16.gmra.mxu0 %v318
    %v2333 = vpop.f32.mrf.mxu0
    %v2334 = vadd.f32 0.0, %v2333
    %v2335 = vpop.f32.mrf.mxu0
    %v2336 = vadd.f32 0.0, %v2335
    %2337 = vmatmul.bf16.gmra.mxu0 %v322
    %v2338 = vpop.f32.mrf.mxu0
    %v2339 = vadd.f32 0.0, %v2338
    %v2340 = vpop.f32.mrf.mxu0
    %v2341 = vadd.f32 0.0, %v2340
    %2342 = vmatmul.bf16.gmra.mxu0 %v326
    %v2343 = vpop.f32.mrf.mxu0
    %v2344 = vadd.f32 0.0, %v2343
    %v2345 = vpop.f32.mrf.mxu0
    %v2346 = vadd.f32 0.0, %v2345
    %2347 = vmatmul.bf16.gmra.mxu0 %v330
    %v2348 = vpop.f32.mrf.mxu0
    %v2349 = vadd.f32 0.0, %v2348
    %v2350 = vpop.f32.mrf.mxu0
    %v2351 = vadd.f32 0.0, %v2350
    %2352 = vmatmul.bf16.gmra.mxu0 %v334
    %v2353 = vpop.f32.mrf.mxu0
    %v2354 = vadd.f32 0.0, %v2353
    %v2355 = vpop.f32.mrf.mxu0
    %v2356 = vadd.f32 0.0, %v2355
    %2357 = vmatmul.bf16.gmra.mxu0 %v338
    %v2358 = vpop.f32.mrf.mxu0
    %v2359 = vadd.f32 0.0, %v2358
    %v2360 = vpop.f32.mrf.mxu0
    %2361 = vdwg.mxu0
    %2362 = vmatpush.bf16.msra.mxu0 %v2240
    %2363 = vmatpush.bf16.msra.mxu0 %v2239
    %2364 = vmatpush.bf16.msra.mxu0 %v2238
    %2365 = vmatpush.bf16.msra.mxu0 %v2237
    %2366 = vmatpush.bf16.msra.mxu0 %v2236
    %2367 = vmatpush.bf16.msra.mxu0 %v2235
    %2368 = vmatpush.bf16.msra.mxu0 %v2234
    %2369 = vmatpush.bf16.msra.mxu0 %v2233
    %2370 = vmatmul.bf16.gmra.mxu0 %v291
    %v2371 = vpop.f32.mrf.mxu0
    %v2372 = vadd.f32 %v2299, %v2371
    %v2373 = vpop.f32.mrf.mxu0
    %v2374 = vadd.f32 %v2301, %v2373
    %2375 = vmatmul.bf16.gmra.mxu0 %v295
    %v2376 = vpop.f32.mrf.mxu0
    %v2377 = vadd.f32 %v2304, %v2376
    %v2378 = vpop.f32.mrf.mxu0
    %v2379 = vadd.f32 %v2306, %v2378
    %2380 = vmatmul.bf16.gmra.mxu0 %v299
    %v2381 = vpop.f32.mrf.mxu0
    %v2382 = vadd.f32 %v2309, %v2381
    %v2383 = vpop.f32.mrf.mxu0
    %v2384 = vadd.f32 %v2311, %v2383
    %2385 = vmatmul.bf16.gmra.mxu0 %v303
    %v2386 = vpop.f32.mrf.mxu0
    %v2387 = vadd.f32 %v2314, %v2386
    %v2388 = vpop.f32.mrf.mxu0
    %v2389 = vadd.f32 %v2316, %v2388
    %2390 = vmatmul.bf16.gmra.mxu0 %v307
    %v2391 = vpop.f32.mrf.mxu0
    %v2392 = vadd.f32 %v2319, %v2391
    %v2393 = vpop.f32.mrf.mxu0
    %v2394 = vadd.f32 %v2321, %v2393
    %2395 = vmatmul.bf16.gmra.mxu0 %v311
    %v2396 = vpop.f32.mrf.mxu0
    %v2397 = vadd.f32 %v2324, %v2396
    %v2398 = vpop.f32.mrf.mxu0
    %v2399 = vadd.f32 %v2326, %v2398
    %2400 = vmatmul.bf16.gmra.mxu0 %v315
    %v2401 = vpop.f32.mrf.mxu0
    %v2402 = vadd.f32 %v2329, %v2401
    %v2403 = vpop.f32.mrf.mxu0
    %v2404 = vadd.f32 %v2331, %v2403
    %2405 = vmatmul.bf16.gmra.mxu0 %v319
    %v2406 = vpop.f32.mrf.mxu0
    %v2407 = vadd.f32 %v2334, %v2406
    %v2408 = vpop.f32.mrf.mxu0
    %v2409 = vadd.f32 %v2336, %v2408
    %2410 = vmatmul.bf16.gmra.mxu0 %v323
    %v2411 = vpop.f32.mrf.mxu0
    %v2412 = vadd.f32 %v2339, %v2411
    %v2413 = vpop.f32.mrf.mxu0
    %v2414 = vadd.f32 %v2341, %v2413
    %2415 = vmatmul.bf16.gmra.mxu0 %v327
    %v2416 = vpop.f32.mrf.mxu0
    %v2417 = vadd.f32 %v2344, %v2416
    %v2418 = vpop.f32.mrf.mxu0
    %v2419 = vadd.f32 %v2346, %v2418
    %2420 = vmatmul.bf16.gmra.mxu0 %v331
    %v2421 = vpop.f32.mrf.mxu0
    %v2422 = vadd.f32 %v2349, %v2421
    %v2423 = vpop.f32.mrf.mxu0
    %v2424 = vadd.f32 %v2351, %v2423
    %2425 = vmatmul.bf16.gmra.mxu0 %v335
    %v2426 = vpop.f32.mrf.mxu0
    %v2427 = vadd.f32 %v2354, %v2426
    %v2428 = vpop.f32.mrf.mxu0
    %v2429 = vadd.f32 %v2356, %v2428
    %2430 = vmatmul.bf16.gmra.mxu0 %v339
    %v2431 = vpop.f32.mrf.mxu0
    %v2432 = vadd.f32 %v2359, %v2431
    %v2433 = vpop.f32.mrf.mxu0
    %2434 = vdwg.mxu0
    %2435 = vmatpush.bf16.msra.mxu0 %v2248
    %2436 = vmatpush.bf16.msra.mxu0 %v2247
    %2437 = vmatpush.bf16.msra.mxu0 %v2246
    %2438 = vmatpush.bf16.msra.mxu0 %v2245
    %2439 = vmatpush.bf16.msra.mxu0 %v2244
    %2440 = vmatpush.bf16.msra.mxu0 %v2243
    %2441 = vmatpush.bf16.msra.mxu0 %v2242
    %2442 = vmatpush.bf16.msra.mxu0 %v2241
    %2443 = vmatmul.bf16.gmra.mxu0 %v292
    %v2444 = vpop.f32.mrf.mxu0
    %v2445 = vadd.f32 %v2372, %v2444
    %v2446 = vpop.f32.mrf.mxu0
    %v2447 = vadd.f32 %v2374, %v2446
    %2448 = vmatmul.bf16.gmra.mxu0 %v296
    %v2449 = vpop.f32.mrf.mxu0
    %v2450 = vadd.f32 %v2377, %v2449
    %v2451 = vpop.f32.mrf.mxu0
    %v2452 = vadd.f32 %v2379, %v2451
    %2453 = vmatmul.bf16.gmra.mxu0 %v300
    %v2454 = vpop.f32.mrf.mxu0
    %v2455 = vadd.f32 %v2382, %v2454
    %v2456 = vpop.f32.mrf.mxu0
    %v2457 = vadd.f32 %v2384, %v2456
    %2458 = vmatmul.bf16.gmra.mxu0 %v304
    %v2459 = vpop.f32.mrf.mxu0
    %v2460 = vadd.f32 %v2387, %v2459
    %v2461 = vpop.f32.mrf.mxu0
    %v2462 = vadd.f32 %v2389, %v2461
    %2463 = vmatmul.bf16.gmra.mxu0 %v308
    %v2464 = vpop.f32.mrf.mxu0
    %v2465 = vadd.f32 %v2392, %v2464
    %v2466 = vpop.f32.mrf.mxu0
    %v2467 = vadd.f32 %v2394, %v2466
    %2468 = vmatmul.bf16.gmra.mxu0 %v312
    %v2469 = vpop.f32.mrf.mxu0
    %v2470 = vadd.f32 %v2397, %v2469
    %v2471 = vpop.f32.mrf.mxu0
    %v2472 = vadd.f32 %v2399, %v2471
    %2473 = vmatmul.bf16.gmra.mxu0 %v316
    %v2474 = vpop.f32.mrf.mxu0
    %v2475 = vadd.f32 %v2402, %v2474
    %v2476 = vpop.f32.mrf.mxu0
    %v2477 = vadd.f32 %v2404, %v2476
    %2478 = vmatmul.bf16.gmra.mxu0 %v320
    %v2479 = vpop.f32.mrf.mxu0
    %v2480 = vadd.f32 %v2407, %v2479
    %v2481 = vpop.f32.mrf.mxu0
    %v2482 = vadd.f32 %v2409, %v2481
    %2483 = vmatmul.bf16.gmra.mxu0 %v324
    %v2484 = vpop.f32.mrf.mxu0
    %v2485 = vadd.f32 %v2412, %v2484
    %v2486 = vpop.f32.mrf.mxu0
    %v2487 = vadd.f32 %v2414, %v2486
    %2488 = vmatmul.bf16.gmra.mxu0 %v328
    %v2489 = vpop.f32.mrf.mxu0
    %v2490 = vadd.f32 %v2417, %v2489
    %v2491 = vpop.f32.mrf.mxu0
    %v2492 = vadd.f32 %v2419, %v2491
    %2493 = vmatmul.bf16.gmra.mxu0 %v332
    %v2494 = vpop.f32.mrf.mxu0
    %v2495 = vadd.f32 %v2422, %v2494
    %v2496 = vpop.f32.mrf.mxu0
    %v2497 = vadd.f32 %v2424, %v2496
    %2498 = vmatmul.bf16.gmra.mxu0 %v336
    %v2499 = vpop.f32.mrf.mxu0
    %v2500 = vadd.f32 %v2427, %v2499
    %v2501 = vpop.f32.mrf.mxu0
    %v2502 = vadd.f32 %v2429, %v2501
    %2503 = vmatmul.bf16.gmra.mxu0 %v340
    %v2504 = vpop.f32.mrf.mxu0
    %v2505 = vadd.f32 %v2432, %v2504
    %v2506 = vpop.f32.mrf.mxu0
    %2507 = vdwg.mxu0
    %2508 = vmatpush.bf16.msra.mxu0 0
    %2509 = vmatpush.bf16.msra.mxu0 %v2287
    %2510 = vmatpush.bf16.msra.mxu0 %v2254
    %2511 = vmatpush.bf16.msra.mxu0 %v2253
    %2512 = vmatpush.bf16.msra.mxu0 %v2252
    %2513 = vmatpush.bf16.msra.mxu0 %v2251
    %2514 = vmatpush.bf16.msra.mxu0 %v2250
    %2515 = vmatpush.bf16.msra.mxu0 %v2249
    %2516 = vmatmul.bf16.gmra.mxu0 %v568
    %v2517 = vpop.f32.mrf.mxu0
    %v2518 = vadd.f32 %v2445, %v2517
    %v2519 = vpop.f32.mrf.mxu0
    %v2520 = vadd.f32 %v2447, %v2519
    %2521 = vmatmul.bf16.gmra.mxu0 %v571
    %v2522 = vpop.f32.mrf.mxu0
    %v2523 = vadd.f32 %v2450, %v2522
    %v2524 = vpop.f32.mrf.mxu0
    %v2525 = vadd.f32 %v2452, %v2524
    %2526 = vmatmul.bf16.gmra.mxu0 %v574
    %v2527 = vpop.f32.mrf.mxu0
    %v2528 = vadd.f32 %v2455, %v2527
    %v2529 = vpop.f32.mrf.mxu0
    %v2530 = vadd.f32 %v2457, %v2529
    %2531 = vmatmul.bf16.gmra.mxu0 %v577
    %v2532 = vpop.f32.mrf.mxu0
    %v2533 = vadd.f32 %v2460, %v2532
    %v2534 = vpop.f32.mrf.mxu0
    %v2535 = vadd.f32 %v2462, %v2534
    %2536 = vmatmul.bf16.gmra.mxu0 %v580
    %v2537 = vpop.f32.mrf.mxu0
    %v2538 = vadd.f32 %v2465, %v2537
    %v2539 = vpop.f32.mrf.mxu0
    %v2540 = vadd.f32 %v2467, %v2539
    %2541 = vmatmul.bf16.gmra.mxu0 %v583
    %v2542 = vpop.f32.mrf.mxu0
    %v2543 = vadd.f32 %v2470, %v2542
    %v2544 = vpop.f32.mrf.mxu0
    %v2545 = vadd.f32 %v2472, %v2544
    %2546 = vmatmul.bf16.gmra.mxu0 %v586
    %v2547 = vpop.f32.mrf.mxu0
    %v2548 = vadd.f32 %v2475, %v2547
    %v2549 = vpop.f32.mrf.mxu0
    %v2550 = vadd.f32 %v2477, %v2549
    %2551 = vmatmul.bf16.gmra.mxu0 %v589
    %v2552 = vpop.f32.mrf.mxu0
    %v2553 = vadd.f32 %v2480, %v2552
    %v2554 = vpop.f32.mrf.mxu0
    %v2555 = vadd.f32 %v2482, %v2554
    %2556 = vmatmul.bf16.gmra.mxu0 %v592
    %v2557 = vpop.f32.mrf.mxu0
    %v2558 = vadd.f32 %v2485, %v2557
    %v2559 = vpop.f32.mrf.mxu0
    %v2560 = vadd.f32 %v2487, %v2559
    %2561 = vmatmul.bf16.gmra.mxu0 %v595
    %v2562 = vpop.f32.mrf.mxu0
    %v2563 = vadd.f32 %v2490, %v2562
    %v2564 = vpop.f32.mrf.mxu0
    %v2565 = vadd.f32 %v2492, %v2564
    %2566 = vmatmul.bf16.gmra.mxu0 %v598
    %v2567 = vpop.f32.mrf.mxu0
    %v2568 = vadd.f32 %v2495, %v2567
    %v2569 = vpop.f32.mrf.mxu0
    %v2570 = vadd.f32 %v2497, %v2569
    %2571 = vmatmul.bf16.gmra.mxu0 %v601
    %v2572 = vpop.f32.mrf.mxu0
    %v2573 = vadd.f32 %v2500, %v2572
    %v2574 = vpop.f32.mrf.mxu0
    %v2575 = vadd.f32 %v2502, %v2574
    %2576 = vmatmul.bf16.gmra.mxu0 %v604
    %v2577 = vpop.f32.mrf.mxu0
    %v2578 = vadd.f32 %v2505, %v2577
    %v2579 = vpop.f32.mrf.mxu0
    %2580 = vdwg.mxu0
    %v2581 = vmax.f32 %v2013, %v2518
    %v2582 = vmax.f32 %v2014, %v2520
    %v2583 = vmax.f32 %v2015, %v2523
    %v2584 = vmax.f32 %v2016, %v2525
    %v2585 = vmax.f32 %v2017, %v2528
    %v2586 = vmax.f32 %v2018, %v2530
    %v2587 = vmax.f32 %v2019, %v2533
    %v2588 = vmax.f32 %v2020, %v2535
    %v2589 = vmax.f32 %v2021, %v2538
    %v2590 = vmax.f32 %v2022, %v2540
    %v2591 = vmax.f32 %v2023, %v2543
    %v2592 = vmax.f32 %v2024, %v2545
    %v2593 = vmax.f32 %v2025, %v2548
    %v2594 = vmax.f32 %v2026, %v2550
    %v2595 = vmax.f32 %v2027, %v2553
    %v2596 = vmax.f32 %v2028, %v2555
    %v2597 = vmax.f32 %v2029, %v2558
    %v2598 = vmax.f32 %v2030, %v2560
    %v2599 = vmax.f32 %v2031, %v2563
    %v2600 = vmax.f32 %v2032, %v2565
    %v2601 = vmax.f32 %v2033, %v2568
    %v2602 = vmax.f32 %v2034, %v2570
    %v2603 = vmax.f32 %v2035, %v2573
    %v2604 = vmax.f32 %v2036, %v2575
    %v2605 = vmax.f32 %v2037, %v2578
    %s2606 = scalar_lea.vmem %s1, 992
    %v2607 = vld [vmem:[%s2606] sm:$0xf]
    %v2608 = vld [vmem:[%s2606 + $0x4] sm:$0xf]
    %v2609 = vld [vmem:[%s2606 + $0x8] sm:$0xf]
    %v2610 = vld [vmem:[%s2606 + $0xc] sm:$0xf]
    %v2611 = vld [vmem:[%s2606 + $0x10] sm:$0xf]
    %v2612 = vld [vmem:[%s2606 + $0x14] sm:$0xf]
    %v2613 = vld [vmem:[%s2606 + $0x18] sm:$0xf]
    %v2614 = vld [vmem:[%s2606 + $0x1c] sm:$0xf]
    %v2615 = vld [vmem:[%s2606 + $0x20] sm:$0xf]
    %v2616 = vld [vmem:[%s2606 + $0x24] sm:$0xf]
    %v2617 = vld [vmem:[%s2606 + $0x28] sm:$0xf]
    %v2618 = vld [vmem:[%s2606 + $0x2c] sm:$0xf]
    %v2619 = vld [vmem:[%s2606 + $0x30] sm:$0xf]
    %v2620 = vld [vmem:[%s2606 + $0x34] sm:$0xf]
    %v2621 = vld [vmem:[%s2606 + $0x38] sm:$0xf]
    %v2622 = vld [vmem:[%s2606 + $0x3c] sm:$0xf]
    %v2623 = vld [vmem:[%s2606 + $0x40] sm:$0xf]
    %v2624 = vld [vmem:[%s2606 + $0x44] sm:$0xf]
    %v2625 = vld [vmem:[%s2606 + $0x48] sm:$0xf]
    %v2626 = vld [vmem:[%s2606 + $0x4c] sm:$0xf]
    %v2627 = vld [vmem:[%s2606 + $0x50] sm:$0xf]
    %v2628 = vld [vmem:[%s2606 + $0x54] sm:$0xf]
    %v2629 = vld [vmem:[%s2606 + $0x58] sm:$0xf]
    %v2630 = vld [vmem:[%s2606 + $0x5c] sm:$0xf]
    %v2631 = vld [vmem:[%s2606 + $0x60] sm:$0xf]
    %v2632 = vld [vmem:[%s2606 + $0x64] sm:$0xf]
    %v2633 = vld [vmem:[%s2606 + $0x68] sm:$0xf]
    %v2634 = vld [vmem:[%s2606 + $0x6c] sm:$0xf]
    %v2635 = vld [vmem:[%s2606 + $0x70] sm:$0xf]
    %v2636 = vld [vmem:[%s2606 + $0x74] sm:$0xf]
    %v2637 = vld [vmem:[%s2606 + $0x78] sm:$0xf]
    %v2638 = vld [vmem:[%s2606 + $0x7c] sm:$0xf]
    %v2639 = vld [vmem:[%s2606 + $0x80] sm:$0xf]
    %v2640 = vld [vmem:[%s2606 + $0x84] sm:$0xf]
    %v2641 = vld [vmem:[%s2606 + $0x88] sm:$0xf]
    %v2642 = vld [vmem:[%s2606 + $0x8c] sm:$0xf]
    %v2643 = vld [vmem:[%s2606 + $0x90] sm:$0xf]
    %v2644 = vld [vmem:[%s2606 + $0x94] sm:$0xf]
    %v2645 = vld [vmem:[%s2606 + $0x98] sm:$0xf]
    %v2646 = vld [vmem:[%s2606 + $0x9c] sm:$0xf]
    %v2647 = vld [vmem:[%s2606 + $0xa0] sm:$0xf]
    %v2648 = vld [vmem:[%s2606 + $0xa4] sm:$0xf]
    %v2649 = vld [vmem:[%s2606 + $0xa8] sm:$0xf]
    %v2650 = vld [vmem:[%s2606 + $0xac] sm:$0xf]
    %v2651 = vld [vmem:[%s2606 + $0xb0] sm:$0xf]
    %v2652 = vld [vmem:[%s2606 + $0xb4] sm:$0xf]
    %v2653 = vld [vmem:[%s2606 + $0xb8] sm:$0xf]
    %v2654 = vld [vmem:[%s2606 + $0xbc] sm:$0xf]
    %v2655 = vld [vmem:[%s2606 + $0xc0] sm:$0xf]
    %v2656 = vld [vmem:[%s2606 + $0xc4] sm:$0xf]
    %v2657 = vld [vmem:[%s2606 + $0xc8] sm:$0xf]
    %v2658 = vld [vmem:[%s2606 + $0xcc] sm:$0xf]
    %v2659 = vld [vmem:[%s2606 + $0xd0] sm:$0xf]
    %v2660 = vld [vmem:[%s2606 + $0xd4] sm:$0xf]
    %v2661 = vld [vmem:[%s2606 + $0xd8] sm:$0xf]
    %v2662 = vld [vmem:[%s2606 + $0xdc] sm:$0xf]
    %v2663 = vld [vmem:[%s2606 + $0xe0] sm:$0xf]
    %v2664 = vld [vmem:[%s2606 + $0xe4] sm:$0xf]
    %v2665 = vld [vmem:[%s2606 + $0xe8] sm:$0xf]
    %v2666 = vld [vmem:[%s2606 + $0xec] sm:$0xf]
    %v2667 = vld [vmem:[%s2606 + $0xf0] sm:$0xf]
    %v2668 = vld [vmem:[%s2606 + $0xf4] sm:$0x1]
    %v2731 = vunpack.c.l.b16 %v2607
    %v2732 = vunpack.c.l.b16 %v2608
    %v2733 = vunpack.c.l.b16 %v2609
    %v2734 = vunpack.c.l.b16 %v2610
    %v2735 = vunpack.c.l.b16 %v2611
    %v2736 = vunpack.c.l.b16 %v2612
    %v2737 = vunpack.c.l.b16 %v2613
    %v2738 = vunpack.c.l.b16 %v2614
    %v2739 = vunpack.c.l.b16 %v2615
    %v2740 = vunpack.c.l.b16 %v2616
    %v2741 = vunpack.c.l.b16 %v2617
    %v2742 = vunpack.c.l.b16 %v2618
    %v2743 = vunpack.c.l.b16 %v2619
    %v2744 = vunpack.c.l.b16 %v2620
    %v2745 = vunpack.c.l.b16 %v2621
    %v2746 = vunpack.c.l.b16 %v2622
    %v2747 = vunpack.c.l.b16 %v2623
    %v2748 = vunpack.c.l.b16 %v2624
    %v2749 = vunpack.c.l.b16 %v2625
    %v2750 = vunpack.c.l.b16 %v2626
    %v2751 = vunpack.c.l.b16 %v2627
    %v2752 = vunpack.c.l.b16 %v2628
    %v2753 = vunpack.c.l.b16 %v2629
    %v2754 = vunpack.c.l.b16 %v2630
    %v2755 = vunpack.c.l.b16 %v2631
    %v2756 = vunpack.c.l.b16 %v2632
    %v2757 = vunpack.c.l.b16 %v2633
    %v2758 = vunpack.c.l.b16 %v2634
    %v2759 = vunpack.c.l.b16 %v2635
    %v2760 = vunpack.c.l.b16 %v2636
    %v2761 = vunpack.c.l.b16 %v2637
    %v2762 = vunpack.c.l.b16 %v2638
    %v2763 = vunpack.c.l.b16 %v2639
    %v2764 = vunpack.c.l.b16 %v2640
    %v2765 = vunpack.c.l.b16 %v2641
    %v2766 = vunpack.c.l.b16 %v2642
    %v2767 = vunpack.c.l.b16 %v2643
    %v2768 = vunpack.c.l.b16 %v2644
    %v2769 = vunpack.c.l.b16 %v2645
    %v2770 = vunpack.c.l.b16 %v2646
    %v2771 = vunpack.c.l.b16 %v2647
    %v2772 = vunpack.c.l.b16 %v2648
    %v2773 = vunpack.c.l.b16 %v2649
    %v2774 = vunpack.c.l.b16 %v2650
    %v2775 = vunpack.c.l.b16 %v2651
    %v2776 = vunpack.c.l.b16 %v2652
    %v2777 = vunpack.c.l.b16 %v2653
    %v2778 = vunpack.c.l.b16 %v2654
    %v2779 = vunpack.c.l.b16 %v2655
    %v2780 = vunpack.c.l.b16 %v2656
    %v2781 = vunpack.c.l.b16 %v2657
    %v2782 = vunpack.c.l.b16 %v2658
    %v2783 = vunpack.c.l.b16 %v2659
    %v2784 = vunpack.c.l.b16 %v2660
    %v2785 = vunpack.c.l.b16 %v2661
    %v2786 = vunpack.c.l.b16 %v2662
    %v2787 = vunpack.c.l.b16 %v2663
    %v2788 = vunpack.c.l.b16 %v2664
    %v2789 = vunpack.c.l.b16 %v2665
    %v2790 = vunpack.c.l.b16 %v2666
    %v2791 = vunpack.c.l.b16 %v2667
    %v2792 = vunpack.c.l.b16 %v2668
    %v2793 = vpack.c.b16 %v2732, %v2731
    %v2794 = vpack.c.b16 %v2734, %v2733
    %v2795 = vpack.c.b16 %v2736, %v2735
    %v2796 = vpack.c.b16 %v2738, %v2737
    %v2797 = vpack.c.b16 %v2740, %v2739
    %v2798 = vpack.c.b16 %v2742, %v2741
    %v2799 = vpack.c.b16 %v2744, %v2743
    %v2800 = vpack.c.b16 %v2746, %v2745
    %v2801 = vpack.c.b16 %v2748, %v2747
    %v2802 = vpack.c.b16 %v2750, %v2749
    %v2803 = vpack.c.b16 %v2752, %v2751
    %v2804 = vpack.c.b16 %v2754, %v2753
    %v2805 = vpack.c.b16 %v2756, %v2755
    %v2806 = vpack.c.b16 %v2758, %v2757
    %v2807 = vpack.c.b16 %v2760, %v2759
    %v2808 = vpack.c.b16 %v2762, %v2761
    %v2809 = vpack.c.b16 %v2764, %v2763
    %v2810 = vpack.c.b16 %v2766, %v2765
    %v2811 = vpack.c.b16 %v2768, %v2767
    %v2812 = vpack.c.b16 %v2770, %v2769
    %v2813 = vpack.c.b16 %v2772, %v2771
    %v2814 = vpack.c.b16 %v2774, %v2773
    %v2815 = vpack.c.b16 %v2776, %v2775
    %v2816 = vpack.c.b16 %v2778, %v2777
    %v2817 = vpack.c.b16 %v2780, %v2779
    %v2818 = vpack.c.b16 %v2782, %v2781
    %v2819 = vpack.c.b16 %v2784, %v2783
    %v2820 = vpack.c.b16 %v2786, %v2785
    %v2821 = vpack.c.b16 %v2788, %v2787
    %v2822 = vpack.c.b16 %v2790, %v2789
    %v2823 = vpack.c.b16 %v2792, %v2791
    %v2855 = vsel %vm606, %v2823, 0
    %2857 = vmatpush.bf16.msra.mxu0 %v2800
    %2858 = vmatpush.bf16.msra.mxu0 %v2799
    %2859 = vmatpush.bf16.msra.mxu0 %v2798
    %2860 = vmatpush.bf16.msra.mxu0 %v2797
    %2861 = vmatpush.bf16.msra.mxu0 %v2796
    %2862 = vmatpush.bf16.msra.mxu0 %v2795
    %2863 = vmatpush.bf16.msra.mxu0 %v2794
    %2864 = vmatpush.bf16.msra.mxu0 %v2793
    %2865 = vmatmul.bf16.gmra.mxu0 %v290
    %v2866 = vpop.f32.mrf.mxu0
    %v2867 = vadd.f32 0.0, %v2866
    %v2868 = vpop.f32.mrf.mxu0
    %v2869 = vadd.f32 0.0, %v2868
    %2870 = vmatmul.bf16.gmra.mxu0 %v294
    %v2871 = vpop.f32.mrf.mxu0
    %v2872 = vadd.f32 0.0, %v2871
    %v2873 = vpop.f32.mrf.mxu0
    %v2874 = vadd.f32 0.0, %v2873
    %2875 = vmatmul.bf16.gmra.mxu0 %v298
    %v2876 = vpop.f32.mrf.mxu0
    %v2877 = vadd.f32 0.0, %v2876
    %v2878 = vpop.f32.mrf.mxu0
    %v2879 = vadd.f32 0.0, %v2878
    %2880 = vmatmul.bf16.gmra.mxu0 %v302
    %v2881 = vpop.f32.mrf.mxu0
    %v2882 = vadd.f32 0.0, %v2881
    %v2883 = vpop.f32.mrf.mxu0
    %v2884 = vadd.f32 0.0, %v2883
    %2885 = vmatmul.bf16.gmra.mxu0 %v306
    %v2886 = vpop.f32.mrf.mxu0
    %v2887 = vadd.f32 0.0, %v2886
    %v2888 = vpop.f32.mrf.mxu0
    %v2889 = vadd.f32 0.0, %v2888
    %2890 = vmatmul.bf16.gmra.mxu0 %v310
    %v2891 = vpop.f32.mrf.mxu0
    %v2892 = vadd.f32 0.0, %v2891
    %v2893 = vpop.f32.mrf.mxu0
    %v2894 = vadd.f32 0.0, %v2893
    %2895 = vmatmul.bf16.gmra.mxu0 %v314
    %v2896 = vpop.f32.mrf.mxu0
    %v2897 = vadd.f32 0.0, %v2896
    %v2898 = vpop.f32.mrf.mxu0
    %v2899 = vadd.f32 0.0, %v2898
    %2900 = vmatmul.bf16.gmra.mxu0 %v318
    %v2901 = vpop.f32.mrf.mxu0
    %v2902 = vadd.f32 0.0, %v2901
    %v2903 = vpop.f32.mrf.mxu0
    %v2904 = vadd.f32 0.0, %v2903
    %2905 = vmatmul.bf16.gmra.mxu0 %v322
    %v2906 = vpop.f32.mrf.mxu0
    %v2907 = vadd.f32 0.0, %v2906
    %v2908 = vpop.f32.mrf.mxu0
    %v2909 = vadd.f32 0.0, %v2908
    %2910 = vmatmul.bf16.gmra.mxu0 %v326
    %v2911 = vpop.f32.mrf.mxu0
    %v2912 = vadd.f32 0.0, %v2911
    %v2913 = vpop.f32.mrf.mxu0
    %v2914 = vadd.f32 0.0, %v2913
    %2915 = vmatmul.bf16.gmra.mxu0 %v330
    %v2916 = vpop.f32.mrf.mxu0
    %v2917 = vadd.f32 0.0, %v2916
    %v2918 = vpop.f32.mrf.mxu0
    %v2919 = vadd.f32 0.0, %v2918
    %2920 = vmatmul.bf16.gmra.mxu0 %v334
    %v2921 = vpop.f32.mrf.mxu0
    %v2922 = vadd.f32 0.0, %v2921
    %v2923 = vpop.f32.mrf.mxu0
    %v2924 = vadd.f32 0.0, %v2923
    %2925 = vmatmul.bf16.gmra.mxu0 %v338
    %v2926 = vpop.f32.mrf.mxu0
    %v2927 = vadd.f32 0.0, %v2926
    %v2928 = vpop.f32.mrf.mxu0
    %2929 = vdwg.mxu0
    %2930 = vmatpush.bf16.msra.mxu0 %v2808
    %2931 = vmatpush.bf16.msra.mxu0 %v2807
    %2932 = vmatpush.bf16.msra.mxu0 %v2806
    %2933 = vmatpush.bf16.msra.mxu0 %v2805
    %2934 = vmatpush.bf16.msra.mxu0 %v2804
    %2935 = vmatpush.bf16.msra.mxu0 %v2803
    %2936 = vmatpush.bf16.msra.mxu0 %v2802
    %2937 = vmatpush.bf16.msra.mxu0 %v2801
    %2938 = vmatmul.bf16.gmra.mxu0 %v291
    %v2939 = vpop.f32.mrf.mxu0
    %v2940 = vadd.f32 %v2867, %v2939
    %v2941 = vpop.f32.mrf.mxu0
    %v2942 = vadd.f32 %v2869, %v2941
    %2943 = vmatmul.bf16.gmra.mxu0 %v295
    %v2944 = vpop.f32.mrf.mxu0
    %v2945 = vadd.f32 %v2872, %v2944
    %v2946 = vpop.f32.mrf.mxu0
    %v2947 = vadd.f32 %v2874, %v2946
    %2948 = vmatmul.bf16.gmra.mxu0 %v299
    %v2949 = vpop.f32.mrf.mxu0
    %v2950 = vadd.f32 %v2877, %v2949
    %v2951 = vpop.f32.mrf.mxu0
    %v2952 = vadd.f32 %v2879, %v2951
    %2953 = vmatmul.bf16.gmra.mxu0 %v303
    %v2954 = vpop.f32.mrf.mxu0
    %v2955 = vadd.f32 %v2882, %v2954
    %v2956 = vpop.f32.mrf.mxu0
    %v2957 = vadd.f32 %v2884, %v2956
    %2958 = vmatmul.bf16.gmra.mxu0 %v307
    %v2959 = vpop.f32.mrf.mxu0
    %v2960 = vadd.f32 %v2887, %v2959
    %v2961 = vpop.f32.mrf.mxu0
    %v2962 = vadd.f32 %v2889, %v2961
    %2963 = vmatmul.bf16.gmra.mxu0 %v311
    %v2964 = vpop.f32.mrf.mxu0
    %v2965 = vadd.f32 %v2892, %v2964
    %v2966 = vpop.f32.mrf.mxu0
    %v2967 = vadd.f32 %v2894, %v2966
    %2968 = vmatmul.bf16.gmra.mxu0 %v315
    %v2969 = vpop.f32.mrf.mxu0
    %v2970 = vadd.f32 %v2897, %v2969
    %v2971 = vpop.f32.mrf.mxu0
    %v2972 = vadd.f32 %v2899, %v2971
    %2973 = vmatmul.bf16.gmra.mxu0 %v319
    %v2974 = vpop.f32.mrf.mxu0
    %v2975 = vadd.f32 %v2902, %v2974
    %v2976 = vpop.f32.mrf.mxu0
    %v2977 = vadd.f32 %v2904, %v2976
    %2978 = vmatmul.bf16.gmra.mxu0 %v323
    %v2979 = vpop.f32.mrf.mxu0
    %v2980 = vadd.f32 %v2907, %v2979
    %v2981 = vpop.f32.mrf.mxu0
    %v2982 = vadd.f32 %v2909, %v2981
    %2983 = vmatmul.bf16.gmra.mxu0 %v327
    %v2984 = vpop.f32.mrf.mxu0
    %v2985 = vadd.f32 %v2912, %v2984
    %v2986 = vpop.f32.mrf.mxu0
    %v2987 = vadd.f32 %v2914, %v2986
    %2988 = vmatmul.bf16.gmra.mxu0 %v331
    %v2989 = vpop.f32.mrf.mxu0
    %v2990 = vadd.f32 %v2917, %v2989
    %v2991 = vpop.f32.mrf.mxu0
    %v2992 = vadd.f32 %v2919, %v2991
    %2993 = vmatmul.bf16.gmra.mxu0 %v335
    %v2994 = vpop.f32.mrf.mxu0
    %v2995 = vadd.f32 %v2922, %v2994
    %v2996 = vpop.f32.mrf.mxu0
    %v2997 = vadd.f32 %v2924, %v2996
    %2998 = vmatmul.bf16.gmra.mxu0 %v339
    %v2999 = vpop.f32.mrf.mxu0
    %v3000 = vadd.f32 %v2927, %v2999
    %v3001 = vpop.f32.mrf.mxu0
    %3002 = vdwg.mxu0
    %3003 = vmatpush.bf16.msra.mxu0 %v2816
    %3004 = vmatpush.bf16.msra.mxu0 %v2815
    %3005 = vmatpush.bf16.msra.mxu0 %v2814
    %3006 = vmatpush.bf16.msra.mxu0 %v2813
    %3007 = vmatpush.bf16.msra.mxu0 %v2812
    %3008 = vmatpush.bf16.msra.mxu0 %v2811
    %3009 = vmatpush.bf16.msra.mxu0 %v2810
    %3010 = vmatpush.bf16.msra.mxu0 %v2809
    %3011 = vmatmul.bf16.gmra.mxu0 %v292
    %v3012 = vpop.f32.mrf.mxu0
    %v3013 = vadd.f32 %v2940, %v3012
    %v3014 = vpop.f32.mrf.mxu0
    %v3015 = vadd.f32 %v2942, %v3014
    %3016 = vmatmul.bf16.gmra.mxu0 %v296
    %v3017 = vpop.f32.mrf.mxu0
    %v3018 = vadd.f32 %v2945, %v3017
    %v3019 = vpop.f32.mrf.mxu0
    %v3020 = vadd.f32 %v2947, %v3019
    %3021 = vmatmul.bf16.gmra.mxu0 %v300
    %v3022 = vpop.f32.mrf.mxu0
    %v3023 = vadd.f32 %v2950, %v3022
    %v3024 = vpop.f32.mrf.mxu0
    %v3025 = vadd.f32 %v2952, %v3024
    %3026 = vmatmul.bf16.gmra.mxu0 %v304
    %v3027 = vpop.f32.mrf.mxu0
    %v3028 = vadd.f32 %v2955, %v3027
    %v3029 = vpop.f32.mrf.mxu0
    %v3030 = vadd.f32 %v2957, %v3029
    %3031 = vmatmul.bf16.gmra.mxu0 %v308
    %v3032 = vpop.f32.mrf.mxu0
    %v3033 = vadd.f32 %v2960, %v3032
    %v3034 = vpop.f32.mrf.mxu0
    %v3035 = vadd.f32 %v2962, %v3034
    %3036 = vmatmul.bf16.gmra.mxu0 %v312
    %v3037 = vpop.f32.mrf.mxu0
    %v3038 = vadd.f32 %v2965, %v3037
    %v3039 = vpop.f32.mrf.mxu0
    %v3040 = vadd.f32 %v2967, %v3039
    %3041 = vmatmul.bf16.gmra.mxu0 %v316
    %v3042 = vpop.f32.mrf.mxu0
    %v3043 = vadd.f32 %v2970, %v3042
    %v3044 = vpop.f32.mrf.mxu0
    %v3045 = vadd.f32 %v2972, %v3044
    %3046 = vmatmul.bf16.gmra.mxu0 %v320
    %v3047 = vpop.f32.mrf.mxu0
    %v3048 = vadd.f32 %v2975, %v3047
    %v3049 = vpop.f32.mrf.mxu0
    %v3050 = vadd.f32 %v2977, %v3049
    %3051 = vmatmul.bf16.gmra.mxu0 %v324
    %v3052 = vpop.f32.mrf.mxu0
    %v3053 = vadd.f32 %v2980, %v3052
    %v3054 = vpop.f32.mrf.mxu0
    %v3055 = vadd.f32 %v2982, %v3054
    %3056 = vmatmul.bf16.gmra.mxu0 %v328
    %v3057 = vpop.f32.mrf.mxu0
    %v3058 = vadd.f32 %v2985, %v3057
    %v3059 = vpop.f32.mrf.mxu0
    %v3060 = vadd.f32 %v2987, %v3059
    %3061 = vmatmul.bf16.gmra.mxu0 %v332
    %v3062 = vpop.f32.mrf.mxu0
    %v3063 = vadd.f32 %v2990, %v3062
    %v3064 = vpop.f32.mrf.mxu0
    %v3065 = vadd.f32 %v2992, %v3064
    %3066 = vmatmul.bf16.gmra.mxu0 %v336
    %v3067 = vpop.f32.mrf.mxu0
    %v3068 = vadd.f32 %v2995, %v3067
    %v3069 = vpop.f32.mrf.mxu0
    %v3070 = vadd.f32 %v2997, %v3069
    %3071 = vmatmul.bf16.gmra.mxu0 %v340
    %v3072 = vpop.f32.mrf.mxu0
    %v3073 = vadd.f32 %v3000, %v3072
    %v3074 = vpop.f32.mrf.mxu0
    %3075 = vdwg.mxu0
    %3076 = vmatpush.bf16.msra.mxu0 0
    %3077 = vmatpush.bf16.msra.mxu0 %v2855
    %3078 = vmatpush.bf16.msra.mxu0 %v2822
    %3079 = vmatpush.bf16.msra.mxu0 %v2821
    %3080 = vmatpush.bf16.msra.mxu0 %v2820
    %3081 = vmatpush.bf16.msra.mxu0 %v2819
    %3082 = vmatpush.bf16.msra.mxu0 %v2818
    %3083 = vmatpush.bf16.msra.mxu0 %v2817
    %3084 = vmatmul.bf16.gmra.mxu0 %v568
    %v3085 = vpop.f32.mrf.mxu0
    %v3086 = vadd.f32 %v3013, %v3085
    %v3087 = vpop.f32.mrf.mxu0
    %v3088 = vadd.f32 %v3015, %v3087
    %3089 = vmatmul.bf16.gmra.mxu0 %v571
    %v3090 = vpop.f32.mrf.mxu0
    %v3091 = vadd.f32 %v3018, %v3090
    %v3092 = vpop.f32.mrf.mxu0
    %v3093 = vadd.f32 %v3020, %v3092
    %3094 = vmatmul.bf16.gmra.mxu0 %v574
    %v3095 = vpop.f32.mrf.mxu0
    %v3096 = vadd.f32 %v3023, %v3095
    %v3097 = vpop.f32.mrf.mxu0
    %v3098 = vadd.f32 %v3025, %v3097
    %3099 = vmatmul.bf16.gmra.mxu0 %v577
    %v3100 = vpop.f32.mrf.mxu0
    %v3101 = vadd.f32 %v3028, %v3100
    %v3102 = vpop.f32.mrf.mxu0
    %v3103 = vadd.f32 %v3030, %v3102
    %3104 = vmatmul.bf16.gmra.mxu0 %v580
    %v3105 = vpop.f32.mrf.mxu0
    %v3106 = vadd.f32 %v3033, %v3105
    %v3107 = vpop.f32.mrf.mxu0
    %v3108 = vadd.f32 %v3035, %v3107
    %3109 = vmatmul.bf16.gmra.mxu0 %v583
    %v3110 = vpop.f32.mrf.mxu0
    %v3111 = vadd.f32 %v3038, %v3110
    %v3112 = vpop.f32.mrf.mxu0
    %v3113 = vadd.f32 %v3040, %v3112
    %3114 = vmatmul.bf16.gmra.mxu0 %v586
    %v3115 = vpop.f32.mrf.mxu0
    %v3116 = vadd.f32 %v3043, %v3115
    %v3117 = vpop.f32.mrf.mxu0
    %v3118 = vadd.f32 %v3045, %v3117
    %3119 = vmatmul.bf16.gmra.mxu0 %v589
    %v3120 = vpop.f32.mrf.mxu0
    %v3121 = vadd.f32 %v3048, %v3120
    %v3122 = vpop.f32.mrf.mxu0
    %v3123 = vadd.f32 %v3050, %v3122
    %3124 = vmatmul.bf16.gmra.mxu0 %v592
    %v3125 = vpop.f32.mrf.mxu0
    %v3126 = vadd.f32 %v3053, %v3125
    %v3127 = vpop.f32.mrf.mxu0
    %v3128 = vadd.f32 %v3055, %v3127
    %3129 = vmatmul.bf16.gmra.mxu0 %v595
    %v3130 = vpop.f32.mrf.mxu0
    %v3131 = vadd.f32 %v3058, %v3130
    %v3132 = vpop.f32.mrf.mxu0
    %v3133 = vadd.f32 %v3060, %v3132
    %3134 = vmatmul.bf16.gmra.mxu0 %v598
    %v3135 = vpop.f32.mrf.mxu0
    %v3136 = vadd.f32 %v3063, %v3135
    %v3137 = vpop.f32.mrf.mxu0
    %v3138 = vadd.f32 %v3065, %v3137
    %3139 = vmatmul.bf16.gmra.mxu0 %v601
    %v3140 = vpop.f32.mrf.mxu0
    %v3141 = vadd.f32 %v3068, %v3140
    %v3142 = vpop.f32.mrf.mxu0
    %v3143 = vadd.f32 %v3070, %v3142
    %3144 = vmatmul.bf16.gmra.mxu0 %v604
    %v3145 = vpop.f32.mrf.mxu0
    %v3146 = vadd.f32 %v3073, %v3145
    %v3147 = vpop.f32.mrf.mxu0
    %3148 = vdwg.mxu0
    %v3149 = vmax.f32 %v2581, %v3086
    %v3150 = vmax.f32 %v2582, %v3088
    %v3151 = vmax.f32 %v2583, %v3091
    %v3152 = vmax.f32 %v2584, %v3093
    %v3153 = vmax.f32 %v2585, %v3096
    %v3154 = vmax.f32 %v2586, %v3098
    %v3155 = vmax.f32 %v2587, %v3101
    %v3156 = vmax.f32 %v2588, %v3103
    %v3157 = vmax.f32 %v2589, %v3106
    %v3158 = vmax.f32 %v2590, %v3108
    %v3159 = vmax.f32 %v2591, %v3111
    %v3160 = vmax.f32 %v2592, %v3113
    %v3161 = vmax.f32 %v2593, %v3116
    %v3162 = vmax.f32 %v2594, %v3118
    %v3163 = vmax.f32 %v2595, %v3121
    %v3164 = vmax.f32 %v2596, %v3123
    %v3165 = vmax.f32 %v2597, %v3126
    %v3166 = vmax.f32 %v2598, %v3128
    %v3167 = vmax.f32 %v2599, %v3131
    %v3168 = vmax.f32 %v2600, %v3133
    %v3169 = vmax.f32 %v2601, %v3136
    %v3170 = vmax.f32 %v2602, %v3138
    %v3171 = vmax.f32 %v2603, %v3141
    %v3172 = vmax.f32 %v2604, %v3143
    %v3173 = vmax.f32 %v2605, %v3146
    %s3174 = scalar_lea.vmem %s1, 1240
    %v3175 = vld [vmem:[%s3174] sm:$0xf]
    %v3176 = vld [vmem:[%s3174 + $0x4] sm:$0xf]
    %v3177 = vld [vmem:[%s3174 + $0x8] sm:$0xf]
    %v3178 = vld [vmem:[%s3174 + $0xc] sm:$0xf]
    %v3179 = vld [vmem:[%s3174 + $0x10] sm:$0xf]
    %v3180 = vld [vmem:[%s3174 + $0x14] sm:$0xf]
    %v3181 = vld [vmem:[%s3174 + $0x18] sm:$0xf]
    %v3182 = vld [vmem:[%s3174 + $0x1c] sm:$0xf]
    %v3183 = vld [vmem:[%s3174 + $0x20] sm:$0xf]
    %v3184 = vld [vmem:[%s3174 + $0x24] sm:$0xf]
    %v3185 = vld [vmem:[%s3174 + $0x28] sm:$0xf]
    %v3186 = vld [vmem:[%s3174 + $0x2c] sm:$0xf]
    %v3187 = vld [vmem:[%s3174 + $0x30] sm:$0xf]
    %v3188 = vld [vmem:[%s3174 + $0x34] sm:$0xf]
    %v3189 = vld [vmem:[%s3174 + $0x38] sm:$0xf]
    %v3190 = vld [vmem:[%s3174 + $0x3c] sm:$0xf]
    %v3191 = vld [vmem:[%s3174 + $0x40] sm:$0xf]
    %v3192 = vld [vmem:[%s3174 + $0x44] sm:$0xf]
    %v3193 = vld [vmem:[%s3174 + $0x48] sm:$0xf]
    %v3194 = vld [vmem:[%s3174 + $0x4c] sm:$0xf]
    %v3195 = vld [vmem:[%s3174 + $0x50] sm:$0xf]
    %v3196 = vld [vmem:[%s3174 + $0x54] sm:$0xf]
    %v3197 = vld [vmem:[%s3174 + $0x58] sm:$0xf]
    %v3198 = vld [vmem:[%s3174 + $0x5c] sm:$0xf]
    %v3199 = vld [vmem:[%s3174 + $0x60] sm:$0xf]
    %v3200 = vld [vmem:[%s3174 + $0x64] sm:$0xf]
    %v3201 = vld [vmem:[%s3174 + $0x68] sm:$0xf]
    %v3202 = vld [vmem:[%s3174 + $0x6c] sm:$0xf]
    %v3203 = vld [vmem:[%s3174 + $0x70] sm:$0xf]
    %v3204 = vld [vmem:[%s3174 + $0x74] sm:$0xf]
    %v3205 = vld [vmem:[%s3174 + $0x78] sm:$0xf]
    %v3206 = vld [vmem:[%s3174 + $0x7c] sm:$0xf]
    %v3207 = vld [vmem:[%s3174 + $0x80] sm:$0xf]
    %v3208 = vld [vmem:[%s3174 + $0x84] sm:$0xf]
    %v3209 = vld [vmem:[%s3174 + $0x88] sm:$0xf]
    %v3210 = vld [vmem:[%s3174 + $0x8c] sm:$0xf]
    %v3211 = vld [vmem:[%s3174 + $0x90] sm:$0xf]
    %v3212 = vld [vmem:[%s3174 + $0x94] sm:$0xf]
    %v3213 = vld [vmem:[%s3174 + $0x98] sm:$0xf]
    %v3214 = vld [vmem:[%s3174 + $0x9c] sm:$0xf]
    %v3215 = vld [vmem:[%s3174 + $0xa0] sm:$0xf]
    %v3216 = vld [vmem:[%s3174 + $0xa4] sm:$0xf]
    %v3217 = vld [vmem:[%s3174 + $0xa8] sm:$0xf]
    %v3218 = vld [vmem:[%s3174 + $0xac] sm:$0xf]
    %v3219 = vld [vmem:[%s3174 + $0xb0] sm:$0xf]
    %v3220 = vld [vmem:[%s3174 + $0xb4] sm:$0xf]
    %v3221 = vld [vmem:[%s3174 + $0xb8] sm:$0xf]
    %v3222 = vld [vmem:[%s3174 + $0xbc] sm:$0xf]
    %v3223 = vld [vmem:[%s3174 + $0xc0] sm:$0xf]
    %v3224 = vld [vmem:[%s3174 + $0xc4] sm:$0xf]
    %v3225 = vld [vmem:[%s3174 + $0xc8] sm:$0xf]
    %v3226 = vld [vmem:[%s3174 + $0xcc] sm:$0xf]
    %v3227 = vld [vmem:[%s3174 + $0xd0] sm:$0xf]
    %v3228 = vld [vmem:[%s3174 + $0xd4] sm:$0xf]
    %v3229 = vld [vmem:[%s3174 + $0xd8] sm:$0xf]
    %v3230 = vld [vmem:[%s3174 + $0xdc] sm:$0xf]
    %v3231 = vld [vmem:[%s3174 + $0xe0] sm:$0xf]
    %v3232 = vld [vmem:[%s3174 + $0xe4] sm:$0xf]
    %v3233 = vld [vmem:[%s3174 + $0xe8] sm:$0xf]
    %v3234 = vld [vmem:[%s3174 + $0xec] sm:$0xf]
    %v3235 = vld [vmem:[%s3174 + $0xf0] sm:$0xf]
    %v3236 = vld [vmem:[%s3174 + $0xf4] sm:$0x1]
    %v3299 = vunpack.c.l.b16 %v3175
    %v3300 = vunpack.c.l.b16 %v3176
    %v3301 = vunpack.c.l.b16 %v3177
    %v3302 = vunpack.c.l.b16 %v3178
    %v3303 = vunpack.c.l.b16 %v3179
    %v3304 = vunpack.c.l.b16 %v3180
    %v3305 = vunpack.c.l.b16 %v3181
    %v3306 = vunpack.c.l.b16 %v3182
    %v3307 = vunpack.c.l.b16 %v3183
    %v3308 = vunpack.c.l.b16 %v3184
    %v3309 = vunpack.c.l.b16 %v3185
    %v3310 = vunpack.c.l.b16 %v3186
    %v3311 = vunpack.c.l.b16 %v3187
    %v3312 = vunpack.c.l.b16 %v3188
    %v3313 = vunpack.c.l.b16 %v3189
    %v3314 = vunpack.c.l.b16 %v3190
    %v3315 = vunpack.c.l.b16 %v3191
    %v3316 = vunpack.c.l.b16 %v3192
    %v3317 = vunpack.c.l.b16 %v3193
    %v3318 = vunpack.c.l.b16 %v3194
    %v3319 = vunpack.c.l.b16 %v3195
    %v3320 = vunpack.c.l.b16 %v3196
    %v3321 = vunpack.c.l.b16 %v3197
    %v3322 = vunpack.c.l.b16 %v3198
    %v3323 = vunpack.c.l.b16 %v3199
    %v3324 = vunpack.c.l.b16 %v3200
    %v3325 = vunpack.c.l.b16 %v3201
    %v3326 = vunpack.c.l.b16 %v3202
    %v3327 = vunpack.c.l.b16 %v3203
    %v3328 = vunpack.c.l.b16 %v3204
    %v3329 = vunpack.c.l.b16 %v3205
    %v3330 = vunpack.c.l.b16 %v3206
    %v3331 = vunpack.c.l.b16 %v3207
    %v3332 = vunpack.c.l.b16 %v3208
    %v3333 = vunpack.c.l.b16 %v3209
    %v3334 = vunpack.c.l.b16 %v3210
    %v3335 = vunpack.c.l.b16 %v3211
    %v3336 = vunpack.c.l.b16 %v3212
    %v3337 = vunpack.c.l.b16 %v3213
    %v3338 = vunpack.c.l.b16 %v3214
    %v3339 = vunpack.c.l.b16 %v3215
    %v3340 = vunpack.c.l.b16 %v3216
    %v3341 = vunpack.c.l.b16 %v3217
    %v3342 = vunpack.c.l.b16 %v3218
    %v3343 = vunpack.c.l.b16 %v3219
    %v3344 = vunpack.c.l.b16 %v3220
    %v3345 = vunpack.c.l.b16 %v3221
    %v3346 = vunpack.c.l.b16 %v3222
    %v3347 = vunpack.c.l.b16 %v3223
    %v3348 = vunpack.c.l.b16 %v3224
    %v3349 = vunpack.c.l.b16 %v3225
    %v3350 = vunpack.c.l.b16 %v3226
    %v3351 = vunpack.c.l.b16 %v3227
    %v3352 = vunpack.c.l.b16 %v3228
    %v3353 = vunpack.c.l.b16 %v3229
    %v3354 = vunpack.c.l.b16 %v3230
    %v3355 = vunpack.c.l.b16 %v3231
    %v3356 = vunpack.c.l.b16 %v3232
    %v3357 = vunpack.c.l.b16 %v3233
    %v3358 = vunpack.c.l.b16 %v3234
    %v3359 = vunpack.c.l.b16 %v3235
    %v3360 = vunpack.c.l.b16 %v3236
    %v3361 = vpack.c.b16 %v3300, %v3299
    %v3362 = vpack.c.b16 %v3302, %v3301
    %v3363 = vpack.c.b16 %v3304, %v3303
    %v3364 = vpack.c.b16 %v3306, %v3305
    %v3365 = vpack.c.b16 %v3308, %v3307
    %v3366 = vpack.c.b16 %v3310, %v3309
    %v3367 = vpack.c.b16 %v3312, %v3311
    %v3368 = vpack.c.b16 %v3314, %v3313
    %v3369 = vpack.c.b16 %v3316, %v3315
    %v3370 = vpack.c.b16 %v3318, %v3317
    %v3371 = vpack.c.b16 %v3320, %v3319
    %v3372 = vpack.c.b16 %v3322, %v3321
    %v3373 = vpack.c.b16 %v3324, %v3323
    %v3374 = vpack.c.b16 %v3326, %v3325
    %v3375 = vpack.c.b16 %v3328, %v3327
    %v3376 = vpack.c.b16 %v3330, %v3329
    %v3377 = vpack.c.b16 %v3332, %v3331
    %v3378 = vpack.c.b16 %v3334, %v3333
    %v3379 = vpack.c.b16 %v3336, %v3335
    %v3380 = vpack.c.b16 %v3338, %v3337
    %v3381 = vpack.c.b16 %v3340, %v3339
    %v3382 = vpack.c.b16 %v3342, %v3341
    %v3383 = vpack.c.b16 %v3344, %v3343
    %v3384 = vpack.c.b16 %v3346, %v3345
    %v3385 = vpack.c.b16 %v3348, %v3347
    %v3386 = vpack.c.b16 %v3350, %v3349
    %v3387 = vpack.c.b16 %v3352, %v3351
    %v3388 = vpack.c.b16 %v3354, %v3353
    %v3389 = vpack.c.b16 %v3356, %v3355
    %v3390 = vpack.c.b16 %v3358, %v3357
    %v3391 = vpack.c.b16 %v3360, %v3359
    %v3423 = vsel %vm606, %v3391, 0
    %3425 = vmatpush.bf16.msra.mxu0 %v3368
    %3426 = vmatpush.bf16.msra.mxu0 %v3367
    %3427 = vmatpush.bf16.msra.mxu0 %v3366
    %3428 = vmatpush.bf16.msra.mxu0 %v3365
    %3429 = vmatpush.bf16.msra.mxu0 %v3364
    %3430 = vmatpush.bf16.msra.mxu0 %v3363
    %3431 = vmatpush.bf16.msra.mxu0 %v3362
    %3432 = vmatpush.bf16.msra.mxu0 %v3361
    %3433 = vmatmul.bf16.gmra.mxu0 %v290
    %v3434 = vpop.f32.mrf.mxu0
    %v3435 = vadd.f32 0.0, %v3434
    %v3436 = vpop.f32.mrf.mxu0
    %v3437 = vadd.f32 0.0, %v3436
    %3438 = vmatmul.bf16.gmra.mxu0 %v294
    %v3439 = vpop.f32.mrf.mxu0
    %v3440 = vadd.f32 0.0, %v3439
    %v3441 = vpop.f32.mrf.mxu0
    %v3442 = vadd.f32 0.0, %v3441
    %3443 = vmatmul.bf16.gmra.mxu0 %v298
    %v3444 = vpop.f32.mrf.mxu0
    %v3445 = vadd.f32 0.0, %v3444
    %v3446 = vpop.f32.mrf.mxu0
    %v3447 = vadd.f32 0.0, %v3446
    %3448 = vmatmul.bf16.gmra.mxu0 %v302
    %v3449 = vpop.f32.mrf.mxu0
    %v3450 = vadd.f32 0.0, %v3449
    %v3451 = vpop.f32.mrf.mxu0
    %v3452 = vadd.f32 0.0, %v3451
    %3453 = vmatmul.bf16.gmra.mxu0 %v306
    %v3454 = vpop.f32.mrf.mxu0
    %v3455 = vadd.f32 0.0, %v3454
    %v3456 = vpop.f32.mrf.mxu0
    %v3457 = vadd.f32 0.0, %v3456
    %3458 = vmatmul.bf16.gmra.mxu0 %v310
    %v3459 = vpop.f32.mrf.mxu0
    %v3460 = vadd.f32 0.0, %v3459
    %v3461 = vpop.f32.mrf.mxu0
    %v3462 = vadd.f32 0.0, %v3461
    %3463 = vmatmul.bf16.gmra.mxu0 %v314
    %v3464 = vpop.f32.mrf.mxu0
    %v3465 = vadd.f32 0.0, %v3464
    %v3466 = vpop.f32.mrf.mxu0
    %v3467 = vadd.f32 0.0, %v3466
    %3468 = vmatmul.bf16.gmra.mxu0 %v318
    %v3469 = vpop.f32.mrf.mxu0
    %v3470 = vadd.f32 0.0, %v3469
    %v3471 = vpop.f32.mrf.mxu0
    %v3472 = vadd.f32 0.0, %v3471
    %3473 = vmatmul.bf16.gmra.mxu0 %v322
    %v3474 = vpop.f32.mrf.mxu0
    %v3475 = vadd.f32 0.0, %v3474
    %v3476 = vpop.f32.mrf.mxu0
    %v3477 = vadd.f32 0.0, %v3476
    %3478 = vmatmul.bf16.gmra.mxu0 %v326
    %v3479 = vpop.f32.mrf.mxu0
    %v3480 = vadd.f32 0.0, %v3479
    %v3481 = vpop.f32.mrf.mxu0
    %v3482 = vadd.f32 0.0, %v3481
    %3483 = vmatmul.bf16.gmra.mxu0 %v330
    %v3484 = vpop.f32.mrf.mxu0
    %v3485 = vadd.f32 0.0, %v3484
    %v3486 = vpop.f32.mrf.mxu0
    %v3487 = vadd.f32 0.0, %v3486
    %3488 = vmatmul.bf16.gmra.mxu0 %v334
    %v3489 = vpop.f32.mrf.mxu0
    %v3490 = vadd.f32 0.0, %v3489
    %v3491 = vpop.f32.mrf.mxu0
    %v3492 = vadd.f32 0.0, %v3491
    %3493 = vmatmul.bf16.gmra.mxu0 %v338
    %v3494 = vpop.f32.mrf.mxu0
    %v3495 = vadd.f32 0.0, %v3494
    %v3496 = vpop.f32.mrf.mxu0
    %3497 = vdwg.mxu0
    %3498 = vmatpush.bf16.msra.mxu0 %v3376
    %3499 = vmatpush.bf16.msra.mxu0 %v3375
    %3500 = vmatpush.bf16.msra.mxu0 %v3374
    %3501 = vmatpush.bf16.msra.mxu0 %v3373
    %3502 = vmatpush.bf16.msra.mxu0 %v3372
    %3503 = vmatpush.bf16.msra.mxu0 %v3371
    %3504 = vmatpush.bf16.msra.mxu0 %v3370
    %3505 = vmatpush.bf16.msra.mxu0 %v3369
    %3506 = vmatmul.bf16.gmra.mxu0 %v291
    %v3507 = vpop.f32.mrf.mxu0
    %v3508 = vadd.f32 %v3435, %v3507
    %v3509 = vpop.f32.mrf.mxu0
    %v3510 = vadd.f32 %v3437, %v3509
    %3511 = vmatmul.bf16.gmra.mxu0 %v295
    %v3512 = vpop.f32.mrf.mxu0
    %v3513 = vadd.f32 %v3440, %v3512
    %v3514 = vpop.f32.mrf.mxu0
    %v3515 = vadd.f32 %v3442, %v3514
    %3516 = vmatmul.bf16.gmra.mxu0 %v299
    %v3517 = vpop.f32.mrf.mxu0
    %v3518 = vadd.f32 %v3445, %v3517
    %v3519 = vpop.f32.mrf.mxu0
    %v3520 = vadd.f32 %v3447, %v3519
    %3521 = vmatmul.bf16.gmra.mxu0 %v303
    %v3522 = vpop.f32.mrf.mxu0
    %v3523 = vadd.f32 %v3450, %v3522
    %v3524 = vpop.f32.mrf.mxu0
    %v3525 = vadd.f32 %v3452, %v3524
    %3526 = vmatmul.bf16.gmra.mxu0 %v307
    %v3527 = vpop.f32.mrf.mxu0
    %v3528 = vadd.f32 %v3455, %v3527
    %v3529 = vpop.f32.mrf.mxu0
    %v3530 = vadd.f32 %v3457, %v3529
    %3531 = vmatmul.bf16.gmra.mxu0 %v311
    %v3532 = vpop.f32.mrf.mxu0
    %v3533 = vadd.f32 %v3460, %v3532
    %v3534 = vpop.f32.mrf.mxu0
    %v3535 = vadd.f32 %v3462, %v3534
    %3536 = vmatmul.bf16.gmra.mxu0 %v315
    %v3537 = vpop.f32.mrf.mxu0
    %v3538 = vadd.f32 %v3465, %v3537
    %v3539 = vpop.f32.mrf.mxu0
    %v3540 = vadd.f32 %v3467, %v3539
    %3541 = vmatmul.bf16.gmra.mxu0 %v319
    %v3542 = vpop.f32.mrf.mxu0
    %v3543 = vadd.f32 %v3470, %v3542
    %v3544 = vpop.f32.mrf.mxu0
    %v3545 = vadd.f32 %v3472, %v3544
    %3546 = vmatmul.bf16.gmra.mxu0 %v323
    %v3547 = vpop.f32.mrf.mxu0
    %v3548 = vadd.f32 %v3475, %v3547
    %v3549 = vpop.f32.mrf.mxu0
    %v3550 = vadd.f32 %v3477, %v3549
    %3551 = vmatmul.bf16.gmra.mxu0 %v327
    %v3552 = vpop.f32.mrf.mxu0
    %v3553 = vadd.f32 %v3480, %v3552
    %v3554 = vpop.f32.mrf.mxu0
    %v3555 = vadd.f32 %v3482, %v3554
    %3556 = vmatmul.bf16.gmra.mxu0 %v331
    %v3557 = vpop.f32.mrf.mxu0
    %v3558 = vadd.f32 %v3485, %v3557
    %v3559 = vpop.f32.mrf.mxu0
    %v3560 = vadd.f32 %v3487, %v3559
    %3561 = vmatmul.bf16.gmra.mxu0 %v335
    %v3562 = vpop.f32.mrf.mxu0
    %v3563 = vadd.f32 %v3490, %v3562
    %v3564 = vpop.f32.mrf.mxu0
    %v3565 = vadd.f32 %v3492, %v3564
    %3566 = vmatmul.bf16.gmra.mxu0 %v339
    %v3567 = vpop.f32.mrf.mxu0
    %v3568 = vadd.f32 %v3495, %v3567
    %v3569 = vpop.f32.mrf.mxu0
    %3570 = vdwg.mxu0
    %3571 = vmatpush.bf16.msra.mxu0 %v3384
    %3572 = vmatpush.bf16.msra.mxu0 %v3383
    %3573 = vmatpush.bf16.msra.mxu0 %v3382
    %3574 = vmatpush.bf16.msra.mxu0 %v3381
    %3575 = vmatpush.bf16.msra.mxu0 %v3380
    %3576 = vmatpush.bf16.msra.mxu0 %v3379
    %3577 = vmatpush.bf16.msra.mxu0 %v3378
    %3578 = vmatpush.bf16.msra.mxu0 %v3377
    %3579 = vmatmul.bf16.gmra.mxu0 %v292
    %v3580 = vpop.f32.mrf.mxu0
    %v3581 = vadd.f32 %v3508, %v3580
    %v3582 = vpop.f32.mrf.mxu0
    %v3583 = vadd.f32 %v3510, %v3582
    %3584 = vmatmul.bf16.gmra.mxu0 %v296
    %v3585 = vpop.f32.mrf.mxu0
    %v3586 = vadd.f32 %v3513, %v3585
    %v3587 = vpop.f32.mrf.mxu0
    %v3588 = vadd.f32 %v3515, %v3587
    %3589 = vmatmul.bf16.gmra.mxu0 %v300
    %v3590 = vpop.f32.mrf.mxu0
    %v3591 = vadd.f32 %v3518, %v3590
    %v3592 = vpop.f32.mrf.mxu0
    %v3593 = vadd.f32 %v3520, %v3592
    %3594 = vmatmul.bf16.gmra.mxu0 %v304
    %v3595 = vpop.f32.mrf.mxu0
    %v3596 = vadd.f32 %v3523, %v3595
    %v3597 = vpop.f32.mrf.mxu0
    %v3598 = vadd.f32 %v3525, %v3597
    %3599 = vmatmul.bf16.gmra.mxu0 %v308
    %v3600 = vpop.f32.mrf.mxu0
    %v3601 = vadd.f32 %v3528, %v3600
    %v3602 = vpop.f32.mrf.mxu0
    %v3603 = vadd.f32 %v3530, %v3602
    %3604 = vmatmul.bf16.gmra.mxu0 %v312
    %v3605 = vpop.f32.mrf.mxu0
    %v3606 = vadd.f32 %v3533, %v3605
    %v3607 = vpop.f32.mrf.mxu0
    %v3608 = vadd.f32 %v3535, %v3607
    %3609 = vmatmul.bf16.gmra.mxu0 %v316
    %v3610 = vpop.f32.mrf.mxu0
    %v3611 = vadd.f32 %v3538, %v3610
    %v3612 = vpop.f32.mrf.mxu0
    %v3613 = vadd.f32 %v3540, %v3612
    %3614 = vmatmul.bf16.gmra.mxu0 %v320
    %v3615 = vpop.f32.mrf.mxu0
    %v3616 = vadd.f32 %v3543, %v3615
    %v3617 = vpop.f32.mrf.mxu0
    %v3618 = vadd.f32 %v3545, %v3617
    %3619 = vmatmul.bf16.gmra.mxu0 %v324
    %v3620 = vpop.f32.mrf.mxu0
    %v3621 = vadd.f32 %v3548, %v3620
    %v3622 = vpop.f32.mrf.mxu0
    %v3623 = vadd.f32 %v3550, %v3622
    %3624 = vmatmul.bf16.gmra.mxu0 %v328
    %v3625 = vpop.f32.mrf.mxu0
    %v3626 = vadd.f32 %v3553, %v3625
    %v3627 = vpop.f32.mrf.mxu0
    %v3628 = vadd.f32 %v3555, %v3627
    %3629 = vmatmul.bf16.gmra.mxu0 %v332
    %v3630 = vpop.f32.mrf.mxu0
    %v3631 = vadd.f32 %v3558, %v3630
    %v3632 = vpop.f32.mrf.mxu0
    %v3633 = vadd.f32 %v3560, %v3632
    %3634 = vmatmul.bf16.gmra.mxu0 %v336
    %v3635 = vpop.f32.mrf.mxu0
    %v3636 = vadd.f32 %v3563, %v3635
    %v3637 = vpop.f32.mrf.mxu0
    %v3638 = vadd.f32 %v3565, %v3637
    %3639 = vmatmul.bf16.gmra.mxu0 %v340
    %v3640 = vpop.f32.mrf.mxu0
    %v3641 = vadd.f32 %v3568, %v3640
    %v3642 = vpop.f32.mrf.mxu0
    %3643 = vdwg.mxu0
    %3644 = vmatpush.bf16.msra.mxu0 0
    %3645 = vmatpush.bf16.msra.mxu0 %v3423
    %3646 = vmatpush.bf16.msra.mxu0 %v3390
    %3647 = vmatpush.bf16.msra.mxu0 %v3389
    %3648 = vmatpush.bf16.msra.mxu0 %v3388
    %3649 = vmatpush.bf16.msra.mxu0 %v3387
    %3650 = vmatpush.bf16.msra.mxu0 %v3386
    %3651 = vmatpush.bf16.msra.mxu0 %v3385
    %3652 = vmatmul.bf16.gmra.mxu0 %v568
    %v3653 = vpop.f32.mrf.mxu0
    %v3654 = vadd.f32 %v3581, %v3653
    %v3655 = vpop.f32.mrf.mxu0
    %v3656 = vadd.f32 %v3583, %v3655
    %3657 = vmatmul.bf16.gmra.mxu0 %v571
    %v3658 = vpop.f32.mrf.mxu0
    %v3659 = vadd.f32 %v3586, %v3658
    %v3660 = vpop.f32.mrf.mxu0
    %v3661 = vadd.f32 %v3588, %v3660
    %3662 = vmatmul.bf16.gmra.mxu0 %v574
    %v3663 = vpop.f32.mrf.mxu0
    %v3664 = vadd.f32 %v3591, %v3663
    %v3665 = vpop.f32.mrf.mxu0
    %v3666 = vadd.f32 %v3593, %v3665
    %3667 = vmatmul.bf16.gmra.mxu0 %v577
    %v3668 = vpop.f32.mrf.mxu0
    %v3669 = vadd.f32 %v3596, %v3668
    %v3670 = vpop.f32.mrf.mxu0
    %v3671 = vadd.f32 %v3598, %v3670
    %3672 = vmatmul.bf16.gmra.mxu0 %v580
    %v3673 = vpop.f32.mrf.mxu0
    %v3674 = vadd.f32 %v3601, %v3673
    %v3675 = vpop.f32.mrf.mxu0
    %v3676 = vadd.f32 %v3603, %v3675
    %3677 = vmatmul.bf16.gmra.mxu0 %v583
    %v3678 = vpop.f32.mrf.mxu0
    %v3679 = vadd.f32 %v3606, %v3678
    %v3680 = vpop.f32.mrf.mxu0
    %v3681 = vadd.f32 %v3608, %v3680
    %3682 = vmatmul.bf16.gmra.mxu0 %v586
    %v3683 = vpop.f32.mrf.mxu0
    %v3684 = vadd.f32 %v3611, %v3683
    %v3685 = vpop.f32.mrf.mxu0
    %v3686 = vadd.f32 %v3613, %v3685
    %3687 = vmatmul.bf16.gmra.mxu0 %v589
    %v3688 = vpop.f32.mrf.mxu0
    %v3689 = vadd.f32 %v3616, %v3688
    %v3690 = vpop.f32.mrf.mxu0
    %v3691 = vadd.f32 %v3618, %v3690
    %3692 = vmatmul.bf16.gmra.mxu0 %v592
    %v3693 = vpop.f32.mrf.mxu0
    %v3694 = vadd.f32 %v3621, %v3693
    %v3695 = vpop.f32.mrf.mxu0
    %v3696 = vadd.f32 %v3623, %v3695
    %3697 = vmatmul.bf16.gmra.mxu0 %v595
    %v3698 = vpop.f32.mrf.mxu0
    %v3699 = vadd.f32 %v3626, %v3698
    %v3700 = vpop.f32.mrf.mxu0
    %v3701 = vadd.f32 %v3628, %v3700
    %3702 = vmatmul.bf16.gmra.mxu0 %v598
    %v3703 = vpop.f32.mrf.mxu0
    %v3704 = vadd.f32 %v3631, %v3703
    %v3705 = vpop.f32.mrf.mxu0
    %v3706 = vadd.f32 %v3633, %v3705
    %3707 = vmatmul.bf16.gmra.mxu0 %v601
    %v3708 = vpop.f32.mrf.mxu0
    %v3709 = vadd.f32 %v3636, %v3708
    %v3710 = vpop.f32.mrf.mxu0
    %v3711 = vadd.f32 %v3638, %v3710
    %3712 = vmatmul.bf16.gmra.mxu0 %v604
    %v3713 = vpop.f32.mrf.mxu0
    %v3714 = vadd.f32 %v3641, %v3713
    %v3715 = vpop.f32.mrf.mxu0
    %3716 = vdwg.mxu0
    %v3717 = vmax.f32 %v3149, %v3654
    %v3718 = vmax.f32 %v3150, %v3656
    %v3719 = vmax.f32 %v3151, %v3659
    %v3720 = vmax.f32 %v3152, %v3661
    %v3721 = vmax.f32 %v3153, %v3664
    %v3722 = vmax.f32 %v3154, %v3666
    %v3723 = vmax.f32 %v3155, %v3669
    %v3724 = vmax.f32 %v3156, %v3671
    %v3725 = vmax.f32 %v3157, %v3674
    %v3726 = vmax.f32 %v3158, %v3676
    %v3727 = vmax.f32 %v3159, %v3679
    %v3728 = vmax.f32 %v3160, %v3681
    %v3729 = vmax.f32 %v3161, %v3684
    %v3730 = vmax.f32 %v3162, %v3686
    %v3731 = vmax.f32 %v3163, %v3689
    %v3732 = vmax.f32 %v3164, %v3691
    %v3733 = vmax.f32 %v3165, %v3694
    %v3734 = vmax.f32 %v3166, %v3696
    %v3735 = vmax.f32 %v3167, %v3699
    %v3736 = vmax.f32 %v3168, %v3701
    %v3737 = vmax.f32 %v3169, %v3704
    %v3738 = vmax.f32 %v3170, %v3706
    %v3739 = vmax.f32 %v3171, %v3709
    %v3740 = vmax.f32 %v3172, %v3711
    %v3741 = vmax.f32 %v3173, %v3714
    %s3742 = scalar_lea.vmem %s1, 1488
    %v3743 = vld [vmem:[%s3742] sm:$0xf]
    %v3744 = vld [vmem:[%s3742 + $0x4] sm:$0xf]
    %v3745 = vld [vmem:[%s3742 + $0x8] sm:$0xf]
    %v3746 = vld [vmem:[%s3742 + $0xc] sm:$0xf]
    %v3747 = vld [vmem:[%s3742 + $0x10] sm:$0xf]
    %v3748 = vld [vmem:[%s3742 + $0x14] sm:$0xf]
    %v3749 = vld [vmem:[%s3742 + $0x18] sm:$0xf]
    %v3750 = vld [vmem:[%s3742 + $0x1c] sm:$0xf]
    %v3751 = vld [vmem:[%s3742 + $0x20] sm:$0xf]
    %v3752 = vld [vmem:[%s3742 + $0x24] sm:$0xf]
    %v3753 = vld [vmem:[%s3742 + $0x28] sm:$0xf]
    %v3754 = vld [vmem:[%s3742 + $0x2c] sm:$0xf]
    %v3755 = vld [vmem:[%s3742 + $0x30] sm:$0xf]
    %v3756 = vld [vmem:[%s3742 + $0x34] sm:$0xf]
    %v3757 = vld [vmem:[%s3742 + $0x38] sm:$0xf]
    %v3758 = vld [vmem:[%s3742 + $0x3c] sm:$0xf]
    %v3759 = vld [vmem:[%s3742 + $0x40] sm:$0xf]
    %v3760 = vld [vmem:[%s3742 + $0x44] sm:$0xf]
    %v3761 = vld [vmem:[%s3742 + $0x48] sm:$0xf]
    %v3762 = vld [vmem:[%s3742 + $0x4c] sm:$0xf]
    %v3763 = vld [vmem:[%s3742 + $0x50] sm:$0xf]
    %v3764 = vld [vmem:[%s3742 + $0x54] sm:$0xf]
    %v3765 = vld [vmem:[%s3742 + $0x58] sm:$0xf]
    %v3766 = vld [vmem:[%s3742 + $0x5c] sm:$0xf]
    %v3767 = vld [vmem:[%s3742 + $0x60] sm:$0xf]
    %v3768 = vld [vmem:[%s3742 + $0x64] sm:$0xf]
    %v3769 = vld [vmem:[%s3742 + $0x68] sm:$0xf]
    %v3770 = vld [vmem:[%s3742 + $0x6c] sm:$0xf]
    %v3771 = vld [vmem:[%s3742 + $0x70] sm:$0xf]
    %v3772 = vld [vmem:[%s3742 + $0x74] sm:$0xf]
    %v3773 = vld [vmem:[%s3742 + $0x78] sm:$0xf]
    %v3774 = vld [vmem:[%s3742 + $0x7c] sm:$0xf]
    %v3775 = vld [vmem:[%s3742 + $0x80] sm:$0xf]
    %v3776 = vld [vmem:[%s3742 + $0x84] sm:$0xf]
    %v3777 = vld [vmem:[%s3742 + $0x88] sm:$0xf]
    %v3778 = vld [vmem:[%s3742 + $0x8c] sm:$0xf]
    %v3779 = vld [vmem:[%s3742 + $0x90] sm:$0xf]
    %v3780 = vld [vmem:[%s3742 + $0x94] sm:$0xf]
    %v3781 = vld [vmem:[%s3742 + $0x98] sm:$0xf]
    %v3782 = vld [vmem:[%s3742 + $0x9c] sm:$0xf]
    %v3783 = vld [vmem:[%s3742 + $0xa0] sm:$0xf]
    %v3784 = vld [vmem:[%s3742 + $0xa4] sm:$0xf]
    %v3785 = vld [vmem:[%s3742 + $0xa8] sm:$0xf]
    %v3786 = vld [vmem:[%s3742 + $0xac] sm:$0xf]
    %v3787 = vld [vmem:[%s3742 + $0xb0] sm:$0xf]
    %v3788 = vld [vmem:[%s3742 + $0xb4] sm:$0xf]
    %v3789 = vld [vmem:[%s3742 + $0xb8] sm:$0xf]
    %v3790 = vld [vmem:[%s3742 + $0xbc] sm:$0xf]
    %v3791 = vld [vmem:[%s3742 + $0xc0] sm:$0xf]
    %v3792 = vld [vmem:[%s3742 + $0xc4] sm:$0xf]
    %v3793 = vld [vmem:[%s3742 + $0xc8] sm:$0xf]
    %v3794 = vld [vmem:[%s3742 + $0xcc] sm:$0xf]
    %v3795 = vld [vmem:[%s3742 + $0xd0] sm:$0xf]
    %v3796 = vld [vmem:[%s3742 + $0xd4] sm:$0xf]
    %v3797 = vld [vmem:[%s3742 + $0xd8] sm:$0xf]
    %v3798 = vld [vmem:[%s3742 + $0xdc] sm:$0xf]
    %v3799 = vld [vmem:[%s3742 + $0xe0] sm:$0xf]
    %v3800 = vld [vmem:[%s3742 + $0xe4] sm:$0xf]
    %v3801 = vld [vmem:[%s3742 + $0xe8] sm:$0xf]
    %v3802 = vld [vmem:[%s3742 + $0xec] sm:$0xf]
    %v3803 = vld [vmem:[%s3742 + $0xf0] sm:$0xf]
    %v3804 = vld [vmem:[%s3742 + $0xf4] sm:$0x1]
    %v3867 = vunpack.c.l.b16 %v3743
    %v3868 = vunpack.c.l.b16 %v3744
    %v3869 = vunpack.c.l.b16 %v3745
    %v3870 = vunpack.c.l.b16 %v3746
    %v3871 = vunpack.c.l.b16 %v3747
    %v3872 = vunpack.c.l.b16 %v3748
    %v3873 = vunpack.c.l.b16 %v3749
    %v3874 = vunpack.c.l.b16 %v3750
    %v3875 = vunpack.c.l.b16 %v3751
    %v3876 = vunpack.c.l.b16 %v3752
    %v3877 = vunpack.c.l.b16 %v3753
    %v3878 = vunpack.c.l.b16 %v3754
    %v3879 = vunpack.c.l.b16 %v3755
    %v3880 = vunpack.c.l.b16 %v3756
    %v3881 = vunpack.c.l.b16 %v3757
    %v3882 = vunpack.c.l.b16 %v3758
    %v3883 = vunpack.c.l.b16 %v3759
    %v3884 = vunpack.c.l.b16 %v3760
    %v3885 = vunpack.c.l.b16 %v3761
    %v3886 = vunpack.c.l.b16 %v3762
    %v3887 = vunpack.c.l.b16 %v3763
    %v3888 = vunpack.c.l.b16 %v3764
    %v3889 = vunpack.c.l.b16 %v3765
    %v3890 = vunpack.c.l.b16 %v3766
    %v3891 = vunpack.c.l.b16 %v3767
    %v3892 = vunpack.c.l.b16 %v3768
    %v3893 = vunpack.c.l.b16 %v3769
    %v3894 = vunpack.c.l.b16 %v3770
    %v3895 = vunpack.c.l.b16 %v3771
    %v3896 = vunpack.c.l.b16 %v3772
    %v3897 = vunpack.c.l.b16 %v3773
    %v3898 = vunpack.c.l.b16 %v3774
    %v3899 = vunpack.c.l.b16 %v3775
    %v3900 = vunpack.c.l.b16 %v3776
    %v3901 = vunpack.c.l.b16 %v3777
    %v3902 = vunpack.c.l.b16 %v3778
    %v3903 = vunpack.c.l.b16 %v3779
    %v3904 = vunpack.c.l.b16 %v3780
    %v3905 = vunpack.c.l.b16 %v3781
    %v3906 = vunpack.c.l.b16 %v3782
    %v3907 = vunpack.c.l.b16 %v3783
    %v3908 = vunpack.c.l.b16 %v3784
    %v3909 = vunpack.c.l.b16 %v3785
    %v3910 = vunpack.c.l.b16 %v3786
    %v3911 = vunpack.c.l.b16 %v3787
    %v3912 = vunpack.c.l.b16 %v3788
    %v3913 = vunpack.c.l.b16 %v3789
    %v3914 = vunpack.c.l.b16 %v3790
    %v3915 = vunpack.c.l.b16 %v3791
    %v3916 = vunpack.c.l.b16 %v3792
    %v3917 = vunpack.c.l.b16 %v3793
    %v3918 = vunpack.c.l.b16 %v3794
    %v3919 = vunpack.c.l.b16 %v3795
    %v3920 = vunpack.c.l.b16 %v3796
    %v3921 = vunpack.c.l.b16 %v3797
    %v3922 = vunpack.c.l.b16 %v3798
    %v3923 = vunpack.c.l.b16 %v3799
    %v3924 = vunpack.c.l.b16 %v3800
    %v3925 = vunpack.c.l.b16 %v3801
    %v3926 = vunpack.c.l.b16 %v3802
    %v3927 = vunpack.c.l.b16 %v3803
    %v3928 = vunpack.c.l.b16 %v3804
    %v3929 = vpack.c.b16 %v3868, %v3867
    %v3930 = vpack.c.b16 %v3870, %v3869
    %v3931 = vpack.c.b16 %v3872, %v3871
    %v3932 = vpack.c.b16 %v3874, %v3873
    %v3933 = vpack.c.b16 %v3876, %v3875
    %v3934 = vpack.c.b16 %v3878, %v3877
    %v3935 = vpack.c.b16 %v3880, %v3879
    %v3936 = vpack.c.b16 %v3882, %v3881
    %v3937 = vpack.c.b16 %v3884, %v3883
    %v3938 = vpack.c.b16 %v3886, %v3885
    %v3939 = vpack.c.b16 %v3888, %v3887
    %v3940 = vpack.c.b16 %v3890, %v3889
    %v3941 = vpack.c.b16 %v3892, %v3891
    %v3942 = vpack.c.b16 %v3894, %v3893
    %v3943 = vpack.c.b16 %v3896, %v3895
    %v3944 = vpack.c.b16 %v3898, %v3897
    %v3945 = vpack.c.b16 %v3900, %v3899
    %v3946 = vpack.c.b16 %v3902, %v3901
    %v3947 = vpack.c.b16 %v3904, %v3903
    %v3948 = vpack.c.b16 %v3906, %v3905
    %v3949 = vpack.c.b16 %v3908, %v3907
    %v3950 = vpack.c.b16 %v3910, %v3909
    %v3951 = vpack.c.b16 %v3912, %v3911
    %v3952 = vpack.c.b16 %v3914, %v3913
    %v3953 = vpack.c.b16 %v3916, %v3915
    %v3954 = vpack.c.b16 %v3918, %v3917
    %v3955 = vpack.c.b16 %v3920, %v3919
    %v3956 = vpack.c.b16 %v3922, %v3921
    %v3957 = vpack.c.b16 %v3924, %v3923
    %v3958 = vpack.c.b16 %v3926, %v3925
    %v3959 = vpack.c.b16 %v3928, %v3927
    %v3991 = vsel %vm606, %v3959, 0
    %3993 = vmatpush.bf16.msra.mxu0 %v3936
    %3994 = vmatpush.bf16.msra.mxu0 %v3935
    %3995 = vmatpush.bf16.msra.mxu0 %v3934
    %3996 = vmatpush.bf16.msra.mxu0 %v3933
    %3997 = vmatpush.bf16.msra.mxu0 %v3932
    %3998 = vmatpush.bf16.msra.mxu0 %v3931
    %3999 = vmatpush.bf16.msra.mxu0 %v3930
    %4000 = vmatpush.bf16.msra.mxu0 %v3929
    %4001 = vmatmul.bf16.gmra.mxu0 %v290
    %v4002 = vpop.f32.mrf.mxu0
    %v4003 = vadd.f32 0.0, %v4002
    %v4004 = vpop.f32.mrf.mxu0
    %v4005 = vadd.f32 0.0, %v4004
    %4006 = vmatmul.bf16.gmra.mxu0 %v294
    %v4007 = vpop.f32.mrf.mxu0
    %v4008 = vadd.f32 0.0, %v4007
    %v4009 = vpop.f32.mrf.mxu0
    %v4010 = vadd.f32 0.0, %v4009
    %4011 = vmatmul.bf16.gmra.mxu0 %v298
    %v4012 = vpop.f32.mrf.mxu0
    %v4013 = vadd.f32 0.0, %v4012
    %v4014 = vpop.f32.mrf.mxu0
    %v4015 = vadd.f32 0.0, %v4014
    %4016 = vmatmul.bf16.gmra.mxu0 %v302
    %v4017 = vpop.f32.mrf.mxu0
    %v4018 = vadd.f32 0.0, %v4017
    %v4019 = vpop.f32.mrf.mxu0
    %v4020 = vadd.f32 0.0, %v4019
    %4021 = vmatmul.bf16.gmra.mxu0 %v306
    %v4022 = vpop.f32.mrf.mxu0
    %v4023 = vadd.f32 0.0, %v4022
    %v4024 = vpop.f32.mrf.mxu0
    %v4025 = vadd.f32 0.0, %v4024
    %4026 = vmatmul.bf16.gmra.mxu0 %v310
    %v4027 = vpop.f32.mrf.mxu0
    %v4028 = vadd.f32 0.0, %v4027
    %v4029 = vpop.f32.mrf.mxu0
    %v4030 = vadd.f32 0.0, %v4029
    %4031 = vmatmul.bf16.gmra.mxu0 %v314
    %v4032 = vpop.f32.mrf.mxu0
    %v4033 = vadd.f32 0.0, %v4032
    %v4034 = vpop.f32.mrf.mxu0
    %v4035 = vadd.f32 0.0, %v4034
    %4036 = vmatmul.bf16.gmra.mxu0 %v318
    %v4037 = vpop.f32.mrf.mxu0
    %v4038 = vadd.f32 0.0, %v4037
    %v4039 = vpop.f32.mrf.mxu0
    %v4040 = vadd.f32 0.0, %v4039
    %4041 = vmatmul.bf16.gmra.mxu0 %v322
    %v4042 = vpop.f32.mrf.mxu0
    %v4043 = vadd.f32 0.0, %v4042
    %v4044 = vpop.f32.mrf.mxu0
    %v4045 = vadd.f32 0.0, %v4044
    %4046 = vmatmul.bf16.gmra.mxu0 %v326
    %v4047 = vpop.f32.mrf.mxu0
    %v4048 = vadd.f32 0.0, %v4047
    %v4049 = vpop.f32.mrf.mxu0
    %v4050 = vadd.f32 0.0, %v4049
    %4051 = vmatmul.bf16.gmra.mxu0 %v330
    %v4052 = vpop.f32.mrf.mxu0
    %v4053 = vadd.f32 0.0, %v4052
    %v4054 = vpop.f32.mrf.mxu0
    %v4055 = vadd.f32 0.0, %v4054
    %4056 = vmatmul.bf16.gmra.mxu0 %v334
    %v4057 = vpop.f32.mrf.mxu0
    %v4058 = vadd.f32 0.0, %v4057
    %v4059 = vpop.f32.mrf.mxu0
    %v4060 = vadd.f32 0.0, %v4059
    %4061 = vmatmul.bf16.gmra.mxu0 %v338
    %v4062 = vpop.f32.mrf.mxu0
    %v4063 = vadd.f32 0.0, %v4062
    %v4064 = vpop.f32.mrf.mxu0
    %4065 = vdwg.mxu0
    %4066 = vmatpush.bf16.msra.mxu0 %v3944
    %4067 = vmatpush.bf16.msra.mxu0 %v3943
    %4068 = vmatpush.bf16.msra.mxu0 %v3942
    %4069 = vmatpush.bf16.msra.mxu0 %v3941
    %4070 = vmatpush.bf16.msra.mxu0 %v3940
    %4071 = vmatpush.bf16.msra.mxu0 %v3939
    %4072 = vmatpush.bf16.msra.mxu0 %v3938
    %4073 = vmatpush.bf16.msra.mxu0 %v3937
    %4074 = vmatmul.bf16.gmra.mxu0 %v291
    %v4075 = vpop.f32.mrf.mxu0
    %v4076 = vadd.f32 %v4003, %v4075
    %v4077 = vpop.f32.mrf.mxu0
    %v4078 = vadd.f32 %v4005, %v4077
    %4079 = vmatmul.bf16.gmra.mxu0 %v295
    %v4080 = vpop.f32.mrf.mxu0
    %v4081 = vadd.f32 %v4008, %v4080
    %v4082 = vpop.f32.mrf.mxu0
    %v4083 = vadd.f32 %v4010, %v4082
    %4084 = vmatmul.bf16.gmra.mxu0 %v299
    %v4085 = vpop.f32.mrf.mxu0
    %v4086 = vadd.f32 %v4013, %v4085
    %v4087 = vpop.f32.mrf.mxu0
    %v4088 = vadd.f32 %v4015, %v4087
    %4089 = vmatmul.bf16.gmra.mxu0 %v303
    %v4090 = vpop.f32.mrf.mxu0
    %v4091 = vadd.f32 %v4018, %v4090
    %v4092 = vpop.f32.mrf.mxu0
    %v4093 = vadd.f32 %v4020, %v4092
    %4094 = vmatmul.bf16.gmra.mxu0 %v307
    %v4095 = vpop.f32.mrf.mxu0
    %v4096 = vadd.f32 %v4023, %v4095
    %v4097 = vpop.f32.mrf.mxu0
    %v4098 = vadd.f32 %v4025, %v4097
    %4099 = vmatmul.bf16.gmra.mxu0 %v311
    %v4100 = vpop.f32.mrf.mxu0
    %v4101 = vadd.f32 %v4028, %v4100
    %v4102 = vpop.f32.mrf.mxu0
    %v4103 = vadd.f32 %v4030, %v4102
    %4104 = vmatmul.bf16.gmra.mxu0 %v315
    %v4105 = vpop.f32.mrf.mxu0
    %v4106 = vadd.f32 %v4033, %v4105
    %v4107 = vpop.f32.mrf.mxu0
    %v4108 = vadd.f32 %v4035, %v4107
    %4109 = vmatmul.bf16.gmra.mxu0 %v319
    %v4110 = vpop.f32.mrf.mxu0
    %v4111 = vadd.f32 %v4038, %v4110
    %v4112 = vpop.f32.mrf.mxu0
    %v4113 = vadd.f32 %v4040, %v4112
    %4114 = vmatmul.bf16.gmra.mxu0 %v323
    %v4115 = vpop.f32.mrf.mxu0
    %v4116 = vadd.f32 %v4043, %v4115
    %v4117 = vpop.f32.mrf.mxu0
    %v4118 = vadd.f32 %v4045, %v4117
    %4119 = vmatmul.bf16.gmra.mxu0 %v327
    %v4120 = vpop.f32.mrf.mxu0
    %v4121 = vadd.f32 %v4048, %v4120
    %v4122 = vpop.f32.mrf.mxu0
    %v4123 = vadd.f32 %v4050, %v4122
    %4124 = vmatmul.bf16.gmra.mxu0 %v331
    %v4125 = vpop.f32.mrf.mxu0
    %v4126 = vadd.f32 %v4053, %v4125
    %v4127 = vpop.f32.mrf.mxu0
    %v4128 = vadd.f32 %v4055, %v4127
    %4129 = vmatmul.bf16.gmra.mxu0 %v335
    %v4130 = vpop.f32.mrf.mxu0
    %v4131 = vadd.f32 %v4058, %v4130
    %v4132 = vpop.f32.mrf.mxu0
    %v4133 = vadd.f32 %v4060, %v4132
    %4134 = vmatmul.bf16.gmra.mxu0 %v339
    %v4135 = vpop.f32.mrf.mxu0
    %v4136 = vadd.f32 %v4063, %v4135
    %v4137 = vpop.f32.mrf.mxu0
    %4138 = vdwg.mxu0
    %4139 = vmatpush.bf16.msra.mxu0 %v3952
    %4140 = vmatpush.bf16.msra.mxu0 %v3951
    %4141 = vmatpush.bf16.msra.mxu0 %v3950
    %4142 = vmatpush.bf16.msra.mxu0 %v3949
    %4143 = vmatpush.bf16.msra.mxu0 %v3948
    %4144 = vmatpush.bf16.msra.mxu0 %v3947
    %4145 = vmatpush.bf16.msra.mxu0 %v3946
    %4146 = vmatpush.bf16.msra.mxu0 %v3945
    %4147 = vmatmul.bf16.gmra.mxu0 %v292
    %v4148 = vpop.f32.mrf.mxu0
    %v4149 = vadd.f32 %v4076, %v4148
    %v4150 = vpop.f32.mrf.mxu0
    %v4151 = vadd.f32 %v4078, %v4150
    %4152 = vmatmul.bf16.gmra.mxu0 %v296
    %v4153 = vpop.f32.mrf.mxu0
    %v4154 = vadd.f32 %v4081, %v4153
    %v4155 = vpop.f32.mrf.mxu0
    %v4156 = vadd.f32 %v4083, %v4155
    %4157 = vmatmul.bf16.gmra.mxu0 %v300
    %v4158 = vpop.f32.mrf.mxu0
    %v4159 = vadd.f32 %v4086, %v4158
    %v4160 = vpop.f32.mrf.mxu0
    %v4161 = vadd.f32 %v4088, %v4160
    %4162 = vmatmul.bf16.gmra.mxu0 %v304
    %v4163 = vpop.f32.mrf.mxu0
    %v4164 = vadd.f32 %v4091, %v4163
    %v4165 = vpop.f32.mrf.mxu0
    %v4166 = vadd.f32 %v4093, %v4165
    %4167 = vmatmul.bf16.gmra.mxu0 %v308
    %v4168 = vpop.f32.mrf.mxu0
    %v4169 = vadd.f32 %v4096, %v4168
    %v4170 = vpop.f32.mrf.mxu0
    %v4171 = vadd.f32 %v4098, %v4170
    %4172 = vmatmul.bf16.gmra.mxu0 %v312
    %v4173 = vpop.f32.mrf.mxu0
    %v4174 = vadd.f32 %v4101, %v4173
    %v4175 = vpop.f32.mrf.mxu0
    %v4176 = vadd.f32 %v4103, %v4175
    %4177 = vmatmul.bf16.gmra.mxu0 %v316
    %v4178 = vpop.f32.mrf.mxu0
    %v4179 = vadd.f32 %v4106, %v4178
    %v4180 = vpop.f32.mrf.mxu0
    %v4181 = vadd.f32 %v4108, %v4180
    %4182 = vmatmul.bf16.gmra.mxu0 %v320
    %v4183 = vpop.f32.mrf.mxu0
    %v4184 = vadd.f32 %v4111, %v4183
    %v4185 = vpop.f32.mrf.mxu0
    %v4186 = vadd.f32 %v4113, %v4185
    %4187 = vmatmul.bf16.gmra.mxu0 %v324
    %v4188 = vpop.f32.mrf.mxu0
    %v4189 = vadd.f32 %v4116, %v4188
    %v4190 = vpop.f32.mrf.mxu0
    %v4191 = vadd.f32 %v4118, %v4190
    %4192 = vmatmul.bf16.gmra.mxu0 %v328
    %v4193 = vpop.f32.mrf.mxu0
    %v4194 = vadd.f32 %v4121, %v4193
    %v4195 = vpop.f32.mrf.mxu0
    %v4196 = vadd.f32 %v4123, %v4195
    %4197 = vmatmul.bf16.gmra.mxu0 %v332
    %v4198 = vpop.f32.mrf.mxu0
    %v4199 = vadd.f32 %v4126, %v4198
    %v4200 = vpop.f32.mrf.mxu0
    %v4201 = vadd.f32 %v4128, %v4200
    %4202 = vmatmul.bf16.gmra.mxu0 %v336
    %v4203 = vpop.f32.mrf.mxu0
    %v4204 = vadd.f32 %v4131, %v4203
    %v4205 = vpop.f32.mrf.mxu0
    %v4206 = vadd.f32 %v4133, %v4205
    %4207 = vmatmul.bf16.gmra.mxu0 %v340
    %v4208 = vpop.f32.mrf.mxu0
    %v4209 = vadd.f32 %v4136, %v4208
    %v4210 = vpop.f32.mrf.mxu0
    %4211 = vdwg.mxu0
    %4212 = vmatpush.bf16.msra.mxu0 0
    %4213 = vmatpush.bf16.msra.mxu0 %v3991
    %4214 = vmatpush.bf16.msra.mxu0 %v3958
    %4215 = vmatpush.bf16.msra.mxu0 %v3957
    %4216 = vmatpush.bf16.msra.mxu0 %v3956
    %4217 = vmatpush.bf16.msra.mxu0 %v3955
    %4218 = vmatpush.bf16.msra.mxu0 %v3954
    %4219 = vmatpush.bf16.msra.mxu0 %v3953
    %4220 = vmatmul.bf16.gmra.mxu0 %v568
    %v4221 = vpop.f32.mrf.mxu0
    %v4222 = vadd.f32 %v4149, %v4221
    %v4223 = vpop.f32.mrf.mxu0
    %v4224 = vadd.f32 %v4151, %v4223
    %4225 = vmatmul.bf16.gmra.mxu0 %v571
    %v4226 = vpop.f32.mrf.mxu0
    %v4227 = vadd.f32 %v4154, %v4226
    %v4228 = vpop.f32.mrf.mxu0
    %v4229 = vadd.f32 %v4156, %v4228
    %4230 = vmatmul.bf16.gmra.mxu0 %v574
    %v4231 = vpop.f32.mrf.mxu0
    %v4232 = vadd.f32 %v4159, %v4231
    %v4233 = vpop.f32.mrf.mxu0
    %v4234 = vadd.f32 %v4161, %v4233
    %4235 = vmatmul.bf16.gmra.mxu0 %v577
    %v4236 = vpop.f32.mrf.mxu0
    %v4237 = vadd.f32 %v4164, %v4236
    %v4238 = vpop.f32.mrf.mxu0
    %v4239 = vadd.f32 %v4166, %v4238
    %4240 = vmatmul.bf16.gmra.mxu0 %v580
    %v4241 = vpop.f32.mrf.mxu0
    %v4242 = vadd.f32 %v4169, %v4241
    %v4243 = vpop.f32.mrf.mxu0
    %v4244 = vadd.f32 %v4171, %v4243
    %4245 = vmatmul.bf16.gmra.mxu0 %v583
    %v4246 = vpop.f32.mrf.mxu0
    %v4247 = vadd.f32 %v4174, %v4246
    %v4248 = vpop.f32.mrf.mxu0
    %v4249 = vadd.f32 %v4176, %v4248
    %4250 = vmatmul.bf16.gmra.mxu0 %v586
    %v4251 = vpop.f32.mrf.mxu0
    %v4252 = vadd.f32 %v4179, %v4251
    %v4253 = vpop.f32.mrf.mxu0
    %v4254 = vadd.f32 %v4181, %v4253
    %4255 = vmatmul.bf16.gmra.mxu0 %v589
    %v4256 = vpop.f32.mrf.mxu0
    %v4257 = vadd.f32 %v4184, %v4256
    %v4258 = vpop.f32.mrf.mxu0
    %v4259 = vadd.f32 %v4186, %v4258
    %4260 = vmatmul.bf16.gmra.mxu0 %v592
    %v4261 = vpop.f32.mrf.mxu0
    %v4262 = vadd.f32 %v4189, %v4261
    %v4263 = vpop.f32.mrf.mxu0
    %v4264 = vadd.f32 %v4191, %v4263
    %4265 = vmatmul.bf16.gmra.mxu0 %v595
    %v4266 = vpop.f32.mrf.mxu0
    %v4267 = vadd.f32 %v4194, %v4266
    %v4268 = vpop.f32.mrf.mxu0
    %v4269 = vadd.f32 %v4196, %v4268
    %4270 = vmatmul.bf16.gmra.mxu0 %v598
    %v4271 = vpop.f32.mrf.mxu0
    %v4272 = vadd.f32 %v4199, %v4271
    %v4273 = vpop.f32.mrf.mxu0
    %v4274 = vadd.f32 %v4201, %v4273
    %4275 = vmatmul.bf16.gmra.mxu0 %v601
    %v4276 = vpop.f32.mrf.mxu0
    %v4277 = vadd.f32 %v4204, %v4276
    %v4278 = vpop.f32.mrf.mxu0
    %v4279 = vadd.f32 %v4206, %v4278
    %4280 = vmatmul.bf16.gmra.mxu0 %v604
    %v4281 = vpop.f32.mrf.mxu0
    %v4282 = vadd.f32 %v4209, %v4281
    %v4283 = vpop.f32.mrf.mxu0
    %4284 = vdwg.mxu0
    %v4285 = vmax.f32 %v3717, %v4222
    %v4286 = vmax.f32 %v3718, %v4224
    %v4287 = vmax.f32 %v3719, %v4227
    %v4288 = vmax.f32 %v3720, %v4229
    %v4289 = vmax.f32 %v3721, %v4232
    %v4290 = vmax.f32 %v3722, %v4234
    %v4291 = vmax.f32 %v3723, %v4237
    %v4292 = vmax.f32 %v3724, %v4239
    %v4293 = vmax.f32 %v3725, %v4242
    %v4294 = vmax.f32 %v3726, %v4244
    %v4295 = vmax.f32 %v3727, %v4247
    %v4296 = vmax.f32 %v3728, %v4249
    %v4297 = vmax.f32 %v3729, %v4252
    %v4298 = vmax.f32 %v3730, %v4254
    %v4299 = vmax.f32 %v3731, %v4257
    %v4300 = vmax.f32 %v3732, %v4259
    %v4301 = vmax.f32 %v3733, %v4262
    %v4302 = vmax.f32 %v3734, %v4264
    %v4303 = vmax.f32 %v3735, %v4267
    %v4304 = vmax.f32 %v3736, %v4269
    %v4305 = vmax.f32 %v3737, %v4272
    %v4306 = vmax.f32 %v3738, %v4274
    %v4307 = vmax.f32 %v3739, %v4277
    %v4308 = vmax.f32 %v3740, %v4279
    %v4309 = vmax.f32 %v3741, %v4282
    %s4310 = scalar_lea.vmem %s1, 1736
    %v4311 = vld [vmem:[%s4310] sm:$0xf]
    %v4312 = vld [vmem:[%s4310 + $0x4] sm:$0xf]
    %v4313 = vld [vmem:[%s4310 + $0x8] sm:$0xf]
    %v4314 = vld [vmem:[%s4310 + $0xc] sm:$0xf]
    %v4315 = vld [vmem:[%s4310 + $0x10] sm:$0xf]
    %v4316 = vld [vmem:[%s4310 + $0x14] sm:$0xf]
    %v4317 = vld [vmem:[%s4310 + $0x18] sm:$0xf]
    %v4318 = vld [vmem:[%s4310 + $0x1c] sm:$0xf]
    %v4319 = vld [vmem:[%s4310 + $0x20] sm:$0xf]
    %v4320 = vld [vmem:[%s4310 + $0x24] sm:$0xf]
    %v4321 = vld [vmem:[%s4310 + $0x28] sm:$0xf]
    %v4322 = vld [vmem:[%s4310 + $0x2c] sm:$0xf]
    %v4323 = vld [vmem:[%s4310 + $0x30] sm:$0xf]
    %v4324 = vld [vmem:[%s4310 + $0x34] sm:$0xf]
    %v4325 = vld [vmem:[%s4310 + $0x38] sm:$0xf]
    %v4326 = vld [vmem:[%s4310 + $0x3c] sm:$0xf]
    %v4327 = vld [vmem:[%s4310 + $0x40] sm:$0xf]
    %v4328 = vld [vmem:[%s4310 + $0x44] sm:$0xf]
    %v4329 = vld [vmem:[%s4310 + $0x48] sm:$0xf]
    %v4330 = vld [vmem:[%s4310 + $0x4c] sm:$0xf]
    %v4331 = vld [vmem:[%s4310 + $0x50] sm:$0xf]
    %v4332 = vld [vmem:[%s4310 + $0x54] sm:$0xf]
    %v4333 = vld [vmem:[%s4310 + $0x58] sm:$0xf]
    %v4334 = vld [vmem:[%s4310 + $0x5c] sm:$0xf]
    %v4335 = vld [vmem:[%s4310 + $0x60] sm:$0xf]
    %v4336 = vld [vmem:[%s4310 + $0x64] sm:$0xf]
    %v4337 = vld [vmem:[%s4310 + $0x68] sm:$0xf]
    %v4338 = vld [vmem:[%s4310 + $0x6c] sm:$0xf]
    %v4339 = vld [vmem:[%s4310 + $0x70] sm:$0xf]
    %v4340 = vld [vmem:[%s4310 + $0x74] sm:$0xf]
    %v4341 = vld [vmem:[%s4310 + $0x78] sm:$0xf]
    %v4342 = vld [vmem:[%s4310 + $0x7c] sm:$0xf]
    %v4343 = vld [vmem:[%s4310 + $0x80] sm:$0xf]
    %v4344 = vld [vmem:[%s4310 + $0x84] sm:$0xf]
    %v4345 = vld [vmem:[%s4310 + $0x88] sm:$0xf]
    %v4346 = vld [vmem:[%s4310 + $0x8c] sm:$0xf]
    %v4347 = vld [vmem:[%s4310 + $0x90] sm:$0xf]
    %v4348 = vld [vmem:[%s4310 + $0x94] sm:$0xf]
    %v4349 = vld [vmem:[%s4310 + $0x98] sm:$0xf]
    %v4350 = vld [vmem:[%s4310 + $0x9c] sm:$0xf]
    %v4351 = vld [vmem:[%s4310 + $0xa0] sm:$0xf]
    %v4352 = vld [vmem:[%s4310 + $0xa4] sm:$0xf]
    %v4353 = vld [vmem:[%s4310 + $0xa8] sm:$0xf]
    %v4354 = vld [vmem:[%s4310 + $0xac] sm:$0xf]
    %v4355 = vld [vmem:[%s4310 + $0xb0] sm:$0xf]
    %v4356 = vld [vmem:[%s4310 + $0xb4] sm:$0xf]
    %v4357 = vld [vmem:[%s4310 + $0xb8] sm:$0xf]
    %v4358 = vld [vmem:[%s4310 + $0xbc] sm:$0xf]
    %v4359 = vld [vmem:[%s4310 + $0xc0] sm:$0xf]
    %v4360 = vld [vmem:[%s4310 + $0xc4] sm:$0xf]
    %v4361 = vld [vmem:[%s4310 + $0xc8] sm:$0xf]
    %v4362 = vld [vmem:[%s4310 + $0xcc] sm:$0xf]
    %v4363 = vld [vmem:[%s4310 + $0xd0] sm:$0xf]
    %v4364 = vld [vmem:[%s4310 + $0xd4] sm:$0xf]
    %v4365 = vld [vmem:[%s4310 + $0xd8] sm:$0xf]
    %v4366 = vld [vmem:[%s4310 + $0xdc] sm:$0xf]
    %v4367 = vld [vmem:[%s4310 + $0xe0] sm:$0xf]
    %v4368 = vld [vmem:[%s4310 + $0xe4] sm:$0xf]
    %v4369 = vld [vmem:[%s4310 + $0xe8] sm:$0xf]
    %v4370 = vld [vmem:[%s4310 + $0xec] sm:$0xf]
    %v4371 = vld [vmem:[%s4310 + $0xf0] sm:$0xf]
    %v4372 = vld [vmem:[%s4310 + $0xf4] sm:$0x1]
    %v4435 = vunpack.c.l.b16 %v4311
    %v4436 = vunpack.c.l.b16 %v4312
    %v4437 = vunpack.c.l.b16 %v4313
    %v4438 = vunpack.c.l.b16 %v4314
    %v4439 = vunpack.c.l.b16 %v4315
    %v4440 = vunpack.c.l.b16 %v4316
    %v4441 = vunpack.c.l.b16 %v4317
    %v4442 = vunpack.c.l.b16 %v4318
    %v4443 = vunpack.c.l.b16 %v4319
    %v4444 = vunpack.c.l.b16 %v4320
    %v4445 = vunpack.c.l.b16 %v4321
    %v4446 = vunpack.c.l.b16 %v4322
    %v4447 = vunpack.c.l.b16 %v4323
    %v4448 = vunpack.c.l.b16 %v4324
    %v4449 = vunpack.c.l.b16 %v4325
    %v4450 = vunpack.c.l.b16 %v4326
    %v4451 = vunpack.c.l.b16 %v4327
    %v4452 = vunpack.c.l.b16 %v4328
    %v4453 = vunpack.c.l.b16 %v4329
    %v4454 = vunpack.c.l.b16 %v4330
    %v4455 = vunpack.c.l.b16 %v4331
    %v4456 = vunpack.c.l.b16 %v4332
    %v4457 = vunpack.c.l.b16 %v4333
    %v4458 = vunpack.c.l.b16 %v4334
    %v4459 = vunpack.c.l.b16 %v4335
    %v4460 = vunpack.c.l.b16 %v4336
    %v4461 = vunpack.c.l.b16 %v4337
    %v4462 = vunpack.c.l.b16 %v4338
    %v4463 = vunpack.c.l.b16 %v4339
    %v4464 = vunpack.c.l.b16 %v4340
    %v4465 = vunpack.c.l.b16 %v4341
    %v4466 = vunpack.c.l.b16 %v4342
    %v4467 = vunpack.c.l.b16 %v4343
    %v4468 = vunpack.c.l.b16 %v4344
    %v4469 = vunpack.c.l.b16 %v4345
    %v4470 = vunpack.c.l.b16 %v4346
    %v4471 = vunpack.c.l.b16 %v4347
    %v4472 = vunpack.c.l.b16 %v4348
    %v4473 = vunpack.c.l.b16 %v4349
    %v4474 = vunpack.c.l.b16 %v4350
    %v4475 = vunpack.c.l.b16 %v4351
    %v4476 = vunpack.c.l.b16 %v4352
    %v4477 = vunpack.c.l.b16 %v4353
    %v4478 = vunpack.c.l.b16 %v4354
    %v4479 = vunpack.c.l.b16 %v4355
    %v4480 = vunpack.c.l.b16 %v4356
    %v4481 = vunpack.c.l.b16 %v4357
    %v4482 = vunpack.c.l.b16 %v4358
    %v4483 = vunpack.c.l.b16 %v4359
    %v4484 = vunpack.c.l.b16 %v4360
    %v4485 = vunpack.c.l.b16 %v4361
    %v4486 = vunpack.c.l.b16 %v4362
    %v4487 = vunpack.c.l.b16 %v4363
    %v4488 = vunpack.c.l.b16 %v4364
    %v4489 = vunpack.c.l.b16 %v4365
    %v4490 = vunpack.c.l.b16 %v4366
    %v4491 = vunpack.c.l.b16 %v4367
    %v4492 = vunpack.c.l.b16 %v4368
    %v4493 = vunpack.c.l.b16 %v4369
    %v4494 = vunpack.c.l.b16 %v4370
    %v4495 = vunpack.c.l.b16 %v4371
    %v4496 = vunpack.c.l.b16 %v4372
    %v4497 = vpack.c.b16 %v4436, %v4435
    %v4498 = vpack.c.b16 %v4438, %v4437
    %v4499 = vpack.c.b16 %v4440, %v4439
    %v4500 = vpack.c.b16 %v4442, %v4441
    %v4501 = vpack.c.b16 %v4444, %v4443
    %v4502 = vpack.c.b16 %v4446, %v4445
    %v4503 = vpack.c.b16 %v4448, %v4447
    %v4504 = vpack.c.b16 %v4450, %v4449
    %v4505 = vpack.c.b16 %v4452, %v4451
    %v4506 = vpack.c.b16 %v4454, %v4453
    %v4507 = vpack.c.b16 %v4456, %v4455
    %v4508 = vpack.c.b16 %v4458, %v4457
    %v4509 = vpack.c.b16 %v4460, %v4459
    %v4510 = vpack.c.b16 %v4462, %v4461
    %v4511 = vpack.c.b16 %v4464, %v4463
    %v4512 = vpack.c.b16 %v4466, %v4465
    %v4513 = vpack.c.b16 %v4468, %v4467
    %v4514 = vpack.c.b16 %v4470, %v4469
    %v4515 = vpack.c.b16 %v4472, %v4471
    %v4516 = vpack.c.b16 %v4474, %v4473
    %v4517 = vpack.c.b16 %v4476, %v4475
    %v4518 = vpack.c.b16 %v4478, %v4477
    %v4519 = vpack.c.b16 %v4480, %v4479
    %v4520 = vpack.c.b16 %v4482, %v4481
    %v4521 = vpack.c.b16 %v4484, %v4483
    %v4522 = vpack.c.b16 %v4486, %v4485
    %v4523 = vpack.c.b16 %v4488, %v4487
    %v4524 = vpack.c.b16 %v4490, %v4489
    %v4525 = vpack.c.b16 %v4492, %v4491
    %v4526 = vpack.c.b16 %v4494, %v4493
    %v4527 = vpack.c.b16 %v4496, %v4495
    %v4559 = vsel %vm606, %v4527, 0
    %4561 = vmatpush.bf16.msra.mxu0 %v4504
    %4562 = vmatpush.bf16.msra.mxu0 %v4503
    %4563 = vmatpush.bf16.msra.mxu0 %v4502
    %4564 = vmatpush.bf16.msra.mxu0 %v4501
    %4565 = vmatpush.bf16.msra.mxu0 %v4500
    %4566 = vmatpush.bf16.msra.mxu0 %v4499
    %4567 = vmatpush.bf16.msra.mxu0 %v4498
    %4568 = vmatpush.bf16.msra.mxu0 %v4497
    %4569 = vmatmul.bf16.gmra.mxu0 %v290
    %v4570 = vpop.f32.mrf.mxu0
    %v4571 = vadd.f32 0.0, %v4570
    %v4572 = vpop.f32.mrf.mxu0
    %v4573 = vadd.f32 0.0, %v4572
    %4574 = vmatmul.bf16.gmra.mxu0 %v294
    %v4575 = vpop.f32.mrf.mxu0
    %v4576 = vadd.f32 0.0, %v4575
    %v4577 = vpop.f32.mrf.mxu0
    %v4578 = vadd.f32 0.0, %v4577
    %4579 = vmatmul.bf16.gmra.mxu0 %v298
    %v4580 = vpop.f32.mrf.mxu0
    %v4581 = vadd.f32 0.0, %v4580
    %v4582 = vpop.f32.mrf.mxu0
    %v4583 = vadd.f32 0.0, %v4582
    %4584 = vmatmul.bf16.gmra.mxu0 %v302
    %v4585 = vpop.f32.mrf.mxu0
    %v4586 = vadd.f32 0.0, %v4585
    %v4587 = vpop.f32.mrf.mxu0
    %v4588 = vadd.f32 0.0, %v4587
    %4589 = vmatmul.bf16.gmra.mxu0 %v306
    %v4590 = vpop.f32.mrf.mxu0
    %v4591 = vadd.f32 0.0, %v4590
    %v4592 = vpop.f32.mrf.mxu0
    %v4593 = vadd.f32 0.0, %v4592
    %4594 = vmatmul.bf16.gmra.mxu0 %v310
    %v4595 = vpop.f32.mrf.mxu0
    %v4596 = vadd.f32 0.0, %v4595
    %v4597 = vpop.f32.mrf.mxu0
    %v4598 = vadd.f32 0.0, %v4597
    %4599 = vmatmul.bf16.gmra.mxu0 %v314
    %v4600 = vpop.f32.mrf.mxu0
    %v4601 = vadd.f32 0.0, %v4600
    %v4602 = vpop.f32.mrf.mxu0
    %v4603 = vadd.f32 0.0, %v4602
    %4604 = vmatmul.bf16.gmra.mxu0 %v318
    %v4605 = vpop.f32.mrf.mxu0
    %v4606 = vadd.f32 0.0, %v4605
    %v4607 = vpop.f32.mrf.mxu0
    %v4608 = vadd.f32 0.0, %v4607
    %4609 = vmatmul.bf16.gmra.mxu0 %v322
    %v4610 = vpop.f32.mrf.mxu0
    %v4611 = vadd.f32 0.0, %v4610
    %v4612 = vpop.f32.mrf.mxu0
    %v4613 = vadd.f32 0.0, %v4612
    %4614 = vmatmul.bf16.gmra.mxu0 %v326
    %v4615 = vpop.f32.mrf.mxu0
    %v4616 = vadd.f32 0.0, %v4615
    %v4617 = vpop.f32.mrf.mxu0
    %v4618 = vadd.f32 0.0, %v4617
    %4619 = vmatmul.bf16.gmra.mxu0 %v330
    %v4620 = vpop.f32.mrf.mxu0
    %v4621 = vadd.f32 0.0, %v4620
    %v4622 = vpop.f32.mrf.mxu0
    %v4623 = vadd.f32 0.0, %v4622
    %4624 = vmatmul.bf16.gmra.mxu0 %v334
    %v4625 = vpop.f32.mrf.mxu0
    %v4626 = vadd.f32 0.0, %v4625
    %v4627 = vpop.f32.mrf.mxu0
    %v4628 = vadd.f32 0.0, %v4627
    %4629 = vmatmul.bf16.gmra.mxu0 %v338
    %v4630 = vpop.f32.mrf.mxu0
    %v4631 = vadd.f32 0.0, %v4630
    %v4632 = vpop.f32.mrf.mxu0
    %4633 = vdwg.mxu0
    %4634 = vmatpush.bf16.msra.mxu0 %v4512
    %4635 = vmatpush.bf16.msra.mxu0 %v4511
    %4636 = vmatpush.bf16.msra.mxu0 %v4510
    %4637 = vmatpush.bf16.msra.mxu0 %v4509
    %4638 = vmatpush.bf16.msra.mxu0 %v4508
    %4639 = vmatpush.bf16.msra.mxu0 %v4507
    %4640 = vmatpush.bf16.msra.mxu0 %v4506
    %4641 = vmatpush.bf16.msra.mxu0 %v4505
    %4642 = vmatmul.bf16.gmra.mxu0 %v291
    %v4643 = vpop.f32.mrf.mxu0
    %v4644 = vadd.f32 %v4571, %v4643
    %v4645 = vpop.f32.mrf.mxu0
    %v4646 = vadd.f32 %v4573, %v4645
    %4647 = vmatmul.bf16.gmra.mxu0 %v295
    %v4648 = vpop.f32.mrf.mxu0
    %v4649 = vadd.f32 %v4576, %v4648
    %v4650 = vpop.f32.mrf.mxu0
    %v4651 = vadd.f32 %v4578, %v4650
    %4652 = vmatmul.bf16.gmra.mxu0 %v299
    %v4653 = vpop.f32.mrf.mxu0
    %v4654 = vadd.f32 %v4581, %v4653
    %v4655 = vpop.f32.mrf.mxu0
    %v4656 = vadd.f32 %v4583, %v4655
    %4657 = vmatmul.bf16.gmra.mxu0 %v303
    %v4658 = vpop.f32.mrf.mxu0
    %v4659 = vadd.f32 %v4586, %v4658
    %v4660 = vpop.f32.mrf.mxu0
    %v4661 = vadd.f32 %v4588, %v4660
    %4662 = vmatmul.bf16.gmra.mxu0 %v307
    %v4663 = vpop.f32.mrf.mxu0
    %v4664 = vadd.f32 %v4591, %v4663
    %v4665 = vpop.f32.mrf.mxu0
    %v4666 = vadd.f32 %v4593, %v4665
    %4667 = vmatmul.bf16.gmra.mxu0 %v311
    %v4668 = vpop.f32.mrf.mxu0
    %v4669 = vadd.f32 %v4596, %v4668
    %v4670 = vpop.f32.mrf.mxu0
    %v4671 = vadd.f32 %v4598, %v4670
    %4672 = vmatmul.bf16.gmra.mxu0 %v315
    %v4673 = vpop.f32.mrf.mxu0
    %v4674 = vadd.f32 %v4601, %v4673
    %v4675 = vpop.f32.mrf.mxu0
    %v4676 = vadd.f32 %v4603, %v4675
    %4677 = vmatmul.bf16.gmra.mxu0 %v319
    %v4678 = vpop.f32.mrf.mxu0
    %v4679 = vadd.f32 %v4606, %v4678
    %v4680 = vpop.f32.mrf.mxu0
    %v4681 = vadd.f32 %v4608, %v4680
    %4682 = vmatmul.bf16.gmra.mxu0 %v323
    %v4683 = vpop.f32.mrf.mxu0
    %v4684 = vadd.f32 %v4611, %v4683
    %v4685 = vpop.f32.mrf.mxu0
    %v4686 = vadd.f32 %v4613, %v4685
    %4687 = vmatmul.bf16.gmra.mxu0 %v327
    %v4688 = vpop.f32.mrf.mxu0
    %v4689 = vadd.f32 %v4616, %v4688
    %v4690 = vpop.f32.mrf.mxu0
    %v4691 = vadd.f32 %v4618, %v4690
    %4692 = vmatmul.bf16.gmra.mxu0 %v331
    %v4693 = vpop.f32.mrf.mxu0
    %v4694 = vadd.f32 %v4621, %v4693
    %v4695 = vpop.f32.mrf.mxu0
    %v4696 = vadd.f32 %v4623, %v4695
    %4697 = vmatmul.bf16.gmra.mxu0 %v335
    %v4698 = vpop.f32.mrf.mxu0
    %v4699 = vadd.f32 %v4626, %v4698
    %v4700 = vpop.f32.mrf.mxu0
    %v4701 = vadd.f32 %v4628, %v4700
    %4702 = vmatmul.bf16.gmra.mxu0 %v339
    %v4703 = vpop.f32.mrf.mxu0
    %v4704 = vadd.f32 %v4631, %v4703
    %v4705 = vpop.f32.mrf.mxu0
    %4706 = vdwg.mxu0
    %4707 = vmatpush.bf16.msra.mxu0 %v4520
    %4708 = vmatpush.bf16.msra.mxu0 %v4519
    %4709 = vmatpush.bf16.msra.mxu0 %v4518
    %4710 = vmatpush.bf16.msra.mxu0 %v4517
    %4711 = vmatpush.bf16.msra.mxu0 %v4516
    %4712 = vmatpush.bf16.msra.mxu0 %v4515
    %4713 = vmatpush.bf16.msra.mxu0 %v4514
    %4714 = vmatpush.bf16.msra.mxu0 %v4513
    %4715 = vmatmul.bf16.gmra.mxu0 %v292
    %v4716 = vpop.f32.mrf.mxu0
    %v4717 = vadd.f32 %v4644, %v4716
    %v4718 = vpop.f32.mrf.mxu0
    %v4719 = vadd.f32 %v4646, %v4718
    %4720 = vmatmul.bf16.gmra.mxu0 %v296
    %v4721 = vpop.f32.mrf.mxu0
    %v4722 = vadd.f32 %v4649, %v4721
    %v4723 = vpop.f32.mrf.mxu0
    %v4724 = vadd.f32 %v4651, %v4723
    %4725 = vmatmul.bf16.gmra.mxu0 %v300
    %v4726 = vpop.f32.mrf.mxu0
    %v4727 = vadd.f32 %v4654, %v4726
    %v4728 = vpop.f32.mrf.mxu0
    %v4729 = vadd.f32 %v4656, %v4728
    %4730 = vmatmul.bf16.gmra.mxu0 %v304
    %v4731 = vpop.f32.mrf.mxu0
    %v4732 = vadd.f32 %v4659, %v4731
    %v4733 = vpop.f32.mrf.mxu0
    %v4734 = vadd.f32 %v4661, %v4733
    %4735 = vmatmul.bf16.gmra.mxu0 %v308
    %v4736 = vpop.f32.mrf.mxu0
    %v4737 = vadd.f32 %v4664, %v4736
    %v4738 = vpop.f32.mrf.mxu0
    %v4739 = vadd.f32 %v4666, %v4738
    %4740 = vmatmul.bf16.gmra.mxu0 %v312
    %v4741 = vpop.f32.mrf.mxu0
    %v4742 = vadd.f32 %v4669, %v4741
    %v4743 = vpop.f32.mrf.mxu0
    %v4744 = vadd.f32 %v4671, %v4743
    %4745 = vmatmul.bf16.gmra.mxu0 %v316
    %v4746 = vpop.f32.mrf.mxu0
    %v4747 = vadd.f32 %v4674, %v4746
    %v4748 = vpop.f32.mrf.mxu0
    %v4749 = vadd.f32 %v4676, %v4748
    %4750 = vmatmul.bf16.gmra.mxu0 %v320
    %v4751 = vpop.f32.mrf.mxu0
    %v4752 = vadd.f32 %v4679, %v4751
    %v4753 = vpop.f32.mrf.mxu0
    %v4754 = vadd.f32 %v4681, %v4753
    %4755 = vmatmul.bf16.gmra.mxu0 %v324
    %v4756 = vpop.f32.mrf.mxu0
    %v4757 = vadd.f32 %v4684, %v4756
    %v4758 = vpop.f32.mrf.mxu0
    %v4759 = vadd.f32 %v4686, %v4758
    %4760 = vmatmul.bf16.gmra.mxu0 %v328
    %v4761 = vpop.f32.mrf.mxu0
    %v4762 = vadd.f32 %v4689, %v4761
    %v4763 = vpop.f32.mrf.mxu0
    %v4764 = vadd.f32 %v4691, %v4763
    %4765 = vmatmul.bf16.gmra.mxu0 %v332
    %v4766 = vpop.f32.mrf.mxu0
    %v4767 = vadd.f32 %v4694, %v4766
    %v4768 = vpop.f32.mrf.mxu0
    %v4769 = vadd.f32 %v4696, %v4768
    %4770 = vmatmul.bf16.gmra.mxu0 %v336
    %v4771 = vpop.f32.mrf.mxu0
    %v4772 = vadd.f32 %v4699, %v4771
    %v4773 = vpop.f32.mrf.mxu0
    %v4774 = vadd.f32 %v4701, %v4773
    %4775 = vmatmul.bf16.gmra.mxu0 %v340
    %v4776 = vpop.f32.mrf.mxu0
    %v4777 = vadd.f32 %v4704, %v4776
    %v4778 = vpop.f32.mrf.mxu0
    %4779 = vdwg.mxu0
    %4780 = vmatpush.bf16.msra.mxu0 0
    %4781 = vmatpush.bf16.msra.mxu0 %v4559
    %4782 = vmatpush.bf16.msra.mxu0 %v4526
    %4783 = vmatpush.bf16.msra.mxu0 %v4525
    %4784 = vmatpush.bf16.msra.mxu0 %v4524
    %4785 = vmatpush.bf16.msra.mxu0 %v4523
    %4786 = vmatpush.bf16.msra.mxu0 %v4522
    %4787 = vmatpush.bf16.msra.mxu0 %v4521
    %4788 = vmatmul.bf16.gmra.mxu0 %v568
    %v4789 = vpop.f32.mrf.mxu0
    %v4790 = vadd.f32 %v4717, %v4789
    %v4791 = vpop.f32.mrf.mxu0
    %v4792 = vadd.f32 %v4719, %v4791
    %4793 = vmatmul.bf16.gmra.mxu0 %v571
    %v4794 = vpop.f32.mrf.mxu0
    %v4795 = vadd.f32 %v4722, %v4794
    %v4796 = vpop.f32.mrf.mxu0
    %v4797 = vadd.f32 %v4724, %v4796
    %4798 = vmatmul.bf16.gmra.mxu0 %v574
    %v4799 = vpop.f32.mrf.mxu0
    %v4800 = vadd.f32 %v4727, %v4799
    %v4801 = vpop.f32.mrf.mxu0
    %v4802 = vadd.f32 %v4729, %v4801
    %4803 = vmatmul.bf16.gmra.mxu0 %v577
    %v4804 = vpop.f32.mrf.mxu0
    %v4805 = vadd.f32 %v4732, %v4804
    %v4806 = vpop.f32.mrf.mxu0
    %v4807 = vadd.f32 %v4734, %v4806
    %4808 = vmatmul.bf16.gmra.mxu0 %v580
    %v4809 = vpop.f32.mrf.mxu0
    %v4810 = vadd.f32 %v4737, %v4809
    %v4811 = vpop.f32.mrf.mxu0
    %v4812 = vadd.f32 %v4739, %v4811
    %4813 = vmatmul.bf16.gmra.mxu0 %v583
    %v4814 = vpop.f32.mrf.mxu0
    %v4815 = vadd.f32 %v4742, %v4814
    %v4816 = vpop.f32.mrf.mxu0
    %v4817 = vadd.f32 %v4744, %v4816
    %4818 = vmatmul.bf16.gmra.mxu0 %v586
    %v4819 = vpop.f32.mrf.mxu0
    %v4820 = vadd.f32 %v4747, %v4819
    %v4821 = vpop.f32.mrf.mxu0
    %v4822 = vadd.f32 %v4749, %v4821
    %4823 = vmatmul.bf16.gmra.mxu0 %v589
    %v4824 = vpop.f32.mrf.mxu0
    %v4825 = vadd.f32 %v4752, %v4824
    %v4826 = vpop.f32.mrf.mxu0
    %v4827 = vadd.f32 %v4754, %v4826
    %4828 = vmatmul.bf16.gmra.mxu0 %v592
    %v4829 = vpop.f32.mrf.mxu0
    %v4830 = vadd.f32 %v4757, %v4829
    %v4831 = vpop.f32.mrf.mxu0
    %v4832 = vadd.f32 %v4759, %v4831
    %4833 = vmatmul.bf16.gmra.mxu0 %v595
    %v4834 = vpop.f32.mrf.mxu0
    %v4835 = vadd.f32 %v4762, %v4834
    %v4836 = vpop.f32.mrf.mxu0
    %v4837 = vadd.f32 %v4764, %v4836
    %4838 = vmatmul.bf16.gmra.mxu0 %v598
    %v4839 = vpop.f32.mrf.mxu0
    %v4840 = vadd.f32 %v4767, %v4839
    %v4841 = vpop.f32.mrf.mxu0
    %v4842 = vadd.f32 %v4769, %v4841
    %4843 = vmatmul.bf16.gmra.mxu0 %v601
    %v4844 = vpop.f32.mrf.mxu0
    %v4845 = vadd.f32 %v4772, %v4844
    %v4846 = vpop.f32.mrf.mxu0
    %v4847 = vadd.f32 %v4774, %v4846
    %4848 = vmatmul.bf16.gmra.mxu0 %v604
    %v4849 = vpop.f32.mrf.mxu0
    %v4850 = vadd.f32 %v4777, %v4849
    %v4851 = vpop.f32.mrf.mxu0
    %4852 = vdwg.mxu0
    %v4853 = vmax.f32 %v4285, %v4790
    %v4854 = vmax.f32 %v4286, %v4792
    %v4855 = vmax.f32 %v4287, %v4795
    %v4856 = vmax.f32 %v4288, %v4797
    %v4857 = vmax.f32 %v4289, %v4800
    %v4858 = vmax.f32 %v4290, %v4802
    %v4859 = vmax.f32 %v4291, %v4805
    %v4860 = vmax.f32 %v4292, %v4807
    %v4861 = vmax.f32 %v4293, %v4810
    %v4862 = vmax.f32 %v4294, %v4812
    %v4863 = vmax.f32 %v4295, %v4815
    %v4864 = vmax.f32 %v4296, %v4817
    %v4865 = vmax.f32 %v4297, %v4820
    %v4866 = vmax.f32 %v4298, %v4822
    %v4867 = vmax.f32 %v4299, %v4825
    %v4868 = vmax.f32 %v4300, %v4827
    %v4869 = vmax.f32 %v4301, %v4830
    %v4870 = vmax.f32 %v4302, %v4832
    %v4871 = vmax.f32 %v4303, %v4835
    %v4872 = vmax.f32 %v4304, %v4837
    %v4873 = vmax.f32 %v4305, %v4840
    %v4874 = vmax.f32 %v4306, %v4842
    %v4875 = vmax.f32 %v4307, %v4845
    %v4876 = vmax.f32 %v4308, %v4847
    %v4877 = vmax.f32 %v4309, %v4850
    %s4878 = scalar_lea.vmem %s1, 1984
    %v4879 = vld [vmem:[%s4878] sm:$0xf]
    %v4880 = vld [vmem:[%s4878 + $0x4] sm:$0xf]
    %v4881 = vld [vmem:[%s4878 + $0x8] sm:$0xf]
    %v4882 = vld [vmem:[%s4878 + $0xc] sm:$0xf]
    %v4883 = vld [vmem:[%s4878 + $0x10] sm:$0xf]
    %v4884 = vld [vmem:[%s4878 + $0x14] sm:$0xf]
    %v4885 = vld [vmem:[%s4878 + $0x18] sm:$0xf]
    %v4886 = vld [vmem:[%s4878 + $0x1c] sm:$0xf]
    %v4887 = vld [vmem:[%s4878 + $0x20] sm:$0xf]
    %v4888 = vld [vmem:[%s4878 + $0x24] sm:$0xf]
    %v4889 = vld [vmem:[%s4878 + $0x28] sm:$0xf]
    %v4890 = vld [vmem:[%s4878 + $0x2c] sm:$0xf]
    %v4891 = vld [vmem:[%s4878 + $0x30] sm:$0xf]
    %v4892 = vld [vmem:[%s4878 + $0x34] sm:$0xf]
    %v4893 = vld [vmem:[%s4878 + $0x38] sm:$0xf]
    %v4894 = vld [vmem:[%s4878 + $0x3c] sm:$0xf]
    %v4895 = vld [vmem:[%s4878 + $0x40] sm:$0xf]
    %v4896 = vld [vmem:[%s4878 + $0x44] sm:$0xf]
    %v4897 = vld [vmem:[%s4878 + $0x48] sm:$0xf]
    %v4898 = vld [vmem:[%s4878 + $0x4c] sm:$0xf]
    %v4899 = vld [vmem:[%s4878 + $0x50] sm:$0xf]
    %v4900 = vld [vmem:[%s4878 + $0x54] sm:$0xf]
    %v4901 = vld [vmem:[%s4878 + $0x58] sm:$0xf]
    %v4902 = vld [vmem:[%s4878 + $0x5c] sm:$0xf]
    %v4903 = vld [vmem:[%s4878 + $0x60] sm:$0xf]
    %v4904 = vld [vmem:[%s4878 + $0x64] sm:$0xf]
    %v4905 = vld [vmem:[%s4878 + $0x68] sm:$0xf]
    %v4906 = vld [vmem:[%s4878 + $0x6c] sm:$0xf]
    %v4907 = vld [vmem:[%s4878 + $0x70] sm:$0xf]
    %v4908 = vld [vmem:[%s4878 + $0x74] sm:$0xf]
    %v4909 = vld [vmem:[%s4878 + $0x78] sm:$0xf]
    %v4910 = vld [vmem:[%s4878 + $0x7c] sm:$0xf]
    %v4911 = vld [vmem:[%s4878 + $0x80] sm:$0xf]
    %v4912 = vld [vmem:[%s4878 + $0x84] sm:$0xf]
    %v4913 = vld [vmem:[%s4878 + $0x88] sm:$0xf]
    %v4914 = vld [vmem:[%s4878 + $0x8c] sm:$0xf]
    %v4915 = vld [vmem:[%s4878 + $0x90] sm:$0xf]
    %v4916 = vld [vmem:[%s4878 + $0x94] sm:$0xf]
    %v4917 = vld [vmem:[%s4878 + $0x98] sm:$0xf]
    %v4918 = vld [vmem:[%s4878 + $0x9c] sm:$0xf]
    %v4919 = vld [vmem:[%s4878 + $0xa0] sm:$0xf]
    %v4920 = vld [vmem:[%s4878 + $0xa4] sm:$0xf]
    %v4921 = vld [vmem:[%s4878 + $0xa8] sm:$0xf]
    %v4922 = vld [vmem:[%s4878 + $0xac] sm:$0xf]
    %v4923 = vld [vmem:[%s4878 + $0xb0] sm:$0xf]
    %v4924 = vld [vmem:[%s4878 + $0xb4] sm:$0xf]
    %v4925 = vld [vmem:[%s4878 + $0xb8] sm:$0xf]
    %v4926 = vld [vmem:[%s4878 + $0xbc] sm:$0xf]
    %v4927 = vld [vmem:[%s4878 + $0xc0] sm:$0xf]
    %v4928 = vld [vmem:[%s4878 + $0xc4] sm:$0xf]
    %v4929 = vld [vmem:[%s4878 + $0xc8] sm:$0xf]
    %v4930 = vld [vmem:[%s4878 + $0xcc] sm:$0xf]
    %v4931 = vld [vmem:[%s4878 + $0xd0] sm:$0xf]
    %v4932 = vld [vmem:[%s4878 + $0xd4] sm:$0xf]
    %v4933 = vld [vmem:[%s4878 + $0xd8] sm:$0xf]
    %v4934 = vld [vmem:[%s4878 + $0xdc] sm:$0xf]
    %v4935 = vld [vmem:[%s4878 + $0xe0] sm:$0xf]
    %v4936 = vld [vmem:[%s4878 + $0xe4] sm:$0xf]
    %v4937 = vld [vmem:[%s4878 + $0xe8] sm:$0xf]
    %v4938 = vld [vmem:[%s4878 + $0xec] sm:$0xf]
    %v4939 = vld [vmem:[%s4878 + $0xf0] sm:$0xf]
    %v4940 = vld [vmem:[%s4878 + $0xf4] sm:$0x1]
    %v5003 = vunpack.c.l.b16 %v4879
    %v5004 = vunpack.c.l.b16 %v4880
    %v5005 = vunpack.c.l.b16 %v4881
    %v5006 = vunpack.c.l.b16 %v4882
    %v5007 = vunpack.c.l.b16 %v4883
    %v5008 = vunpack.c.l.b16 %v4884
    %v5009 = vunpack.c.l.b16 %v4885
    %v5010 = vunpack.c.l.b16 %v4886
    %v5011 = vunpack.c.l.b16 %v4887
    %v5012 = vunpack.c.l.b16 %v4888
    %v5013 = vunpack.c.l.b16 %v4889
    %v5014 = vunpack.c.l.b16 %v4890
    %v5015 = vunpack.c.l.b16 %v4891
    %v5016 = vunpack.c.l.b16 %v4892
    %v5017 = vunpack.c.l.b16 %v4893
    %v5018 = vunpack.c.l.b16 %v4894
    %v5019 = vunpack.c.l.b16 %v4895
    %v5020 = vunpack.c.l.b16 %v4896
    %v5021 = vunpack.c.l.b16 %v4897
    %v5022 = vunpack.c.l.b16 %v4898
    %v5023 = vunpack.c.l.b16 %v4899
    %v5024 = vunpack.c.l.b16 %v4900
    %v5025 = vunpack.c.l.b16 %v4901
    %v5026 = vunpack.c.l.b16 %v4902
    %v5027 = vunpack.c.l.b16 %v4903
    %v5028 = vunpack.c.l.b16 %v4904
    %v5029 = vunpack.c.l.b16 %v4905
    %v5030 = vunpack.c.l.b16 %v4906
    %v5031 = vunpack.c.l.b16 %v4907
    %v5032 = vunpack.c.l.b16 %v4908
    %v5033 = vunpack.c.l.b16 %v4909
    %v5034 = vunpack.c.l.b16 %v4910
    %v5035 = vunpack.c.l.b16 %v4911
    %v5036 = vunpack.c.l.b16 %v4912
    %v5037 = vunpack.c.l.b16 %v4913
    %v5038 = vunpack.c.l.b16 %v4914
    %v5039 = vunpack.c.l.b16 %v4915
    %v5040 = vunpack.c.l.b16 %v4916
    %v5041 = vunpack.c.l.b16 %v4917
    %v5042 = vunpack.c.l.b16 %v4918
    %v5043 = vunpack.c.l.b16 %v4919
    %v5044 = vunpack.c.l.b16 %v4920
    %v5045 = vunpack.c.l.b16 %v4921
    %v5046 = vunpack.c.l.b16 %v4922
    %v5047 = vunpack.c.l.b16 %v4923
    %v5048 = vunpack.c.l.b16 %v4924
    %v5049 = vunpack.c.l.b16 %v4925
    %v5050 = vunpack.c.l.b16 %v4926
    %v5051 = vunpack.c.l.b16 %v4927
    %v5052 = vunpack.c.l.b16 %v4928
    %v5053 = vunpack.c.l.b16 %v4929
    %v5054 = vunpack.c.l.b16 %v4930
    %v5055 = vunpack.c.l.b16 %v4931
    %v5056 = vunpack.c.l.b16 %v4932
    %v5057 = vunpack.c.l.b16 %v4933
    %v5058 = vunpack.c.l.b16 %v4934
    %v5059 = vunpack.c.l.b16 %v4935
    %v5060 = vunpack.c.l.b16 %v4936
    %v5061 = vunpack.c.l.b16 %v4937
    %v5062 = vunpack.c.l.b16 %v4938
    %v5063 = vunpack.c.l.b16 %v4939
    %v5064 = vunpack.c.l.b16 %v4940
    %v5065 = vpack.c.b16 %v5004, %v5003
    %v5066 = vpack.c.b16 %v5006, %v5005
    %v5067 = vpack.c.b16 %v5008, %v5007
    %v5068 = vpack.c.b16 %v5010, %v5009
    %v5069 = vpack.c.b16 %v5012, %v5011
    %v5070 = vpack.c.b16 %v5014, %v5013
    %v5071 = vpack.c.b16 %v5016, %v5015
    %v5072 = vpack.c.b16 %v5018, %v5017
    %v5073 = vpack.c.b16 %v5020, %v5019
    %v5074 = vpack.c.b16 %v5022, %v5021
    %v5075 = vpack.c.b16 %v5024, %v5023
    %v5076 = vpack.c.b16 %v5026, %v5025
    %v5077 = vpack.c.b16 %v5028, %v5027
    %v5078 = vpack.c.b16 %v5030, %v5029
    %v5079 = vpack.c.b16 %v5032, %v5031
    %v5080 = vpack.c.b16 %v5034, %v5033
    %v5081 = vpack.c.b16 %v5036, %v5035
    %v5082 = vpack.c.b16 %v5038, %v5037
    %v5083 = vpack.c.b16 %v5040, %v5039
    %v5084 = vpack.c.b16 %v5042, %v5041
    %v5085 = vpack.c.b16 %v5044, %v5043
    %v5086 = vpack.c.b16 %v5046, %v5045
    %v5087 = vpack.c.b16 %v5048, %v5047
    %v5088 = vpack.c.b16 %v5050, %v5049
    %v5089 = vpack.c.b16 %v5052, %v5051
    %v5090 = vpack.c.b16 %v5054, %v5053
    %v5091 = vpack.c.b16 %v5056, %v5055
    %v5092 = vpack.c.b16 %v5058, %v5057
    %v5093 = vpack.c.b16 %v5060, %v5059
    %v5094 = vpack.c.b16 %v5062, %v5061
    %v5095 = vpack.c.b16 %v5064, %v5063
    %v5127 = vsel %vm606, %v5095, 0
    %5129 = vmatpush.bf16.msra.mxu0 %v5072
    %5130 = vmatpush.bf16.msra.mxu0 %v5071
    %5131 = vmatpush.bf16.msra.mxu0 %v5070
    %5132 = vmatpush.bf16.msra.mxu0 %v5069
    %5133 = vmatpush.bf16.msra.mxu0 %v5068
    %5134 = vmatpush.bf16.msra.mxu0 %v5067
    %5135 = vmatpush.bf16.msra.mxu0 %v5066
    %5136 = vmatpush.bf16.msra.mxu0 %v5065
    %5137 = vmatmul.bf16.gmra.mxu0 %v290
    %v5138 = vpop.f32.mrf.mxu0
    %v5139 = vadd.f32 0.0, %v5138
    %v5140 = vpop.f32.mrf.mxu0
    %v5141 = vadd.f32 0.0, %v5140
    %5142 = vmatmul.bf16.gmra.mxu0 %v294
    %v5143 = vpop.f32.mrf.mxu0
    %v5144 = vadd.f32 0.0, %v5143
    %v5145 = vpop.f32.mrf.mxu0
    %v5146 = vadd.f32 0.0, %v5145
    %5147 = vmatmul.bf16.gmra.mxu0 %v298
    %v5148 = vpop.f32.mrf.mxu0
    %v5149 = vadd.f32 0.0, %v5148
    %v5150 = vpop.f32.mrf.mxu0
    %v5151 = vadd.f32 0.0, %v5150
    %5152 = vmatmul.bf16.gmra.mxu0 %v302
    %v5153 = vpop.f32.mrf.mxu0
    %v5154 = vadd.f32 0.0, %v5153
    %v5155 = vpop.f32.mrf.mxu0
    %v5156 = vadd.f32 0.0, %v5155
    %5157 = vmatmul.bf16.gmra.mxu0 %v306
    %v5158 = vpop.f32.mrf.mxu0
    %v5159 = vadd.f32 0.0, %v5158
    %v5160 = vpop.f32.mrf.mxu0
    %v5161 = vadd.f32 0.0, %v5160
    %5162 = vmatmul.bf16.gmra.mxu0 %v310
    %v5163 = vpop.f32.mrf.mxu0
    %v5164 = vadd.f32 0.0, %v5163
    %v5165 = vpop.f32.mrf.mxu0
    %v5166 = vadd.f32 0.0, %v5165
    %5167 = vmatmul.bf16.gmra.mxu0 %v314
    %v5168 = vpop.f32.mrf.mxu0
    %v5169 = vadd.f32 0.0, %v5168
    %v5170 = vpop.f32.mrf.mxu0
    %v5171 = vadd.f32 0.0, %v5170
    %5172 = vmatmul.bf16.gmra.mxu0 %v318
    %v5173 = vpop.f32.mrf.mxu0
    %v5174 = vadd.f32 0.0, %v5173
    %v5175 = vpop.f32.mrf.mxu0
    %v5176 = vadd.f32 0.0, %v5175
    %5177 = vmatmul.bf16.gmra.mxu0 %v322
    %v5178 = vpop.f32.mrf.mxu0
    %v5179 = vadd.f32 0.0, %v5178
    %v5180 = vpop.f32.mrf.mxu0
    %v5181 = vadd.f32 0.0, %v5180
    %5182 = vmatmul.bf16.gmra.mxu0 %v326
    %v5183 = vpop.f32.mrf.mxu0
    %v5184 = vadd.f32 0.0, %v5183
    %v5185 = vpop.f32.mrf.mxu0
    %v5186 = vadd.f32 0.0, %v5185
    %5187 = vmatmul.bf16.gmra.mxu0 %v330
    %v5188 = vpop.f32.mrf.mxu0
    %v5189 = vadd.f32 0.0, %v5188
    %v5190 = vpop.f32.mrf.mxu0
    %v5191 = vadd.f32 0.0, %v5190
    %5192 = vmatmul.bf16.gmra.mxu0 %v334
    %v5193 = vpop.f32.mrf.mxu0
    %v5194 = vadd.f32 0.0, %v5193
    %v5195 = vpop.f32.mrf.mxu0
    %v5196 = vadd.f32 0.0, %v5195
    %5197 = vmatmul.bf16.gmra.mxu0 %v338
    %v5198 = vpop.f32.mrf.mxu0
    %v5199 = vadd.f32 0.0, %v5198
    %v5200 = vpop.f32.mrf.mxu0
    %5201 = vdwg.mxu0
    %5202 = vmatpush.bf16.msra.mxu0 %v5080
    %5203 = vmatpush.bf16.msra.mxu0 %v5079
    %5204 = vmatpush.bf16.msra.mxu0 %v5078
    %5205 = vmatpush.bf16.msra.mxu0 %v5077
    %5206 = vmatpush.bf16.msra.mxu0 %v5076
    %5207 = vmatpush.bf16.msra.mxu0 %v5075
    %5208 = vmatpush.bf16.msra.mxu0 %v5074
    %5209 = vmatpush.bf16.msra.mxu0 %v5073
    %5210 = vmatmul.bf16.gmra.mxu0 %v291
    %v5211 = vpop.f32.mrf.mxu0
    %v5212 = vadd.f32 %v5139, %v5211
    %v5213 = vpop.f32.mrf.mxu0
    %v5214 = vadd.f32 %v5141, %v5213
    %5215 = vmatmul.bf16.gmra.mxu0 %v295
    %v5216 = vpop.f32.mrf.mxu0
    %v5217 = vadd.f32 %v5144, %v5216
    %v5218 = vpop.f32.mrf.mxu0
    %v5219 = vadd.f32 %v5146, %v5218
    %5220 = vmatmul.bf16.gmra.mxu0 %v299
    %v5221 = vpop.f32.mrf.mxu0
    %v5222 = vadd.f32 %v5149, %v5221
    %v5223 = vpop.f32.mrf.mxu0
    %v5224 = vadd.f32 %v5151, %v5223
    %5225 = vmatmul.bf16.gmra.mxu0 %v303
    %v5226 = vpop.f32.mrf.mxu0
    %v5227 = vadd.f32 %v5154, %v5226
    %v5228 = vpop.f32.mrf.mxu0
    %v5229 = vadd.f32 %v5156, %v5228
    %5230 = vmatmul.bf16.gmra.mxu0 %v307
    %v5231 = vpop.f32.mrf.mxu0
    %v5232 = vadd.f32 %v5159, %v5231
    %v5233 = vpop.f32.mrf.mxu0
    %v5234 = vadd.f32 %v5161, %v5233
    %5235 = vmatmul.bf16.gmra.mxu0 %v311
    %v5236 = vpop.f32.mrf.mxu0
    %v5237 = vadd.f32 %v5164, %v5236
    %v5238 = vpop.f32.mrf.mxu0
    %v5239 = vadd.f32 %v5166, %v5238
    %5240 = vmatmul.bf16.gmra.mxu0 %v315
    %v5241 = vpop.f32.mrf.mxu0
    %v5242 = vadd.f32 %v5169, %v5241
    %v5243 = vpop.f32.mrf.mxu0
    %v5244 = vadd.f32 %v5171, %v5243
    %5245 = vmatmul.bf16.gmra.mxu0 %v319
    %v5246 = vpop.f32.mrf.mxu0
    %v5247 = vadd.f32 %v5174, %v5246
    %v5248 = vpop.f32.mrf.mxu0
    %v5249 = vadd.f32 %v5176, %v5248
    %5250 = vmatmul.bf16.gmra.mxu0 %v323
    %v5251 = vpop.f32.mrf.mxu0
    %v5252 = vadd.f32 %v5179, %v5251
    %v5253 = vpop.f32.mrf.mxu0
    %v5254 = vadd.f32 %v5181, %v5253
    %5255 = vmatmul.bf16.gmra.mxu0 %v327
    %v5256 = vpop.f32.mrf.mxu0
    %v5257 = vadd.f32 %v5184, %v5256
    %v5258 = vpop.f32.mrf.mxu0
    %v5259 = vadd.f32 %v5186, %v5258
    %5260 = vmatmul.bf16.gmra.mxu0 %v331
    %v5261 = vpop.f32.mrf.mxu0
    %v5262 = vadd.f32 %v5189, %v5261
    %v5263 = vpop.f32.mrf.mxu0
    %v5264 = vadd.f32 %v5191, %v5263
    %5265 = vmatmul.bf16.gmra.mxu0 %v335
    %v5266 = vpop.f32.mrf.mxu0
    %v5267 = vadd.f32 %v5194, %v5266
    %v5268 = vpop.f32.mrf.mxu0
    %v5269 = vadd.f32 %v5196, %v5268
    %5270 = vmatmul.bf16.gmra.mxu0 %v339
    %v5271 = vpop.f32.mrf.mxu0
    %v5272 = vadd.f32 %v5199, %v5271
    %v5273 = vpop.f32.mrf.mxu0
    %5274 = vdwg.mxu0
    %5275 = vmatpush.bf16.msra.mxu0 %v5088
    %5276 = vmatpush.bf16.msra.mxu0 %v5087
    %5277 = vmatpush.bf16.msra.mxu0 %v5086
    %5278 = vmatpush.bf16.msra.mxu0 %v5085
    %5279 = vmatpush.bf16.msra.mxu0 %v5084
    %5280 = vmatpush.bf16.msra.mxu0 %v5083
    %5281 = vmatpush.bf16.msra.mxu0 %v5082
    %5282 = vmatpush.bf16.msra.mxu0 %v5081
    %5283 = vmatmul.bf16.gmra.mxu0 %v292
    %v5284 = vpop.f32.mrf.mxu0
    %v5285 = vadd.f32 %v5212, %v5284
    %v5286 = vpop.f32.mrf.mxu0
    %v5287 = vadd.f32 %v5214, %v5286
    %5288 = vmatmul.bf16.gmra.mxu0 %v296
    %v5289 = vpop.f32.mrf.mxu0
    %v5290 = vadd.f32 %v5217, %v5289
    %v5291 = vpop.f32.mrf.mxu0
    %v5292 = vadd.f32 %v5219, %v5291
    %5293 = vmatmul.bf16.gmra.mxu0 %v300
    %v5294 = vpop.f32.mrf.mxu0
    %v5295 = vadd.f32 %v5222, %v5294
    %v5296 = vpop.f32.mrf.mxu0
    %v5297 = vadd.f32 %v5224, %v5296
    %5298 = vmatmul.bf16.gmra.mxu0 %v304
    %v5299 = vpop.f32.mrf.mxu0
    %v5300 = vadd.f32 %v5227, %v5299
    %v5301 = vpop.f32.mrf.mxu0
    %v5302 = vadd.f32 %v5229, %v5301
    %5303 = vmatmul.bf16.gmra.mxu0 %v308
    %v5304 = vpop.f32.mrf.mxu0
    %v5305 = vadd.f32 %v5232, %v5304
    %v5306 = vpop.f32.mrf.mxu0
    %v5307 = vadd.f32 %v5234, %v5306
    %5308 = vmatmul.bf16.gmra.mxu0 %v312
    %v5309 = vpop.f32.mrf.mxu0
    %v5310 = vadd.f32 %v5237, %v5309
    %v5311 = vpop.f32.mrf.mxu0
    %v5312 = vadd.f32 %v5239, %v5311
    %5313 = vmatmul.bf16.gmra.mxu0 %v316
    %v5314 = vpop.f32.mrf.mxu0
    %v5315 = vadd.f32 %v5242, %v5314
    %v5316 = vpop.f32.mrf.mxu0
    %v5317 = vadd.f32 %v5244, %v5316
    %5318 = vmatmul.bf16.gmra.mxu0 %v320
    %v5319 = vpop.f32.mrf.mxu0
    %v5320 = vadd.f32 %v5247, %v5319
    %v5321 = vpop.f32.mrf.mxu0
    %v5322 = vadd.f32 %v5249, %v5321
    %5323 = vmatmul.bf16.gmra.mxu0 %v324
    %v5324 = vpop.f32.mrf.mxu0
    %v5325 = vadd.f32 %v5252, %v5324
    %v5326 = vpop.f32.mrf.mxu0
    %v5327 = vadd.f32 %v5254, %v5326
    %5328 = vmatmul.bf16.gmra.mxu0 %v328
    %v5329 = vpop.f32.mrf.mxu0
    %v5330 = vadd.f32 %v5257, %v5329
    %v5331 = vpop.f32.mrf.mxu0
    %v5332 = vadd.f32 %v5259, %v5331
    %5333 = vmatmul.bf16.gmra.mxu0 %v332
    %v5334 = vpop.f32.mrf.mxu0
    %v5335 = vadd.f32 %v5262, %v5334
    %v5336 = vpop.f32.mrf.mxu0
    %v5337 = vadd.f32 %v5264, %v5336
    %5338 = vmatmul.bf16.gmra.mxu0 %v336
    %v5339 = vpop.f32.mrf.mxu0
    %v5340 = vadd.f32 %v5267, %v5339
    %v5341 = vpop.f32.mrf.mxu0
    %v5342 = vadd.f32 %v5269, %v5341
    %5343 = vmatmul.bf16.gmra.mxu0 %v340
    %v5344 = vpop.f32.mrf.mxu0
    %v5345 = vadd.f32 %v5272, %v5344
    %v5346 = vpop.f32.mrf.mxu0
    %5347 = vdwg.mxu0
    %5348 = vmatpush.bf16.msra.mxu0 0
    %5349 = vmatpush.bf16.msra.mxu0 %v5127
    %5350 = vmatpush.bf16.msra.mxu0 %v5094
    %5351 = vmatpush.bf16.msra.mxu0 %v5093
    %5352 = vmatpush.bf16.msra.mxu0 %v5092
    %5353 = vmatpush.bf16.msra.mxu0 %v5091
    %5354 = vmatpush.bf16.msra.mxu0 %v5090
    %5355 = vmatpush.bf16.msra.mxu0 %v5089
    %5356 = vmatmul.bf16.gmra.mxu0 %v568
    %v5357 = vpop.f32.mrf.mxu0
    %v5358 = vadd.f32 %v5285, %v5357
    %v5359 = vpop.f32.mrf.mxu0
    %v5360 = vadd.f32 %v5287, %v5359
    %5361 = vmatmul.bf16.gmra.mxu0 %v571
    %v5362 = vpop.f32.mrf.mxu0
    %v5363 = vadd.f32 %v5290, %v5362
    %v5364 = vpop.f32.mrf.mxu0
    %v5365 = vadd.f32 %v5292, %v5364
    %5366 = vmatmul.bf16.gmra.mxu0 %v574
    %v5367 = vpop.f32.mrf.mxu0
    %v5368 = vadd.f32 %v5295, %v5367
    %v5369 = vpop.f32.mrf.mxu0
    %v5370 = vadd.f32 %v5297, %v5369
    %5371 = vmatmul.bf16.gmra.mxu0 %v577
    %v5372 = vpop.f32.mrf.mxu0
    %v5373 = vadd.f32 %v5300, %v5372
    %v5374 = vpop.f32.mrf.mxu0
    %v5375 = vadd.f32 %v5302, %v5374
    %5376 = vmatmul.bf16.gmra.mxu0 %v580
    %v5377 = vpop.f32.mrf.mxu0
    %v5378 = vadd.f32 %v5305, %v5377
    %v5379 = vpop.f32.mrf.mxu0
    %v5380 = vadd.f32 %v5307, %v5379
    %5381 = vmatmul.bf16.gmra.mxu0 %v583
    %v5382 = vpop.f32.mrf.mxu0
    %v5383 = vadd.f32 %v5310, %v5382
    %v5384 = vpop.f32.mrf.mxu0
    %v5385 = vadd.f32 %v5312, %v5384
    %5386 = vmatmul.bf16.gmra.mxu0 %v586
    %v5387 = vpop.f32.mrf.mxu0
    %v5388 = vadd.f32 %v5315, %v5387
    %v5389 = vpop.f32.mrf.mxu0
    %v5390 = vadd.f32 %v5317, %v5389
    %5391 = vmatmul.bf16.gmra.mxu0 %v589
    %v5392 = vpop.f32.mrf.mxu0
    %v5393 = vadd.f32 %v5320, %v5392
    %v5394 = vpop.f32.mrf.mxu0
    %v5395 = vadd.f32 %v5322, %v5394
    %5396 = vmatmul.bf16.gmra.mxu0 %v592
    %v5397 = vpop.f32.mrf.mxu0
    %v5398 = vadd.f32 %v5325, %v5397
    %v5399 = vpop.f32.mrf.mxu0
    %v5400 = vadd.f32 %v5327, %v5399
    %5401 = vmatmul.bf16.gmra.mxu0 %v595
    %v5402 = vpop.f32.mrf.mxu0
    %v5403 = vadd.f32 %v5330, %v5402
    %v5404 = vpop.f32.mrf.mxu0
    %v5405 = vadd.f32 %v5332, %v5404
    %5406 = vmatmul.bf16.gmra.mxu0 %v598
    %v5407 = vpop.f32.mrf.mxu0
    %v5408 = vadd.f32 %v5335, %v5407
    %v5409 = vpop.f32.mrf.mxu0
    %v5410 = vadd.f32 %v5337, %v5409
    %5411 = vmatmul.bf16.gmra.mxu0 %v601
    %v5412 = vpop.f32.mrf.mxu0
    %v5413 = vadd.f32 %v5340, %v5412
    %v5414 = vpop.f32.mrf.mxu0
    %v5415 = vadd.f32 %v5342, %v5414
    %5416 = vmatmul.bf16.gmra.mxu0 %v604
    %v5417 = vpop.f32.mrf.mxu0
    %v5418 = vadd.f32 %v5345, %v5417
    %v5419 = vpop.f32.mrf.mxu0
    %5420 = vdwg.mxu0
    %v5421 = vmax.f32 %v4853, %v5358
    %v5422 = vmax.f32 %v4854, %v5360
    %v5423 = vmax.f32 %v4855, %v5363
    %v5424 = vmax.f32 %v4856, %v5365
    %v5425 = vmax.f32 %v4857, %v5368
    %v5426 = vmax.f32 %v4858, %v5370
    %v5427 = vmax.f32 %v4859, %v5373
    %v5428 = vmax.f32 %v4860, %v5375
    %v5429 = vmax.f32 %v4861, %v5378
    %v5430 = vmax.f32 %v4862, %v5380
    %v5431 = vmax.f32 %v4863, %v5383
    %v5432 = vmax.f32 %v4864, %v5385
    %v5433 = vmax.f32 %v4865, %v5388
    %v5434 = vmax.f32 %v4866, %v5390
    %v5435 = vmax.f32 %v4867, %v5393
    %v5436 = vmax.f32 %v4868, %v5395
    %v5437 = vmax.f32 %v4869, %v5398
    %v5438 = vmax.f32 %v4870, %v5400
    %v5439 = vmax.f32 %v4871, %v5403
    %v5440 = vmax.f32 %v4872, %v5405
    %v5441 = vmax.f32 %v4873, %v5408
    %v5442 = vmax.f32 %v4874, %v5410
    %v5443 = vmax.f32 %v4875, %v5413
    %v5444 = vmax.f32 %v4876, %v5415
    %v5445 = vmax.f32 %v4877, %v5418
    %v5446 = vld [vmem:[%s2] sm:$0x1]
    %v5448 = vperm.slane %v5446, 0
    %v5450 = vadd.f32 %v5421, %v5448
    %v5451 = vadd.f32 %v5422, %v5448
    %v5452 = vadd.f32 %v5423, %v5448
    %v5453 = vadd.f32 %v5424, %v5448
    %v5454 = vadd.f32 %v5425, %v5448
    %v5455 = vadd.f32 %v5426, %v5448
    %v5456 = vadd.f32 %v5427, %v5448
    %v5457 = vadd.f32 %v5428, %v5448
    %v5458 = vadd.f32 %v5429, %v5448
    %v5459 = vadd.f32 %v5430, %v5448
    %v5460 = vadd.f32 %v5431, %v5448
    %v5461 = vadd.f32 %v5432, %v5448
    %v5462 = vadd.f32 %v5433, %v5448
    %v5463 = vadd.f32 %v5434, %v5448
    %v5464 = vadd.f32 %v5435, %v5448
    %v5465 = vadd.f32 %v5436, %v5448
    %v5466 = vadd.f32 %v5437, %v5448
    %v5467 = vadd.f32 %v5438, %v5448
    %v5468 = vadd.f32 %v5439, %v5448
    %v5469 = vadd.f32 %v5440, %v5448
    %v5470 = vadd.f32 %v5441, %v5448
    %v5471 = vadd.f32 %v5442, %v5448
    %v5472 = vadd.f32 %v5443, %v5448
    %v5473 = vadd.f32 %v5444, %v5448
    %v5474 = vadd.f32 %v5445, %v5448
    %v5475 = vmax.f32 %v5450, 0.0
    %v5476 = vmax.f32 %v5451, 0.0
    %v5477 = vmax.f32 %v5452, 0.0
    %v5478 = vmax.f32 %v5453, 0.0
    %v5479 = vmax.f32 %v5454, 0.0
    %v5480 = vmax.f32 %v5455, 0.0
    %v5481 = vmax.f32 %v5456, 0.0
    %v5482 = vmax.f32 %v5457, 0.0
    %v5483 = vmax.f32 %v5458, 0.0
    %v5484 = vmax.f32 %v5459, 0.0
    %v5485 = vmax.f32 %v5460, 0.0
    %v5486 = vmax.f32 %v5461, 0.0
    %v5487 = vmax.f32 %v5462, 0.0
    %v5488 = vmax.f32 %v5463, 0.0
    %v5489 = vmax.f32 %v5464, 0.0
    %v5490 = vmax.f32 %v5465, 0.0
    %v5491 = vmax.f32 %v5466, 0.0
    %v5492 = vmax.f32 %v5467, 0.0
    %v5493 = vmax.f32 %v5468, 0.0
    %v5494 = vmax.f32 %v5469, 0.0
    %v5495 = vmax.f32 %v5470, 0.0
    %v5496 = vmax.f32 %v5471, 0.0
    %v5497 = vmax.f32 %v5472, 0.0
    %v5498 = vmax.f32 %v5473, 0.0
    %v5499 = vmax.f32 %v5474, 0.0
    %v5500 = vld [vmem:[%s3] sm:$0xff]
    %v5501 = vld [vmem:[%s3 + $0x8] sm:$0xff]
    %v5502 = vld [vmem:[%s3 + $0x10] sm:$0xf]
    %s5503 = scalar_lea.vmem %s3, 24
    %v5504 = vld [vmem:[%s5503] sm:$0xff]
    %v5505 = vld [vmem:[%s5503 + $0x8] sm:$0xff]
    %v5506 = vld [vmem:[%s5503 + $0x10] sm:$0xf]
    %vm5507 = vcmask 162816
    %v5509 = vsel %vm5507, %v5476, 0
    %vm5511 = vcmask 1043456
    %v5513 = vsel %vm5511, %v5506, 0
    %5515 = vmatpush.msra.mxu0 0.0
    %5516 = vmatpush.msra.mxu0 0.0
    %5517 = vmatpush.msra.mxu0 0.0
    %5518 = vmatpush.msra.mxu0 0.0
    %5519 = vmatpush.msra.mxu0 0.0
    %5520 = vmatpush.msra.mxu0 0.0
    %5521 = vmatpush.msra.mxu0 0.0
    %5522 = vmatpush.msra.mxu0 0.0
    %5523 = vmatpush.msra.mxu0 0.0
    %5524 = vmatpush.msra.mxu0 0.0
    %5525 = vmatpush.msra.mxu0 0.0
    %5526 = vmatpush.msra.mxu0 0.0
    %5527 = vmatpush.msra.mxu0 0.0
    %5528 = vmatpush.msra.mxu0 %v5513
    %5529 = vmatpush.msra.mxu0 %v5505
    %5530 = vmatpush.msra.mxu0 %v5504
    %5531 = vmatmul.f32.gmra.mxu0 %v5509
    %v5532 = vpop.f32.mrf.mxu0
    %v5533 = vadd.f32 0.0, %v5532
    %5534 = vdwg.mxu0
    %v5536 = vsel %vm5507, %v5475, 0
    %v5539 = vsel %vm5511, %v5502, 0
    %5541 = vmatpush.msra.mxu0 0.0
    %5542 = vmatpush.msra.mxu0 0.0
    %5543 = vmatpush.msra.mxu0 0.0
    %5544 = vmatpush.msra.mxu0 0.0
    %5545 = vmatpush.msra.mxu0 0.0
    %5546 = vmatpush.msra.mxu0 0.0
    %5547 = vmatpush.msra.mxu0 0.0
    %5548 = vmatpush.msra.mxu0 0.0
    %5549 = vmatpush.msra.mxu0 0.0
    %5550 = vmatpush.msra.mxu0 0.0
    %5551 = vmatpush.msra.mxu0 0.0
    %5552 = vmatpush.msra.mxu0 0.0
    %5553 = vmatpush.msra.mxu0 0.0
    %5554 = vmatpush.msra.mxu0 %v5539
    %5555 = vmatpush.msra.mxu0 %v5501
    %5556 = vmatpush.msra.mxu0 %v5500
    %5557 = vmatmul.f32.gmra.mxu0 %v5536
    %v5558 = vpop.f32.mrf.mxu0
    %v5559 = vadd.f32 %v5533, %v5558
    %5560 = vdwg.mxu0
    %s5561 = scalar_lea.vmem %s3, 48
    %v5562 = vld [vmem:[%s5561] sm:$0xff]
    %v5563 = vld [vmem:[%s5561 + $0x8] sm:$0xff]
    %v5564 = vld [vmem:[%s5561 + $0x10] sm:$0xf]
    %v5566 = vsel %vm5507, %v5477, 0
    %v5569 = vsel %vm5511, %v5564, 0
    %5571 = vmatpush.msra.mxu0 0.0
    %5572 = vmatpush.msra.mxu0 0.0
    %5573 = vmatpush.msra.mxu0 0.0
    %5574 = vmatpush.msra.mxu0 0.0
    %5575 = vmatpush.msra.mxu0 0.0
    %5576 = vmatpush.msra.mxu0 0.0
    %5577 = vmatpush.msra.mxu0 0.0
    %5578 = vmatpush.msra.mxu0 0.0
    %5579 = vmatpush.msra.mxu0 0.0
    %5580 = vmatpush.msra.mxu0 0.0
    %5581 = vmatpush.msra.mxu0 0.0
    %5582 = vmatpush.msra.mxu0 0.0
    %5583 = vmatpush.msra.mxu0 0.0
    %5584 = vmatpush.msra.mxu0 %v5569
    %5585 = vmatpush.msra.mxu0 %v5563
    %5586 = vmatpush.msra.mxu0 %v5562
    %5587 = vmatmul.f32.gmra.mxu0 %v5566
    %v5588 = vpop.f32.mrf.mxu0
    %v5589 = vadd.f32 0.0, %v5588
    %5590 = vdwg.mxu0
    %v5591 = vadd.f32 %v5559, %v5589
    %s5592 = scalar_lea.vmem %s3, 72
    %v5593 = vld [vmem:[%s5592] sm:$0xff]
    %v5594 = vld [vmem:[%s5592 + $0x8] sm:$0xff]
    %v5595 = vld [vmem:[%s5592 + $0x10] sm:$0xf]
    %v5597 = vsel %vm5507, %v5478, 0
    %v5600 = vsel %vm5511, %v5595, 0
    %5602 = vmatpush.msra.mxu0 0.0
    %5603 = vmatpush.msra.mxu0 0.0
    %5604 = vmatpush.msra.mxu0 0.0
    %5605 = vmatpush.msra.mxu0 0.0
    %5606 = vmatpush.msra.mxu0 0.0
    %5607 = vmatpush.msra.mxu0 0.0
    %5608 = vmatpush.msra.mxu0 0.0
    %5609 = vmatpush.msra.mxu0 0.0
    %5610 = vmatpush.msra.mxu0 0.0
    %5611 = vmatpush.msra.mxu0 0.0
    %5612 = vmatpush.msra.mxu0 0.0
    %5613 = vmatpush.msra.mxu0 0.0
    %5614 = vmatpush.msra.mxu0 0.0
    %5615 = vmatpush.msra.mxu0 %v5600
    %5616 = vmatpush.msra.mxu0 %v5594
    %5617 = vmatpush.msra.mxu0 %v5593
    %5618 = vmatmul.f32.gmra.mxu0 %v5597
    %v5619 = vpop.f32.mrf.mxu0
    %v5620 = vadd.f32 0.0, %v5619
    %5621 = vdwg.mxu0
    %v5622 = vadd.f32 %v5591, %v5620
    %s5623 = scalar_lea.vmem %s3, 96
    %v5624 = vld [vmem:[%s5623] sm:$0xff]
    %v5625 = vld [vmem:[%s5623 + $0x8] sm:$0xff]
    %v5626 = vld [vmem:[%s5623 + $0x10] sm:$0xf]
    %v5628 = vsel %vm5507, %v5479, 0
    %v5631 = vsel %vm5511, %v5626, 0
    %5633 = vmatpush.msra.mxu0 0.0
    %5634 = vmatpush.msra.mxu0 0.0
    %5635 = vmatpush.msra.mxu0 0.0
    %5636 = vmatpush.msra.mxu0 0.0
    %5637 = vmatpush.msra.mxu0 0.0
    %5638 = vmatpush.msra.mxu0 0.0
    %5639 = vmatpush.msra.mxu0 0.0
    %5640 = vmatpush.msra.mxu0 0.0
    %5641 = vmatpush.msra.mxu0 0.0
    %5642 = vmatpush.msra.mxu0 0.0
    %5643 = vmatpush.msra.mxu0 0.0
    %5644 = vmatpush.msra.mxu0 0.0
    %5645 = vmatpush.msra.mxu0 0.0
    %5646 = vmatpush.msra.mxu0 %v5631
    %5647 = vmatpush.msra.mxu0 %v5625
    %5648 = vmatpush.msra.mxu0 %v5624
    %5649 = vmatmul.f32.gmra.mxu0 %v5628
    %v5650 = vpop.f32.mrf.mxu0
    %v5651 = vadd.f32 0.0, %v5650
    %5652 = vdwg.mxu0
    %v5653 = vadd.f32 %v5622, %v5651
    %s5654 = scalar_lea.vmem %s3, 120
    %v5655 = vld [vmem:[%s5654] sm:$0xff]
    %v5656 = vld [vmem:[%s5654 + $0x8] sm:$0xff]
    %v5657 = vld [vmem:[%s5654 + $0x10] sm:$0xf]
    %v5659 = vsel %vm5507, %v5480, 0
    %v5662 = vsel %vm5511, %v5657, 0
    %5664 = vmatpush.msra.mxu0 0.0
    %5665 = vmatpush.msra.mxu0 0.0
    %5666 = vmatpush.msra.mxu0 0.0
    %5667 = vmatpush.msra.mxu0 0.0
    %5668 = vmatpush.msra.mxu0 0.0
    %5669 = vmatpush.msra.mxu0 0.0
    %5670 = vmatpush.msra.mxu0 0.0
    %5671 = vmatpush.msra.mxu0 0.0
    %5672 = vmatpush.msra.mxu0 0.0
    %5673 = vmatpush.msra.mxu0 0.0
    %5674 = vmatpush.msra.mxu0 0.0
    %5675 = vmatpush.msra.mxu0 0.0
    %5676 = vmatpush.msra.mxu0 0.0
    %5677 = vmatpush.msra.mxu0 %v5662
    %5678 = vmatpush.msra.mxu0 %v5656
    %5679 = vmatpush.msra.mxu0 %v5655
    %5680 = vmatmul.f32.gmra.mxu0 %v5659
    %v5681 = vpop.f32.mrf.mxu0
    %v5682 = vadd.f32 0.0, %v5681
    %5683 = vdwg.mxu0
    %v5684 = vadd.f32 %v5653, %v5682
    %s5685 = scalar_lea.vmem %s3, 144
    %v5686 = vld [vmem:[%s5685] sm:$0xff]
    %v5687 = vld [vmem:[%s5685 + $0x8] sm:$0xff]
    %v5688 = vld [vmem:[%s5685 + $0x10] sm:$0xf]
    %v5690 = vsel %vm5507, %v5481, 0
    %v5693 = vsel %vm5511, %v5688, 0
    %5695 = vmatpush.msra.mxu0 0.0
    %5696 = vmatpush.msra.mxu0 0.0
    %5697 = vmatpush.msra.mxu0 0.0
    %5698 = vmatpush.msra.mxu0 0.0
    %5699 = vmatpush.msra.mxu0 0.0
    %5700 = vmatpush.msra.mxu0 0.0
    %5701 = vmatpush.msra.mxu0 0.0
    %5702 = vmatpush.msra.mxu0 0.0
    %5703 = vmatpush.msra.mxu0 0.0
    %5704 = vmatpush.msra.mxu0 0.0
    %5705 = vmatpush.msra.mxu0 0.0
    %5706 = vmatpush.msra.mxu0 0.0
    %5707 = vmatpush.msra.mxu0 0.0
    %5708 = vmatpush.msra.mxu0 %v5693
    %5709 = vmatpush.msra.mxu0 %v5687
    %5710 = vmatpush.msra.mxu0 %v5686
    %5711 = vmatmul.f32.gmra.mxu0 %v5690
    %v5712 = vpop.f32.mrf.mxu0
    %v5713 = vadd.f32 0.0, %v5712
    %5714 = vdwg.mxu0
    %v5715 = vadd.f32 %v5684, %v5713
    %s5716 = scalar_lea.vmem %s3, 168
    %v5717 = vld [vmem:[%s5716] sm:$0xff]
    %v5718 = vld [vmem:[%s5716 + $0x8] sm:$0xff]
    %v5719 = vld [vmem:[%s5716 + $0x10] sm:$0xf]
    %v5721 = vsel %vm5507, %v5482, 0
    %v5724 = vsel %vm5511, %v5719, 0
    %5726 = vmatpush.msra.mxu0 0.0
    %5727 = vmatpush.msra.mxu0 0.0
    %5728 = vmatpush.msra.mxu0 0.0
    %5729 = vmatpush.msra.mxu0 0.0
    %5730 = vmatpush.msra.mxu0 0.0
    %5731 = vmatpush.msra.mxu0 0.0
    %5732 = vmatpush.msra.mxu0 0.0
    %5733 = vmatpush.msra.mxu0 0.0
    %5734 = vmatpush.msra.mxu0 0.0
    %5735 = vmatpush.msra.mxu0 0.0
    %5736 = vmatpush.msra.mxu0 0.0
    %5737 = vmatpush.msra.mxu0 0.0
    %5738 = vmatpush.msra.mxu0 0.0
    %5739 = vmatpush.msra.mxu0 %v5724
    %5740 = vmatpush.msra.mxu0 %v5718
    %5741 = vmatpush.msra.mxu0 %v5717
    %5742 = vmatmul.f32.gmra.mxu0 %v5721
    %v5743 = vpop.f32.mrf.mxu0
    %v5744 = vadd.f32 0.0, %v5743
    %5745 = vdwg.mxu0
    %v5746 = vadd.f32 %v5715, %v5744
    %s5747 = scalar_lea.vmem %s3, 192
    %v5748 = vld [vmem:[%s5747] sm:$0xff]
    %v5749 = vld [vmem:[%s5747 + $0x8] sm:$0xff]
    %v5750 = vld [vmem:[%s5747 + $0x10] sm:$0xf]
    %v5752 = vsel %vm5507, %v5483, 0
    %v5755 = vsel %vm5511, %v5750, 0
    %5757 = vmatpush.msra.mxu0 0.0
    %5758 = vmatpush.msra.mxu0 0.0
    %5759 = vmatpush.msra.mxu0 0.0
    %5760 = vmatpush.msra.mxu0 0.0
    %5761 = vmatpush.msra.mxu0 0.0
    %5762 = vmatpush.msra.mxu0 0.0
    %5763 = vmatpush.msra.mxu0 0.0
    %5764 = vmatpush.msra.mxu0 0.0
    %5765 = vmatpush.msra.mxu0 0.0
    %5766 = vmatpush.msra.mxu0 0.0
    %5767 = vmatpush.msra.mxu0 0.0
    %5768 = vmatpush.msra.mxu0 0.0
    %5769 = vmatpush.msra.mxu0 0.0
    %5770 = vmatpush.msra.mxu0 %v5755
    %5771 = vmatpush.msra.mxu0 %v5749
    %5772 = vmatpush.msra.mxu0 %v5748
    %5773 = vmatmul.f32.gmra.mxu0 %v5752
    %v5774 = vpop.f32.mrf.mxu0
    %v5775 = vadd.f32 0.0, %v5774
    %5776 = vdwg.mxu0
    %v5777 = vadd.f32 %v5746, %v5775
    %s5778 = scalar_lea.vmem %s3, 216
    %v5779 = vld [vmem:[%s5778] sm:$0xff]
    %v5780 = vld [vmem:[%s5778 + $0x8] sm:$0xff]
    %v5781 = vld [vmem:[%s5778 + $0x10] sm:$0xf]
    %v5783 = vsel %vm5507, %v5484, 0
    %v5786 = vsel %vm5511, %v5781, 0
    %5788 = vmatpush.msra.mxu0 0.0
    %5789 = vmatpush.msra.mxu0 0.0
    %5790 = vmatpush.msra.mxu0 0.0
    %5791 = vmatpush.msra.mxu0 0.0
    %5792 = vmatpush.msra.mxu0 0.0
    %5793 = vmatpush.msra.mxu0 0.0
    %5794 = vmatpush.msra.mxu0 0.0
    %5795 = vmatpush.msra.mxu0 0.0
    %5796 = vmatpush.msra.mxu0 0.0
    %5797 = vmatpush.msra.mxu0 0.0
    %5798 = vmatpush.msra.mxu0 0.0
    %5799 = vmatpush.msra.mxu0 0.0
    %5800 = vmatpush.msra.mxu0 0.0
    %5801 = vmatpush.msra.mxu0 %v5786
    %5802 = vmatpush.msra.mxu0 %v5780
    %5803 = vmatpush.msra.mxu0 %v5779
    %5804 = vmatmul.f32.gmra.mxu0 %v5783
    %v5805 = vpop.f32.mrf.mxu0
    %v5806 = vadd.f32 0.0, %v5805
    %5807 = vdwg.mxu0
    %v5808 = vadd.f32 %v5777, %v5806
    %s5809 = scalar_lea.vmem %s3, 240
    %v5810 = vld [vmem:[%s5809] sm:$0xff]
    %v5811 = vld [vmem:[%s5809 + $0x8] sm:$0xff]
    %v5812 = vld [vmem:[%s5809 + $0x10] sm:$0xf]
    %v5814 = vsel %vm5507, %v5485, 0
    %v5817 = vsel %vm5511, %v5812, 0
    %5819 = vmatpush.msra.mxu0 0.0
    %5820 = vmatpush.msra.mxu0 0.0
    %5821 = vmatpush.msra.mxu0 0.0
    %5822 = vmatpush.msra.mxu0 0.0
    %5823 = vmatpush.msra.mxu0 0.0
    %5824 = vmatpush.msra.mxu0 0.0
    %5825 = vmatpush.msra.mxu0 0.0
    %5826 = vmatpush.msra.mxu0 0.0
    %5827 = vmatpush.msra.mxu0 0.0
    %5828 = vmatpush.msra.mxu0 0.0
    %5829 = vmatpush.msra.mxu0 0.0
    %5830 = vmatpush.msra.mxu0 0.0
    %5831 = vmatpush.msra.mxu0 0.0
    %5832 = vmatpush.msra.mxu0 %v5817
    %5833 = vmatpush.msra.mxu0 %v5811
    %5834 = vmatpush.msra.mxu0 %v5810
    %5835 = vmatmul.f32.gmra.mxu0 %v5814
    %v5836 = vpop.f32.mrf.mxu0
    %v5837 = vadd.f32 0.0, %v5836
    %5838 = vdwg.mxu0
    %v5839 = vadd.f32 %v5808, %v5837
    %s5840 = scalar_lea.vmem %s3, 264
    %v5841 = vld [vmem:[%s5840] sm:$0xff]
    %v5842 = vld [vmem:[%s5840 + $0x8] sm:$0xff]
    %v5843 = vld [vmem:[%s5840 + $0x10] sm:$0xf]
    %v5845 = vsel %vm5507, %v5486, 0
    %v5848 = vsel %vm5511, %v5843, 0
    %5850 = vmatpush.msra.mxu0 0.0
    %5851 = vmatpush.msra.mxu0 0.0
    %5852 = vmatpush.msra.mxu0 0.0
    %5853 = vmatpush.msra.mxu0 0.0
    %5854 = vmatpush.msra.mxu0 0.0
    %5855 = vmatpush.msra.mxu0 0.0
    %5856 = vmatpush.msra.mxu0 0.0
    %5857 = vmatpush.msra.mxu0 0.0
    %5858 = vmatpush.msra.mxu0 0.0
    %5859 = vmatpush.msra.mxu0 0.0
    %5860 = vmatpush.msra.mxu0 0.0
    %5861 = vmatpush.msra.mxu0 0.0
    %5862 = vmatpush.msra.mxu0 0.0
    %5863 = vmatpush.msra.mxu0 %v5848
    %5864 = vmatpush.msra.mxu0 %v5842
    %5865 = vmatpush.msra.mxu0 %v5841
    %5866 = vmatmul.f32.gmra.mxu0 %v5845
    %v5867 = vpop.f32.mrf.mxu0
    %v5868 = vadd.f32 0.0, %v5867
    %5869 = vdwg.mxu0
    %v5870 = vadd.f32 %v5839, %v5868
    %s5871 = scalar_lea.vmem %s3, 288
    %v5872 = vld [vmem:[%s5871] sm:$0xff]
    %v5873 = vld [vmem:[%s5871 + $0x8] sm:$0xff]
    %v5874 = vld [vmem:[%s5871 + $0x10] sm:$0xf]
    %v5876 = vsel %vm5507, %v5487, 0
    %v5879 = vsel %vm5511, %v5874, 0
    %5881 = vmatpush.msra.mxu0 0.0
    %5882 = vmatpush.msra.mxu0 0.0
    %5883 = vmatpush.msra.mxu0 0.0
    %5884 = vmatpush.msra.mxu0 0.0
    %5885 = vmatpush.msra.mxu0 0.0
    %5886 = vmatpush.msra.mxu0 0.0
    %5887 = vmatpush.msra.mxu0 0.0
    %5888 = vmatpush.msra.mxu0 0.0
    %5889 = vmatpush.msra.mxu0 0.0
    %5890 = vmatpush.msra.mxu0 0.0
    %5891 = vmatpush.msra.mxu0 0.0
    %5892 = vmatpush.msra.mxu0 0.0
    %5893 = vmatpush.msra.mxu0 0.0
    %5894 = vmatpush.msra.mxu0 %v5879
    %5895 = vmatpush.msra.mxu0 %v5873
    %5896 = vmatpush.msra.mxu0 %v5872
    %5897 = vmatmul.f32.gmra.mxu0 %v5876
    %v5898 = vpop.f32.mrf.mxu0
    %v5899 = vadd.f32 0.0, %v5898
    %5900 = vdwg.mxu0
    %v5901 = vadd.f32 %v5870, %v5899
    %s5902 = scalar_lea.vmem %s3, 312
    %v5903 = vld [vmem:[%s5902] sm:$0xff]
    %v5904 = vld [vmem:[%s5902 + $0x8] sm:$0xff]
    %v5905 = vld [vmem:[%s5902 + $0x10] sm:$0xf]
    %v5907 = vsel %vm5507, %v5488, 0
    %v5910 = vsel %vm5511, %v5905, 0
    %5912 = vmatpush.msra.mxu0 0.0
    %5913 = vmatpush.msra.mxu0 0.0
    %5914 = vmatpush.msra.mxu0 0.0
    %5915 = vmatpush.msra.mxu0 0.0
    %5916 = vmatpush.msra.mxu0 0.0
    %5917 = vmatpush.msra.mxu0 0.0
    %5918 = vmatpush.msra.mxu0 0.0
    %5919 = vmatpush.msra.mxu0 0.0
    %5920 = vmatpush.msra.mxu0 0.0
    %5921 = vmatpush.msra.mxu0 0.0
    %5922 = vmatpush.msra.mxu0 0.0
    %5923 = vmatpush.msra.mxu0 0.0
    %5924 = vmatpush.msra.mxu0 0.0
    %5925 = vmatpush.msra.mxu0 %v5910
    %5926 = vmatpush.msra.mxu0 %v5904
    %5927 = vmatpush.msra.mxu0 %v5903
    %5928 = vmatmul.f32.gmra.mxu0 %v5907
    %v5929 = vpop.f32.mrf.mxu0
    %v5930 = vadd.f32 0.0, %v5929
    %5931 = vdwg.mxu0
    %v5932 = vadd.f32 %v5901, %v5930
    %s5933 = scalar_lea.vmem %s3, 336
    %v5934 = vld [vmem:[%s5933] sm:$0xff]
    %v5935 = vld [vmem:[%s5933 + $0x8] sm:$0xff]
    %v5936 = vld [vmem:[%s5933 + $0x10] sm:$0xf]
    %v5938 = vsel %vm5507, %v5489, 0
    %v5941 = vsel %vm5511, %v5936, 0
    %5943 = vmatpush.msra.mxu0 0.0
    %5944 = vmatpush.msra.mxu0 0.0
    %5945 = vmatpush.msra.mxu0 0.0
    %5946 = vmatpush.msra.mxu0 0.0
    %5947 = vmatpush.msra.mxu0 0.0
    %5948 = vmatpush.msra.mxu0 0.0
    %5949 = vmatpush.msra.mxu0 0.0
    %5950 = vmatpush.msra.mxu0 0.0
    %5951 = vmatpush.msra.mxu0 0.0
    %5952 = vmatpush.msra.mxu0 0.0
    %5953 = vmatpush.msra.mxu0 0.0
    %5954 = vmatpush.msra.mxu0 0.0
    %5955 = vmatpush.msra.mxu0 0.0
    %5956 = vmatpush.msra.mxu0 %v5941
    %5957 = vmatpush.msra.mxu0 %v5935
    %5958 = vmatpush.msra.mxu0 %v5934
    %5959 = vmatmul.f32.gmra.mxu0 %v5938
    %v5960 = vpop.f32.mrf.mxu0
    %v5961 = vadd.f32 0.0, %v5960
    %5962 = vdwg.mxu0
    %v5963 = vadd.f32 %v5932, %v5961
    %s5964 = scalar_lea.vmem %s3, 360
    %v5965 = vld [vmem:[%s5964] sm:$0xff]
    %v5966 = vld [vmem:[%s5964 + $0x8] sm:$0xff]
    %v5967 = vld [vmem:[%s5964 + $0x10] sm:$0xf]
    %v5969 = vsel %vm5507, %v5490, 0
    %v5972 = vsel %vm5511, %v5967, 0
    %5974 = vmatpush.msra.mxu0 0.0
    %5975 = vmatpush.msra.mxu0 0.0
    %5976 = vmatpush.msra.mxu0 0.0
    %5977 = vmatpush.msra.mxu0 0.0
    %5978 = vmatpush.msra.mxu0 0.0
    %5979 = vmatpush.msra.mxu0 0.0
    %5980 = vmatpush.msra.mxu0 0.0
    %5981 = vmatpush.msra.mxu0 0.0
    %5982 = vmatpush.msra.mxu0 0.0
    %5983 = vmatpush.msra.mxu0 0.0
    %5984 = vmatpush.msra.mxu0 0.0
    %5985 = vmatpush.msra.mxu0 0.0
    %5986 = vmatpush.msra.mxu0 0.0
    %5987 = vmatpush.msra.mxu0 %v5972
    %5988 = vmatpush.msra.mxu0 %v5966
    %5989 = vmatpush.msra.mxu0 %v5965
    %5990 = vmatmul.f32.gmra.mxu0 %v5969
    %v5991 = vpop.f32.mrf.mxu0
    %v5992 = vadd.f32 0.0, %v5991
    %5993 = vdwg.mxu0
    %v5994 = vadd.f32 %v5963, %v5992
    %s5995 = scalar_lea.vmem %s3, 384
    %v5996 = vld [vmem:[%s5995] sm:$0xff]
    %v5997 = vld [vmem:[%s5995 + $0x8] sm:$0xff]
    %v5998 = vld [vmem:[%s5995 + $0x10] sm:$0xf]
    %v6000 = vsel %vm5507, %v5491, 0
    %v6003 = vsel %vm5511, %v5998, 0
    %6005 = vmatpush.msra.mxu0 0.0
    %6006 = vmatpush.msra.mxu0 0.0
    %6007 = vmatpush.msra.mxu0 0.0
    %6008 = vmatpush.msra.mxu0 0.0
    %6009 = vmatpush.msra.mxu0 0.0
    %6010 = vmatpush.msra.mxu0 0.0
    %6011 = vmatpush.msra.mxu0 0.0
    %6012 = vmatpush.msra.mxu0 0.0
    %6013 = vmatpush.msra.mxu0 0.0
    %6014 = vmatpush.msra.mxu0 0.0
    %6015 = vmatpush.msra.mxu0 0.0
    %6016 = vmatpush.msra.mxu0 0.0
    %6017 = vmatpush.msra.mxu0 0.0
    %6018 = vmatpush.msra.mxu0 %v6003
    %6019 = vmatpush.msra.mxu0 %v5997
    %6020 = vmatpush.msra.mxu0 %v5996
    %6021 = vmatmul.f32.gmra.mxu0 %v6000
    %v6022 = vpop.f32.mrf.mxu0
    %v6023 = vadd.f32 0.0, %v6022
    %6024 = vdwg.mxu0
    %v6025 = vadd.f32 %v5994, %v6023
    %s6026 = scalar_lea.vmem %s3, 408
    %v6027 = vld [vmem:[%s6026] sm:$0xff]
    %v6028 = vld [vmem:[%s6026 + $0x8] sm:$0xff]
    %v6029 = vld [vmem:[%s6026 + $0x10] sm:$0xf]
    %v6031 = vsel %vm5507, %v5492, 0
    %v6034 = vsel %vm5511, %v6029, 0
    %6036 = vmatpush.msra.mxu0 0.0
    %6037 = vmatpush.msra.mxu0 0.0
    %6038 = vmatpush.msra.mxu0 0.0
    %6039 = vmatpush.msra.mxu0 0.0
    %6040 = vmatpush.msra.mxu0 0.0
    %6041 = vmatpush.msra.mxu0 0.0
    %6042 = vmatpush.msra.mxu0 0.0
    %6043 = vmatpush.msra.mxu0 0.0
    %6044 = vmatpush.msra.mxu0 0.0
    %6045 = vmatpush.msra.mxu0 0.0
    %6046 = vmatpush.msra.mxu0 0.0
    %6047 = vmatpush.msra.mxu0 0.0
    %6048 = vmatpush.msra.mxu0 0.0
    %6049 = vmatpush.msra.mxu0 %v6034
    %6050 = vmatpush.msra.mxu0 %v6028
    %6051 = vmatpush.msra.mxu0 %v6027
    %6052 = vmatmul.f32.gmra.mxu0 %v6031
    %v6053 = vpop.f32.mrf.mxu0
    %v6054 = vadd.f32 0.0, %v6053
    %6055 = vdwg.mxu0
    %v6056 = vadd.f32 %v6025, %v6054
    %s6057 = scalar_lea.vmem %s3, 432
    %v6058 = vld [vmem:[%s6057] sm:$0xff]
    %v6059 = vld [vmem:[%s6057 + $0x8] sm:$0xff]
    %v6060 = vld [vmem:[%s6057 + $0x10] sm:$0xf]
    %v6062 = vsel %vm5507, %v5493, 0
    %v6065 = vsel %vm5511, %v6060, 0
    %6067 = vmatpush.msra.mxu0 0.0
    %6068 = vmatpush.msra.mxu0 0.0
    %6069 = vmatpush.msra.mxu0 0.0
    %6070 = vmatpush.msra.mxu0 0.0
    %6071 = vmatpush.msra.mxu0 0.0
    %6072 = vmatpush.msra.mxu0 0.0
    %6073 = vmatpush.msra.mxu0 0.0
    %6074 = vmatpush.msra.mxu0 0.0
    %6075 = vmatpush.msra.mxu0 0.0
    %6076 = vmatpush.msra.mxu0 0.0
    %6077 = vmatpush.msra.mxu0 0.0
    %6078 = vmatpush.msra.mxu0 0.0
    %6079 = vmatpush.msra.mxu0 0.0
    %6080 = vmatpush.msra.mxu0 %v6065
    %6081 = vmatpush.msra.mxu0 %v6059
    %6082 = vmatpush.msra.mxu0 %v6058
    %6083 = vmatmul.f32.gmra.mxu0 %v6062
    %v6084 = vpop.f32.mrf.mxu0
    %v6085 = vadd.f32 0.0, %v6084
    %6086 = vdwg.mxu0
    %v6087 = vadd.f32 %v6056, %v6085
    %s6088 = scalar_lea.vmem %s3, 456
    %v6089 = vld [vmem:[%s6088] sm:$0xff]
    %v6090 = vld [vmem:[%s6088 + $0x8] sm:$0xff]
    %v6091 = vld [vmem:[%s6088 + $0x10] sm:$0xf]
    %v6093 = vsel %vm5507, %v5494, 0
    %v6096 = vsel %vm5511, %v6091, 0
    %6098 = vmatpush.msra.mxu0 0.0
    %6099 = vmatpush.msra.mxu0 0.0
    %6100 = vmatpush.msra.mxu0 0.0
    %6101 = vmatpush.msra.mxu0 0.0
    %6102 = vmatpush.msra.mxu0 0.0
    %6103 = vmatpush.msra.mxu0 0.0
    %6104 = vmatpush.msra.mxu0 0.0
    %6105 = vmatpush.msra.mxu0 0.0
    %6106 = vmatpush.msra.mxu0 0.0
    %6107 = vmatpush.msra.mxu0 0.0
    %6108 = vmatpush.msra.mxu0 0.0
    %6109 = vmatpush.msra.mxu0 0.0
    %6110 = vmatpush.msra.mxu0 0.0
    %6111 = vmatpush.msra.mxu0 %v6096
    %6112 = vmatpush.msra.mxu0 %v6090
    %6113 = vmatpush.msra.mxu0 %v6089
    %6114 = vmatmul.f32.gmra.mxu0 %v6093
    %v6115 = vpop.f32.mrf.mxu0
    %v6116 = vadd.f32 0.0, %v6115
    %6117 = vdwg.mxu0
    %v6118 = vadd.f32 %v6087, %v6116
    %s6119 = scalar_lea.vmem %s3, 480
    %v6120 = vld [vmem:[%s6119] sm:$0xff]
    %v6121 = vld [vmem:[%s6119 + $0x8] sm:$0xff]
    %v6122 = vld [vmem:[%s6119 + $0x10] sm:$0xf]
    %v6124 = vsel %vm5507, %v5495, 0
    %v6127 = vsel %vm5511, %v6122, 0
    %6129 = vmatpush.msra.mxu0 0.0
    %6130 = vmatpush.msra.mxu0 0.0
    %6131 = vmatpush.msra.mxu0 0.0
    %6132 = vmatpush.msra.mxu0 0.0
    %6133 = vmatpush.msra.mxu0 0.0
    %6134 = vmatpush.msra.mxu0 0.0
    %6135 = vmatpush.msra.mxu0 0.0
    %6136 = vmatpush.msra.mxu0 0.0
    %6137 = vmatpush.msra.mxu0 0.0
    %6138 = vmatpush.msra.mxu0 0.0
    %6139 = vmatpush.msra.mxu0 0.0
    %6140 = vmatpush.msra.mxu0 0.0
    %6141 = vmatpush.msra.mxu0 0.0
    %6142 = vmatpush.msra.mxu0 %v6127
    %6143 = vmatpush.msra.mxu0 %v6121
    %6144 = vmatpush.msra.mxu0 %v6120
    %6145 = vmatmul.f32.gmra.mxu0 %v6124
    %v6146 = vpop.f32.mrf.mxu0
    %v6147 = vadd.f32 0.0, %v6146
    %6148 = vdwg.mxu0
    %v6149 = vadd.f32 %v6118, %v6147
    %s6150 = scalar_lea.vmem %s3, 504
    %v6151 = vld [vmem:[%s6150] sm:$0xff]
    %v6152 = vld [vmem:[%s6150 + $0x8] sm:$0xff]
    %v6153 = vld [vmem:[%s6150 + $0x10] sm:$0xf]
    %v6155 = vsel %vm5507, %v5496, 0
    %v6158 = vsel %vm5511, %v6153, 0
    %6160 = vmatpush.msra.mxu0 0.0
    %6161 = vmatpush.msra.mxu0 0.0
    %6162 = vmatpush.msra.mxu0 0.0
    %6163 = vmatpush.msra.mxu0 0.0
    %6164 = vmatpush.msra.mxu0 0.0
    %6165 = vmatpush.msra.mxu0 0.0
    %6166 = vmatpush.msra.mxu0 0.0
    %6167 = vmatpush.msra.mxu0 0.0
    %6168 = vmatpush.msra.mxu0 0.0
    %6169 = vmatpush.msra.mxu0 0.0
    %6170 = vmatpush.msra.mxu0 0.0
    %6171 = vmatpush.msra.mxu0 0.0
    %6172 = vmatpush.msra.mxu0 0.0
    %6173 = vmatpush.msra.mxu0 %v6158
    %6174 = vmatpush.msra.mxu0 %v6152
    %6175 = vmatpush.msra.mxu0 %v6151
    %6176 = vmatmul.f32.gmra.mxu0 %v6155
    %v6177 = vpop.f32.mrf.mxu0
    %v6178 = vadd.f32 0.0, %v6177
    %6179 = vdwg.mxu0
    %v6180 = vadd.f32 %v6149, %v6178
    %s6181 = scalar_lea.vmem %s3, 528
    %v6182 = vld [vmem:[%s6181] sm:$0xff]
    %v6183 = vld [vmem:[%s6181 + $0x8] sm:$0xff]
    %v6184 = vld [vmem:[%s6181 + $0x10] sm:$0xf]
    %v6186 = vsel %vm5507, %v5497, 0
    %v6189 = vsel %vm5511, %v6184, 0
    %6191 = vmatpush.msra.mxu0 0.0
    %6192 = vmatpush.msra.mxu0 0.0
    %6193 = vmatpush.msra.mxu0 0.0
    %6194 = vmatpush.msra.mxu0 0.0
    %6195 = vmatpush.msra.mxu0 0.0
    %6196 = vmatpush.msra.mxu0 0.0
    %6197 = vmatpush.msra.mxu0 0.0
    %6198 = vmatpush.msra.mxu0 0.0
    %6199 = vmatpush.msra.mxu0 0.0
    %6200 = vmatpush.msra.mxu0 0.0
    %6201 = vmatpush.msra.mxu0 0.0
    %6202 = vmatpush.msra.mxu0 0.0
    %6203 = vmatpush.msra.mxu0 0.0
    %6204 = vmatpush.msra.mxu0 %v6189
    %6205 = vmatpush.msra.mxu0 %v6183
    %6206 = vmatpush.msra.mxu0 %v6182
    %6207 = vmatmul.f32.gmra.mxu0 %v6186
    %v6208 = vpop.f32.mrf.mxu0
    %v6209 = vadd.f32 0.0, %v6208
    %6210 = vdwg.mxu0
    %v6211 = vadd.f32 %v6180, %v6209
    %s6212 = scalar_lea.vmem %s3, 552
    %v6213 = vld [vmem:[%s6212] sm:$0xff]
    %v6214 = vld [vmem:[%s6212 + $0x8] sm:$0xff]
    %v6215 = vld [vmem:[%s6212 + $0x10] sm:$0xf]
    %v6217 = vsel %vm5507, %v5498, 0
    %v6220 = vsel %vm5511, %v6215, 0
    %6222 = vmatpush.msra.mxu0 0.0
    %6223 = vmatpush.msra.mxu0 0.0
    %6224 = vmatpush.msra.mxu0 0.0
    %6225 = vmatpush.msra.mxu0 0.0
    %6226 = vmatpush.msra.mxu0 0.0
    %6227 = vmatpush.msra.mxu0 0.0
    %6228 = vmatpush.msra.mxu0 0.0
    %6229 = vmatpush.msra.mxu0 0.0
    %6230 = vmatpush.msra.mxu0 0.0
    %6231 = vmatpush.msra.mxu0 0.0
    %6232 = vmatpush.msra.mxu0 0.0
    %6233 = vmatpush.msra.mxu0 0.0
    %6234 = vmatpush.msra.mxu0 0.0
    %6235 = vmatpush.msra.mxu0 %v6220
    %6236 = vmatpush.msra.mxu0 %v6214
    %6237 = vmatpush.msra.mxu0 %v6213
    %6238 = vmatmul.f32.gmra.mxu0 %v6217
    %v6239 = vpop.f32.mrf.mxu0
    %v6240 = vadd.f32 0.0, %v6239
    %6241 = vdwg.mxu0
    %v6242 = vadd.f32 %v6211, %v6240
    %s6243 = scalar_lea.vmem %s3, 576
    %v6244 = vld [vmem:[%s6243] sm:$0xff]
    %v6245 = vld [vmem:[%s6243 + $0x8] sm:$0xff]
    %v6246 = vld [vmem:[%s6243 + $0x10] sm:$0xf]
    %v6248 = vsel %vm5507, %v5499, 0
    %v6251 = vsel %vm5511, %v6246, 0
    %6253 = vmatpush.msra.mxu0 0.0
    %6254 = vmatpush.msra.mxu0 0.0
    %6255 = vmatpush.msra.mxu0 0.0
    %6256 = vmatpush.msra.mxu0 0.0
    %6257 = vmatpush.msra.mxu0 0.0
    %6258 = vmatpush.msra.mxu0 0.0
    %6259 = vmatpush.msra.mxu0 0.0
    %6260 = vmatpush.msra.mxu0 0.0
    %6261 = vmatpush.msra.mxu0 0.0
    %6262 = vmatpush.msra.mxu0 0.0
    %6263 = vmatpush.msra.mxu0 0.0
    %6264 = vmatpush.msra.mxu0 0.0
    %6265 = vmatpush.msra.mxu0 0.0
    %6266 = vmatpush.msra.mxu0 %v6251
    %6267 = vmatpush.msra.mxu0 %v6245
    %6268 = vmatpush.msra.mxu0 %v6244
    %6269 = vmatmul.f32.gmra.mxu0 %v6248
    %v6270 = vpop.f32.mrf.mxu0
    %v6271 = vadd.f32 0.0, %v6270
    %6272 = vdwg.mxu0
    %v6273 = vadd.f32 %v6242, %v6271
    %v6274 = vld [vmem:[%s4] sm:$0x1]
    %v6276 = vperm.slane %v6274, 0
    %v6278 = vadd.f32 %v6273, %v6276
    %v6279 = vld [vmem:[%s5] sm:$0xff]
    %v6280 = vld [vmem:[%s5 + $0x8] sm:$0xff]
    %v6281 = vld [vmem:[%s5 + $0x10] sm:$0xff]
    %v6282 = vld [vmem:[%s5 + $0x18] sm:$0xff]
    %v6283 = vld [vmem:[%s5 + $0x20] sm:$0xff]
    %v6284 = vld [vmem:[%s5 + $0x28] sm:$0xff]
    %v6285 = vld [vmem:[%s5 + $0x30] sm:$0xff]
    %v6286 = vld [vmem:[%s5 + $0x38] sm:$0xff]
    %v6287 = vld [vmem:[%s5 + $0x40] sm:$0xff]
    %v6288 = vld [vmem:[%s5 + $0x48] sm:$0xff]
    %v6289 = vld [vmem:[%s5 + $0x50] sm:$0xff]
    %v6290 = vld [vmem:[%s5 + $0x58] sm:$0xff]
    %v6291 = vld [vmem:[%s5 + $0x60] sm:$0xf]
    %v6292 = vld [vmem:[%s6] sm:$0x1]
    %v6294 = vperm.slane %v6292, 0
    %vm6296 = vcmask 818176
    %v6298 = vsel %vm6296, %v6278, 0
    %v6301 = vsel %vm5511, %v6291, 0
    %6303 = vmatpush.msra.mxu0 0.0
    %6304 = vmatpush.msra.mxu0 0.0
    %6305 = vmatpush.msra.mxu0 0.0
    %6306 = vmatpush.msra.mxu0 %v6301
    %6307 = vmatpush.msra.mxu0 %v6290
    %6308 = vmatpush.msra.mxu0 %v6289
    %6309 = vmatpush.msra.mxu0 %v6288
    %6310 = vmatpush.msra.mxu0 %v6287
    %6311 = vmatpush.msra.mxu0 %v6286
    %6312 = vmatpush.msra.mxu0 %v6285
    %6313 = vmatpush.msra.mxu0 %v6284
    %6314 = vmatpush.msra.mxu0 %v6283
    %6315 = vmatpush.msra.mxu0 %v6282
    %6316 = vmatpush.msra.mxu0 %v6281
    %6317 = vmatpush.msra.mxu0 %v6280
    %6318 = vmatpush.msra.mxu0 %v6279
    %6319 = vmatmul.f32.gmra.mxu0 %v6298
    %v6320 = vpop.f32.mrf.mxu0
    %v6321 = vadd.f32 %v6294, %v6320
    %6322 = vdwg.mxu0
    %vm6323 = vcmask 115712
    %6324 = vst.msk [vmem:[#allocation2] sm:$0x3] %vm6323, %v6321
    // Predicated region
    $region30: #{simple_net_dropout_forward.3} parent=1 // pred_check
      _
    $region31: #{simple_net_dropout_forward.3} parent=1 // pred_check_branch
      %6326 = sbr.rel (0) target = $region33
    $region32: #{simple_net_dropout_forward.3} parent=1 // pred_region
      %6328 = vsyncadd [#allocation3], 0
      %s6330 = sshll.u32 [#allocation2], 4
      %s6331 = int_to_ptr.vmem [resolvable:$true] %s6330
      %s6332 = sshll.u32 %s7, 4
      %s6333 = int_to_ptr.hbm [resolvable:$true] %s6332
      %6335 = dma.vmem_to_hbm [thread:$0]  %s6331, 32, %s6333, [#allocation3]
    $region33: #{simple_net_dropout_forward.3} parent=1 // pred_fallthru
      _
    // Predicated region
    $region34: #{simple_net_dropout_forward.3} parent=1 // pred_check
      _
    $region35: #{simple_net_dropout_forward.3} parent=1 // pred_check_branch
      %6337 = sbr.rel (0) target = $region37
    $region36: #{simple_net_dropout_forward.3} parent=1 // pred_region
      %6339 = dma.done [#allocation3], 32
    $region37: #{simple_net_dropout_forward.3} parent=1 // pred_fallthru
      _
    %6340 = vsyncpa [#allocation3], 1

</llo_original>
